<compile_context>
chip_gen: v6e
topology: v6e:2x2x1
jax: 0.10.0
libtpu: 0.0.40
codegen_flags: <defaults>
</compile_context>

<pallas_src>
import jax
import jax.numpy as jnp
from jax import lax
from jax.experimental import pallas as pl
from jax.experimental.pallas import tpu as pltpu


def basic_block_kernel(x_ref, w1_ref, b1_ref, w2_ref, b2_ref, out_ref,
                       pad_ref):
    # x_ref  : (1, H, W, C)  bf16 unpadded NHWC input block (also the residual)
    # w*_ref : (3, 3*C, C)   bf16 im2col weights, one (3*C, C) slab per ky tap
    #                        row, BN scale folded in
    # b*_ref : (1, C)        f32 folded BN bias
    # out_ref: (1, H, W, C)  bf16
    # pad_ref: (H+2, W+2, C) bf16 shared "same"-padding scratch (used for
    #                        conv1's input, then reused for conv2's input)
    _, H, W, C = out_ref.shape
    HW = H * W

    zrow = jnp.zeros((1, W + 2, C), pad_ref.dtype)   # border row
    zcol = jnp.zeros((H, 1, C), pad_ref.dtype)       # in-register W border

    def stage_padded(interior_hwc):
        # Zero only the two border rows (full-width, aligned row stores),
        # then store W-padded interior rows built in-register — no masked
        # sublane-strided column stores, no W-offset interior store.
        pad_ref[0:1, :, :] = zrow
        pad_ref[H + 1:H + 2, :, :] = zrow
        pad_ref[1:H + 1, :, :] = jnp.concatenate(
            [zcol, interior_hwc, zcol], axis=1)

    def conv3x3(w_ref):
        # ky-split: 3 accumulating MXU matmuls over (HW, 3*C) slabs keeps the
        # live patch matrix 3x smaller than a single (HW, 9*C) im2col while
        # keeping the MXU contraction reasonably deep (K = 3*C).
        acc = None
        for ky in range(3):
            slab = jnp.concatenate(
                [pad_ref[ky:ky + H, kx:kx + W, :].reshape(HW, C)
                 for kx in range(3)], axis=-1)                     # (HW,3C) bf16
            part = jnp.dot(slab, w_ref[ky],
                           preferred_element_type=jnp.float32)     # (HW, C) f32
            acc = part if acc is None else acc + part
        return acc

    # ---- conv1 (+ folded bn1 scale) -> bias + relu --------------------------
    stage_padded(x_ref[0])
    out1 = jnp.maximum(conv3x3(w1_ref) + b1_ref[...], 0.0)        # (HW, C) f32

    # ---- conv2 (+ folded bn2 scale): restage bf16 out1 into the same scratch
    stage_padded(out1.astype(pad_ref.dtype).reshape(H, W, C))     # single cast
    out2 = conv3x3(w2_ref) + b2_ref[...]                          # (HW, C) f32

    # ---- residual add (f32) + final relu, bf16 writeback --------------------
    # TODO(synk): residual is the bf16-cast input (PyTorch adds an f32
    #             identity); carry an f32 residual if tighter parity is needed.
    res = x_ref[0].reshape(HW, C).astype(jnp.float32)
    out = jnp.maximum(out2 + res, 0.0)
    out_ref[...] = out.reshape(1, H, W, C).astype(out_ref.dtype)


def fold_bn(gamma, beta, mean, var, eps=1e-5):
    scale = gamma / jnp.sqrt(var + eps)
    bias = beta - mean * scale
    return scale, bias


def basic_block_forward(x_nchw, w1, bn1, w2, bn2):
    """x_nchw: (B, C, H, W) float32; w*: (Cout, Cin, 3, 3) torch OIHW layout.

    Returns NCHW bf16 (the kernel writes bf16 to halve output HBM traffic).
    """
    B, C, H, W = x_nchw.shape

    # NCHW -> NHWC + bf16 cast in one wrapper pass; spatial pad=1 now happens
    # inside the kernel (no wrapper jnp.pad HBM pass).
    x = jnp.transpose(x_nchw, (0, 2, 3, 1)).astype(jnp.bfloat16)

    s1, b1 = fold_bn(*bn1)
    s2, b2 = fold_bn(*bn2)

    # Fold BN scale into conv weights (per output channel), then to im2col
    # layout: OIHW -> (kh, kw, Cin, Cout) -> (3, 3*Cin, Cout), bf16.
    w1k = jnp.transpose(w1 * s1[:, None, None, None], (2, 3, 1, 0))
    w2k = jnp.transpose(w2 * s2[:, None, None, None], (2, 3, 1, 0))
    w1k = w1k.reshape(3, 3 * C, C).astype(jnp.bfloat16)
    w2k = w2k.reshape(3, 3 * C, C).astype(jnp.bfloat16)

    b1 = b1.reshape(1, C).astype(jnp.float32)
    b2 = b2.reshape(1, C).astype(jnp.float32)

    out_nhwc = pl.pallas_call(
        basic_block_kernel,
        out_shape=jax.ShapeDtypeStruct((B, H, W, C), jnp.bfloat16),
        grid_spec=pltpu.PrefetchScalarGridSpec(
            num_scalar_prefetch=0,
            grid=(B,),
            in_specs=[
                pl.BlockSpec((1, H, W, C), lambda b: (b, 0, 0, 0)),
                pl.BlockSpec((3, 3 * C, C), lambda b: (0, 0, 0)),
                pl.BlockSpec((1, C), lambda b: (0, 0)),
                pl.BlockSpec((3, 3 * C, C), lambda b: (0, 0, 0)),
                pl.BlockSpec((1, C), lambda b: (0, 0)),
            ],
            out_specs=pl.BlockSpec((1, H, W, C), lambda b: (b, 0, 0, 0)),
            scratch_shapes=[pltpu.VMEM((H + 2, W + 2, C), jnp.bfloat16)],
        ),
        compiler_params=pltpu.CompilerParams(
            dimension_semantics=("parallel",),
            # Above the 16/32 MiB scoped defaults; re-derive per chip for
            # production shapes (keep headroom under v7x's 64 MiB physical).
            vmem_limit_bytes=48 * 1024 * 1024),
    )(x, w1k, b1, w2k, b2)

    return jnp.transpose(out_nhwc, (0, 3, 1, 2))                  # NCHW bf16


def reference_forward(x, w1, bn1, w2, bn2):
    """Pure-JAX (XLA conv, f32) reference of the PyTorch BasicBlock forward."""
    def conv(h, w):
        return lax.conv_general_dilated(
            h, w, window_strides=(1, 1), padding=((1, 1), (1, 1)),
            dimension_numbers=('NCHW', 'OIHW', 'NCHW'))

    def bn(h, gamma, beta, mean, var, eps=1e-5):
        g = gamma[None, :, None, None]
        b = beta[None, :, None, None]
        m = mean[None, :, None, None]
        v = var[None, :, None, None]
        return (h - m) / jnp.sqrt(v + eps) * g + b

    out = jax.nn.relu(bn(conv(x, w1), *bn1))
    out = bn(conv(out, w2), *bn2)
    return jax.nn.relu(out + x)


if __name__ == "__main__":
    B, C, H, W = 2, 4, 16, 16          # inplanes = planes = 4, stride = 1
    key = jax.random.PRNGKey(0)
    keys = jax.random.split(key, 11)

    x = jax.random.normal(keys[0], (B, C, H, W), jnp.float32)

    # conv weights (torch layout OIHW), deterministic init
    w1 = jax.random.normal(keys[1], (C, C, 3, 3), jnp.float32) * 0.2
    w2 = jax.random.normal(keys[2], (C, C, 3, 3), jnp.float32) * 0.2

    # BatchNorm (eval mode) parameters / running stats
    bn1 = (1.0 + 0.1 * jax.random.normal(keys[3], (C,), jnp.float32),   # gamma
           0.1 * jax.random.normal(keys[4], (C,), jnp.float32),         # beta
           0.1 * jax.random.normal(keys[5], (C,), jnp.float32),         # running_mean
           1.0 + 0.1 * jax.random.uniform(keys[6], (C,), jnp.float32))  # running_var
    bn2 = (1.0 + 0.1 * jax.random.normal(keys[7], (C,), jnp.float32),
           0.1 * jax.random.normal(keys[8], (C,), jnp.float32),
           0.1 * jax.random.normal(keys[9], (C,), jnp.float32),
           1.0 + 0.1 * jax.random.uniform(keys[10], (C,), jnp.float32))

    out = basic_block_forward(x, w1, bn1, w2, bn2)
    out = jax.block_until_ready(out)

    ref = jax.block_until_ready(reference_forward(x, w1, bn1, w2, bn2))
    assert out.shape == (B, C, H, W)
    out_f32 = out.astype(jnp.float32)
    # bf16 activations/weights/output (f32 accumulation) vs the f32 XLA
    # reference: loosened tolerance relative to an all-f32 pipeline.
    assert jnp.allclose(out_f32, ref, atol=1e-1, rtol=1e-1), (
        float(jnp.max(jnp.abs(out_f32 - ref))))

    print("KERNEL_OK")
</pallas_src>

<mosaic_0001>
module attributes {stable_mosaic.version = 11 : i64} {
  func.func @basic_block_kernel(%arg0: i32, %arg1: memref<1x16x16x4xbf16, #tpu.memory_space<vmem>>, %arg2: memref<3x12x4xbf16, #tpu.memory_space<vmem>>, %arg3: memref<1x4xf32, #tpu.memory_space<vmem>>, %arg4: memref<3x12x4xbf16, #tpu.memory_space<vmem>>, %arg5: memref<1x4xf32, #tpu.memory_space<vmem>>, %arg6: memref<1x16x16x4xbf16, #tpu.memory_space<vmem>>, %arg7: memref<18x18x4xbf16, #tpu.memory_space<vmem>>) attributes {dimension_semantics = [#tpu.dimension_semantics<parallel>], iteration_bounds = array<i64: 2>, scalar_prefetch = 0 : i64, scratch_operands = 1 : i64, tpu.core_type = #tpu.core_type<tc>, window_params = [{transform_indices = @transform_0, window_bounds = array<i64: 1, 16, 16, 4>}, {pipeline_mode = #tpu.pipeline_mode<synchronous>, transform_indices = @transform_1, window_bounds = array<i64: 3, 12, 4>}, {pipeline_mode = #tpu.pipeline_mode<synchronous>, transform_indices = @transform_2, window_bounds = array<i64: 1, 4>}, {pipeline_mode = #tpu.pipeline_mode<synchronous>, transform_indices = @transform_3, window_bounds = array<i64: 3, 12, 4>}, {pipeline_mode = #tpu.pipeline_mode<synchronous>, transform_indices = @transform_4, window_bounds = array<i64: 1, 4>}, {transform_indices = @transform_5, window_bounds = array<i64: 1, 16, 16, 4>}]} {
    %cst = arith.constant 0.000000e+00 : bf16
    %0 = vector.broadcast %cst : bf16 to vector<1x18x4xbf16>
    %cst_0 = arith.constant 0.000000e+00 : bf16
    %1 = vector.broadcast %cst_0 : bf16 to vector<16x1x4xbf16>
    %c0 = arith.constant 0 : index
    %c0_1 = arith.constant 0 : index
    %c0_2 = arith.constant 0 : index
    %c0_3 = arith.constant 0 : index
    %2 = vector.load %arg1[%c0, %c0_1, %c0_2, %c0_3] : memref<1x16x16x4xbf16, #tpu.memory_space<vmem>>, vector<1x16x16x4xbf16>
    %3 = vector.shape_cast %2 : vector<1x16x16x4xbf16> to vector<16x16x4xbf16>
    %c0_4 = arith.constant 0 : index
    %c0_5 = arith.constant 0 : index
    %c0_6 = arith.constant 0 : index
    %4 = vector.load %arg7[%c0_4, %c0_5, %c0_6] : memref<18x18x4xbf16, #tpu.memory_space<vmem>>, vector<1x18x4xbf16>
    tpu.vector_store %arg7[%c0_4, %c0_5, %c0_6], %0 {strides = array<i32>} : memref<18x18x4xbf16, #tpu.memory_space<vmem>>, vector<1x18x4xbf16>,
    %c17 = arith.constant 17 : index
    %c0_7 = arith.constant 0 : index
    %c0_8 = arith.constant 0 : index
    %5 = vector.load %arg7[%c17, %c0_7, %c0_8] : memref<18x18x4xbf16, #tpu.memory_space<vmem>>, vector<1x18x4xbf16>
    tpu.vector_store %arg7[%c17, %c0_7, %c0_8], %0 {strides = array<i32>} : memref<18x18x4xbf16, #tpu.memory_space<vmem>>, vector<1x18x4xbf16>,
    %6 = tpu.concatenate %1, %3, %1 in 1 : vector<16x1x4xbf16>, vector<16x16x4xbf16>, vector<16x1x4xbf16> -> vector<16x18x4xbf16>
    %c1 = arith.constant 1 : index
    %c0_9 = arith.constant 0 : index
    %c0_10 = arith.constant 0 : index
    %7 = vector.load %arg7[%c1, %c0_9, %c0_10] : memref<18x18x4xbf16, #tpu.memory_space<vmem>>, vector<16x18x4xbf16>
    tpu.vector_store %arg7[%c1, %c0_9, %c0_10], %6 {strides = array<i32>} : memref<18x18x4xbf16, #tpu.memory_space<vmem>>, vector<16x18x4xbf16>,
    %c0_11 = arith.constant 0 : index
    %c0_12 = arith.constant 0 : index
    %c0_13 = arith.constant 0 : index
    %8 = vector.load %arg7[%c0_11, %c0_12, %c0_13] : memref<18x18x4xbf16, #tpu.memory_space<vmem>>, vector<16x16x4xbf16>
    %9 = vector.shape_cast %8 : vector<16x16x4xbf16> to vector<256x4xbf16>
    %c0_14 = arith.constant 0 : index
    %c1_15 = arith.constant 1 : index
    %c0_16 = arith.constant 0 : index
    %10 = vector.load %arg7[%c0_14, %c1_15, %c0_16] : memref<18x18x4xbf16, #tpu.memory_space<vmem>>, vector<16x16x4xbf16>
    %11 = vector.shape_cast %10 : vector<16x16x4xbf16> to vector<256x4xbf16>
    %c0_17 = arith.constant 0 : index
    %c2 = arith.constant 2 : index
    %c0_18 = arith.constant 0 : index
    %12 = vector.load %arg7[%c0_17, %c2, %c0_18] : memref<18x18x4xbf16, #tpu.memory_space<vmem>>, vector<16x16x4xbf16>
    %13 = vector.shape_cast %12 : vector<16x16x4xbf16> to vector<256x4xbf16>
    %14 = tpu.concatenate %9, %11, %13 in 1 : vector<256x4xbf16>, vector<256x4xbf16>, vector<256x4xbf16> -> vector<256x12xbf16>
    %c0_19 = arith.constant 0 : index
    %c0_20 = arith.constant 0 : index
    %c0_21 = arith.constant 0 : index
    %15 = vector.load %arg2[%c0_19, %c0_20, %c0_21] : memref<3x12x4xbf16, #tpu.memory_space<vmem>>, vector<1x12x4xbf16>
    %16 = vector.shape_cast %15 : vector<1x12x4xbf16> to vector<12x4xbf16>
    %cst_22 = arith.constant dense<0.000000e+00> : vector<256x4xf32>
    %17 = tpu.matmul %14, %16, %cst_22 {dimension_numbers = #tpu.dot_dimension_numbers<[1], [0], [0], [1], [0, 0, 1, 1], [], []>} : vector<256x12xbf16>, vector<12x4xbf16>, vector<256x4xf32> -> vector<256x4xf32>
    %c1_23 = arith.constant 1 : index
    %c0_24 = arith.constant 0 : index
    %c0_25 = arith.constant 0 : index
    %18 = vector.load %arg7[%c1_23, %c0_24, %c0_25] : memref<18x18x4xbf16, #tpu.memory_space<vmem>>, vector<16x16x4xbf16>
    %19 = vector.shape_cast %18 : vector<16x16x4xbf16> to vector<256x4xbf16>
    %c1_26 = arith.constant 1 : index
    %c1_27 = arith.constant 1 : index
    %c0_28 = arith.constant 0 : index
    %20 = vector.load %arg7[%c1_26, %c1_27, %c0_28] : memref<18x18x4xbf16, #tpu.memory_space<vmem>>, vector<16x16x4xbf16>
    %21 = vector.shape_cast %20 : vector<16x16x4xbf16> to vector<256x4xbf16>
    %c1_29 = arith.constant 1 : index
    %c2_30 = arith.constant 2 : index
    %c0_31 = arith.constant 0 : index
    %22 = vector.load %arg7[%c1_29, %c2_30, %c0_31] : memref<18x18x4xbf16, #tpu.memory_space<vmem>>, vector<16x16x4xbf16>
    %23 = vector.shape_cast %22 : vector<16x16x4xbf16> to vector<256x4xbf16>
    %24 = tpu.concatenate %19, %21, %23 in 1 : vector<256x4xbf16>, vector<256x4xbf16>, vector<256x4xbf16> -> vector<256x12xbf16>
    %c1_32 = arith.constant 1 : index
    %c0_33 = arith.constant 0 : index
    %c0_34 = arith.constant 0 : index
    %25 = vector.load %arg2[%c1_32, %c0_33, %c0_34] : memref<3x12x4xbf16, #tpu.memory_space<vmem>>, vector<1x12x4xbf16>
    %26 = vector.shape_cast %25 : vector<1x12x4xbf16> to vector<12x4xbf16>
    %cst_35 = arith.constant dense<0.000000e+00> : vector<256x4xf32>
    %27 = tpu.matmul %24, %26, %cst_35 {dimension_numbers = #tpu.dot_dimension_numbers<[1], [0], [0], [1], [0, 0, 1, 1], [], []>} : vector<256x12xbf16>, vector<12x4xbf16>, vector<256x4xf32> -> vector<256x4xf32>
    %28 = arith.addf %17, %27 : vector<256x4xf32>
    %c2_36 = arith.constant 2 : index
    %c0_37 = arith.constant 0 : index
    %c0_38 = arith.constant 0 : index
    %29 = vector.load %arg7[%c2_36, %c0_37, %c0_38] : memref<18x18x4xbf16, #tpu.memory_space<vmem>>, vector<16x16x4xbf16>
    %30 = vector.shape_cast %29 : vector<16x16x4xbf16> to vector<256x4xbf16>
    %c2_39 = arith.constant 2 : index
    %c1_40 = arith.constant 1 : index
    %c0_41 = arith.constant 0 : index
    %31 = vector.load %arg7[%c2_39, %c1_40, %c0_41] : memref<18x18x4xbf16, #tpu.memory_space<vmem>>, vector<16x16x4xbf16>
    %32 = vector.shape_cast %31 : vector<16x16x4xbf16> to vector<256x4xbf16>
    %c2_42 = arith.constant 2 : index
    %c2_43 = arith.constant 2 : index
    %c0_44 = arith.constant 0 : index
    %33 = vector.load %arg7[%c2_42, %c2_43, %c0_44] : memref<18x18x4xbf16, #tpu.memory_space<vmem>>, vector<16x16x4xbf16>
    %34 = vector.shape_cast %33 : vector<16x16x4xbf16> to vector<256x4xbf16>
    %35 = tpu.concatenate %30, %32, %34 in 1 : vector<256x4xbf16>, vector<256x4xbf16>, vector<256x4xbf16> -> vector<256x12xbf16>
    %c2_45 = arith.constant 2 : index
    %c0_46 = arith.constant 0 : index
    %c0_47 = arith.constant 0 : index
    %36 = vector.load %arg2[%c2_45, %c0_46, %c0_47] : memref<3x12x4xbf16, #tpu.memory_space<vmem>>, vector<1x12x4xbf16>
    %37 = vector.shape_cast %36 : vector<1x12x4xbf16> to vector<12x4xbf16>
    %cst_48 = arith.constant dense<0.000000e+00> : vector<256x4xf32>
    %38 = tpu.matmul %35, %37, %cst_48 {dimension_numbers = #tpu.dot_dimension_numbers<[1], [0], [0], [1], [0, 0, 1, 1], [], []>} : vector<256x12xbf16>, vector<12x4xbf16>, vector<256x4xf32> -> vector<256x4xf32>
    %39 = arith.addf %28, %38 : vector<256x4xf32>
    %c0_49 = arith.constant 0 : index
    %c0_50 = arith.constant 0 : index
    %40 = vector.load %arg3[%c0_49, %c0_50] : memref<1x4xf32, #tpu.memory_space<vmem>>, vector<1x4xf32>
    %41 = vector.broadcast %40 : vector<1x4xf32> to vector<256x4xf32>
    %42 = arith.addf %39, %41 : vector<256x4xf32>
    %cst_51 = arith.constant 0.000000e+00 : f32
    %43 = vector.broadcast %cst_51 : f32 to vector<256x4xf32>
    %44 = arith.maximumf %42, %43 : vector<256x4xf32>
    %45 = arith.truncf %44 : vector<256x4xf32> to vector<256x4xbf16>
    %46 = vector.shape_cast %45 : vector<256x4xbf16> to vector<16x16x4xbf16>
    %c0_52 = arith.constant 0 : index
    %c0_53 = arith.constant 0 : index
    %c0_54 = arith.constant 0 : index
    %47 = vector.load %arg7[%c0_52, %c0_53, %c0_54] : memref<18x18x4xbf16, #tpu.memory_space<vmem>>, vector<1x18x4xbf16>
    tpu.vector_store %arg7[%c0_52, %c0_53, %c0_54], %0 {strides = array<i32>} : memref<18x18x4xbf16, #tpu.memory_space<vmem>>, vector<1x18x4xbf16>,
    %c17_55 = arith.constant 17 : index
    %c0_56 = arith.constant 0 : index
    %c0_57 = arith.constant 0 : index
    %48 = vector.load %arg7[%c17_55, %c0_56, %c0_57] : memref<18x18x4xbf16, #tpu.memory_space<vmem>>, vector<1x18x4xbf16>
    tpu.vector_store %arg7[%c17_55, %c0_56, %c0_57], %0 {strides = array<i32>} : memref<18x18x4xbf16, #tpu.memory_space<vmem>>, vector<1x18x4xbf16>,
    %49 = tpu.concatenate %1, %46, %1 in 1 : vector<16x1x4xbf16>, vector<16x16x4xbf16>, vector<16x1x4xbf16> -> vector<16x18x4xbf16>
    %c1_58 = arith.constant 1 : index
    %c0_59 = arith.constant 0 : index
    %c0_60 = arith.constant 0 : index
    %50 = vector.load %arg7[%c1_58, %c0_59, %c0_60] : memref<18x18x4xbf16, #tpu.memory_space<vmem>>, vector<16x18x4xbf16>
    tpu.vector_store %arg7[%c1_58, %c0_59, %c0_60], %49 {strides = array<i32>} : memref<18x18x4xbf16, #tpu.memory_space<vmem>>, vector<16x18x4xbf16>,
    %c0_61 = arith.constant 0 : index
    %c0_62 = arith.constant 0 : index
    %c0_63 = arith.constant 0 : index
    %51 = vector.load %arg7[%c0_61, %c0_62, %c0_63] : memref<18x18x4xbf16, #tpu.memory_space<vmem>>, vector<16x16x4xbf16>
    %52 = vector.shape_cast %51 : vector<16x16x4xbf16> to vector<256x4xbf16>
    %c0_64 = arith.constant 0 : index
    %c1_65 = arith.constant 1 : index
    %c0_66 = arith.constant 0 : index
    %53 = vector.load %arg7[%c0_64, %c1_65, %c0_66] : memref<18x18x4xbf16, #tpu.memory_space<vmem>>, vector<16x16x4xbf16>
    %54 = vector.shape_cast %53 : vector<16x16x4xbf16> to vector<256x4xbf16>
    %c0_67 = arith.constant 0 : index
    %c2_68 = arith.constant 2 : index
    %c0_69 = arith.constant 0 : index
    %55 = vector.load %arg7[%c0_67, %c2_68, %c0_69] : memref<18x18x4xbf16, #tpu.memory_space<vmem>>, vector<16x16x4xbf16>
    %56 = vector.shape_cast %55 : vector<16x16x4xbf16> to vector<256x4xbf16>
    %57 = tpu.concatenate %52, %54, %56 in 1 : vector<256x4xbf16>, vector<256x4xbf16>, vector<256x4xbf16> -> vector<256x12xbf16>
    %c0_70 = arith.constant 0 : index
    %c0_71 = arith.constant 0 : index
    %c0_72 = arith.constant 0 : index
    %58 = vector.load %arg4[%c0_70, %c0_71, %c0_72] : memref<3x12x4xbf16, #tpu.memory_space<vmem>>, vector<1x12x4xbf16>
    %59 = vector.shape_cast %58 : vector<1x12x4xbf16> to vector<12x4xbf16>
    %cst_73 = arith.constant dense<0.000000e+00> : vector<256x4xf32>
    %60 = tpu.matmul %57, %59, %cst_73 {dimension_numbers = #tpu.dot_dimension_numbers<[1], [0], [0], [1], [0, 0, 1, 1], [], []>} : vector<256x12xbf16>, vector<12x4xbf16>, vector<256x4xf32> -> vector<256x4xf32>
    %c1_74 = arith.constant 1 : index
    %c0_75 = arith.constant 0 : index
    %c0_76 = arith.constant 0 : index
    %61 = vector.load %arg7[%c1_74, %c0_75, %c0_76] : memref<18x18x4xbf16, #tpu.memory_space<vmem>>, vector<16x16x4xbf16>
    %62 = vector.shape_cast %61 : vector<16x16x4xbf16> to vector<256x4xbf16>
    %c1_77 = arith.constant 1 : index
    %c1_78 = arith.constant 1 : index
    %c0_79 = arith.constant 0 : index
    %63 = vector.load %arg7[%c1_77, %c1_78, %c0_79] : memref<18x18x4xbf16, #tpu.memory_space<vmem>>, vector<16x16x4xbf16>
    %64 = vector.shape_cast %63 : vector<16x16x4xbf16> to vector<256x4xbf16>
    %c1_80 = arith.constant 1 : index
    %c2_81 = arith.constant 2 : index
    %c0_82 = arith.constant 0 : index
    %65 = vector.load %arg7[%c1_80, %c2_81, %c0_82] : memref<18x18x4xbf16, #tpu.memory_space<vmem>>, vector<16x16x4xbf16>
    %66 = vector.shape_cast %65 : vector<16x16x4xbf16> to vector<256x4xbf16>
    %67 = tpu.concatenate %62, %64, %66 in 1 : vector<256x4xbf16>, vector<256x4xbf16>, vector<256x4xbf16> -> vector<256x12xbf16>
    %c1_83 = arith.constant 1 : index
    %c0_84 = arith.constant 0 : index
    %c0_85 = arith.constant 0 : index
    %68 = vector.load %arg4[%c1_83, %c0_84, %c0_85] : memref<3x12x4xbf16, #tpu.memory_space<vmem>>, vector<1x12x4xbf16>
    %69 = vector.shape_cast %68 : vector<1x12x4xbf16> to vector<12x4xbf16>
    %cst_86 = arith.constant dense<0.000000e+00> : vector<256x4xf32>
    %70 = tpu.matmul %67, %69, %cst_86 {dimension_numbers = #tpu.dot_dimension_numbers<[1], [0], [0], [1], [0, 0, 1, 1], [], []>} : vector<256x12xbf16>, vector<12x4xbf16>, vector<256x4xf32> -> vector<256x4xf32>
    %71 = arith.addf %60, %70 : vector<256x4xf32>
    %c2_87 = arith.constant 2 : index
    %c0_88 = arith.constant 0 : index
    %c0_89 = arith.constant 0 : index
    %72 = vector.load %arg7[%c2_87, %c0_88, %c0_89] : memref<18x18x4xbf16, #tpu.memory_space<vmem>>, vector<16x16x4xbf16>
    %73 = vector.shape_cast %72 : vector<16x16x4xbf16> to vector<256x4xbf16>
    %c2_90 = arith.constant 2 : index
    %c1_91 = arith.constant 1 : index
    %c0_92 = arith.constant 0 : index
    %74 = vector.load %arg7[%c2_90, %c1_91, %c0_92] : memref<18x18x4xbf16, #tpu.memory_space<vmem>>, vector<16x16x4xbf16>
    %75 = vector.shape_cast %74 : vector<16x16x4xbf16> to vector<256x4xbf16>
    %c2_93 = arith.constant 2 : index
    %c2_94 = arith.constant 2 : index
    %c0_95 = arith.constant 0 : index
    %76 = vector.load %arg7[%c2_93, %c2_94, %c0_95] : memref<18x18x4xbf16, #tpu.memory_space<vmem>>, vector<16x16x4xbf16>
    %77 = vector.shape_cast %76 : vector<16x16x4xbf16> to vector<256x4xbf16>
    %78 = tpu.concatenate %73, %75, %77 in 1 : vector<256x4xbf16>, vector<256x4xbf16>, vector<256x4xbf16> -> vector<256x12xbf16>
    %c2_96 = arith.constant 2 : index
    %c0_97 = arith.constant 0 : index
    %c0_98 = arith.constant 0 : index
    %79 = vector.load %arg4[%c2_96, %c0_97, %c0_98] : memref<3x12x4xbf16, #tpu.memory_space<vmem>>, vector<1x12x4xbf16>
    %80 = vector.shape_cast %79 : vector<1x12x4xbf16> to vector<12x4xbf16>
    %cst_99 = arith.constant dense<0.000000e+00> : vector<256x4xf32>
    %81 = tpu.matmul %78, %80, %cst_99 {dimension_numbers = #tpu.dot_dimension_numbers<[1], [0], [0], [1], [0, 0, 1, 1], [], []>} : vector<256x12xbf16>, vector<12x4xbf16>, vector<256x4xf32> -> vector<256x4xf32>
    %82 = arith.addf %71, %81 : vector<256x4xf32>
    %c0_100 = arith.constant 0 : index
    %c0_101 = arith.constant 0 : index
    %83 = vector.load %arg5[%c0_100, %c0_101] : memref<1x4xf32, #tpu.memory_space<vmem>>, vector<1x4xf32>
    %84 = vector.broadcast %83 : vector<1x4xf32> to vector<256x4xf32>
    %85 = arith.addf %82, %84 : vector<256x4xf32>
    %c0_102 = arith.constant 0 : index
    %c0_103 = arith.constant 0 : index
    %c0_104 = arith.constant 0 : index
    %c0_105 = arith.constant 0 : index
    %86 = vector.load %arg1[%c0_102, %c0_103, %c0_104, %c0_105] : memref<1x16x16x4xbf16, #tpu.memory_space<vmem>>, vector<1x16x16x4xbf16>
    %87 = vector.shape_cast %86 : vector<1x16x16x4xbf16> to vector<16x16x4xbf16>
    %88 = vector.shape_cast %87 : vector<16x16x4xbf16> to vector<256x4xbf16>
    %89 = arith.extf %88 : vector<256x4xbf16> to vector<256x4xf32>
    %90 = arith.addf %85, %89 : vector<256x4xf32>
    %cst_106 = arith.constant 0.000000e+00 : f32
    %91 = vector.broadcast %cst_106 : f32 to vector<256x4xf32>
    %92 = arith.maximumf %90, %91 : vector<256x4xf32>
    %93 = vector.shape_cast %92 : vector<256x4xf32> to vector<1x16x16x4xf32>
    %94 = arith.truncf %93 : vector<1x16x16x4xf32> to vector<1x16x16x4xbf16>
    %c0_107 = arith.constant 0 : index
    %c0_108 = arith.constant 0 : index
    %c0_109 = arith.constant 0 : index
    %c0_110 = arith.constant 0 : index
    %95 = vector.load %arg6[%c0_107, %c0_108, %c0_109, %c0_110] : memref<1x16x16x4xbf16, #tpu.memory_space<vmem>>, vector<1x16x16x4xbf16>
    tpu.vector_store %arg6[%c0_107, %c0_108, %c0_109, %c0_110], %94 {strides = array<i32>} : memref<1x16x16x4xbf16, #tpu.memory_space<vmem>>, vector<1x16x16x4xbf16>,
    return
  }
  func.func @transform_0(%arg0: i32) -> (i32, i32, i32, i32) {
    %c0_i32 = arith.constant 0 : i32
    %c0_i32_0 = arith.constant 0 : i32
    %c0_i32_1 = arith.constant 0 : i32
    %c0_i32_2 = arith.constant 0 : i32
    return %arg0, %c0_i32, %c0_i32_0, %c0_i32_1 : i32, i32, i32, i32
  }
  func.func @transform_1(%arg0: i32) -> (i32, i32, i32) {
    %c0_i32 = arith.constant 0 : i32
    %c0_i32_0 = arith.constant 0 : i32
    %c0_i32_1 = arith.constant 0 : i32
    %c0_i32_2 = arith.constant 0 : i32
    return %c0_i32, %c0_i32_0, %c0_i32_1 : i32, i32, i32
  }
  func.func @transform_2(%arg0: i32) -> (i32, i32) {
    %c0_i32 = arith.constant 0 : i32
    %c0_i32_0 = arith.constant 0 : i32
    %c0_i32_1 = arith.constant 0 : i32
    return %c0_i32, %c0_i32_0 : i32, i32
  }
  func.func @transform_3(%arg0: i32) -> (i32, i32, i32) {
    %c0_i32 = arith.constant 0 : i32
    %c0_i32_0 = arith.constant 0 : i32
    %c0_i32_1 = arith.constant 0 : i32
    %c0_i32_2 = arith.constant 0 : i32
    return %c0_i32, %c0_i32_0, %c0_i32_1 : i32, i32, i32
  }
  func.func @transform_4(%arg0: i32) -> (i32, i32) {
    %c0_i32 = arith.constant 0 : i32
    %c0_i32_0 = arith.constant 0 : i32
    %c0_i32_1 = arith.constant 0 : i32
    return %c0_i32, %c0_i32_0 : i32, i32
  }
  func.func @transform_5(%arg0: i32) -> (i32, i32, i32, i32) {
    %c0_i32 = arith.constant 0 : i32
    %c0_i32_0 = arith.constant 0 : i32
    %c0_i32_1 = arith.constant 0 : i32
    %c0_i32_2 = arith.constant 0 : i32
    return %arg0, %c0_i32, %c0_i32_0, %c0_i32_1 : i32, i32, i32, i32
  }
}

</mosaic_0001>

<llo_original>
// kernel: tpu_custom_call.1
$region0: #{tpu_custom_call.1}
  #allocation0 [shape = 'u32[]', space=smem, size = 0x4, offset = 0x4, fixed_abs, tag = 'smem constant byte address 0x4 - core index']
  #allocation1 [shape = 'u32[144,128]{1,0:T(1,128)}', space=vmem, size = 0x12000, scoped, tag = 'internal scratch']
  #allocation2 [shape = 'bf16[18,18,4]{2,1,0:T(8,128)(2,1)}', space=vmem, size = 0x1b000, scoped, tag = 'scratch operand']
  %s0 = inlined_call_operand.vmem [shape: bf16[2,16,16,4], index: 0, kind: input, shape index: {}]
  %s1 = inlined_call_operand.vmem [shape: bf16[3,12,4], index: 1, kind: input, shape index: {}]
  %s2 = inlined_call_operand.vmem [shape: f32[1,4], index: 2, kind: input, shape index: {}]
  %s3 = inlined_call_operand.vmem [shape: bf16[3,12,4], index: 3, kind: input, shape index: {}]
  %s4 = inlined_call_operand.vmem [shape: f32[1,4], index: 4, kind: input, shape index: {}]
  %s5 = inlined_call_operand.vmem [shape: bf16[2,16,16,4], index: 5, kind: output, shape index: {}]
  %s6 = sld [smem:[#allocation0]]
  $region53: #{tpu_custom_call.1} parent=0
    _
  %s8 = ssub.s32 1, %s6
  %s9 = scalar_select 0, %s8, %s6
  loop: start=0, step=1, limit=4
  $region2: #{tpu_custom_call.1} parent=0 // loop_pre_header
    _
  $region3: #{tpu_custom_call.1} parent=0 // loop_header
    %s11 = sphi 0, %s15
    %p12 = scmp.ge.s32.totalorder %s11, 4
    %s21 = sphi 0, %s23
    %s24 = sphi 0, %s21
    %s25 = sphi 0, %s24
    %s41 = sphi 0, %s25
    %s45 = sphi 0, %s45
    %s47 = sphi 0, %s45
    %s48 = sphi 0, %s47
    %s62 = sphi 0, %s48
    %s66 = sphi 0, %s66
    %s68 = sphi 0, %s66
    %s69 = sphi 0, %s68
    %s83 = sphi 0, %s69
    %s87 = sphi 0, %s87
    %s89 = sphi 0, %s87
    %s90 = sphi 0, %s89
    %s104 = sphi 0, %s90
    %s108 = sphi 0, %s108
    %s110 = sphi 0, %s108
    %s111 = sphi 0, %s110
    %s125 = sphi 0, %s111
    %s131 = sphi 0, %s133
    %s134 = sphi 0, %s131
    %s135 = sphi 0, %s134
    %s151 = sphi 0, %s135
  $region4: #{tpu_custom_call.1} parent=0 // loop_header_branch
    %14 = sbr.rel (%p12) target = $region8
  $region5: #{tpu_custom_call.1} parent=0 // loop_body
    %s16 = ssub.s32 %s11, 1
    %s17 = ssub.s32 %s11, 2
    %s18 = sadd.s32 %s11, 1
    %s19 = ssub.s32 %s11, %s18
    %p20 = scmp.eq.s32.totalorder %s19, 0
    %s22 = sadd.s32 %s21, 1
    %s23 = scalar_select %p20, %s21, %s22
    %p26 = pneg %p20
    %p27 = scmp.eq.s32.totalorder %s11, 1
    %p28 = por %p26, %p27
    %p29 = scmp.ne.s32.totalorder %s21, %s24
    %p30 = scmp.eq.s32.totalorder %s11, 0
    %p31 = por %p29, %p30
    %p32 = scmp.ne.s32.totalorder %s21, %s24
    %p33 = scmp.eq.s32.totalorder %s16, 1
    %p34 = por %p32, %p33
    %p35 = scmp.ne.s32.totalorder %s24, %s25
    %p36 = scmp.eq.s32.totalorder %s16, 0
    %p37 = por %p35, %p36
    %p38 = scmp.ne.s32.totalorder %s24, %s25
    %p39 = scmp.eq.s32.totalorder %s17, 1
    %p40 = por %p38, %p39
    %p42 = scmp.ne.s32.totalorder %s25, %s41
    %p43 = scmp.eq.s32.totalorder %s17, 0
    %p44 = por %p42, %p43
    %s46 = sadd.s32 %s45, 1
    %p49 = scmp.eq.s32.totalorder %s11, 1
    %p50 = scmp.ne.s32.totalorder %s45, %s47
    %p51 = scmp.eq.s32.totalorder %s11, 0
    %p52 = por %p50, %p51
    %p53 = scmp.ne.s32.totalorder %s45, %s47
    %p54 = scmp.eq.s32.totalorder %s16, 1
    %p55 = por %p53, %p54
    %p56 = scmp.ne.s32.totalorder %s47, %s48
    %p57 = scmp.eq.s32.totalorder %s16, 0
    %p58 = por %p56, %p57
    %p59 = scmp.ne.s32.totalorder %s47, %s48
    %p60 = scmp.eq.s32.totalorder %s17, 1
    %p61 = por %p59, %p60
    %p63 = scmp.ne.s32.totalorder %s48, %s62
    %p64 = scmp.eq.s32.totalorder %s17, 0
    %p65 = por %p63, %p64
    %s67 = sadd.s32 %s66, 1
    %p70 = scmp.eq.s32.totalorder %s11, 1
    %p71 = scmp.ne.s32.totalorder %s66, %s68
    %p72 = scmp.eq.s32.totalorder %s11, 0
    %p73 = por %p71, %p72
    %p74 = scmp.ne.s32.totalorder %s66, %s68
    %p75 = scmp.eq.s32.totalorder %s16, 1
    %p76 = por %p74, %p75
    %p77 = scmp.ne.s32.totalorder %s68, %s69
    %p78 = scmp.eq.s32.totalorder %s16, 0
    %p79 = por %p77, %p78
    %p80 = scmp.ne.s32.totalorder %s68, %s69
    %p81 = scmp.eq.s32.totalorder %s17, 1
    %p82 = por %p80, %p81
    %p84 = scmp.ne.s32.totalorder %s69, %s83
    %p85 = scmp.eq.s32.totalorder %s17, 0
    %p86 = por %p84, %p85
    %s88 = sadd.s32 %s87, 1
    %p91 = scmp.eq.s32.totalorder %s11, 1
    %p92 = scmp.ne.s32.totalorder %s87, %s89
    %p93 = scmp.eq.s32.totalorder %s11, 0
    %p94 = por %p92, %p93
    %p95 = scmp.ne.s32.totalorder %s87, %s89
    %p96 = scmp.eq.s32.totalorder %s16, 1
    %p97 = por %p95, %p96
    %p98 = scmp.ne.s32.totalorder %s89, %s90
    %p99 = scmp.eq.s32.totalorder %s16, 0
    %p100 = por %p98, %p99
    %p101 = scmp.ne.s32.totalorder %s89, %s90
    %p102 = scmp.eq.s32.totalorder %s17, 1
    %p103 = por %p101, %p102
    %p105 = scmp.ne.s32.totalorder %s90, %s104
    %p106 = scmp.eq.s32.totalorder %s17, 0
    %p107 = por %p105, %p106
    %s109 = sadd.s32 %s108, 1
    %p112 = scmp.eq.s32.totalorder %s11, 1
    %p113 = scmp.ne.s32.totalorder %s108, %s110
    %p114 = scmp.eq.s32.totalorder %s11, 0
    %p115 = por %p113, %p114
    %p116 = scmp.ne.s32.totalorder %s108, %s110
    %p117 = scmp.eq.s32.totalorder %s16, 1
    %p118 = por %p116, %p117
    %p119 = scmp.ne.s32.totalorder %s110, %s111
    %p120 = scmp.eq.s32.totalorder %s16, 0
    %p121 = por %p119, %p120
    %p122 = scmp.ne.s32.totalorder %s110, %s111
    %p123 = scmp.eq.s32.totalorder %s17, 1
    %p124 = por %p122, %p123
    %p126 = scmp.ne.s32.totalorder %s111, %s125
    %p127 = scmp.eq.s32.totalorder %s17, 0
    %p128 = por %p126, %p127
    %s129 = ssub.s32 %s11, %s18
    %p130 = scmp.eq.s32.totalorder %s129, 0
    %s132 = sadd.s32 %s131, 1
    %s133 = scalar_select %p130, %s131, %s132
    %p136 = pneg %p130
    %p137 = scmp.eq.s32.totalorder %s11, 1
    %p138 = por %p136, %p137
    %p139 = scmp.ne.s32.totalorder %s131, %s134
    %p140 = scmp.eq.s32.totalorder %s11, 0
    %p141 = por %p139, %p140
    %p142 = scmp.ne.s32.totalorder %s131, %s134
    %p143 = scmp.eq.s32.totalorder %s16, 1
    %p144 = por %p142, %p143
    %p145 = scmp.ne.s32.totalorder %s134, %s135
    %p146 = scmp.eq.s32.totalorder %s16, 0
    %p147 = por %p145, %p146
    %p148 = scmp.ne.s32.totalorder %s134, %s135
    %p149 = scmp.eq.s32.totalorder %s17, 1
    %p150 = por %p148, %p149
    %p152 = scmp.ne.s32.totalorder %s135, %s151
    %p153 = scmp.eq.s32.totalorder %s17, 0
    %p154 = por %p152, %p153
    %p155 = scmp.le.s32.totalorder 1, %s11
    %p156 = scmp.lt.s32.totalorder %s11, 3
    %p157 = pnand %p155, %p156
    %p158 = pneg %p157
    // Predicated region
    $region9: #{tpu_custom_call.1} parent=5 // pred_check
      _
    $region10: #{tpu_custom_call.1} parent=5 // pred_check_branch
      %160 = sbr.rel (%p157) target = $region12
    $region11: #{tpu_custom_call.1} parent=5 // pred_region
      %s161 = ssub.s32 %s11, 1
      // Predicated region
      $region13: #{tpu_custom_call.1} parent=11 // pred_check
        %p162 = pneg %p58
      $region14: #{tpu_custom_call.1} parent=11 // pred_check_branch
        %164 = sbr.rel (%p162) target = $region16
      $region15: #{tpu_custom_call.1} parent=11 // pred_region
        _
      $region16: #{tpu_custom_call.1} parent=11 // pred_fallthru
        _
      // Predicated region
      $region17: #{tpu_custom_call.1} parent=11 // pred_check
        %p165 = pneg %p79
      $region18: #{tpu_custom_call.1} parent=11 // pred_check_branch
        %167 = sbr.rel (%p165) target = $region20
      $region19: #{tpu_custom_call.1} parent=11 // pred_region
        _
      $region20: #{tpu_custom_call.1} parent=11 // pred_fallthru
        _
      // Predicated region
      $region21: #{tpu_custom_call.1} parent=11 // pred_check
        %p168 = pneg %p100
      $region22: #{tpu_custom_call.1} parent=11 // pred_check_branch
        %170 = sbr.rel (%p168) target = $region24
      $region23: #{tpu_custom_call.1} parent=11 // pred_region
        _
      $region24: #{tpu_custom_call.1} parent=11 // pred_fallthru
        _
      // Predicated region
      $region25: #{tpu_custom_call.1} parent=11 // pred_check
        %p171 = pneg %p121
      $region26: #{tpu_custom_call.1} parent=11 // pred_check_branch
        %173 = sbr.rel (%p171) target = $region28
      $region27: #{tpu_custom_call.1} parent=11 // pred_region
        _
      $region28: #{tpu_custom_call.1} parent=11 // pred_fallthru
        _
    $region12: #{tpu_custom_call.1} parent=5 // pred_fallthru
      _
    %p174 = scmp.lt.s32.totalorder %s11, 2
    // Predicated region
    $region29: #{tpu_custom_call.1} parent=5 // pred_check
      %p175 = pneg %p174
    $region30: #{tpu_custom_call.1} parent=5 // pred_check_branch
      %177 = sbr.rel (%p175) target = $region32
    $region31: #{tpu_custom_call.1} parent=5 // pred_region
      // Predicated region
      $region33: #{tpu_custom_call.1} parent=31 // pred_check
        %p178 = pneg %p31
      $region34: #{tpu_custom_call.1} parent=31 // pred_check_branch
        %180 = sbr.rel (%p178) target = $region36
      $region35: #{tpu_custom_call.1} parent=31 // pred_region
        %p181 = scmp.lt.s32.totalorder %s11, 1
        %s182 = scalar_select %p181, %s11, 1
        %s183 = smul.addr %s182, 32
        %s184 = smul.addr %s183, 4
        %s185 = scalar_lea.vmem %s0, %s184
      $region36: #{tpu_custom_call.1} parent=31 // pred_fallthru
        _
    $region32: #{tpu_custom_call.1} parent=5 // pred_fallthru
      _
    %p186 = scmp.le.s32.totalorder 1, %s11
    %p187 = scmp.lt.s32.totalorder %s11, 3
    %p188 = pnand %p186, %p187
    %p189 = pneg %p188
    // Predicated region
    $region37: #{tpu_custom_call.1} parent=5 // pred_check
      _
    $region38: #{tpu_custom_call.1} parent=5 // pred_check_branch
      %191 = sbr.rel (%p188) target = $region40
    $region39: #{tpu_custom_call.1} parent=5 // pred_region
      %s192 = ssub.s32 %s11, 1
      %p193 = scmp.lt.s32.totalorder %s16, 1
      %s194 = scalar_select %p193, %s16, 1
      %s195 = smul.addr %s194, 32
      %s196 = smul.addr %s195, 4
      %s197 = scalar_lea.vmem %s0, %s196
      %p198 = pneg %p37
      %p199 = pneg %p34
      %p200 = pneg %p58
      %p201 = pneg %p55
      %p202 = pneg %p79
      %p203 = pneg %p76
      %p204 = pneg %p100
      %p205 = pneg %p97
      %p206 = pneg %p121
      %p207 = pneg %p118
      %p208 = pneg %p147
      %p209 = pneg %p144
      %p210 = scmp.lt.s32.totalorder %s16, 1
      %s211 = scalar_select %p210, %s16, 1
      %s212 = smul.addr %s211, 32
      %s213 = smul.addr %s212, 4
      %s214 = scalar_lea.vmem %s5, %s213
      %p215 = scmp.lt.s32.totalorder %s16, 1
      %s216 = scalar_select %p215, %s16, 1
      %s217 = smul.addr %s216, 32
      %s218 = smul.addr %s217, 4
      %s219 = scalar_lea.vmem %s0, %s218
      %p220 = scmp.lt.s32.totalorder %s16, 1
      %s221 = scalar_select %p220, %s16, 1
      %s222 = smul.addr %s221, 32
      %s223 = smul.addr %s222, 4
      %s224 = scalar_lea.vmem %s5, %s223
      %v226 = vld [vmem:[%s219] sm:$0xf]
      %v227 = vld [vmem:[%s219 + $0x4] sm:$0xf]
      %v228 = vld [vmem:[%s219 + $0x8] sm:$0xf]
      %v229 = vld [vmem:[%s219 + $0xc] sm:$0xf]
      %v230 = vld [vmem:[%s219 + $0x10] sm:$0xf]
      %v231 = vld [vmem:[%s219 + $0x14] sm:$0xf]
      %v232 = vld [vmem:[%s219 + $0x18] sm:$0xf]
      %v233 = vld [vmem:[%s219 + $0x1c] sm:$0xf]
      %v234 = vld [vmem:[%s219 + $0x20] sm:$0xf]
      %v235 = vld [vmem:[%s219 + $0x24] sm:$0xf]
      %v236 = vld [vmem:[%s219 + $0x28] sm:$0xf]
      %v237 = vld [vmem:[%s219 + $0x2c] sm:$0xf]
      %v238 = vld [vmem:[%s219 + $0x30] sm:$0xf]
      %v239 = vld [vmem:[%s219 + $0x34] sm:$0xf]
      %v240 = vld [vmem:[%s219 + $0x38] sm:$0xf]
      %v241 = vld [vmem:[%s219 + $0x3c] sm:$0xf]
      %v242 = vld [vmem:[%s219 + $0x40] sm:$0xf]
      %v243 = vld [vmem:[%s219 + $0x44] sm:$0xf]
      %v244 = vld [vmem:[%s219 + $0x48] sm:$0xf]
      %v245 = vld [vmem:[%s219 + $0x4c] sm:$0xf]
      %v246 = vld [vmem:[%s219 + $0x50] sm:$0xf]
      %v247 = vld [vmem:[%s219 + $0x54] sm:$0xf]
      %v248 = vld [vmem:[%s219 + $0x58] sm:$0xf]
      %v249 = vld [vmem:[%s219 + $0x5c] sm:$0xf]
      %v250 = vld [vmem:[%s219 + $0x60] sm:$0xf]
      %v251 = vld [vmem:[%s219 + $0x64] sm:$0xf]
      %v252 = vld [vmem:[%s219 + $0x68] sm:$0xf]
      %v253 = vld [vmem:[%s219 + $0x6c] sm:$0xf]
      %v254 = vld [vmem:[%s219 + $0x70] sm:$0xf]
      %v255 = vld [vmem:[%s219 + $0x74] sm:$0xf]
      %v256 = vld [vmem:[%s219 + $0x78] sm:$0xf]
      %v257 = vld [vmem:[%s219 + $0x7c] sm:$0xf]
      %vm258 = vcmask 27648
      %259 = vst.msk [vmem:[#allocation2] sm:$0xf] %vm258, 0
      %260 = vst.msk [vmem:[#allocation2 + $0x4] sm:$0xf] %vm258, 0
      %vm261 = vcmask 24576
      %262 = vst.msk [vmem:[#allocation2 + $0x8] sm:$0x1] %vm261, 0
      %s263 = scalar_lea.vmem [#allocation2], 204
      %264 = vst.msk [vmem:[%s263] sm:$0xf] %vm258, 0
      %265 = vst.msk [vmem:[%s263 + $0x4] sm:$0xf] %vm258, 0
      %266 = vst.msk [vmem:[%s263 + $0x8] sm:$0x1] %vm261, 0
      %v299 = vunpack.c.l.b16 %v226
      %v300 = vunpack.c.l.b16 %v227
      %v301 = vunpack.c.l.b16 %v228
      %v302 = vunpack.c.l.b16 %v229
      %v303 = vunpack.c.l.b16 %v230
      %v304 = vunpack.c.l.b16 %v231
      %v305 = vunpack.c.l.b16 %v232
      %v306 = vunpack.c.l.b16 %v233
      %v307 = vunpack.c.l.b16 %v234
      %v308 = vunpack.c.l.b16 %v235
      %v309 = vunpack.c.l.b16 %v236
      %v310 = vunpack.c.l.b16 %v237
      %v311 = vunpack.c.l.b16 %v238
      %v312 = vunpack.c.l.b16 %v239
      %v313 = vunpack.c.l.b16 %v240
      %v314 = vunpack.c.l.b16 %v241
      %v315 = vunpack.c.l.b16 %v242
      %v316 = vunpack.c.l.b16 %v243
      %v317 = vunpack.c.l.b16 %v244
      %v318 = vunpack.c.l.b16 %v245
      %v319 = vunpack.c.l.b16 %v246
      %v320 = vunpack.c.l.b16 %v247
      %v321 = vunpack.c.l.b16 %v248
      %v322 = vunpack.c.l.b16 %v249
      %v323 = vunpack.c.l.b16 %v250
      %v324 = vunpack.c.l.b16 %v251
      %v325 = vunpack.c.l.b16 %v252
      %v326 = vunpack.c.l.b16 %v253
      %v327 = vunpack.c.l.b16 %v254
      %v328 = vunpack.c.l.b16 %v255
      %v329 = vunpack.c.l.b16 %v256
      %v330 = vunpack.c.l.b16 %v257
      %v331 = vpack.c.b16 %v300, %v299
      %v332 = vpack.c.b16 %v302, %v301
      %v333 = vpack.c.b16 %v304, %v303
      %v334 = vpack.c.b16 %v306, %v305
      %v335 = vpack.c.b16 %v308, %v307
      %v336 = vpack.c.b16 %v310, %v309
      %v337 = vpack.c.b16 %v312, %v311
      %v338 = vpack.c.b16 %v314, %v313
      %v339 = vpack.c.b16 %v316, %v315
      %v340 = vpack.c.b16 %v318, %v317
      %v341 = vpack.c.b16 %v320, %v319
      %v342 = vpack.c.b16 %v322, %v321
      %v343 = vpack.c.b16 %v324, %v323
      %v344 = vpack.c.b16 %v326, %v325
      %v345 = vpack.c.b16 %v328, %v327
      %v346 = vpack.c.b16 %v330, %v329
      %v348 = vshrl.u32 %v331, 16
      %v350 = vrot.slane %v348, 7
      %v351 = vshll.u32 %v331, 16
      %v353 = vor.u32 %v350, %v351
      %v355 = vshrl.u32 %v332, 16
      %v357 = vrot.slane %v355, 7
      %v358 = vshll.u32 %v332, 16
      %v360 = vor.u32 %v357, %v358
      %v362 = vshrl.u32 %v333, 16
      %v364 = vrot.slane %v362, 7
      %v365 = vshll.u32 %v333, 16
      %v367 = vor.u32 %v364, %v365
      %v369 = vshrl.u32 %v334, 16
      %v371 = vrot.slane %v369, 7
      %v372 = vshll.u32 %v334, 16
      %v374 = vor.u32 %v371, %v372
      %v376 = vshrl.u32 %v335, 16
      %v378 = vrot.slane %v376, 7
      %v379 = vshll.u32 %v335, 16
      %v381 = vor.u32 %v378, %v379
      %v383 = vshrl.u32 %v336, 16
      %v385 = vrot.slane %v383, 7
      %v386 = vshll.u32 %v336, 16
      %v388 = vor.u32 %v385, %v386
      %v390 = vshrl.u32 %v337, 16
      %v392 = vrot.slane %v390, 7
      %v393 = vshll.u32 %v337, 16
      %v395 = vor.u32 %v392, %v393
      %v397 = vshrl.u32 %v338, 16
      %v399 = vrot.slane %v397, 7
      %v400 = vshll.u32 %v338, 16
      %v402 = vor.u32 %v399, %v400
      %v404 = vshrl.u32 %v339, 16
      %v406 = vrot.slane %v404, 7
      %v407 = vshll.u32 %v339, 16
      %v409 = vor.u32 %v406, %v407
      %v411 = vshrl.u32 %v340, 16
      %v413 = vrot.slane %v411, 7
      %v414 = vshll.u32 %v340, 16
      %v416 = vor.u32 %v413, %v414
      %v418 = vshrl.u32 %v341, 16
      %v420 = vrot.slane %v418, 7
      %v421 = vshll.u32 %v341, 16
      %v423 = vor.u32 %v420, %v421
      %v425 = vshrl.u32 %v342, 16
      %v427 = vrot.slane %v425, 7
      %v428 = vshll.u32 %v342, 16
      %v430 = vor.u32 %v427, %v428
      %v432 = vshrl.u32 %v343, 16
      %v434 = vrot.slane %v432, 7
      %v435 = vshll.u32 %v343, 16
      %v437 = vor.u32 %v434, %v435
      %v439 = vshrl.u32 %v344, 16
      %v441 = vrot.slane %v439, 7
      %v442 = vshll.u32 %v344, 16
      %v444 = vor.u32 %v441, %v442
      %v446 = vshrl.u32 %v345, 16
      %v448 = vrot.slane %v446, 7
      %v449 = vshll.u32 %v345, 16
      %v451 = vor.u32 %v448, %v449
      %v453 = vshrl.u32 %v346, 16
      %v455 = vrot.slane %v453, 7
      %v456 = vshll.u32 %v346, 16
      %v458 = vor.u32 %v455, %v456
      %vm491 = vcmask 1040384
      %vm492 = vsmask.f32 256
      %vm493 = vmand %vm491, %vm492
      %v494 = vsel %vm493, 0, %v353
      %v495 = vsel %vm493, 0, %v360
      %v496 = vsel %vm493, 0, %v367
      %v497 = vsel %vm493, 0, %v374
      %v498 = vsel %vm493, 0, %v381
      %v499 = vsel %vm493, 0, %v388
      %v500 = vsel %vm493, 0, %v395
      %v501 = vsel %vm493, 0, %v402
      %v502 = vsel %vm493, 0, %v409
      %v503 = vsel %vm493, 0, %v416
      %v504 = vsel %vm493, 0, %v423
      %v505 = vsel %vm493, 0, %v430
      %v506 = vsel %vm493, 0, %v437
      %v507 = vsel %vm493, 0, %v444
      %v508 = vsel %vm493, 0, %v451
      %v509 = vsel %vm493, 0, %v458
      %v510 = vsel %vm493, %v350, 0
      %v511 = vsel %vm493, %v357, 0
      %v512 = vsel %vm493, %v364, 0
      %v513 = vsel %vm493, %v371, 0
      %v514 = vsel %vm493, %v378, 0
      %v515 = vsel %vm493, %v385, 0
      %v516 = vsel %vm493, %v392, 0
      %v517 = vsel %vm493, %v399, 0
      %v518 = vsel %vm493, %v406, 0
      %v519 = vsel %vm493, %v413, 0
      %v520 = vsel %vm493, %v420, 0
      %v521 = vsel %vm493, %v427, 0
      %v522 = vsel %vm493, %v434, 0
      %v523 = vsel %vm493, %v441, 0
      %v524 = vsel %vm493, %v448, 0
      %v525 = vsel %vm493, %v455, 0
      %v558 = vunpack.c.l.b16 %v494
      %v559 = vunpack.c.h.b16 %v494
      %v560 = vunpack.c.l.b16 %v510
      %v561 = vunpack.c.l.b16 %v495
      %v562 = vunpack.c.h.b16 %v495
      %v563 = vunpack.c.l.b16 %v511
      %v564 = vunpack.c.l.b16 %v496
      %v565 = vunpack.c.h.b16 %v496
      %v566 = vunpack.c.l.b16 %v512
      %v567 = vunpack.c.l.b16 %v497
      %v568 = vunpack.c.h.b16 %v497
      %v569 = vunpack.c.l.b16 %v513
      %v570 = vunpack.c.l.b16 %v498
      %v571 = vunpack.c.h.b16 %v498
      %v572 = vunpack.c.l.b16 %v514
      %v573 = vunpack.c.l.b16 %v499
      %v574 = vunpack.c.h.b16 %v499
      %v575 = vunpack.c.l.b16 %v515
      %v576 = vunpack.c.l.b16 %v500
      %v577 = vunpack.c.h.b16 %v500
      %v578 = vunpack.c.l.b16 %v516
      %v579 = vunpack.c.l.b16 %v501
      %v580 = vunpack.c.h.b16 %v501
      %v581 = vunpack.c.l.b16 %v517
      %v582 = vunpack.c.l.b16 %v502
      %v583 = vunpack.c.h.b16 %v502
      %v584 = vunpack.c.l.b16 %v518
      %v585 = vunpack.c.l.b16 %v503
      %v586 = vunpack.c.h.b16 %v503
      %v587 = vunpack.c.l.b16 %v519
      %v588 = vunpack.c.l.b16 %v504
      %v589 = vunpack.c.h.b16 %v504
      %v590 = vunpack.c.l.b16 %v520
      %v591 = vunpack.c.l.b16 %v505
      %v592 = vunpack.c.h.b16 %v505
      %v593 = vunpack.c.l.b16 %v521
      %v594 = vunpack.c.l.b16 %v506
      %v595 = vunpack.c.h.b16 %v506
      %v596 = vunpack.c.l.b16 %v522
      %v597 = vunpack.c.l.b16 %v507
      %v598 = vunpack.c.h.b16 %v507
      %v599 = vunpack.c.l.b16 %v523
      %v600 = vunpack.c.l.b16 %v508
      %v601 = vunpack.c.h.b16 %v508
      %v602 = vunpack.c.l.b16 %v524
      %v603 = vunpack.c.l.b16 %v509
      %v604 = vunpack.c.h.b16 %v509
      %v605 = vunpack.c.l.b16 %v525
      %v606 = vpack.c.b16 %v558, %v558
      %v607 = vpack.c.b16 %v559, %v559
      %v608 = vpack.c.b16 %v560, %v560
      %v609 = vpack.c.b16 %v561, %v561
      %v610 = vpack.c.b16 %v562, %v562
      %v611 = vpack.c.b16 %v563, %v563
      %v612 = vpack.c.b16 %v564, %v564
      %v613 = vpack.c.b16 %v565, %v565
      %v614 = vpack.c.b16 %v566, %v566
      %v615 = vpack.c.b16 %v567, %v567
      %v616 = vpack.c.b16 %v568, %v568
      %v617 = vpack.c.b16 %v569, %v569
      %v618 = vpack.c.b16 %v570, %v570
      %v619 = vpack.c.b16 %v571, %v571
      %v620 = vpack.c.b16 %v572, %v572
      %v621 = vpack.c.b16 %v573, %v573
      %v622 = vpack.c.b16 %v574, %v574
      %v623 = vpack.c.b16 %v575, %v575
      %v624 = vpack.c.b16 %v576, %v576
      %v625 = vpack.c.b16 %v577, %v577
      %v626 = vpack.c.b16 %v578, %v578
      %v627 = vpack.c.b16 %v579, %v579
      %v628 = vpack.c.b16 %v580, %v580
      %v629 = vpack.c.b16 %v581, %v581
      %v630 = vpack.c.b16 %v582, %v582
      %v631 = vpack.c.b16 %v583, %v583
      %v632 = vpack.c.b16 %v584, %v584
      %v633 = vpack.c.b16 %v585, %v585
      %v634 = vpack.c.b16 %v586, %v586
      %v635 = vpack.c.b16 %v587, %v587
      %v636 = vpack.c.b16 %v588, %v588
      %v637 = vpack.c.b16 %v589, %v589
      %v638 = vpack.c.b16 %v590, %v590
      %v639 = vpack.c.b16 %v591, %v591
      %v640 = vpack.c.b16 %v592, %v592
      %v641 = vpack.c.b16 %v593, %v593
      %v642 = vpack.c.b16 %v594, %v594
      %v643 = vpack.c.b16 %v595, %v595
      %v644 = vpack.c.b16 %v596, %v596
      %v645 = vpack.c.b16 %v597, %v597
      %v646 = vpack.c.b16 %v598, %v598
      %v647 = vpack.c.b16 %v599, %v599
      %v648 = vpack.c.b16 %v600, %v600
      %v649 = vpack.c.b16 %v601, %v601
      %v650 = vpack.c.b16 %v602, %v602
      %v651 = vpack.c.b16 %v603, %v603
      %v652 = vpack.c.b16 %v604, %v604
      %v653 = vpack.c.b16 %v605, %v605
      %s702 = scalar_lea.vmem [#allocation2], 12
      %703 = vst.msk [vmem:[%s702] sm:$0xf] %vm258, %v606
      %704 = vst.msk [vmem:[%s702 + $0x4] sm:$0xf] %vm258, %v607
      %705 = vst.msk [vmem:[%s702 + $0x8] sm:$0x1] %vm261, %v608
      %706 = vst.msk [vmem:[%s702 + $0xc] sm:$0xf] %vm258, %v609
      %707 = vst.msk [vmem:[%s702 + $0x10] sm:$0xf] %vm258, %v610
      %708 = vst.msk [vmem:[%s702 + $0x14] sm:$0x1] %vm261, %v611
      %709 = vst.msk [vmem:[%s702 + $0x18] sm:$0xf] %vm258, %v612
      %710 = vst.msk [vmem:[%s702 + $0x1c] sm:$0xf] %vm258, %v613
      %711 = vst.msk [vmem:[%s702 + $0x20] sm:$0x1] %vm261, %v614
      %712 = vst.msk [vmem:[%s702 + $0x24] sm:$0xf] %vm258, %v615
      %713 = vst.msk [vmem:[%s702 + $0x28] sm:$0xf] %vm258, %v616
      %714 = vst.msk [vmem:[%s702 + $0x2c] sm:$0x1] %vm261, %v617
      %715 = vst.msk [vmem:[%s702 + $0x30] sm:$0xf] %vm258, %v618
      %716 = vst.msk [vmem:[%s702 + $0x34] sm:$0xf] %vm258, %v619
      %717 = vst.msk [vmem:[%s702 + $0x38] sm:$0x1] %vm261, %v620
      %718 = vst.msk [vmem:[%s702 + $0x3c] sm:$0xf] %vm258, %v621
      %719 = vst.msk [vmem:[%s702 + $0x40] sm:$0xf] %vm258, %v622
      %720 = vst.msk [vmem:[%s702 + $0x44] sm:$0x1] %vm261, %v623
      %721 = vst.msk [vmem:[%s702 + $0x48] sm:$0xf] %vm258, %v624
      %722 = vst.msk [vmem:[%s702 + $0x4c] sm:$0xf] %vm258, %v625
      %723 = vst.msk [vmem:[%s702 + $0x50] sm:$0x1] %vm261, %v626
      %724 = vst.msk [vmem:[%s702 + $0x54] sm:$0xf] %vm258, %v627
      %725 = vst.msk [vmem:[%s702 + $0x58] sm:$0xf] %vm258, %v628
      %726 = vst.msk [vmem:[%s702 + $0x5c] sm:$0x1] %vm261, %v629
      %727 = vst.msk [vmem:[%s702 + $0x60] sm:$0xf] %vm258, %v630
      %728 = vst.msk [vmem:[%s702 + $0x64] sm:$0xf] %vm258, %v631
      %729 = vst.msk [vmem:[%s702 + $0x68] sm:$0x1] %vm261, %v632
      %730 = vst.msk [vmem:[%s702 + $0x6c] sm:$0xf] %vm258, %v633
      %731 = vst.msk [vmem:[%s702 + $0x70] sm:$0xf] %vm258, %v634
      %732 = vst.msk [vmem:[%s702 + $0x74] sm:$0x1] %vm261, %v635
      %733 = vst.msk [vmem:[%s702 + $0x78] sm:$0xf] %vm258, %v636
      %734 = vst.msk [vmem:[%s702 + $0x7c] sm:$0xf] %vm258, %v637
      %735 = vst.msk [vmem:[%s702 + $0x80] sm:$0x1] %vm261, %v638
      %736 = vst.msk [vmem:[%s702 + $0x84] sm:$0xf] %vm258, %v639
      %737 = vst.msk [vmem:[%s702 + $0x88] sm:$0xf] %vm258, %v640
      %738 = vst.msk [vmem:[%s702 + $0x8c] sm:$0x1] %vm261, %v641
      %739 = vst.msk [vmem:[%s702 + $0x90] sm:$0xf] %vm258, %v642
      %740 = vst.msk [vmem:[%s702 + $0x94] sm:$0xf] %vm258, %v643
      %741 = vst.msk [vmem:[%s702 + $0x98] sm:$0x1] %vm261, %v644
      %742 = vst.msk [vmem:[%s702 + $0x9c] sm:$0xf] %vm258, %v645
      %743 = vst.msk [vmem:[%s702 + $0xa0] sm:$0xf] %vm258, %v646
      %744 = vst.msk [vmem:[%s702 + $0xa4] sm:$0x1] %vm261, %v647
      %745 = vst.msk [vmem:[%s702 + $0xa8] sm:$0xf] %vm258, %v648
      %746 = vst.msk [vmem:[%s702 + $0xac] sm:$0xf] %vm258, %v649
      %747 = vst.msk [vmem:[%s702 + $0xb0] sm:$0x1] %vm261, %v650
      %748 = vst.msk [vmem:[%s702 + $0xb4] sm:$0xf] %vm258, %v651
      %749 = vst.msk [vmem:[%s702 + $0xb8] sm:$0xf] %vm258, %v652
      %750 = vst.msk [vmem:[%s702 + $0xbc] sm:$0x1] %vm261, %v653
      %v751 = vld [vmem:[#allocation2] sm:$0xf]
      %v752 = vld [vmem:[#allocation2 + $0x4] sm:$0xf]
      %v753 = vld [vmem:[#allocation2 + $0xc] sm:$0xf]
      %v754 = vld [vmem:[#allocation2 + $0x10] sm:$0xf]
      %v755 = vld [vmem:[#allocation2 + $0x18] sm:$0xf]
      %v756 = vld [vmem:[#allocation2 + $0x1c] sm:$0xf]
      %v757 = vld [vmem:[#allocation2 + $0x24] sm:$0xf]
      %v758 = vld [vmem:[#allocation2 + $0x28] sm:$0xf]
      %v759 = vld [vmem:[#allocation2 + $0x30] sm:$0xf]
      %v760 = vld [vmem:[#allocation2 + $0x34] sm:$0xf]
      %v761 = vld [vmem:[#allocation2 + $0x3c] sm:$0xf]
      %v762 = vld [vmem:[#allocation2 + $0x40] sm:$0xf]
      %v763 = vld [vmem:[#allocation2 + $0x48] sm:$0xf]
      %v764 = vld [vmem:[#allocation2 + $0x4c] sm:$0xf]
      %v765 = vld [vmem:[#allocation2 + $0x54] sm:$0xf]
      %v766 = vld [vmem:[#allocation2 + $0x58] sm:$0xf]
      %v767 = vld [vmem:[#allocation2 + $0x60] sm:$0xf]
      %v768 = vld [vmem:[#allocation2 + $0x64] sm:$0xf]
      %v769 = vld [vmem:[#allocation2 + $0x6c] sm:$0xf]
      %v770 = vld [vmem:[#allocation2 + $0x70] sm:$0xf]
      %v771 = vld [vmem:[#allocation2 + $0x78] sm:$0xf]
      %v772 = vld [vmem:[#allocation2 + $0x7c] sm:$0xf]
      %v773 = vld [vmem:[#allocation2 + $0x84] sm:$0xf]
      %v774 = vld [vmem:[#allocation2 + $0x88] sm:$0xf]
      %v775 = vld [vmem:[#allocation2 + $0x90] sm:$0xf]
      %v776 = vld [vmem:[#allocation2 + $0x94] sm:$0xf]
      %v777 = vld [vmem:[#allocation2 + $0x9c] sm:$0xf]
      %v778 = vld [vmem:[#allocation2 + $0xa0] sm:$0xf]
      %v779 = vld [vmem:[#allocation2 + $0xa8] sm:$0xf]
      %v780 = vld [vmem:[#allocation2 + $0xac] sm:$0xf]
      %v781 = vld [vmem:[#allocation2 + $0xb4] sm:$0xf]
      %v782 = vld [vmem:[#allocation2 + $0xb8] sm:$0xf]
      %v783 = vld [vmem:[#allocation2 + $0x8] sm:$0x1]
      %v784 = vld [vmem:[#allocation2 + $0x14] sm:$0x1]
      %v785 = vld [vmem:[#allocation2 + $0x20] sm:$0x1]
      %v786 = vld [vmem:[#allocation2 + $0x2c] sm:$0x1]
      %v787 = vld [vmem:[#allocation2 + $0x38] sm:$0x1]
      %v788 = vld [vmem:[#allocation2 + $0x44] sm:$0x1]
      %v789 = vld [vmem:[#allocation2 + $0x50] sm:$0x1]
      %v790 = vld [vmem:[#allocation2 + $0x5c] sm:$0x1]
      %v791 = vld [vmem:[#allocation2 + $0x68] sm:$0x1]
      %v792 = vld [vmem:[#allocation2 + $0x74] sm:$0x1]
      %v793 = vld [vmem:[#allocation2 + $0x80] sm:$0x1]
      %v794 = vld [vmem:[#allocation2 + $0x8c] sm:$0x1]
      %v795 = vld [vmem:[#allocation2 + $0x98] sm:$0x1]
      %v796 = vld [vmem:[#allocation2 + $0xa4] sm:$0x1]
      %v797 = vld [vmem:[#allocation2 + $0xb0] sm:$0x1]
      %v798 = vld [vmem:[#allocation2 + $0xbc] sm:$0x1]
      %vm799 = vsmask.f32 3328
      %vm800 = vsmask.f32 7440
      %vm801 = vmor %vm799, %vm800
      %v803 = vshrl.u32 %v751, 16
      %v805 = vrot.slane %v803, 4
      %v806 = vshll.u32 %v751, 16
      %v808 = vrot.slane %v806, 5
      %v809 = vor.u32 %v805, %v808
      %v810 = vrot.slane %v809, 4
      %v812 = vshll.u32 %v752, 16
      %v814 = vrot.slane %v812, 5
      %v815 = vsel %vm801, %v810, %v814
      %v816 = vshrl.u32 %v752, 16
      %v818 = vrot.slane %v816, 4
      %v819 = vor.u32 %v818, %v814
      %v820 = vrot.slane %v819, 4
      %v822 = vshll.u32 %v783, 16
      %v824 = vrot.slane %v822, 5
      %v825 = vsel %vm801, %v820, %v824
      %v827 = vshrl.u32 %v753, 16
      %v829 = vrot.slane %v827, 4
      %v830 = vshll.u32 %v753, 16
      %v832 = vrot.slane %v830, 5
      %v833 = vor.u32 %v829, %v832
      %v834 = vrot.slane %v833, 4
      %v836 = vshll.u32 %v754, 16
      %v838 = vrot.slane %v836, 5
      %v839 = vsel %vm801, %v834, %v838
      %v840 = vshrl.u32 %v754, 16
      %v842 = vrot.slane %v840, 4
      %v843 = vor.u32 %v842, %v838
      %v844 = vrot.slane %v843, 4
      %v846 = vshll.u32 %v784, 16
      %v848 = vrot.slane %v846, 5
      %v849 = vsel %vm801, %v844, %v848
      %v851 = vshrl.u32 %v755, 16
      %v853 = vrot.slane %v851, 4
      %v854 = vshll.u32 %v755, 16
      %v856 = vrot.slane %v854, 5
      %v857 = vor.u32 %v853, %v856
      %v858 = vrot.slane %v857, 4
      %v860 = vshll.u32 %v756, 16
      %v862 = vrot.slane %v860, 5
      %v863 = vsel %vm801, %v858, %v862
      %v864 = vshrl.u32 %v756, 16
      %v866 = vrot.slane %v864, 4
      %v867 = vor.u32 %v866, %v862
      %v868 = vrot.slane %v867, 4
      %v870 = vshll.u32 %v785, 16
      %v872 = vrot.slane %v870, 5
      %v873 = vsel %vm801, %v868, %v872
      %v875 = vshrl.u32 %v757, 16
      %v877 = vrot.slane %v875, 4
      %v878 = vshll.u32 %v757, 16
      %v880 = vrot.slane %v878, 5
      %v881 = vor.u32 %v877, %v880
      %v882 = vrot.slane %v881, 4
      %v884 = vshll.u32 %v758, 16
      %v886 = vrot.slane %v884, 5
      %v887 = vsel %vm801, %v882, %v886
      %v888 = vshrl.u32 %v758, 16
      %v890 = vrot.slane %v888, 4
      %v891 = vor.u32 %v890, %v886
      %v892 = vrot.slane %v891, 4
      %v894 = vshll.u32 %v786, 16
      %v896 = vrot.slane %v894, 5
      %v897 = vsel %vm801, %v892, %v896
      %v899 = vshrl.u32 %v759, 16
      %v901 = vrot.slane %v899, 4
      %v902 = vshll.u32 %v759, 16
      %v904 = vrot.slane %v902, 5
      %v905 = vor.u32 %v901, %v904
      %v906 = vrot.slane %v905, 4
      %v908 = vshll.u32 %v760, 16
      %v910 = vrot.slane %v908, 5
      %v911 = vsel %vm801, %v906, %v910
      %v912 = vshrl.u32 %v760, 16
      %v914 = vrot.slane %v912, 4
      %v915 = vor.u32 %v914, %v910
      %v916 = vrot.slane %v915, 4
      %v918 = vshll.u32 %v787, 16
      %v920 = vrot.slane %v918, 5
      %v921 = vsel %vm801, %v916, %v920
      %v923 = vshrl.u32 %v761, 16
      %v925 = vrot.slane %v923, 4
      %v926 = vshll.u32 %v761, 16
      %v928 = vrot.slane %v926, 5
      %v929 = vor.u32 %v925, %v928
      %v930 = vrot.slane %v929, 4
      %v932 = vshll.u32 %v762, 16
      %v934 = vrot.slane %v932, 5
      %v935 = vsel %vm801, %v930, %v934
      %v936 = vshrl.u32 %v762, 16
      %v938 = vrot.slane %v936, 4
      %v939 = vor.u32 %v938, %v934
      %v940 = vrot.slane %v939, 4
      %v942 = vshll.u32 %v788, 16
      %v944 = vrot.slane %v942, 5
      %v945 = vsel %vm801, %v940, %v944
      %v947 = vshrl.u32 %v763, 16
      %v949 = vrot.slane %v947, 4
      %v950 = vshll.u32 %v763, 16
      %v952 = vrot.slane %v950, 5
      %v953 = vor.u32 %v949, %v952
      %v954 = vrot.slane %v953, 4
      %v956 = vshll.u32 %v764, 16
      %v958 = vrot.slane %v956, 5
      %v959 = vsel %vm801, %v954, %v958
      %v960 = vshrl.u32 %v764, 16
      %v962 = vrot.slane %v960, 4
      %v963 = vor.u32 %v962, %v958
      %v964 = vrot.slane %v963, 4
      %v966 = vshll.u32 %v789, 16
      %v968 = vrot.slane %v966, 5
      %v969 = vsel %vm801, %v964, %v968
      %v971 = vshrl.u32 %v765, 16
      %v973 = vrot.slane %v971, 4
      %v974 = vshll.u32 %v765, 16
      %v976 = vrot.slane %v974, 5
      %v977 = vor.u32 %v973, %v976
      %v978 = vrot.slane %v977, 4
      %v980 = vshll.u32 %v766, 16
      %v982 = vrot.slane %v980, 5
      %v983 = vsel %vm801, %v978, %v982
      %v984 = vshrl.u32 %v766, 16
      %v986 = vrot.slane %v984, 4
      %v987 = vor.u32 %v986, %v982
      %v988 = vrot.slane %v987, 4
      %v990 = vshll.u32 %v790, 16
      %v992 = vrot.slane %v990, 5
      %v993 = vsel %vm801, %v988, %v992
      %v995 = vshrl.u32 %v767, 16
      %v997 = vrot.slane %v995, 4
      %v998 = vshll.u32 %v767, 16
      %v1000 = vrot.slane %v998, 5
      %v1001 = vor.u32 %v997, %v1000
      %v1002 = vrot.slane %v1001, 4
      %v1004 = vshll.u32 %v768, 16
      %v1006 = vrot.slane %v1004, 5
      %v1007 = vsel %vm801, %v1002, %v1006
      %v1008 = vshrl.u32 %v768, 16
      %v1010 = vrot.slane %v1008, 4
      %v1011 = vor.u32 %v1010, %v1006
      %v1012 = vrot.slane %v1011, 4
      %v1014 = vshll.u32 %v791, 16
      %v1016 = vrot.slane %v1014, 5
      %v1017 = vsel %vm801, %v1012, %v1016
      %v1019 = vshrl.u32 %v769, 16
      %v1021 = vrot.slane %v1019, 4
      %v1022 = vshll.u32 %v769, 16
      %v1024 = vrot.slane %v1022, 5
      %v1025 = vor.u32 %v1021, %v1024
      %v1026 = vrot.slane %v1025, 4
      %v1028 = vshll.u32 %v770, 16
      %v1030 = vrot.slane %v1028, 5
      %v1031 = vsel %vm801, %v1026, %v1030
      %v1032 = vshrl.u32 %v770, 16
      %v1034 = vrot.slane %v1032, 4
      %v1035 = vor.u32 %v1034, %v1030
      %v1036 = vrot.slane %v1035, 4
      %v1038 = vshll.u32 %v792, 16
      %v1040 = vrot.slane %v1038, 5
      %v1041 = vsel %vm801, %v1036, %v1040
      %v1043 = vshrl.u32 %v771, 16
      %v1045 = vrot.slane %v1043, 4
      %v1046 = vshll.u32 %v771, 16
      %v1048 = vrot.slane %v1046, 5
      %v1049 = vor.u32 %v1045, %v1048
      %v1050 = vrot.slane %v1049, 4
      %v1052 = vshll.u32 %v772, 16
      %v1054 = vrot.slane %v1052, 5
      %v1055 = vsel %vm801, %v1050, %v1054
      %v1056 = vshrl.u32 %v772, 16
      %v1058 = vrot.slane %v1056, 4
      %v1059 = vor.u32 %v1058, %v1054
      %v1060 = vrot.slane %v1059, 4
      %v1062 = vshll.u32 %v793, 16
      %v1064 = vrot.slane %v1062, 5
      %v1065 = vsel %vm801, %v1060, %v1064
      %v1067 = vshrl.u32 %v773, 16
      %v1069 = vrot.slane %v1067, 4
      %v1070 = vshll.u32 %v773, 16
      %v1072 = vrot.slane %v1070, 5
      %v1073 = vor.u32 %v1069, %v1072
      %v1074 = vrot.slane %v1073, 4
      %v1076 = vshll.u32 %v774, 16
      %v1078 = vrot.slane %v1076, 5
      %v1079 = vsel %vm801, %v1074, %v1078
      %v1080 = vshrl.u32 %v774, 16
      %v1082 = vrot.slane %v1080, 4
      %v1083 = vor.u32 %v1082, %v1078
      %v1084 = vrot.slane %v1083, 4
      %v1086 = vshll.u32 %v794, 16
      %v1088 = vrot.slane %v1086, 5
      %v1089 = vsel %vm801, %v1084, %v1088
      %v1091 = vshrl.u32 %v775, 16
      %v1093 = vrot.slane %v1091, 4
      %v1094 = vshll.u32 %v775, 16
      %v1096 = vrot.slane %v1094, 5
      %v1097 = vor.u32 %v1093, %v1096
      %v1098 = vrot.slane %v1097, 4
      %v1100 = vshll.u32 %v776, 16
      %v1102 = vrot.slane %v1100, 5
      %v1103 = vsel %vm801, %v1098, %v1102
      %v1104 = vshrl.u32 %v776, 16
      %v1106 = vrot.slane %v1104, 4
      %v1107 = vor.u32 %v1106, %v1102
      %v1108 = vrot.slane %v1107, 4
      %v1110 = vshll.u32 %v795, 16
      %v1112 = vrot.slane %v1110, 5
      %v1113 = vsel %vm801, %v1108, %v1112
      %v1115 = vshrl.u32 %v777, 16
      %v1117 = vrot.slane %v1115, 4
      %v1118 = vshll.u32 %v777, 16
      %v1120 = vrot.slane %v1118, 5
      %v1121 = vor.u32 %v1117, %v1120
      %v1122 = vrot.slane %v1121, 4
      %v1124 = vshll.u32 %v778, 16
      %v1126 = vrot.slane %v1124, 5
      %v1127 = vsel %vm801, %v1122, %v1126
      %v1128 = vshrl.u32 %v778, 16
      %v1130 = vrot.slane %v1128, 4
      %v1131 = vor.u32 %v1130, %v1126
      %v1132 = vrot.slane %v1131, 4
      %v1134 = vshll.u32 %v796, 16
      %v1136 = vrot.slane %v1134, 5
      %v1137 = vsel %vm801, %v1132, %v1136
      %v1139 = vshrl.u32 %v779, 16
      %v1141 = vrot.slane %v1139, 4
      %v1142 = vshll.u32 %v779, 16
      %v1144 = vrot.slane %v1142, 5
      %v1145 = vor.u32 %v1141, %v1144
      %v1146 = vrot.slane %v1145, 4
      %v1148 = vshll.u32 %v780, 16
      %v1150 = vrot.slane %v1148, 5
      %v1151 = vsel %vm801, %v1146, %v1150
      %v1152 = vshrl.u32 %v780, 16
      %v1154 = vrot.slane %v1152, 4
      %v1155 = vor.u32 %v1154, %v1150
      %v1156 = vrot.slane %v1155, 4
      %v1158 = vshll.u32 %v797, 16
      %v1160 = vrot.slane %v1158, 5
      %v1161 = vsel %vm801, %v1156, %v1160
      %v1163 = vshrl.u32 %v781, 16
      %v1165 = vrot.slane %v1163, 4
      %v1166 = vshll.u32 %v781, 16
      %v1168 = vrot.slane %v1166, 5
      %v1169 = vor.u32 %v1165, %v1168
      %v1170 = vrot.slane %v1169, 4
      %v1172 = vshll.u32 %v782, 16
      %v1174 = vrot.slane %v1172, 5
      %v1175 = vsel %vm801, %v1170, %v1174
      %v1176 = vshrl.u32 %v782, 16
      %v1178 = vrot.slane %v1176, 4
      %v1179 = vor.u32 %v1178, %v1174
      %v1180 = vrot.slane %v1179, 4
      %v1182 = vshll.u32 %v798, 16
      %v1184 = vrot.slane %v1182, 5
      %v1185 = vsel %vm801, %v1180, %v1184
      %v1186 = vld [vmem:[#allocation2] sm:$0xe]
      %v1187 = vld [vmem:[#allocation2 + $0xc] sm:$0xe]
      %v1188 = vld [vmem:[#allocation2 + $0x18] sm:$0xe]
      %v1189 = vld [vmem:[#allocation2 + $0x24] sm:$0xe]
      %v1190 = vld [vmem:[#allocation2 + $0x30] sm:$0xe]
      %v1191 = vld [vmem:[#allocation2 + $0x3c] sm:$0xe]
      %v1192 = vld [vmem:[#allocation2 + $0x48] sm:$0xe]
      %v1193 = vld [vmem:[#allocation2 + $0x54] sm:$0xe]
      %v1194 = vld [vmem:[#allocation2 + $0x60] sm:$0xe]
      %v1195 = vld [vmem:[#allocation2 + $0x6c] sm:$0xe]
      %v1196 = vld [vmem:[#allocation2 + $0x78] sm:$0xe]
      %v1197 = vld [vmem:[#allocation2 + $0x84] sm:$0xe]
      %v1198 = vld [vmem:[#allocation2 + $0x90] sm:$0xe]
      %v1199 = vld [vmem:[#allocation2 + $0x9c] sm:$0xe]
      %v1200 = vld [vmem:[#allocation2 + $0xa8] sm:$0xe]
      %v1201 = vld [vmem:[#allocation2 + $0xb4] sm:$0xe]
      %vm1250 = vcmask 1042432
      %vm1251 = vcmask 1046532
      %vm1252 = vmor %vm1250, %vm1251
      %v1253 = vrot.slane %v1186, 5
      %v1254 = vrot.slane %v1253, 4
      %v1255 = vrot.slane %v752, 5
      %v1256 = vsel %vm1252, %v1254, %v1255
      %v1257 = vrot.slane %v1255, 4
      %v1258 = vrot.slane %v783, 5
      %v1259 = vsel %vm1252, %v1257, %v1258
      %v1260 = vrot.slane %v1187, 5
      %v1261 = vrot.slane %v1260, 4
      %v1262 = vrot.slane %v754, 5
      %v1263 = vsel %vm1252, %v1261, %v1262
      %v1264 = vrot.slane %v1262, 4
      %v1265 = vrot.slane %v784, 5
      %v1266 = vsel %vm1252, %v1264, %v1265
      %v1267 = vrot.slane %v1188, 5
      %v1268 = vrot.slane %v1267, 4
      %v1269 = vrot.slane %v756, 5
      %v1270 = vsel %vm1252, %v1268, %v1269
      %v1271 = vrot.slane %v1269, 4
      %v1272 = vrot.slane %v785, 5
      %v1273 = vsel %vm1252, %v1271, %v1272
      %v1274 = vrot.slane %v1189, 5
      %v1275 = vrot.slane %v1274, 4
      %v1276 = vrot.slane %v758, 5
      %v1277 = vsel %vm1252, %v1275, %v1276
      %v1278 = vrot.slane %v1276, 4
      %v1279 = vrot.slane %v786, 5
      %v1280 = vsel %vm1252, %v1278, %v1279
      %v1281 = vrot.slane %v1190, 5
      %v1282 = vrot.slane %v1281, 4
      %v1283 = vrot.slane %v760, 5
      %v1284 = vsel %vm1252, %v1282, %v1283
      %v1285 = vrot.slane %v1283, 4
      %v1286 = vrot.slane %v787, 5
      %v1287 = vsel %vm1252, %v1285, %v1286
      %v1288 = vrot.slane %v1191, 5
      %v1289 = vrot.slane %v1288, 4
      %v1290 = vrot.slane %v762, 5
      %v1291 = vsel %vm1252, %v1289, %v1290
      %v1292 = vrot.slane %v1290, 4
      %v1293 = vrot.slane %v788, 5
      %v1294 = vsel %vm1252, %v1292, %v1293
      %v1295 = vrot.slane %v1192, 5
      %v1296 = vrot.slane %v1295, 4
      %v1297 = vrot.slane %v764, 5
      %v1298 = vsel %vm1252, %v1296, %v1297
      %v1299 = vrot.slane %v1297, 4
      %v1300 = vrot.slane %v789, 5
      %v1301 = vsel %vm1252, %v1299, %v1300
      %v1302 = vrot.slane %v1193, 5
      %v1303 = vrot.slane %v1302, 4
      %v1304 = vrot.slane %v766, 5
      %v1305 = vsel %vm1252, %v1303, %v1304
      %v1306 = vrot.slane %v1304, 4
      %v1307 = vrot.slane %v790, 5
      %v1308 = vsel %vm1252, %v1306, %v1307
      %v1309 = vrot.slane %v1194, 5
      %v1310 = vrot.slane %v1309, 4
      %v1311 = vrot.slane %v768, 5
      %v1312 = vsel %vm1252, %v1310, %v1311
      %v1313 = vrot.slane %v1311, 4
      %v1314 = vrot.slane %v791, 5
      %v1315 = vsel %vm1252, %v1313, %v1314
      %v1316 = vrot.slane %v1195, 5
      %v1317 = vrot.slane %v1316, 4
      %v1318 = vrot.slane %v770, 5
      %v1319 = vsel %vm1252, %v1317, %v1318
      %v1320 = vrot.slane %v1318, 4
      %v1321 = vrot.slane %v792, 5
      %v1322 = vsel %vm1252, %v1320, %v1321
      %v1323 = vrot.slane %v1196, 5
      %v1324 = vrot.slane %v1323, 4
      %v1325 = vrot.slane %v772, 5
      %v1326 = vsel %vm1252, %v1324, %v1325
      %v1327 = vrot.slane %v1325, 4
      %v1328 = vrot.slane %v793, 5
      %v1329 = vsel %vm1252, %v1327, %v1328
      %v1330 = vrot.slane %v1197, 5
      %v1331 = vrot.slane %v1330, 4
      %v1332 = vrot.slane %v774, 5
      %v1333 = vsel %vm1252, %v1331, %v1332
      %v1334 = vrot.slane %v1332, 4
      %v1335 = vrot.slane %v794, 5
      %v1336 = vsel %vm1252, %v1334, %v1335
      %v1337 = vrot.slane %v1198, 5
      %v1338 = vrot.slane %v1337, 4
      %v1339 = vrot.slane %v776, 5
      %v1340 = vsel %vm1252, %v1338, %v1339
      %v1341 = vrot.slane %v1339, 4
      %v1342 = vrot.slane %v795, 5
      %v1343 = vsel %vm1252, %v1341, %v1342
      %v1344 = vrot.slane %v1199, 5
      %v1345 = vrot.slane %v1344, 4
      %v1346 = vrot.slane %v778, 5
      %v1347 = vsel %vm1252, %v1345, %v1346
      %v1348 = vrot.slane %v1346, 4
      %v1349 = vrot.slane %v796, 5
      %v1350 = vsel %vm1252, %v1348, %v1349
      %v1351 = vrot.slane %v1200, 5
      %v1352 = vrot.slane %v1351, 4
      %v1353 = vrot.slane %v780, 5
      %v1354 = vsel %vm1252, %v1352, %v1353
      %v1355 = vrot.slane %v1353, 4
      %v1356 = vrot.slane %v797, 5
      %v1357 = vsel %vm1252, %v1355, %v1356
      %v1358 = vrot.slane %v1201, 5
      %v1359 = vrot.slane %v1358, 4
      %v1360 = vrot.slane %v782, 5
      %v1361 = vsel %vm1252, %v1359, %v1360
      %v1362 = vrot.slane %v1360, 4
      %v1363 = vrot.slane %v798, 5
      %v1364 = vsel %vm1252, %v1362, %v1363
      %v1381 = vunpack.c.l.b16 %v751
      %v1382 = vunpack.c.l.b16 %v752
      %v1383 = vunpack.c.l.b16 %v753
      %v1384 = vunpack.c.l.b16 %v754
      %v1385 = vunpack.c.l.b16 %v755
      %v1386 = vunpack.c.l.b16 %v756
      %v1387 = vunpack.c.l.b16 %v757
      %v1388 = vunpack.c.l.b16 %v758
      %v1389 = vunpack.c.l.b16 %v759
      %v1390 = vunpack.c.l.b16 %v760
      %v1391 = vunpack.c.l.b16 %v761
      %v1392 = vunpack.c.l.b16 %v762
      %v1393 = vunpack.c.l.b16 %v763
      %v1394 = vunpack.c.l.b16 %v764
      %v1395 = vunpack.c.l.b16 %v765
      %v1396 = vunpack.c.l.b16 %v766
      %v1397 = vunpack.c.l.b16 %v767
      %v1398 = vunpack.c.l.b16 %v768
      %v1399 = vunpack.c.l.b16 %v769
      %v1400 = vunpack.c.l.b16 %v770
      %v1401 = vunpack.c.l.b16 %v771
      %v1402 = vunpack.c.l.b16 %v772
      %v1403 = vunpack.c.l.b16 %v773
      %v1404 = vunpack.c.l.b16 %v774
      %v1405 = vunpack.c.l.b16 %v775
      %v1406 = vunpack.c.l.b16 %v776
      %v1407 = vunpack.c.l.b16 %v777
      %v1408 = vunpack.c.l.b16 %v778
      %v1409 = vunpack.c.l.b16 %v779
      %v1410 = vunpack.c.l.b16 %v780
      %v1411 = vunpack.c.l.b16 %v781
      %v1412 = vunpack.c.l.b16 %v782
      %v1413 = vpack.c.b16 %v1382, %v1381
      %v1414 = vpack.c.b16 %v1384, %v1383
      %v1415 = vpack.c.b16 %v1386, %v1385
      %v1416 = vpack.c.b16 %v1388, %v1387
      %v1417 = vpack.c.b16 %v1390, %v1389
      %v1418 = vpack.c.b16 %v1392, %v1391
      %v1419 = vpack.c.b16 %v1394, %v1393
      %v1420 = vpack.c.b16 %v1396, %v1395
      %v1421 = vpack.c.b16 %v1398, %v1397
      %v1422 = vpack.c.b16 %v1400, %v1399
      %v1423 = vpack.c.b16 %v1402, %v1401
      %v1424 = vpack.c.b16 %v1404, %v1403
      %v1425 = vpack.c.b16 %v1406, %v1405
      %v1426 = vpack.c.b16 %v1408, %v1407
      %v1427 = vpack.c.b16 %v1410, %v1409
      %v1428 = vpack.c.b16 %v1412, %v1411
      %v1429 = vunpack.c.l.b16 %v815
      %v1430 = vunpack.c.l.b16 %v825
      %v1431 = vunpack.c.l.b16 %v839
      %v1432 = vunpack.c.l.b16 %v849
      %v1433 = vunpack.c.l.b16 %v863
      %v1434 = vunpack.c.l.b16 %v873
      %v1435 = vunpack.c.l.b16 %v887
      %v1436 = vunpack.c.l.b16 %v897
      %v1437 = vunpack.c.l.b16 %v911
      %v1438 = vunpack.c.l.b16 %v921
      %v1439 = vunpack.c.l.b16 %v935
      %v1440 = vunpack.c.l.b16 %v945
      %v1441 = vunpack.c.l.b16 %v959
      %v1442 = vunpack.c.l.b16 %v969
      %v1443 = vunpack.c.l.b16 %v983
      %v1444 = vunpack.c.l.b16 %v993
      %v1445 = vunpack.c.l.b16 %v1007
      %v1446 = vunpack.c.l.b16 %v1017
      %v1447 = vunpack.c.l.b16 %v1031
      %v1448 = vunpack.c.l.b16 %v1041
      %v1449 = vunpack.c.l.b16 %v1055
      %v1450 = vunpack.c.l.b16 %v1065
      %v1451 = vunpack.c.l.b16 %v1079
      %v1452 = vunpack.c.l.b16 %v1089
      %v1453 = vunpack.c.l.b16 %v1103
      %v1454 = vunpack.c.l.b16 %v1113
      %v1455 = vunpack.c.l.b16 %v1127
      %v1456 = vunpack.c.l.b16 %v1137
      %v1457 = vunpack.c.l.b16 %v1151
      %v1458 = vunpack.c.l.b16 %v1161
      %v1459 = vunpack.c.l.b16 %v1175
      %v1460 = vunpack.c.l.b16 %v1185
      %v1461 = vpack.c.b16 %v1430, %v1429
      %v1462 = vpack.c.b16 %v1432, %v1431
      %v1463 = vpack.c.b16 %v1434, %v1433
      %v1464 = vpack.c.b16 %v1436, %v1435
      %v1465 = vpack.c.b16 %v1438, %v1437
      %v1466 = vpack.c.b16 %v1440, %v1439
      %v1467 = vpack.c.b16 %v1442, %v1441
      %v1468 = vpack.c.b16 %v1444, %v1443
      %v1469 = vpack.c.b16 %v1446, %v1445
      %v1470 = vpack.c.b16 %v1448, %v1447
      %v1471 = vpack.c.b16 %v1450, %v1449
      %v1472 = vpack.c.b16 %v1452, %v1451
      %v1473 = vpack.c.b16 %v1454, %v1453
      %v1474 = vpack.c.b16 %v1456, %v1455
      %v1475 = vpack.c.b16 %v1458, %v1457
      %v1476 = vpack.c.b16 %v1460, %v1459
      %1477 = vrot.lane.b32.xlu0 %v1461, 4
      %v1478 = vpop.permute.xlu0 %1477
      %1479 = vrot.lane.b32.xlu0 %v1462, 4
      %v1480 = vpop.permute.xlu0 %1479
      %1481 = vrot.lane.b32.xlu0 %v1463, 4
      %v1482 = vpop.permute.xlu0 %1481
      %1483 = vrot.lane.b32.xlu0 %v1464, 4
      %v1484 = vpop.permute.xlu0 %1483
      %1485 = vrot.lane.b32.xlu0 %v1465, 4
      %v1486 = vpop.permute.xlu0 %1485
      %1487 = vrot.lane.b32.xlu0 %v1466, 4
      %v1488 = vpop.permute.xlu0 %1487
      %1489 = vrot.lane.b32.xlu0 %v1467, 4
      %v1490 = vpop.permute.xlu0 %1489
      %1491 = vrot.lane.b32.xlu0 %v1468, 4
      %v1492 = vpop.permute.xlu0 %1491
      %1493 = vrot.lane.b32.xlu0 %v1469, 4
      %v1494 = vpop.permute.xlu0 %1493
      %1495 = vrot.lane.b32.xlu0 %v1470, 4
      %v1496 = vpop.permute.xlu0 %1495
      %1497 = vrot.lane.b32.xlu0 %v1471, 4
      %v1498 = vpop.permute.xlu0 %1497
      %1499 = vrot.lane.b32.xlu0 %v1472, 4
      %v1500 = vpop.permute.xlu0 %1499
      %1501 = vrot.lane.b32.xlu0 %v1473, 4
      %v1502 = vpop.permute.xlu0 %1501
      %1503 = vrot.lane.b32.xlu0 %v1474, 4
      %v1504 = vpop.permute.xlu0 %1503
      %1505 = vrot.lane.b32.xlu0 %v1475, 4
      %v1506 = vpop.permute.xlu0 %1505
      %1507 = vrot.lane.b32.xlu0 %v1476, 4
      %v1508 = vpop.permute.xlu0 %1507
      %v1509 = vunpack.c.l.b16 %v1256
      %v1510 = vunpack.c.l.b16 %v1259
      %v1511 = vunpack.c.l.b16 %v1263
      %v1512 = vunpack.c.l.b16 %v1266
      %v1513 = vunpack.c.l.b16 %v1270
      %v1514 = vunpack.c.l.b16 %v1273
      %v1515 = vunpack.c.l.b16 %v1277
      %v1516 = vunpack.c.l.b16 %v1280
      %v1517 = vunpack.c.l.b16 %v1284
      %v1518 = vunpack.c.l.b16 %v1287
      %v1519 = vunpack.c.l.b16 %v1291
      %v1520 = vunpack.c.l.b16 %v1294
      %v1521 = vunpack.c.l.b16 %v1298
      %v1522 = vunpack.c.l.b16 %v1301
      %v1523 = vunpack.c.l.b16 %v1305
      %v1524 = vunpack.c.l.b16 %v1308
      %v1525 = vunpack.c.l.b16 %v1312
      %v1526 = vunpack.c.l.b16 %v1315
      %v1527 = vunpack.c.l.b16 %v1319
      %v1528 = vunpack.c.l.b16 %v1322
      %v1529 = vunpack.c.l.b16 %v1326
      %v1530 = vunpack.c.l.b16 %v1329
      %v1531 = vunpack.c.l.b16 %v1333
      %v1532 = vunpack.c.l.b16 %v1336
      %v1533 = vunpack.c.l.b16 %v1340
      %v1534 = vunpack.c.l.b16 %v1343
      %v1535 = vunpack.c.l.b16 %v1347
      %v1536 = vunpack.c.l.b16 %v1350
      %v1537 = vunpack.c.l.b16 %v1354
      %v1538 = vunpack.c.l.b16 %v1357
      %v1539 = vunpack.c.l.b16 %v1361
      %v1540 = vunpack.c.l.b16 %v1364
      %v1541 = vpack.c.b16 %v1510, %v1509
      %v1542 = vpack.c.b16 %v1512, %v1511
      %v1543 = vpack.c.b16 %v1514, %v1513
      %v1544 = vpack.c.b16 %v1516, %v1515
      %v1545 = vpack.c.b16 %v1518, %v1517
      %v1546 = vpack.c.b16 %v1520, %v1519
      %v1547 = vpack.c.b16 %v1522, %v1521
      %v1548 = vpack.c.b16 %v1524, %v1523
      %v1549 = vpack.c.b16 %v1526, %v1525
      %v1550 = vpack.c.b16 %v1528, %v1527
      %v1551 = vpack.c.b16 %v1530, %v1529
      %v1552 = vpack.c.b16 %v1532, %v1531
      %v1553 = vpack.c.b16 %v1534, %v1533
      %v1554 = vpack.c.b16 %v1536, %v1535
      %v1555 = vpack.c.b16 %v1538, %v1537
      %v1556 = vpack.c.b16 %v1540, %v1539
      %1557 = vrot.lane.b32.xlu0 %v1541, 8
      %v1558 = vpop.permute.xlu0 %1557
      %1559 = vrot.lane.b32.xlu0 %v1542, 8
      %v1560 = vpop.permute.xlu0 %1559
      %1561 = vrot.lane.b32.xlu0 %v1543, 8
      %v1562 = vpop.permute.xlu0 %1561
      %1563 = vrot.lane.b32.xlu0 %v1544, 8
      %v1564 = vpop.permute.xlu0 %1563
      %1565 = vrot.lane.b32.xlu0 %v1545, 8
      %v1566 = vpop.permute.xlu0 %1565
      %1567 = vrot.lane.b32.xlu0 %v1546, 8
      %v1568 = vpop.permute.xlu0 %1567
      %1569 = vrot.lane.b32.xlu0 %v1547, 8
      %v1570 = vpop.permute.xlu0 %1569
      %1571 = vrot.lane.b32.xlu0 %v1548, 8
      %v1572 = vpop.permute.xlu0 %1571
      %1573 = vrot.lane.b32.xlu0 %v1549, 8
      %v1574 = vpop.permute.xlu0 %1573
      %1575 = vrot.lane.b32.xlu0 %v1550, 8
      %v1576 = vpop.permute.xlu0 %1575
      %1577 = vrot.lane.b32.xlu0 %v1551, 8
      %v1578 = vpop.permute.xlu0 %1577
      %1579 = vrot.lane.b32.xlu0 %v1552, 8
      %v1580 = vpop.permute.xlu0 %1579
      %1581 = vrot.lane.b32.xlu0 %v1553, 8
      %v1582 = vpop.permute.xlu0 %1581
      %1583 = vrot.lane.b32.xlu0 %v1554, 8
      %v1584 = vpop.permute.xlu0 %1583
      %1585 = vrot.lane.b32.xlu0 %v1555, 8
      %v1586 = vpop.permute.xlu0 %1585
      %1587 = vrot.lane.b32.xlu0 %v1556, 8
      %v1588 = vpop.permute.xlu0 %1587
      %vm1589 = vcmask 31744
      %v1592 = vsel %vm1589, %v1413, %v1478
      %v1595 = vsel %vm1589, %v1414, %v1480
      %v1598 = vsel %vm1589, %v1415, %v1482
      %v1601 = vsel %vm1589, %v1416, %v1484
      %v1604 = vsel %vm1589, %v1417, %v1486
      %v1607 = vsel %vm1589, %v1418, %v1488
      %v1610 = vsel %vm1589, %v1419, %v1490
      %v1613 = vsel %vm1589, %v1420, %v1492
      %v1616 = vsel %vm1589, %v1421, %v1494
      %v1619 = vsel %vm1589, %v1422, %v1496
      %v1622 = vsel %vm1589, %v1423, %v1498
      %v1625 = vsel %vm1589, %v1424, %v1500
      %v1628 = vsel %vm1589, %v1425, %v1502
      %v1631 = vsel %vm1589, %v1426, %v1504
      %v1634 = vsel %vm1589, %v1427, %v1506
      %v1637 = vsel %vm1589, %v1428, %v1508
      %vm1638 = vcmask 64512
      %v1640 = vsel %vm1638, %v1592, %v1558
      %v1642 = vsel %vm1638, %v1595, %v1560
      %v1644 = vsel %vm1638, %v1598, %v1562
      %v1646 = vsel %vm1638, %v1601, %v1564
      %v1648 = vsel %vm1638, %v1604, %v1566
      %v1650 = vsel %vm1638, %v1607, %v1568
      %v1652 = vsel %vm1638, %v1610, %v1570
      %v1654 = vsel %vm1638, %v1613, %v1572
      %v1656 = vsel %vm1638, %v1616, %v1574
      %v1658 = vsel %vm1638, %v1619, %v1576
      %v1660 = vsel %vm1638, %v1622, %v1578
      %v1662 = vsel %vm1638, %v1625, %v1580
      %v1664 = vsel %vm1638, %v1628, %v1582
      %v1666 = vsel %vm1638, %v1631, %v1584
      %v1668 = vsel %vm1638, %v1634, %v1586
      %v1670 = vsel %vm1638, %v1637, %v1588
      %v1671 = vld [vmem:[%s1] sm:$0xf]
      %v1672 = vld [vmem:[%s1 + $0x4] sm:$0x3]
      %v1673 = vld [vmem:[%s702] sm:$0xf]
      %v1674 = vld [vmem:[%s702 + $0x4] sm:$0xf]
      %v1675 = vld [vmem:[%s702 + $0xc] sm:$0xf]
      %v1676 = vld [vmem:[%s702 + $0x10] sm:$0xf]
      %v1677 = vld [vmem:[%s702 + $0x18] sm:$0xf]
      %v1678 = vld [vmem:[%s702 + $0x1c] sm:$0xf]
      %v1679 = vld [vmem:[%s702 + $0x24] sm:$0xf]
      %v1680 = vld [vmem:[%s702 + $0x28] sm:$0xf]
      %v1681 = vld [vmem:[%s702 + $0x30] sm:$0xf]
      %v1682 = vld [vmem:[%s702 + $0x34] sm:$0xf]
      %v1683 = vld [vmem:[%s702 + $0x3c] sm:$0xf]
      %v1684 = vld [vmem:[%s702 + $0x40] sm:$0xf]
      %v1685 = vld [vmem:[%s702 + $0x48] sm:$0xf]
      %v1686 = vld [vmem:[%s702 + $0x4c] sm:$0xf]
      %v1687 = vld [vmem:[%s702 + $0x54] sm:$0xf]
      %v1688 = vld [vmem:[%s702 + $0x58] sm:$0xf]
      %v1689 = vld [vmem:[%s702 + $0x60] sm:$0xf]
      %v1690 = vld [vmem:[%s702 + $0x64] sm:$0xf]
      %v1691 = vld [vmem:[%s702 + $0x6c] sm:$0xf]
      %v1692 = vld [vmem:[%s702 + $0x70] sm:$0xf]
      %v1693 = vld [vmem:[%s702 + $0x78] sm:$0xf]
      %v1694 = vld [vmem:[%s702 + $0x7c] sm:$0xf]
      %v1695 = vld [vmem:[%s702 + $0x84] sm:$0xf]
      %v1696 = vld [vmem:[%s702 + $0x88] sm:$0xf]
      %v1697 = vld [vmem:[%s702 + $0x90] sm:$0xf]
      %v1698 = vld [vmem:[%s702 + $0x94] sm:$0xf]
      %v1699 = vld [vmem:[%s702 + $0x9c] sm:$0xf]
      %v1700 = vld [vmem:[%s702 + $0xa0] sm:$0xf]
      %v1701 = vld [vmem:[%s702 + $0xa8] sm:$0xf]
      %v1702 = vld [vmem:[%s702 + $0xac] sm:$0xf]
      %v1703 = vld [vmem:[%s702 + $0xb4] sm:$0xf]
      %v1704 = vld [vmem:[%s702 + $0xb8] sm:$0xf]
      %v1705 = vld [vmem:[%s702 + $0x8] sm:$0x1]
      %v1706 = vld [vmem:[%s702 + $0x14] sm:$0x1]
      %v1707 = vld [vmem:[%s702 + $0x20] sm:$0x1]
      %v1708 = vld [vmem:[%s702 + $0x2c] sm:$0x1]
      %v1709 = vld [vmem:[%s702 + $0x38] sm:$0x1]
      %v1710 = vld [vmem:[%s702 + $0x44] sm:$0x1]
      %v1711 = vld [vmem:[%s702 + $0x50] sm:$0x1]
      %v1712 = vld [vmem:[%s702 + $0x5c] sm:$0x1]
      %v1713 = vld [vmem:[%s702 + $0x68] sm:$0x1]
      %v1714 = vld [vmem:[%s702 + $0x74] sm:$0x1]
      %v1715 = vld [vmem:[%s702 + $0x80] sm:$0x1]
      %v1716 = vld [vmem:[%s702 + $0x8c] sm:$0x1]
      %v1717 = vld [vmem:[%s702 + $0x98] sm:$0x1]
      %v1718 = vld [vmem:[%s702 + $0xa4] sm:$0x1]
      %v1719 = vld [vmem:[%s702 + $0xb0] sm:$0x1]
      %v1720 = vld [vmem:[%s702 + $0xbc] sm:$0x1]
      %v1722 = vshrl.u32 %v1673, 16
      %v1724 = vrot.slane %v1722, 4
      %v1725 = vshll.u32 %v1673, 16
      %v1727 = vrot.slane %v1725, 5
      %v1728 = vor.u32 %v1724, %v1727
      %v1729 = vrot.slane %v1728, 4
      %v1731 = vshll.u32 %v1674, 16
      %v1733 = vrot.slane %v1731, 5
      %v1734 = vsel %vm801, %v1729, %v1733
      %v1735 = vshrl.u32 %v1674, 16
      %v1737 = vrot.slane %v1735, 4
      %v1738 = vor.u32 %v1737, %v1733
      %v1739 = vrot.slane %v1738, 4
      %v1741 = vshll.u32 %v1705, 16
      %v1743 = vrot.slane %v1741, 5
      %v1744 = vsel %vm801, %v1739, %v1743
      %v1746 = vshrl.u32 %v1675, 16
      %v1748 = vrot.slane %v1746, 4
      %v1749 = vshll.u32 %v1675, 16
      %v1751 = vrot.slane %v1749, 5
      %v1752 = vor.u32 %v1748, %v1751
      %v1753 = vrot.slane %v1752, 4
      %v1755 = vshll.u32 %v1676, 16
      %v1757 = vrot.slane %v1755, 5
      %v1758 = vsel %vm801, %v1753, %v1757
      %v1759 = vshrl.u32 %v1676, 16
      %v1761 = vrot.slane %v1759, 4
      %v1762 = vor.u32 %v1761, %v1757
      %v1763 = vrot.slane %v1762, 4
      %v1765 = vshll.u32 %v1706, 16
      %v1767 = vrot.slane %v1765, 5
      %v1768 = vsel %vm801, %v1763, %v1767
      %v1770 = vshrl.u32 %v1677, 16
      %v1772 = vrot.slane %v1770, 4
      %v1773 = vshll.u32 %v1677, 16
      %v1775 = vrot.slane %v1773, 5
      %v1776 = vor.u32 %v1772, %v1775
      %v1777 = vrot.slane %v1776, 4
      %v1779 = vshll.u32 %v1678, 16
      %v1781 = vrot.slane %v1779, 5
      %v1782 = vsel %vm801, %v1777, %v1781
      %v1783 = vshrl.u32 %v1678, 16
      %v1785 = vrot.slane %v1783, 4
      %v1786 = vor.u32 %v1785, %v1781
      %v1787 = vrot.slane %v1786, 4
      %v1789 = vshll.u32 %v1707, 16
      %v1791 = vrot.slane %v1789, 5
      %v1792 = vsel %vm801, %v1787, %v1791
      %v1794 = vshrl.u32 %v1679, 16
      %v1796 = vrot.slane %v1794, 4
      %v1797 = vshll.u32 %v1679, 16
      %v1799 = vrot.slane %v1797, 5
      %v1800 = vor.u32 %v1796, %v1799
      %v1801 = vrot.slane %v1800, 4
      %v1803 = vshll.u32 %v1680, 16
      %v1805 = vrot.slane %v1803, 5
      %v1806 = vsel %vm801, %v1801, %v1805
      %v1807 = vshrl.u32 %v1680, 16
      %v1809 = vrot.slane %v1807, 4
      %v1810 = vor.u32 %v1809, %v1805
      %v1811 = vrot.slane %v1810, 4
      %v1813 = vshll.u32 %v1708, 16
      %v1815 = vrot.slane %v1813, 5
      %v1816 = vsel %vm801, %v1811, %v1815
      %v1818 = vshrl.u32 %v1681, 16
      %v1820 = vrot.slane %v1818, 4
      %v1821 = vshll.u32 %v1681, 16
      %v1823 = vrot.slane %v1821, 5
      %v1824 = vor.u32 %v1820, %v1823
      %v1825 = vrot.slane %v1824, 4
      %v1827 = vshll.u32 %v1682, 16
      %v1829 = vrot.slane %v1827, 5
      %v1830 = vsel %vm801, %v1825, %v1829
      %v1831 = vshrl.u32 %v1682, 16
      %v1833 = vrot.slane %v1831, 4
      %v1834 = vor.u32 %v1833, %v1829
      %v1835 = vrot.slane %v1834, 4
      %v1837 = vshll.u32 %v1709, 16
      %v1839 = vrot.slane %v1837, 5
      %v1840 = vsel %vm801, %v1835, %v1839
      %v1842 = vshrl.u32 %v1683, 16
      %v1844 = vrot.slane %v1842, 4
      %v1845 = vshll.u32 %v1683, 16
      %v1847 = vrot.slane %v1845, 5
      %v1848 = vor.u32 %v1844, %v1847
      %v1849 = vrot.slane %v1848, 4
      %v1851 = vshll.u32 %v1684, 16
      %v1853 = vrot.slane %v1851, 5
      %v1854 = vsel %vm801, %v1849, %v1853
      %v1855 = vshrl.u32 %v1684, 16
      %v1857 = vrot.slane %v1855, 4
      %v1858 = vor.u32 %v1857, %v1853
      %v1859 = vrot.slane %v1858, 4
      %v1861 = vshll.u32 %v1710, 16
      %v1863 = vrot.slane %v1861, 5
      %v1864 = vsel %vm801, %v1859, %v1863
      %v1866 = vshrl.u32 %v1685, 16
      %v1868 = vrot.slane %v1866, 4
      %v1869 = vshll.u32 %v1685, 16
      %v1871 = vrot.slane %v1869, 5
      %v1872 = vor.u32 %v1868, %v1871
      %v1873 = vrot.slane %v1872, 4
      %v1875 = vshll.u32 %v1686, 16
      %v1877 = vrot.slane %v1875, 5
      %v1878 = vsel %vm801, %v1873, %v1877
      %v1879 = vshrl.u32 %v1686, 16
      %v1881 = vrot.slane %v1879, 4
      %v1882 = vor.u32 %v1881, %v1877
      %v1883 = vrot.slane %v1882, 4
      %v1885 = vshll.u32 %v1711, 16
      %v1887 = vrot.slane %v1885, 5
      %v1888 = vsel %vm801, %v1883, %v1887
      %v1890 = vshrl.u32 %v1687, 16
      %v1892 = vrot.slane %v1890, 4
      %v1893 = vshll.u32 %v1687, 16
      %v1895 = vrot.slane %v1893, 5
      %v1896 = vor.u32 %v1892, %v1895
      %v1897 = vrot.slane %v1896, 4
      %v1899 = vshll.u32 %v1688, 16
      %v1901 = vrot.slane %v1899, 5
      %v1902 = vsel %vm801, %v1897, %v1901
      %v1903 = vshrl.u32 %v1688, 16
      %v1905 = vrot.slane %v1903, 4
      %v1906 = vor.u32 %v1905, %v1901
      %v1907 = vrot.slane %v1906, 4
      %v1909 = vshll.u32 %v1712, 16
      %v1911 = vrot.slane %v1909, 5
      %v1912 = vsel %vm801, %v1907, %v1911
      %v1914 = vshrl.u32 %v1689, 16
      %v1916 = vrot.slane %v1914, 4
      %v1917 = vshll.u32 %v1689, 16
      %v1919 = vrot.slane %v1917, 5
      %v1920 = vor.u32 %v1916, %v1919
      %v1921 = vrot.slane %v1920, 4
      %v1923 = vshll.u32 %v1690, 16
      %v1925 = vrot.slane %v1923, 5
      %v1926 = vsel %vm801, %v1921, %v1925
      %v1927 = vshrl.u32 %v1690, 16
      %v1929 = vrot.slane %v1927, 4
      %v1930 = vor.u32 %v1929, %v1925
      %v1931 = vrot.slane %v1930, 4
      %v1933 = vshll.u32 %v1713, 16
      %v1935 = vrot.slane %v1933, 5
      %v1936 = vsel %vm801, %v1931, %v1935
      %v1938 = vshrl.u32 %v1691, 16
      %v1940 = vrot.slane %v1938, 4
      %v1941 = vshll.u32 %v1691, 16
      %v1943 = vrot.slane %v1941, 5
      %v1944 = vor.u32 %v1940, %v1943
      %v1945 = vrot.slane %v1944, 4
      %v1947 = vshll.u32 %v1692, 16
      %v1949 = vrot.slane %v1947, 5
      %v1950 = vsel %vm801, %v1945, %v1949
      %v1951 = vshrl.u32 %v1692, 16
      %v1953 = vrot.slane %v1951, 4
      %v1954 = vor.u32 %v1953, %v1949
      %v1955 = vrot.slane %v1954, 4
      %v1957 = vshll.u32 %v1714, 16
      %v1959 = vrot.slane %v1957, 5
      %v1960 = vsel %vm801, %v1955, %v1959
      %v1962 = vshrl.u32 %v1693, 16
      %v1964 = vrot.slane %v1962, 4
      %v1965 = vshll.u32 %v1693, 16
      %v1967 = vrot.slane %v1965, 5
      %v1968 = vor.u32 %v1964, %v1967
      %v1969 = vrot.slane %v1968, 4
      %v1971 = vshll.u32 %v1694, 16
      %v1973 = vrot.slane %v1971, 5
      %v1974 = vsel %vm801, %v1969, %v1973
      %v1975 = vshrl.u32 %v1694, 16
      %v1977 = vrot.slane %v1975, 4
      %v1978 = vor.u32 %v1977, %v1973
      %v1979 = vrot.slane %v1978, 4
      %v1981 = vshll.u32 %v1715, 16
      %v1983 = vrot.slane %v1981, 5
      %v1984 = vsel %vm801, %v1979, %v1983
      %v1986 = vshrl.u32 %v1695, 16
      %v1988 = vrot.slane %v1986, 4
      %v1989 = vshll.u32 %v1695, 16
      %v1991 = vrot.slane %v1989, 5
      %v1992 = vor.u32 %v1988, %v1991
      %v1993 = vrot.slane %v1992, 4
      %v1995 = vshll.u32 %v1696, 16
      %v1997 = vrot.slane %v1995, 5
      %v1998 = vsel %vm801, %v1993, %v1997
      %v1999 = vshrl.u32 %v1696, 16
      %v2001 = vrot.slane %v1999, 4
      %v2002 = vor.u32 %v2001, %v1997
      %v2003 = vrot.slane %v2002, 4
      %v2005 = vshll.u32 %v1716, 16
      %v2007 = vrot.slane %v2005, 5
      %v2008 = vsel %vm801, %v2003, %v2007
      %v2010 = vshrl.u32 %v1697, 16
      %v2012 = vrot.slane %v2010, 4
      %v2013 = vshll.u32 %v1697, 16
      %v2015 = vrot.slane %v2013, 5
      %v2016 = vor.u32 %v2012, %v2015
      %v2017 = vrot.slane %v2016, 4
      %v2019 = vshll.u32 %v1698, 16
      %v2021 = vrot.slane %v2019, 5
      %v2022 = vsel %vm801, %v2017, %v2021
      %v2023 = vshrl.u32 %v1698, 16
      %v2025 = vrot.slane %v2023, 4
      %v2026 = vor.u32 %v2025, %v2021
      %v2027 = vrot.slane %v2026, 4
      %v2029 = vshll.u32 %v1717, 16
      %v2031 = vrot.slane %v2029, 5
      %v2032 = vsel %vm801, %v2027, %v2031
      %v2034 = vshrl.u32 %v1699, 16
      %v2036 = vrot.slane %v2034, 4
      %v2037 = vshll.u32 %v1699, 16
      %v2039 = vrot.slane %v2037, 5
      %v2040 = vor.u32 %v2036, %v2039
      %v2041 = vrot.slane %v2040, 4
      %v2043 = vshll.u32 %v1700, 16
      %v2045 = vrot.slane %v2043, 5
      %v2046 = vsel %vm801, %v2041, %v2045
      %v2047 = vshrl.u32 %v1700, 16
      %v2049 = vrot.slane %v2047, 4
      %v2050 = vor.u32 %v2049, %v2045
      %v2051 = vrot.slane %v2050, 4
      %v2053 = vshll.u32 %v1718, 16
      %v2055 = vrot.slane %v2053, 5
      %v2056 = vsel %vm801, %v2051, %v2055
      %v2058 = vshrl.u32 %v1701, 16
      %v2060 = vrot.slane %v2058, 4
      %v2061 = vshll.u32 %v1701, 16
      %v2063 = vrot.slane %v2061, 5
      %v2064 = vor.u32 %v2060, %v2063
      %v2065 = vrot.slane %v2064, 4
      %v2067 = vshll.u32 %v1702, 16
      %v2069 = vrot.slane %v2067, 5
      %v2070 = vsel %vm801, %v2065, %v2069
      %v2071 = vshrl.u32 %v1702, 16
      %v2073 = vrot.slane %v2071, 4
      %v2074 = vor.u32 %v2073, %v2069
      %v2075 = vrot.slane %v2074, 4
      %v2077 = vshll.u32 %v1719, 16
      %v2079 = vrot.slane %v2077, 5
      %v2080 = vsel %vm801, %v2075, %v2079
      %v2082 = vshrl.u32 %v1703, 16
      %v2084 = vrot.slane %v2082, 4
      %v2085 = vshll.u32 %v1703, 16
      %v2087 = vrot.slane %v2085, 5
      %v2088 = vor.u32 %v2084, %v2087
      %v2089 = vrot.slane %v2088, 4
      %v2091 = vshll.u32 %v1704, 16
      %v2093 = vrot.slane %v2091, 5
      %v2094 = vsel %vm801, %v2089, %v2093
      %v2095 = vshrl.u32 %v1704, 16
      %v2097 = vrot.slane %v2095, 4
      %v2098 = vor.u32 %v2097, %v2093
      %v2099 = vrot.slane %v2098, 4
      %v2101 = vshll.u32 %v1720, 16
      %v2103 = vrot.slane %v2101, 5
      %v2104 = vsel %vm801, %v2099, %v2103
      %v2105 = vld [vmem:[%s702] sm:$0xe]
      %v2106 = vld [vmem:[%s702 + $0xc] sm:$0xe]
      %v2107 = vld [vmem:[%s702 + $0x18] sm:$0xe]
      %v2108 = vld [vmem:[%s702 + $0x24] sm:$0xe]
      %v2109 = vld [vmem:[%s702 + $0x30] sm:$0xe]
      %v2110 = vld [vmem:[%s702 + $0x3c] sm:$0xe]
      %v2111 = vld [vmem:[%s702 + $0x48] sm:$0xe]
      %v2112 = vld [vmem:[%s702 + $0x54] sm:$0xe]
      %v2113 = vld [vmem:[%s702 + $0x60] sm:$0xe]
      %v2114 = vld [vmem:[%s702 + $0x6c] sm:$0xe]
      %v2115 = vld [vmem:[%s702 + $0x78] sm:$0xe]
      %v2116 = vld [vmem:[%s702 + $0x84] sm:$0xe]
      %v2117 = vld [vmem:[%s702 + $0x90] sm:$0xe]
      %v2118 = vld [vmem:[%s702 + $0x9c] sm:$0xe]
      %v2119 = vld [vmem:[%s702 + $0xa8] sm:$0xe]
      %v2120 = vld [vmem:[%s702 + $0xb4] sm:$0xe]
      %v2169 = vrot.slane %v2105, 5
      %v2170 = vrot.slane %v2169, 4
      %v2171 = vrot.slane %v1674, 5
      %v2172 = vsel %vm1252, %v2170, %v2171
      %v2173 = vrot.slane %v2171, 4
      %v2174 = vrot.slane %v1705, 5
      %v2175 = vsel %vm1252, %v2173, %v2174
      %v2176 = vrot.slane %v2106, 5
      %v2177 = vrot.slane %v2176, 4
      %v2178 = vrot.slane %v1676, 5
      %v2179 = vsel %vm1252, %v2177, %v2178
      %v2180 = vrot.slane %v2178, 4
      %v2181 = vrot.slane %v1706, 5
      %v2182 = vsel %vm1252, %v2180, %v2181
      %v2183 = vrot.slane %v2107, 5
      %v2184 = vrot.slane %v2183, 4
      %v2185 = vrot.slane %v1678, 5
      %v2186 = vsel %vm1252, %v2184, %v2185
      %v2187 = vrot.slane %v2185, 4
      %v2188 = vrot.slane %v1707, 5
      %v2189 = vsel %vm1252, %v2187, %v2188
      %v2190 = vrot.slane %v2108, 5
      %v2191 = vrot.slane %v2190, 4
      %v2192 = vrot.slane %v1680, 5
      %v2193 = vsel %vm1252, %v2191, %v2192
      %v2194 = vrot.slane %v2192, 4
      %v2195 = vrot.slane %v1708, 5
      %v2196 = vsel %vm1252, %v2194, %v2195
      %v2197 = vrot.slane %v2109, 5
      %v2198 = vrot.slane %v2197, 4
      %v2199 = vrot.slane %v1682, 5
      %v2200 = vsel %vm1252, %v2198, %v2199
      %v2201 = vrot.slane %v2199, 4
      %v2202 = vrot.slane %v1709, 5
      %v2203 = vsel %vm1252, %v2201, %v2202
      %v2204 = vrot.slane %v2110, 5
      %v2205 = vrot.slane %v2204, 4
      %v2206 = vrot.slane %v1684, 5
      %v2207 = vsel %vm1252, %v2205, %v2206
      %v2208 = vrot.slane %v2206, 4
      %v2209 = vrot.slane %v1710, 5
      %v2210 = vsel %vm1252, %v2208, %v2209
      %v2211 = vrot.slane %v2111, 5
      %v2212 = vrot.slane %v2211, 4
      %v2213 = vrot.slane %v1686, 5
      %v2214 = vsel %vm1252, %v2212, %v2213
      %v2215 = vrot.slane %v2213, 4
      %v2216 = vrot.slane %v1711, 5
      %v2217 = vsel %vm1252, %v2215, %v2216
      %v2218 = vrot.slane %v2112, 5
      %v2219 = vrot.slane %v2218, 4
      %v2220 = vrot.slane %v1688, 5
      %v2221 = vsel %vm1252, %v2219, %v2220
      %v2222 = vrot.slane %v2220, 4
      %v2223 = vrot.slane %v1712, 5
      %v2224 = vsel %vm1252, %v2222, %v2223
      %v2225 = vrot.slane %v2113, 5
      %v2226 = vrot.slane %v2225, 4
      %v2227 = vrot.slane %v1690, 5
      %v2228 = vsel %vm1252, %v2226, %v2227
      %v2229 = vrot.slane %v2227, 4
      %v2230 = vrot.slane %v1713, 5
      %v2231 = vsel %vm1252, %v2229, %v2230
      %v2232 = vrot.slane %v2114, 5
      %v2233 = vrot.slane %v2232, 4
      %v2234 = vrot.slane %v1692, 5
      %v2235 = vsel %vm1252, %v2233, %v2234
      %v2236 = vrot.slane %v2234, 4
      %v2237 = vrot.slane %v1714, 5
      %v2238 = vsel %vm1252, %v2236, %v2237
      %v2239 = vrot.slane %v2115, 5
      %v2240 = vrot.slane %v2239, 4
      %v2241 = vrot.slane %v1694, 5
      %v2242 = vsel %vm1252, %v2240, %v2241
      %v2243 = vrot.slane %v2241, 4
      %v2244 = vrot.slane %v1715, 5
      %v2245 = vsel %vm1252, %v2243, %v2244
      %v2246 = vrot.slane %v2116, 5
      %v2247 = vrot.slane %v2246, 4
      %v2248 = vrot.slane %v1696, 5
      %v2249 = vsel %vm1252, %v2247, %v2248
      %v2250 = vrot.slane %v2248, 4
      %v2251 = vrot.slane %v1716, 5
      %v2252 = vsel %vm1252, %v2250, %v2251
      %v2253 = vrot.slane %v2117, 5
      %v2254 = vrot.slane %v2253, 4
      %v2255 = vrot.slane %v1698, 5
      %v2256 = vsel %vm1252, %v2254, %v2255
      %v2257 = vrot.slane %v2255, 4
      %v2258 = vrot.slane %v1717, 5
      %v2259 = vsel %vm1252, %v2257, %v2258
      %v2260 = vrot.slane %v2118, 5
      %v2261 = vrot.slane %v2260, 4
      %v2262 = vrot.slane %v1700, 5
      %v2263 = vsel %vm1252, %v2261, %v2262
      %v2264 = vrot.slane %v2262, 4
      %v2265 = vrot.slane %v1718, 5
      %v2266 = vsel %vm1252, %v2264, %v2265
      %v2267 = vrot.slane %v2119, 5
      %v2268 = vrot.slane %v2267, 4
      %v2269 = vrot.slane %v1702, 5
      %v2270 = vsel %vm1252, %v2268, %v2269
      %v2271 = vrot.slane %v2269, 4
      %v2272 = vrot.slane %v1719, 5
      %v2273 = vsel %vm1252, %v2271, %v2272
      %v2274 = vrot.slane %v2120, 5
      %v2275 = vrot.slane %v2274, 4
      %v2276 = vrot.slane %v1704, 5
      %v2277 = vsel %vm1252, %v2275, %v2276
      %v2278 = vrot.slane %v2276, 4
      %v2279 = vrot.slane %v1720, 5
      %v2280 = vsel %vm1252, %v2278, %v2279
      %v2297 = vunpack.c.l.b16 %v1673
      %v2298 = vunpack.c.l.b16 %v1674
      %v2299 = vunpack.c.l.b16 %v1675
      %v2300 = vunpack.c.l.b16 %v1676
      %v2301 = vunpack.c.l.b16 %v1677
      %v2302 = vunpack.c.l.b16 %v1678
      %v2303 = vunpack.c.l.b16 %v1679
      %v2304 = vunpack.c.l.b16 %v1680
      %v2305 = vunpack.c.l.b16 %v1681
      %v2306 = vunpack.c.l.b16 %v1682
      %v2307 = vunpack.c.l.b16 %v1683
      %v2308 = vunpack.c.l.b16 %v1684
      %v2309 = vunpack.c.l.b16 %v1685
      %v2310 = vunpack.c.l.b16 %v1686
      %v2311 = vunpack.c.l.b16 %v1687
      %v2312 = vunpack.c.l.b16 %v1688
      %v2313 = vunpack.c.l.b16 %v1689
      %v2314 = vunpack.c.l.b16 %v1690
      %v2315 = vunpack.c.l.b16 %v1691
      %v2316 = vunpack.c.l.b16 %v1692
      %v2317 = vunpack.c.l.b16 %v1693
      %v2318 = vunpack.c.l.b16 %v1694
      %v2319 = vunpack.c.l.b16 %v1695
      %v2320 = vunpack.c.l.b16 %v1696
      %v2321 = vunpack.c.l.b16 %v1697
      %v2322 = vunpack.c.l.b16 %v1698
      %v2323 = vunpack.c.l.b16 %v1699
      %v2324 = vunpack.c.l.b16 %v1700
      %v2325 = vunpack.c.l.b16 %v1701
      %v2326 = vunpack.c.l.b16 %v1702
      %v2327 = vunpack.c.l.b16 %v1703
      %v2328 = vunpack.c.l.b16 %v1704
      %v2329 = vpack.c.b16 %v2298, %v2297
      %v2330 = vpack.c.b16 %v2300, %v2299
      %v2331 = vpack.c.b16 %v2302, %v2301
      %v2332 = vpack.c.b16 %v2304, %v2303
      %v2333 = vpack.c.b16 %v2306, %v2305
      %v2334 = vpack.c.b16 %v2308, %v2307
      %v2335 = vpack.c.b16 %v2310, %v2309
      %v2336 = vpack.c.b16 %v2312, %v2311
      %v2337 = vpack.c.b16 %v2314, %v2313
      %v2338 = vpack.c.b16 %v2316, %v2315
      %v2339 = vpack.c.b16 %v2318, %v2317
      %v2340 = vpack.c.b16 %v2320, %v2319
      %v2341 = vpack.c.b16 %v2322, %v2321
      %v2342 = vpack.c.b16 %v2324, %v2323
      %v2343 = vpack.c.b16 %v2326, %v2325
      %v2344 = vpack.c.b16 %v2328, %v2327
      %v2345 = vunpack.c.l.b16 %v1734
      %v2346 = vunpack.c.l.b16 %v1744
      %v2347 = vunpack.c.l.b16 %v1758
      %v2348 = vunpack.c.l.b16 %v1768
      %v2349 = vunpack.c.l.b16 %v1782
      %v2350 = vunpack.c.l.b16 %v1792
      %v2351 = vunpack.c.l.b16 %v1806
      %v2352 = vunpack.c.l.b16 %v1816
      %v2353 = vunpack.c.l.b16 %v1830
      %v2354 = vunpack.c.l.b16 %v1840
      %v2355 = vunpack.c.l.b16 %v1854
      %v2356 = vunpack.c.l.b16 %v1864
      %v2357 = vunpack.c.l.b16 %v1878
      %v2358 = vunpack.c.l.b16 %v1888
      %v2359 = vunpack.c.l.b16 %v1902
      %v2360 = vunpack.c.l.b16 %v1912
      %v2361 = vunpack.c.l.b16 %v1926
      %v2362 = vunpack.c.l.b16 %v1936
      %v2363 = vunpack.c.l.b16 %v1950
      %v2364 = vunpack.c.l.b16 %v1960
      %v2365 = vunpack.c.l.b16 %v1974
      %v2366 = vunpack.c.l.b16 %v1984
      %v2367 = vunpack.c.l.b16 %v1998
      %v2368 = vunpack.c.l.b16 %v2008
      %v2369 = vunpack.c.l.b16 %v2022
      %v2370 = vunpack.c.l.b16 %v2032
      %v2371 = vunpack.c.l.b16 %v2046
      %v2372 = vunpack.c.l.b16 %v2056
      %v2373 = vunpack.c.l.b16 %v2070
      %v2374 = vunpack.c.l.b16 %v2080
      %v2375 = vunpack.c.l.b16 %v2094
      %v2376 = vunpack.c.l.b16 %v2104
      %v2377 = vpack.c.b16 %v2346, %v2345
      %v2378 = vpack.c.b16 %v2348, %v2347
      %v2379 = vpack.c.b16 %v2350, %v2349
      %v2380 = vpack.c.b16 %v2352, %v2351
      %v2381 = vpack.c.b16 %v2354, %v2353
      %v2382 = vpack.c.b16 %v2356, %v2355
      %v2383 = vpack.c.b16 %v2358, %v2357
      %v2384 = vpack.c.b16 %v2360, %v2359
      %v2385 = vpack.c.b16 %v2362, %v2361
      %v2386 = vpack.c.b16 %v2364, %v2363
      %v2387 = vpack.c.b16 %v2366, %v2365
      %v2388 = vpack.c.b16 %v2368, %v2367
      %v2389 = vpack.c.b16 %v2370, %v2369
      %v2390 = vpack.c.b16 %v2372, %v2371
      %v2391 = vpack.c.b16 %v2374, %v2373
      %v2392 = vpack.c.b16 %v2376, %v2375
      %2393 = vrot.lane.b32.xlu0 %v2377, 4
      %v2394 = vpop.permute.xlu0 %2393
      %2395 = vrot.lane.b32.xlu0 %v2378, 4
      %v2396 = vpop.permute.xlu0 %2395
      %2397 = vrot.lane.b32.xlu0 %v2379, 4
      %v2398 = vpop.permute.xlu0 %2397
      %2399 = vrot.lane.b32.xlu0 %v2380, 4
      %v2400 = vpop.permute.xlu0 %2399
      %2401 = vrot.lane.b32.xlu0 %v2381, 4
      %v2402 = vpop.permute.xlu0 %2401
      %2403 = vrot.lane.b32.xlu0 %v2382, 4
      %v2404 = vpop.permute.xlu0 %2403
      %2405 = vrot.lane.b32.xlu0 %v2383, 4
      %v2406 = vpop.permute.xlu0 %2405
      %2407 = vrot.lane.b32.xlu0 %v2384, 4
      %v2408 = vpop.permute.xlu0 %2407
      %2409 = vrot.lane.b32.xlu0 %v2385, 4
      %v2410 = vpop.permute.xlu0 %2409
      %2411 = vrot.lane.b32.xlu0 %v2386, 4
      %v2412 = vpop.permute.xlu0 %2411
      %2413 = vrot.lane.b32.xlu0 %v2387, 4
      %v2414 = vpop.permute.xlu0 %2413
      %2415 = vrot.lane.b32.xlu0 %v2388, 4
      %v2416 = vpop.permute.xlu0 %2415
      %2417 = vrot.lane.b32.xlu0 %v2389, 4
      %v2418 = vpop.permute.xlu0 %2417
      %2419 = vrot.lane.b32.xlu0 %v2390, 4
      %v2420 = vpop.permute.xlu0 %2419
      %2421 = vrot.lane.b32.xlu0 %v2391, 4
      %v2422 = vpop.permute.xlu0 %2421
      %2423 = vrot.lane.b32.xlu0 %v2392, 4
      %v2424 = vpop.permute.xlu0 %2423
      %v2425 = vunpack.c.l.b16 %v2172
      %v2426 = vunpack.c.l.b16 %v2175
      %v2427 = vunpack.c.l.b16 %v2179
      %v2428 = vunpack.c.l.b16 %v2182
      %v2429 = vunpack.c.l.b16 %v2186
      %v2430 = vunpack.c.l.b16 %v2189
      %v2431 = vunpack.c.l.b16 %v2193
      %v2432 = vunpack.c.l.b16 %v2196
      %v2433 = vunpack.c.l.b16 %v2200
      %v2434 = vunpack.c.l.b16 %v2203
      %v2435 = vunpack.c.l.b16 %v2207
      %v2436 = vunpack.c.l.b16 %v2210
      %v2437 = vunpack.c.l.b16 %v2214
      %v2438 = vunpack.c.l.b16 %v2217
      %v2439 = vunpack.c.l.b16 %v2221
      %v2440 = vunpack.c.l.b16 %v2224
      %v2441 = vunpack.c.l.b16 %v2228
      %v2442 = vunpack.c.l.b16 %v2231
      %v2443 = vunpack.c.l.b16 %v2235
      %v2444 = vunpack.c.l.b16 %v2238
      %v2445 = vunpack.c.l.b16 %v2242
      %v2446 = vunpack.c.l.b16 %v2245
      %v2447 = vunpack.c.l.b16 %v2249
      %v2448 = vunpack.c.l.b16 %v2252
      %v2449 = vunpack.c.l.b16 %v2256
      %v2450 = vunpack.c.l.b16 %v2259
      %v2451 = vunpack.c.l.b16 %v2263
      %v2452 = vunpack.c.l.b16 %v2266
      %v2453 = vunpack.c.l.b16 %v2270
      %v2454 = vunpack.c.l.b16 %v2273
      %v2455 = vunpack.c.l.b16 %v2277
      %v2456 = vunpack.c.l.b16 %v2280
      %v2457 = vpack.c.b16 %v2426, %v2425
      %v2458 = vpack.c.b16 %v2428, %v2427
      %v2459 = vpack.c.b16 %v2430, %v2429
      %v2460 = vpack.c.b16 %v2432, %v2431
      %v2461 = vpack.c.b16 %v2434, %v2433
      %v2462 = vpack.c.b16 %v2436, %v2435
      %v2463 = vpack.c.b16 %v2438, %v2437
      %v2464 = vpack.c.b16 %v2440, %v2439
      %v2465 = vpack.c.b16 %v2442, %v2441
      %v2466 = vpack.c.b16 %v2444, %v2443
      %v2467 = vpack.c.b16 %v2446, %v2445
      %v2468 = vpack.c.b16 %v2448, %v2447
      %v2469 = vpack.c.b16 %v2450, %v2449
      %v2470 = vpack.c.b16 %v2452, %v2451
      %v2471 = vpack.c.b16 %v2454, %v2453
      %v2472 = vpack.c.b16 %v2456, %v2455
      %2473 = vrot.lane.b32.xlu0 %v2457, 8
      %v2474 = vpop.permute.xlu0 %2473
      %2475 = vrot.lane.b32.xlu0 %v2458, 8
      %v2476 = vpop.permute.xlu0 %2475
      %2477 = vrot.lane.b32.xlu0 %v2459, 8
      %v2478 = vpop.permute.xlu0 %2477
      %2479 = vrot.lane.b32.xlu0 %v2460, 8
      %v2480 = vpop.permute.xlu0 %2479
      %2481 = vrot.lane.b32.xlu0 %v2461, 8
      %v2482 = vpop.permute.xlu0 %2481
      %2483 = vrot.lane.b32.xlu0 %v2462, 8
      %v2484 = vpop.permute.xlu0 %2483
      %2485 = vrot.lane.b32.xlu0 %v2463, 8
      %v2486 = vpop.permute.xlu0 %2485
      %2487 = vrot.lane.b32.xlu0 %v2464, 8
      %v2488 = vpop.permute.xlu0 %2487
      %2489 = vrot.lane.b32.xlu0 %v2465, 8
      %v2490 = vpop.permute.xlu0 %2489
      %2491 = vrot.lane.b32.xlu0 %v2466, 8
      %v2492 = vpop.permute.xlu0 %2491
      %2493 = vrot.lane.b32.xlu0 %v2467, 8
      %v2494 = vpop.permute.xlu0 %2493
      %2495 = vrot.lane.b32.xlu0 %v2468, 8
      %v2496 = vpop.permute.xlu0 %2495
      %2497 = vrot.lane.b32.xlu0 %v2469, 8
      %v2498 = vpop.permute.xlu0 %2497
      %2499 = vrot.lane.b32.xlu0 %v2470, 8
      %v2500 = vpop.permute.xlu0 %2499
      %2501 = vrot.lane.b32.xlu0 %v2471, 8
      %v2502 = vpop.permute.xlu0 %2501
      %2503 = vrot.lane.b32.xlu0 %v2472, 8
      %v2504 = vpop.permute.xlu0 %2503
      %v2507 = vsel %vm1589, %v2329, %v2394
      %v2510 = vsel %vm1589, %v2330, %v2396
      %v2513 = vsel %vm1589, %v2331, %v2398
      %v2516 = vsel %vm1589, %v2332, %v2400
      %v2519 = vsel %vm1589, %v2333, %v2402
      %v2522 = vsel %vm1589, %v2334, %v2404
      %v2525 = vsel %vm1589, %v2335, %v2406
      %v2528 = vsel %vm1589, %v2336, %v2408
      %v2531 = vsel %vm1589, %v2337, %v2410
      %v2534 = vsel %vm1589, %v2338, %v2412
      %v2537 = vsel %vm1589, %v2339, %v2414
      %v2540 = vsel %vm1589, %v2340, %v2416
      %v2543 = vsel %vm1589, %v2341, %v2418
      %v2546 = vsel %vm1589, %v2342, %v2420
      %v2549 = vsel %vm1589, %v2343, %v2422
      %v2552 = vsel %vm1589, %v2344, %v2424
      %v2554 = vsel %vm1638, %v2507, %v2474
      %v2556 = vsel %vm1638, %v2510, %v2476
      %v2558 = vsel %vm1638, %v2513, %v2478
      %v2560 = vsel %vm1638, %v2516, %v2480
      %v2562 = vsel %vm1638, %v2519, %v2482
      %v2564 = vsel %vm1638, %v2522, %v2484
      %v2566 = vsel %vm1638, %v2525, %v2486
      %v2568 = vsel %vm1638, %v2528, %v2488
      %v2570 = vsel %vm1638, %v2531, %v2490
      %v2572 = vsel %vm1638, %v2534, %v2492
      %v2574 = vsel %vm1638, %v2537, %v2494
      %v2576 = vsel %vm1638, %v2540, %v2496
      %v2578 = vsel %vm1638, %v2543, %v2498
      %v2580 = vsel %vm1638, %v2546, %v2500
      %v2582 = vsel %vm1638, %v2549, %v2502
      %v2584 = vsel %vm1638, %v2552, %v2504
      %s2585 = scalar_lea.vmem %s1, 8
      %v2586 = vld [vmem:[%s2585] sm:$0xf]
      %v2587 = vld [vmem:[%s2585 + $0x4] sm:$0x3]
      %v2590 = vunpack.c.l.b16 %v2586
      %v2591 = vunpack.c.l.b16 %v2587
      %v2592 = vpack.c.b16 %v2591, %v2590
      %vm2593 = vcmask 97280
      %v2594 = vsel %vm2593, %v2554, 0
      %v2596 = vsel %vm2593, %v2556, 0
      %v2598 = vsel %vm2593, %v2558, 0
      %v2600 = vsel %vm2593, %v2560, 0
      %v2602 = vsel %vm2593, %v2562, 0
      %v2604 = vsel %vm2593, %v2564, 0
      %v2606 = vsel %vm2593, %v2566, 0
      %v2608 = vsel %vm2593, %v2568, 0
      %v2610 = vsel %vm2593, %v2570, 0
      %v2612 = vsel %vm2593, %v2572, 0
      %v2614 = vsel %vm2593, %v2574, 0
      %v2616 = vsel %vm2593, %v2576, 0
      %v2618 = vsel %vm2593, %v2578, 0
      %v2620 = vsel %vm2593, %v2580, 0
      %v2622 = vsel %vm2593, %v2582, 0
      %v2624 = vsel %vm2593, %v2584, 0
      %vm2626 = vcmask 1045504
      %v2628 = vsel %vm2626, %v2592, 0
      %2630 = vmatprep.subr.bf16.mxu0 0
      %2631 = vmatpush1.bf16.msra.mxu0 0
      %2632 = vmatprep.subr.bf16.mxu0 0
      %2633 = vmatpush1.bf16.msra.mxu0 0
      %2634 = vmatprep.subr.bf16.mxu0 0
      %2635 = vmatpush1.bf16.msra.mxu0 0
      %2636 = vmatprep.subr.bf16.mxu0 0
      %2637 = vmatpush1.bf16.msra.mxu0 0
      %2638 = vmatprep.subr.bf16.mxu0 0
      %2639 = vmatpush1.bf16.msra.mxu0 0
      %2640 = vmatprep.subr.bf16.mxu0 0
      %2641 = vmatpush1.bf16.msra.mxu0 0
      %2642 = vmatprep.subr.bf16.mxu0 0
      %2643 = vmatpush1.bf16.msra.mxu0 0
      %2644 = vmatprep.subr.bf16.mxu0 0
      %2645 = vmatpush1.bf16.msra.mxu0 %v2628
      %2646 = vmatprep.subr.bf16.mxu0 0
      %2647 = vmatpush2.bf16.msra.mxu0 0
      %2648 = vmatprep.subr.bf16.mxu0 0
      %2649 = vmatpush2.bf16.msra.mxu0 0
      %2650 = vmatprep.subr.bf16.mxu0 0
      %2651 = vmatpush2.bf16.msra.mxu0 0
      %2652 = vmatprep.subr.bf16.mxu0 0
      %2653 = vmatpush2.bf16.msra.mxu0 0
      %2654 = vmatprep.subr.bf16.mxu0 0
      %2655 = vmatpush2.bf16.msra.mxu0 0
      %2656 = vmatprep.subr.bf16.mxu0 0
      %2657 = vmatpush2.bf16.msra.mxu0 0
      %2658 = vmatprep.subr.bf16.mxu0 0
      %2659 = vmatpush2.bf16.msra.mxu0 0
      %2660 = vmatprep.subr.bf16.mxu0 0
      %2661 = vmatpush2.bf16.msra.mxu0 0
      %2662 = vmatprep.mubr.bf16.mxu0 0
      %2663 = vmatmul.mubr.bf16.gmra.mxu0 %v2594
      %v2664 = vpop.f32.mrf.mxu0
      %v2665 = vadd.f32 0.0, %v2664
      %v2666 = vpop.f32.mrf.mxu0
      %v2667 = vpop.f32.mrf.mxu0
      %v2668 = vadd.f32 0.0, %v2667
      %v2669 = vpop.f32.mrf.mxu0
      %2670 = vmatprep.mubr.bf16.mxu0 0
      %2671 = vmatmul.mubr.bf16.gmra.mxu0 %v2596
      %v2672 = vpop.f32.mrf.mxu0
      %v2673 = vadd.f32 0.0, %v2672
      %v2674 = vpop.f32.mrf.mxu0
      %v2675 = vpop.f32.mrf.mxu0
      %v2676 = vadd.f32 0.0, %v2675
      %v2677 = vpop.f32.mrf.mxu0
      %2678 = vmatprep.mubr.bf16.mxu0 0
      %2679 = vmatmul.mubr.bf16.gmra.mxu0 %v2598
      %v2680 = vpop.f32.mrf.mxu0
      %v2681 = vadd.f32 0.0, %v2680
      %v2682 = vpop.f32.mrf.mxu0
      %v2683 = vpop.f32.mrf.mxu0
      %v2684 = vadd.f32 0.0, %v2683
      %v2685 = vpop.f32.mrf.mxu0
      %2686 = vmatprep.mubr.bf16.mxu0 0
      %2687 = vmatmul.mubr.bf16.gmra.mxu0 %v2600
      %v2688 = vpop.f32.mrf.mxu0
      %v2689 = vadd.f32 0.0, %v2688
      %v2690 = vpop.f32.mrf.mxu0
      %v2691 = vpop.f32.mrf.mxu0
      %v2692 = vadd.f32 0.0, %v2691
      %v2693 = vpop.f32.mrf.mxu0
      %2694 = vmatprep.mubr.bf16.mxu0 0
      %2695 = vmatmul.mubr.bf16.gmra.mxu0 %v2602
      %v2696 = vpop.f32.mrf.mxu0
      %v2697 = vadd.f32 0.0, %v2696
      %v2698 = vpop.f32.mrf.mxu0
      %v2699 = vpop.f32.mrf.mxu0
      %v2700 = vadd.f32 0.0, %v2699
      %v2701 = vpop.f32.mrf.mxu0
      %2702 = vmatprep.mubr.bf16.mxu0 0
      %2703 = vmatmul.mubr.bf16.gmra.mxu0 %v2604
      %v2704 = vpop.f32.mrf.mxu0
      %v2705 = vadd.f32 0.0, %v2704
      %v2706 = vpop.f32.mrf.mxu0
      %v2707 = vpop.f32.mrf.mxu0
      %v2708 = vadd.f32 0.0, %v2707
      %v2709 = vpop.f32.mrf.mxu0
      %2710 = vmatprep.mubr.bf16.mxu0 0
      %2711 = vmatmul.mubr.bf16.gmra.mxu0 %v2606
      %v2712 = vpop.f32.mrf.mxu0
      %v2713 = vadd.f32 0.0, %v2712
      %v2714 = vpop.f32.mrf.mxu0
      %v2715 = vpop.f32.mrf.mxu0
      %v2716 = vadd.f32 0.0, %v2715
      %v2717 = vpop.f32.mrf.mxu0
      %2718 = vmatprep.mubr.bf16.mxu0 0
      %2719 = vmatmul.mubr.bf16.gmra.mxu0 %v2608
      %v2720 = vpop.f32.mrf.mxu0
      %v2721 = vadd.f32 0.0, %v2720
      %v2722 = vpop.f32.mrf.mxu0
      %v2723 = vpop.f32.mrf.mxu0
      %v2724 = vadd.f32 0.0, %v2723
      %v2725 = vpop.f32.mrf.mxu0
      %2726 = vmatprep.mubr.bf16.mxu0 0
      %2727 = vmatmul.mubr.bf16.gmra.mxu0 %v2610
      %v2728 = vpop.f32.mrf.mxu0
      %v2729 = vadd.f32 0.0, %v2728
      %v2730 = vpop.f32.mrf.mxu0
      %v2731 = vpop.f32.mrf.mxu0
      %v2732 = vadd.f32 0.0, %v2731
      %v2733 = vpop.f32.mrf.mxu0
      %2734 = vmatprep.mubr.bf16.mxu0 0
      %2735 = vmatmul.mubr.bf16.gmra.mxu0 %v2612
      %v2736 = vpop.f32.mrf.mxu0
      %v2737 = vadd.f32 0.0, %v2736
      %v2738 = vpop.f32.mrf.mxu0
      %v2739 = vpop.f32.mrf.mxu0
      %v2740 = vadd.f32 0.0, %v2739
      %v2741 = vpop.f32.mrf.mxu0
      %2742 = vmatprep.mubr.bf16.mxu0 0
      %2743 = vmatmul.mubr.bf16.gmra.mxu0 %v2614
      %v2744 = vpop.f32.mrf.mxu0
      %v2745 = vadd.f32 0.0, %v2744
      %v2746 = vpop.f32.mrf.mxu0
      %v2747 = vpop.f32.mrf.mxu0
      %v2748 = vadd.f32 0.0, %v2747
      %v2749 = vpop.f32.mrf.mxu0
      %2750 = vmatprep.mubr.bf16.mxu0 0
      %2751 = vmatmul.mubr.bf16.gmra.mxu0 %v2616
      %v2752 = vpop.f32.mrf.mxu0
      %v2753 = vadd.f32 0.0, %v2752
      %v2754 = vpop.f32.mrf.mxu0
      %v2755 = vpop.f32.mrf.mxu0
      %v2756 = vadd.f32 0.0, %v2755
      %v2757 = vpop.f32.mrf.mxu0
      %2758 = vmatprep.mubr.bf16.mxu0 0
      %2759 = vmatmul.mubr.bf16.gmra.mxu0 %v2618
      %v2760 = vpop.f32.mrf.mxu0
      %v2761 = vadd.f32 0.0, %v2760
      %v2762 = vpop.f32.mrf.mxu0
      %v2763 = vpop.f32.mrf.mxu0
      %v2764 = vadd.f32 0.0, %v2763
      %v2765 = vpop.f32.mrf.mxu0
      %2766 = vmatprep.mubr.bf16.mxu0 0
      %2767 = vmatmul.mubr.bf16.gmra.mxu0 %v2620
      %v2768 = vpop.f32.mrf.mxu0
      %v2769 = vadd.f32 0.0, %v2768
      %v2770 = vpop.f32.mrf.mxu0
      %v2771 = vpop.f32.mrf.mxu0
      %v2772 = vadd.f32 0.0, %v2771
      %v2773 = vpop.f32.mrf.mxu0
      %2774 = vmatprep.mubr.bf16.mxu0 0
      %2775 = vmatmul.mubr.bf16.gmra.mxu0 %v2622
      %v2776 = vpop.f32.mrf.mxu0
      %v2777 = vadd.f32 0.0, %v2776
      %v2778 = vpop.f32.mrf.mxu0
      %v2779 = vpop.f32.mrf.mxu0
      %v2780 = vadd.f32 0.0, %v2779
      %v2781 = vpop.f32.mrf.mxu0
      %2782 = vmatprep.mubr.bf16.mxu0 0
      %2783 = vmatmul.mubr.bf16.gmra.mxu0 %v2624
      %v2784 = vpop.f32.mrf.mxu0
      %v2785 = vadd.f32 0.0, %v2784
      %v2786 = vpop.f32.mrf.mxu0
      %v2787 = vpop.f32.mrf.mxu0
      %v2788 = vadd.f32 0.0, %v2787
      %v2789 = vpop.f32.mrf.mxu0
      %2790 = vdwg.mxu0
      %v2793 = vunpack.c.l.b16 %v1671
      %v2794 = vunpack.c.l.b16 %v1672
      %v2795 = vpack.c.b16 %v2794, %v2793
      %v2796 = vsel %vm2593, %v1640, 0
      %v2798 = vsel %vm2593, %v1642, 0
      %v2800 = vsel %vm2593, %v1644, 0
      %v2802 = vsel %vm2593, %v1646, 0
      %v2804 = vsel %vm2593, %v1648, 0
      %v2806 = vsel %vm2593, %v1650, 0
      %v2808 = vsel %vm2593, %v1652, 0
      %v2810 = vsel %vm2593, %v1654, 0
      %v2812 = vsel %vm2593, %v1656, 0
      %v2814 = vsel %vm2593, %v1658, 0
      %v2816 = vsel %vm2593, %v1660, 0
      %v2818 = vsel %vm2593, %v1662, 0
      %v2820 = vsel %vm2593, %v1664, 0
      %v2822 = vsel %vm2593, %v1666, 0
      %v2824 = vsel %vm2593, %v1668, 0
      %v2826 = vsel %vm2593, %v1670, 0
      %v2829 = vsel %vm2626, %v2795, 0
      %2831 = vmatprep.subr.bf16.mxu0 0
      %2832 = vmatpush1.bf16.msra.mxu0 0
      %2833 = vmatprep.subr.bf16.mxu0 0
      %2834 = vmatpush1.bf16.msra.mxu0 0
      %2835 = vmatprep.subr.bf16.mxu0 0
      %2836 = vmatpush1.bf16.msra.mxu0 0
      %2837 = vmatprep.subr.bf16.mxu0 0
      %2838 = vmatpush1.bf16.msra.mxu0 0
      %2839 = vmatprep.subr.bf16.mxu0 0
      %2840 = vmatpush1.bf16.msra.mxu0 0
      %2841 = vmatprep.subr.bf16.mxu0 0
      %2842 = vmatpush1.bf16.msra.mxu0 0
      %2843 = vmatprep.subr.bf16.mxu0 0
      %2844 = vmatpush1.bf16.msra.mxu0 0
      %2845 = vmatprep.subr.bf16.mxu0 0
      %2846 = vmatpush1.bf16.msra.mxu0 %v2829
      %2847 = vmatprep.subr.bf16.mxu0 0
      %2848 = vmatpush2.bf16.msra.mxu0 0
      %2849 = vmatprep.subr.bf16.mxu0 0
      %2850 = vmatpush2.bf16.msra.mxu0 0
      %2851 = vmatprep.subr.bf16.mxu0 0
      %2852 = vmatpush2.bf16.msra.mxu0 0
      %2853 = vmatprep.subr.bf16.mxu0 0
      %2854 = vmatpush2.bf16.msra.mxu0 0
      %2855 = vmatprep.subr.bf16.mxu0 0
      %2856 = vmatpush2.bf16.msra.mxu0 0
      %2857 = vmatprep.subr.bf16.mxu0 0
      %2858 = vmatpush2.bf16.msra.mxu0 0
      %2859 = vmatprep.subr.bf16.mxu0 0
      %2860 = vmatpush2.bf16.msra.mxu0 0
      %2861 = vmatprep.subr.bf16.mxu0 0
      %2862 = vmatpush2.bf16.msra.mxu0 0
      %2863 = vmatprep.mubr.bf16.mxu0 0
      %2864 = vmatmul.mubr.bf16.gmra.mxu0 %v2796
      %v2865 = vpop.f32.mrf.mxu0
      %v2866 = vadd.f32 %v2665, %v2865
      %v2867 = vpop.f32.mrf.mxu0
      %v2868 = vpop.f32.mrf.mxu0
      %v2869 = vadd.f32 %v2668, %v2868
      %v2870 = vpop.f32.mrf.mxu0
      %2871 = vmatprep.mubr.bf16.mxu0 0
      %2872 = vmatmul.mubr.bf16.gmra.mxu0 %v2798
      %v2873 = vpop.f32.mrf.mxu0
      %v2874 = vadd.f32 %v2673, %v2873
      %v2875 = vpop.f32.mrf.mxu0
      %v2876 = vpop.f32.mrf.mxu0
      %v2877 = vadd.f32 %v2676, %v2876
      %v2878 = vpop.f32.mrf.mxu0
      %2879 = vmatprep.mubr.bf16.mxu0 0
      %2880 = vmatmul.mubr.bf16.gmra.mxu0 %v2800
      %v2881 = vpop.f32.mrf.mxu0
      %v2882 = vadd.f32 %v2681, %v2881
      %v2883 = vpop.f32.mrf.mxu0
      %v2884 = vpop.f32.mrf.mxu0
      %v2885 = vadd.f32 %v2684, %v2884
      %v2886 = vpop.f32.mrf.mxu0
      %2887 = vmatprep.mubr.bf16.mxu0 0
      %2888 = vmatmul.mubr.bf16.gmra.mxu0 %v2802
      %v2889 = vpop.f32.mrf.mxu0
      %v2890 = vadd.f32 %v2689, %v2889
      %v2891 = vpop.f32.mrf.mxu0
      %v2892 = vpop.f32.mrf.mxu0
      %v2893 = vadd.f32 %v2692, %v2892
      %v2894 = vpop.f32.mrf.mxu0
      %2895 = vmatprep.mubr.bf16.mxu0 0
      %2896 = vmatmul.mubr.bf16.gmra.mxu0 %v2804
      %v2897 = vpop.f32.mrf.mxu0
      %v2898 = vadd.f32 %v2697, %v2897
      %v2899 = vpop.f32.mrf.mxu0
      %v2900 = vpop.f32.mrf.mxu0
      %v2901 = vadd.f32 %v2700, %v2900
      %v2902 = vpop.f32.mrf.mxu0
      %2903 = vmatprep.mubr.bf16.mxu0 0
      %2904 = vmatmul.mubr.bf16.gmra.mxu0 %v2806
      %v2905 = vpop.f32.mrf.mxu0
      %v2906 = vadd.f32 %v2705, %v2905
      %v2907 = vpop.f32.mrf.mxu0
      %v2908 = vpop.f32.mrf.mxu0
      %v2909 = vadd.f32 %v2708, %v2908
      %v2910 = vpop.f32.mrf.mxu0
      %2911 = vmatprep.mubr.bf16.mxu0 0
      %2912 = vmatmul.mubr.bf16.gmra.mxu0 %v2808
      %v2913 = vpop.f32.mrf.mxu0
      %v2914 = vadd.f32 %v2713, %v2913
      %v2915 = vpop.f32.mrf.mxu0
      %v2916 = vpop.f32.mrf.mxu0
      %v2917 = vadd.f32 %v2716, %v2916
      %v2918 = vpop.f32.mrf.mxu0
      %2919 = vmatprep.mubr.bf16.mxu0 0
      %2920 = vmatmul.mubr.bf16.gmra.mxu0 %v2810
      %v2921 = vpop.f32.mrf.mxu0
      %v2922 = vadd.f32 %v2721, %v2921
      %v2923 = vpop.f32.mrf.mxu0
      %v2924 = vpop.f32.mrf.mxu0
      %v2925 = vadd.f32 %v2724, %v2924
      %v2926 = vpop.f32.mrf.mxu0
      %2927 = vmatprep.mubr.bf16.mxu0 0
      %2928 = vmatmul.mubr.bf16.gmra.mxu0 %v2812
      %v2929 = vpop.f32.mrf.mxu0
      %v2930 = vadd.f32 %v2729, %v2929
      %v2931 = vpop.f32.mrf.mxu0
      %v2932 = vpop.f32.mrf.mxu0
      %v2933 = vadd.f32 %v2732, %v2932
      %v2934 = vpop.f32.mrf.mxu0
      %2935 = vmatprep.mubr.bf16.mxu0 0
      %2936 = vmatmul.mubr.bf16.gmra.mxu0 %v2814
      %v2937 = vpop.f32.mrf.mxu0
      %v2938 = vadd.f32 %v2737, %v2937
      %v2939 = vpop.f32.mrf.mxu0
      %v2940 = vpop.f32.mrf.mxu0
      %v2941 = vadd.f32 %v2740, %v2940
      %v2942 = vpop.f32.mrf.mxu0
      %2943 = vmatprep.mubr.bf16.mxu0 0
      %2944 = vmatmul.mubr.bf16.gmra.mxu0 %v2816
      %v2945 = vpop.f32.mrf.mxu0
      %v2946 = vadd.f32 %v2745, %v2945
      %v2947 = vpop.f32.mrf.mxu0
      %v2948 = vpop.f32.mrf.mxu0
      %v2949 = vadd.f32 %v2748, %v2948
      %v2950 = vpop.f32.mrf.mxu0
      %2951 = vmatprep.mubr.bf16.mxu0 0
      %2952 = vmatmul.mubr.bf16.gmra.mxu0 %v2818
      %v2953 = vpop.f32.mrf.mxu0
      %v2954 = vadd.f32 %v2753, %v2953
      %v2955 = vpop.f32.mrf.mxu0
      %v2956 = vpop.f32.mrf.mxu0
      %v2957 = vadd.f32 %v2756, %v2956
      %v2958 = vpop.f32.mrf.mxu0
      %2959 = vmatprep.mubr.bf16.mxu0 0
      %2960 = vmatmul.mubr.bf16.gmra.mxu0 %v2820
      %v2961 = vpop.f32.mrf.mxu0
      %v2962 = vadd.f32 %v2761, %v2961
      %v2963 = vpop.f32.mrf.mxu0
      %v2964 = vpop.f32.mrf.mxu0
      %v2965 = vadd.f32 %v2764, %v2964
      %v2966 = vpop.f32.mrf.mxu0
      %2967 = vmatprep.mubr.bf16.mxu0 0
      %2968 = vmatmul.mubr.bf16.gmra.mxu0 %v2822
      %v2969 = vpop.f32.mrf.mxu0
      %v2970 = vadd.f32 %v2769, %v2969
      %v2971 = vpop.f32.mrf.mxu0
      %v2972 = vpop.f32.mrf.mxu0
      %v2973 = vadd.f32 %v2772, %v2972
      %v2974 = vpop.f32.mrf.mxu0
      %2975 = vmatprep.mubr.bf16.mxu0 0
      %2976 = vmatmul.mubr.bf16.gmra.mxu0 %v2824
      %v2977 = vpop.f32.mrf.mxu0
      %v2978 = vadd.f32 %v2777, %v2977
      %v2979 = vpop.f32.mrf.mxu0
      %v2980 = vpop.f32.mrf.mxu0
      %v2981 = vadd.f32 %v2780, %v2980
      %v2982 = vpop.f32.mrf.mxu0
      %2983 = vmatprep.mubr.bf16.mxu0 0
      %2984 = vmatmul.mubr.bf16.gmra.mxu0 %v2826
      %v2985 = vpop.f32.mrf.mxu0
      %v2986 = vadd.f32 %v2785, %v2985
      %v2987 = vpop.f32.mrf.mxu0
      %v2988 = vpop.f32.mrf.mxu0
      %v2989 = vadd.f32 %v2788, %v2988
      %v2990 = vpop.f32.mrf.mxu0
      %2991 = vdwg.mxu0
      %s2992 = scalar_lea.vmem [#allocation2], 24
      %v2993 = vld [vmem:[%s2992] sm:$0xf]
      %v2994 = vld [vmem:[%s2992 + $0x4] sm:$0xf]
      %v2995 = vld [vmem:[%s2992 + $0xc] sm:$0xf]
      %v2996 = vld [vmem:[%s2992 + $0x10] sm:$0xf]
      %v2997 = vld [vmem:[%s2992 + $0x18] sm:$0xf]
      %v2998 = vld [vmem:[%s2992 + $0x1c] sm:$0xf]
      %v2999 = vld [vmem:[%s2992 + $0x24] sm:$0xf]
      %v3000 = vld [vmem:[%s2992 + $0x28] sm:$0xf]
      %v3001 = vld [vmem:[%s2992 + $0x30] sm:$0xf]
      %v3002 = vld [vmem:[%s2992 + $0x34] sm:$0xf]
      %v3003 = vld [vmem:[%s2992 + $0x3c] sm:$0xf]
      %v3004 = vld [vmem:[%s2992 + $0x40] sm:$0xf]
      %v3005 = vld [vmem:[%s2992 + $0x48] sm:$0xf]
      %v3006 = vld [vmem:[%s2992 + $0x4c] sm:$0xf]
      %v3007 = vld [vmem:[%s2992 + $0x54] sm:$0xf]
      %v3008 = vld [vmem:[%s2992 + $0x58] sm:$0xf]
      %v3009 = vld [vmem:[%s2992 + $0x60] sm:$0xf]
      %v3010 = vld [vmem:[%s2992 + $0x64] sm:$0xf]
      %v3011 = vld [vmem:[%s2992 + $0x6c] sm:$0xf]
      %v3012 = vld [vmem:[%s2992 + $0x70] sm:$0xf]
      %v3013 = vld [vmem:[%s2992 + $0x78] sm:$0xf]
      %v3014 = vld [vmem:[%s2992 + $0x7c] sm:$0xf]
      %v3015 = vld [vmem:[%s2992 + $0x84] sm:$0xf]
      %v3016 = vld [vmem:[%s2992 + $0x88] sm:$0xf]
      %v3017 = vld [vmem:[%s2992 + $0x90] sm:$0xf]
      %v3018 = vld [vmem:[%s2992 + $0x94] sm:$0xf]
      %v3019 = vld [vmem:[%s2992 + $0x9c] sm:$0xf]
      %v3020 = vld [vmem:[%s2992 + $0xa0] sm:$0xf]
      %v3021 = vld [vmem:[%s2992 + $0xa8] sm:$0xf]
      %v3022 = vld [vmem:[%s2992 + $0xac] sm:$0xf]
      %v3023 = vld [vmem:[%s2992 + $0xb4] sm:$0xf]
      %v3024 = vld [vmem:[%s2992 + $0xb8] sm:$0xf]
      %v3025 = vld [vmem:[%s2992 + $0x8] sm:$0x1]
      %v3026 = vld [vmem:[%s2992 + $0x14] sm:$0x1]
      %v3027 = vld [vmem:[%s2992 + $0x20] sm:$0x1]
      %v3028 = vld [vmem:[%s2992 + $0x2c] sm:$0x1]
      %v3029 = vld [vmem:[%s2992 + $0x38] sm:$0x1]
      %v3030 = vld [vmem:[%s2992 + $0x44] sm:$0x1]
      %v3031 = vld [vmem:[%s2992 + $0x50] sm:$0x1]
      %v3032 = vld [vmem:[%s2992 + $0x5c] sm:$0x1]
      %v3033 = vld [vmem:[%s2992 + $0x68] sm:$0x1]
      %v3034 = vld [vmem:[%s2992 + $0x74] sm:$0x1]
      %v3035 = vld [vmem:[%s2992 + $0x80] sm:$0x1]
      %v3036 = vld [vmem:[%s2992 + $0x8c] sm:$0x1]
      %v3037 = vld [vmem:[%s2992 + $0x98] sm:$0x1]
      %v3038 = vld [vmem:[%s2992 + $0xa4] sm:$0x1]
      %v3039 = vld [vmem:[%s2992 + $0xb0] sm:$0x1]
      %v3040 = vld [vmem:[%s2992 + $0xbc] sm:$0x1]
      %v3042 = vshrl.u32 %v2993, 16
      %v3044 = vrot.slane %v3042, 4
      %v3045 = vshll.u32 %v2993, 16
      %v3047 = vrot.slane %v3045, 5
      %v3048 = vor.u32 %v3044, %v3047
      %v3049 = vrot.slane %v3048, 4
      %v3051 = vshll.u32 %v2994, 16
      %v3053 = vrot.slane %v3051, 5
      %v3054 = vsel %vm801, %v3049, %v3053
      %v3055 = vshrl.u32 %v2994, 16
      %v3057 = vrot.slane %v3055, 4
      %v3058 = vor.u32 %v3057, %v3053
      %v3059 = vrot.slane %v3058, 4
      %v3061 = vshll.u32 %v3025, 16
      %v3063 = vrot.slane %v3061, 5
      %v3064 = vsel %vm801, %v3059, %v3063
      %v3066 = vshrl.u32 %v2995, 16
      %v3068 = vrot.slane %v3066, 4
      %v3069 = vshll.u32 %v2995, 16
      %v3071 = vrot.slane %v3069, 5
      %v3072 = vor.u32 %v3068, %v3071
      %v3073 = vrot.slane %v3072, 4
      %v3075 = vshll.u32 %v2996, 16
      %v3077 = vrot.slane %v3075, 5
      %v3078 = vsel %vm801, %v3073, %v3077
      %v3079 = vshrl.u32 %v2996, 16
      %v3081 = vrot.slane %v3079, 4
      %v3082 = vor.u32 %v3081, %v3077
      %v3083 = vrot.slane %v3082, 4
      %v3085 = vshll.u32 %v3026, 16
      %v3087 = vrot.slane %v3085, 5
      %v3088 = vsel %vm801, %v3083, %v3087
      %v3090 = vshrl.u32 %v2997, 16
      %v3092 = vrot.slane %v3090, 4
      %v3093 = vshll.u32 %v2997, 16
      %v3095 = vrot.slane %v3093, 5
      %v3096 = vor.u32 %v3092, %v3095
      %v3097 = vrot.slane %v3096, 4
      %v3099 = vshll.u32 %v2998, 16
      %v3101 = vrot.slane %v3099, 5
      %v3102 = vsel %vm801, %v3097, %v3101
      %v3103 = vshrl.u32 %v2998, 16
      %v3105 = vrot.slane %v3103, 4
      %v3106 = vor.u32 %v3105, %v3101
      %v3107 = vrot.slane %v3106, 4
      %v3109 = vshll.u32 %v3027, 16
      %v3111 = vrot.slane %v3109, 5
      %v3112 = vsel %vm801, %v3107, %v3111
      %v3114 = vshrl.u32 %v2999, 16
      %v3116 = vrot.slane %v3114, 4
      %v3117 = vshll.u32 %v2999, 16
      %v3119 = vrot.slane %v3117, 5
      %v3120 = vor.u32 %v3116, %v3119
      %v3121 = vrot.slane %v3120, 4
      %v3123 = vshll.u32 %v3000, 16
      %v3125 = vrot.slane %v3123, 5
      %v3126 = vsel %vm801, %v3121, %v3125
      %v3127 = vshrl.u32 %v3000, 16
      %v3129 = vrot.slane %v3127, 4
      %v3130 = vor.u32 %v3129, %v3125
      %v3131 = vrot.slane %v3130, 4
      %v3133 = vshll.u32 %v3028, 16
      %v3135 = vrot.slane %v3133, 5
      %v3136 = vsel %vm801, %v3131, %v3135
      %v3138 = vshrl.u32 %v3001, 16
      %v3140 = vrot.slane %v3138, 4
      %v3141 = vshll.u32 %v3001, 16
      %v3143 = vrot.slane %v3141, 5
      %v3144 = vor.u32 %v3140, %v3143
      %v3145 = vrot.slane %v3144, 4
      %v3147 = vshll.u32 %v3002, 16
      %v3149 = vrot.slane %v3147, 5
      %v3150 = vsel %vm801, %v3145, %v3149
      %v3151 = vshrl.u32 %v3002, 16
      %v3153 = vrot.slane %v3151, 4
      %v3154 = vor.u32 %v3153, %v3149
      %v3155 = vrot.slane %v3154, 4
      %v3157 = vshll.u32 %v3029, 16
      %v3159 = vrot.slane %v3157, 5
      %v3160 = vsel %vm801, %v3155, %v3159
      %v3162 = vshrl.u32 %v3003, 16
      %v3164 = vrot.slane %v3162, 4
      %v3165 = vshll.u32 %v3003, 16
      %v3167 = vrot.slane %v3165, 5
      %v3168 = vor.u32 %v3164, %v3167
      %v3169 = vrot.slane %v3168, 4
      %v3171 = vshll.u32 %v3004, 16
      %v3173 = vrot.slane %v3171, 5
      %v3174 = vsel %vm801, %v3169, %v3173
      %v3175 = vshrl.u32 %v3004, 16
      %v3177 = vrot.slane %v3175, 4
      %v3178 = vor.u32 %v3177, %v3173
      %v3179 = vrot.slane %v3178, 4
      %v3181 = vshll.u32 %v3030, 16
      %v3183 = vrot.slane %v3181, 5
      %v3184 = vsel %vm801, %v3179, %v3183
      %v3186 = vshrl.u32 %v3005, 16
      %v3188 = vrot.slane %v3186, 4
      %v3189 = vshll.u32 %v3005, 16
      %v3191 = vrot.slane %v3189, 5
      %v3192 = vor.u32 %v3188, %v3191
      %v3193 = vrot.slane %v3192, 4
      %v3195 = vshll.u32 %v3006, 16
      %v3197 = vrot.slane %v3195, 5
      %v3198 = vsel %vm801, %v3193, %v3197
      %v3199 = vshrl.u32 %v3006, 16
      %v3201 = vrot.slane %v3199, 4
      %v3202 = vor.u32 %v3201, %v3197
      %v3203 = vrot.slane %v3202, 4
      %v3205 = vshll.u32 %v3031, 16
      %v3207 = vrot.slane %v3205, 5
      %v3208 = vsel %vm801, %v3203, %v3207
      %v3210 = vshrl.u32 %v3007, 16
      %v3212 = vrot.slane %v3210, 4
      %v3213 = vshll.u32 %v3007, 16
      %v3215 = vrot.slane %v3213, 5
      %v3216 = vor.u32 %v3212, %v3215
      %v3217 = vrot.slane %v3216, 4
      %v3219 = vshll.u32 %v3008, 16
      %v3221 = vrot.slane %v3219, 5
      %v3222 = vsel %vm801, %v3217, %v3221
      %v3223 = vshrl.u32 %v3008, 16
      %v3225 = vrot.slane %v3223, 4
      %v3226 = vor.u32 %v3225, %v3221
      %v3227 = vrot.slane %v3226, 4
      %v3229 = vshll.u32 %v3032, 16
      %v3231 = vrot.slane %v3229, 5
      %v3232 = vsel %vm801, %v3227, %v3231
      %v3234 = vshrl.u32 %v3009, 16
      %v3236 = vrot.slane %v3234, 4
      %v3237 = vshll.u32 %v3009, 16
      %v3239 = vrot.slane %v3237, 5
      %v3240 = vor.u32 %v3236, %v3239
      %v3241 = vrot.slane %v3240, 4
      %v3243 = vshll.u32 %v3010, 16
      %v3245 = vrot.slane %v3243, 5
      %v3246 = vsel %vm801, %v3241, %v3245
      %v3247 = vshrl.u32 %v3010, 16
      %v3249 = vrot.slane %v3247, 4
      %v3250 = vor.u32 %v3249, %v3245
      %v3251 = vrot.slane %v3250, 4
      %v3253 = vshll.u32 %v3033, 16
      %v3255 = vrot.slane %v3253, 5
      %v3256 = vsel %vm801, %v3251, %v3255
      %v3258 = vshrl.u32 %v3011, 16
      %v3260 = vrot.slane %v3258, 4
      %v3261 = vshll.u32 %v3011, 16
      %v3263 = vrot.slane %v3261, 5
      %v3264 = vor.u32 %v3260, %v3263
      %v3265 = vrot.slane %v3264, 4
      %v3267 = vshll.u32 %v3012, 16
      %v3269 = vrot.slane %v3267, 5
      %v3270 = vsel %vm801, %v3265, %v3269
      %v3271 = vshrl.u32 %v3012, 16
      %v3273 = vrot.slane %v3271, 4
      %v3274 = vor.u32 %v3273, %v3269
      %v3275 = vrot.slane %v3274, 4
      %v3277 = vshll.u32 %v3034, 16
      %v3279 = vrot.slane %v3277, 5
      %v3280 = vsel %vm801, %v3275, %v3279
      %v3282 = vshrl.u32 %v3013, 16
      %v3284 = vrot.slane %v3282, 4
      %v3285 = vshll.u32 %v3013, 16
      %v3287 = vrot.slane %v3285, 5
      %v3288 = vor.u32 %v3284, %v3287
      %v3289 = vrot.slane %v3288, 4
      %v3291 = vshll.u32 %v3014, 16
      %v3293 = vrot.slane %v3291, 5
      %v3294 = vsel %vm801, %v3289, %v3293
      %v3295 = vshrl.u32 %v3014, 16
      %v3297 = vrot.slane %v3295, 4
      %v3298 = vor.u32 %v3297, %v3293
      %v3299 = vrot.slane %v3298, 4
      %v3301 = vshll.u32 %v3035, 16
      %v3303 = vrot.slane %v3301, 5
      %v3304 = vsel %vm801, %v3299, %v3303
      %v3306 = vshrl.u32 %v3015, 16
      %v3308 = vrot.slane %v3306, 4
      %v3309 = vshll.u32 %v3015, 16
      %v3311 = vrot.slane %v3309, 5
      %v3312 = vor.u32 %v3308, %v3311
      %v3313 = vrot.slane %v3312, 4
      %v3315 = vshll.u32 %v3016, 16
      %v3317 = vrot.slane %v3315, 5
      %v3318 = vsel %vm801, %v3313, %v3317
      %v3319 = vshrl.u32 %v3016, 16
      %v3321 = vrot.slane %v3319, 4
      %v3322 = vor.u32 %v3321, %v3317
      %v3323 = vrot.slane %v3322, 4
      %v3325 = vshll.u32 %v3036, 16
      %v3327 = vrot.slane %v3325, 5
      %v3328 = vsel %vm801, %v3323, %v3327
      %v3330 = vshrl.u32 %v3017, 16
      %v3332 = vrot.slane %v3330, 4
      %v3333 = vshll.u32 %v3017, 16
      %v3335 = vrot.slane %v3333, 5
      %v3336 = vor.u32 %v3332, %v3335
      %v3337 = vrot.slane %v3336, 4
      %v3339 = vshll.u32 %v3018, 16
      %v3341 = vrot.slane %v3339, 5
      %v3342 = vsel %vm801, %v3337, %v3341
      %v3343 = vshrl.u32 %v3018, 16
      %v3345 = vrot.slane %v3343, 4
      %v3346 = vor.u32 %v3345, %v3341
      %v3347 = vrot.slane %v3346, 4
      %v3349 = vshll.u32 %v3037, 16
      %v3351 = vrot.slane %v3349, 5
      %v3352 = vsel %vm801, %v3347, %v3351
      %v3354 = vshrl.u32 %v3019, 16
      %v3356 = vrot.slane %v3354, 4
      %v3357 = vshll.u32 %v3019, 16
      %v3359 = vrot.slane %v3357, 5
      %v3360 = vor.u32 %v3356, %v3359
      %v3361 = vrot.slane %v3360, 4
      %v3363 = vshll.u32 %v3020, 16
      %v3365 = vrot.slane %v3363, 5
      %v3366 = vsel %vm801, %v3361, %v3365
      %v3367 = vshrl.u32 %v3020, 16
      %v3369 = vrot.slane %v3367, 4
      %v3370 = vor.u32 %v3369, %v3365
      %v3371 = vrot.slane %v3370, 4
      %v3373 = vshll.u32 %v3038, 16
      %v3375 = vrot.slane %v3373, 5
      %v3376 = vsel %vm801, %v3371, %v3375
      %v3378 = vshrl.u32 %v3021, 16
      %v3380 = vrot.slane %v3378, 4
      %v3381 = vshll.u32 %v3021, 16
      %v3383 = vrot.slane %v3381, 5
      %v3384 = vor.u32 %v3380, %v3383
      %v3385 = vrot.slane %v3384, 4
      %v3387 = vshll.u32 %v3022, 16
      %v3389 = vrot.slane %v3387, 5
      %v3390 = vsel %vm801, %v3385, %v3389
      %v3391 = vshrl.u32 %v3022, 16
      %v3393 = vrot.slane %v3391, 4
      %v3394 = vor.u32 %v3393, %v3389
      %v3395 = vrot.slane %v3394, 4
      %v3397 = vshll.u32 %v3039, 16
      %v3399 = vrot.slane %v3397, 5
      %v3400 = vsel %vm801, %v3395, %v3399
      %v3402 = vshrl.u32 %v3023, 16
      %v3404 = vrot.slane %v3402, 4
      %v3405 = vshll.u32 %v3023, 16
      %v3407 = vrot.slane %v3405, 5
      %v3408 = vor.u32 %v3404, %v3407
      %v3409 = vrot.slane %v3408, 4
      %v3411 = vshll.u32 %v3024, 16
      %v3413 = vrot.slane %v3411, 5
      %v3414 = vsel %vm801, %v3409, %v3413
      %v3415 = vshrl.u32 %v3024, 16
      %v3417 = vrot.slane %v3415, 4
      %v3418 = vor.u32 %v3417, %v3413
      %v3419 = vrot.slane %v3418, 4
      %v3421 = vshll.u32 %v3040, 16
      %v3423 = vrot.slane %v3421, 5
      %v3424 = vsel %vm801, %v3419, %v3423
      %v3425 = vld [vmem:[%s2992] sm:$0xe]
      %v3426 = vld [vmem:[%s2992 + $0xc] sm:$0xe]
      %v3427 = vld [vmem:[%s2992 + $0x18] sm:$0xe]
      %v3428 = vld [vmem:[%s2992 + $0x24] sm:$0xe]
      %v3429 = vld [vmem:[%s2992 + $0x30] sm:$0xe]
      %v3430 = vld [vmem:[%s2992 + $0x3c] sm:$0xe]
      %v3431 = vld [vmem:[%s2992 + $0x48] sm:$0xe]
      %v3432 = vld [vmem:[%s2992 + $0x54] sm:$0xe]
      %v3433 = vld [vmem:[%s2992 + $0x60] sm:$0xe]
      %v3434 = vld [vmem:[%s2992 + $0x6c] sm:$0xe]
      %v3435 = vld [vmem:[%s2992 + $0x78] sm:$0xe]
      %v3436 = vld [vmem:[%s2992 + $0x84] sm:$0xe]
      %v3437 = vld [vmem:[%s2992 + $0x90] sm:$0xe]
      %v3438 = vld [vmem:[%s2992 + $0x9c] sm:$0xe]
      %v3439 = vld [vmem:[%s2992 + $0xa8] sm:$0xe]
      %v3440 = vld [vmem:[%s2992 + $0xb4] sm:$0xe]
      %v3489 = vrot.slane %v3425, 5
      %v3490 = vrot.slane %v3489, 4
      %v3491 = vrot.slane %v2994, 5
      %v3492 = vsel %vm1252, %v3490, %v3491
      %v3493 = vrot.slane %v3491, 4
      %v3494 = vrot.slane %v3025, 5
      %v3495 = vsel %vm1252, %v3493, %v3494
      %v3496 = vrot.slane %v3426, 5
      %v3497 = vrot.slane %v3496, 4
      %v3498 = vrot.slane %v2996, 5
      %v3499 = vsel %vm1252, %v3497, %v3498
      %v3500 = vrot.slane %v3498, 4
      %v3501 = vrot.slane %v3026, 5
      %v3502 = vsel %vm1252, %v3500, %v3501
      %v3503 = vrot.slane %v3427, 5
      %v3504 = vrot.slane %v3503, 4
      %v3505 = vrot.slane %v2998, 5
      %v3506 = vsel %vm1252, %v3504, %v3505
      %v3507 = vrot.slane %v3505, 4
      %v3508 = vrot.slane %v3027, 5
      %v3509 = vsel %vm1252, %v3507, %v3508
      %v3510 = vrot.slane %v3428, 5
      %v3511 = vrot.slane %v3510, 4
      %v3512 = vrot.slane %v3000, 5
      %v3513 = vsel %vm1252, %v3511, %v3512
      %v3514 = vrot.slane %v3512, 4
      %v3515 = vrot.slane %v3028, 5
      %v3516 = vsel %vm1252, %v3514, %v3515
      %v3517 = vrot.slane %v3429, 5
      %v3518 = vrot.slane %v3517, 4
      %v3519 = vrot.slane %v3002, 5
      %v3520 = vsel %vm1252, %v3518, %v3519
      %v3521 = vrot.slane %v3519, 4
      %v3522 = vrot.slane %v3029, 5
      %v3523 = vsel %vm1252, %v3521, %v3522
      %v3524 = vrot.slane %v3430, 5
      %v3525 = vrot.slane %v3524, 4
      %v3526 = vrot.slane %v3004, 5
      %v3527 = vsel %vm1252, %v3525, %v3526
      %v3528 = vrot.slane %v3526, 4
      %v3529 = vrot.slane %v3030, 5
      %v3530 = vsel %vm1252, %v3528, %v3529
      %v3531 = vrot.slane %v3431, 5
      %v3532 = vrot.slane %v3531, 4
      %v3533 = vrot.slane %v3006, 5
      %v3534 = vsel %vm1252, %v3532, %v3533
      %v3535 = vrot.slane %v3533, 4
      %v3536 = vrot.slane %v3031, 5
      %v3537 = vsel %vm1252, %v3535, %v3536
      %v3538 = vrot.slane %v3432, 5
      %v3539 = vrot.slane %v3538, 4
      %v3540 = vrot.slane %v3008, 5
      %v3541 = vsel %vm1252, %v3539, %v3540
      %v3542 = vrot.slane %v3540, 4
      %v3543 = vrot.slane %v3032, 5
      %v3544 = vsel %vm1252, %v3542, %v3543
      %v3545 = vrot.slane %v3433, 5
      %v3546 = vrot.slane %v3545, 4
      %v3547 = vrot.slane %v3010, 5
      %v3548 = vsel %vm1252, %v3546, %v3547
      %v3549 = vrot.slane %v3547, 4
      %v3550 = vrot.slane %v3033, 5
      %v3551 = vsel %vm1252, %v3549, %v3550
      %v3552 = vrot.slane %v3434, 5
      %v3553 = vrot.slane %v3552, 4
      %v3554 = vrot.slane %v3012, 5
      %v3555 = vsel %vm1252, %v3553, %v3554
      %v3556 = vrot.slane %v3554, 4
      %v3557 = vrot.slane %v3034, 5
      %v3558 = vsel %vm1252, %v3556, %v3557
      %v3559 = vrot.slane %v3435, 5
      %v3560 = vrot.slane %v3559, 4
      %v3561 = vrot.slane %v3014, 5
      %v3562 = vsel %vm1252, %v3560, %v3561
      %v3563 = vrot.slane %v3561, 4
      %v3564 = vrot.slane %v3035, 5
      %v3565 = vsel %vm1252, %v3563, %v3564
      %v3566 = vrot.slane %v3436, 5
      %v3567 = vrot.slane %v3566, 4
      %v3568 = vrot.slane %v3016, 5
      %v3569 = vsel %vm1252, %v3567, %v3568
      %v3570 = vrot.slane %v3568, 4
      %v3571 = vrot.slane %v3036, 5
      %v3572 = vsel %vm1252, %v3570, %v3571
      %v3573 = vrot.slane %v3437, 5
      %v3574 = vrot.slane %v3573, 4
      %v3575 = vrot.slane %v3018, 5
      %v3576 = vsel %vm1252, %v3574, %v3575
      %v3577 = vrot.slane %v3575, 4
      %v3578 = vrot.slane %v3037, 5
      %v3579 = vsel %vm1252, %v3577, %v3578
      %v3580 = vrot.slane %v3438, 5
      %v3581 = vrot.slane %v3580, 4
      %v3582 = vrot.slane %v3020, 5
      %v3583 = vsel %vm1252, %v3581, %v3582
      %v3584 = vrot.slane %v3582, 4
      %v3585 = vrot.slane %v3038, 5
      %v3586 = vsel %vm1252, %v3584, %v3585
      %v3587 = vrot.slane %v3439, 5
      %v3588 = vrot.slane %v3587, 4
      %v3589 = vrot.slane %v3022, 5
      %v3590 = vsel %vm1252, %v3588, %v3589
      %v3591 = vrot.slane %v3589, 4
      %v3592 = vrot.slane %v3039, 5
      %v3593 = vsel %vm1252, %v3591, %v3592
      %v3594 = vrot.slane %v3440, 5
      %v3595 = vrot.slane %v3594, 4
      %v3596 = vrot.slane %v3024, 5
      %v3597 = vsel %vm1252, %v3595, %v3596
      %v3598 = vrot.slane %v3596, 4
      %v3599 = vrot.slane %v3040, 5
      %v3600 = vsel %vm1252, %v3598, %v3599
      %v3617 = vunpack.c.l.b16 %v2993
      %v3618 = vunpack.c.l.b16 %v2994
      %v3619 = vunpack.c.l.b16 %v2995
      %v3620 = vunpack.c.l.b16 %v2996
      %v3621 = vunpack.c.l.b16 %v2997
      %v3622 = vunpack.c.l.b16 %v2998
      %v3623 = vunpack.c.l.b16 %v2999
      %v3624 = vunpack.c.l.b16 %v3000
      %v3625 = vunpack.c.l.b16 %v3001
      %v3626 = vunpack.c.l.b16 %v3002
      %v3627 = vunpack.c.l.b16 %v3003
      %v3628 = vunpack.c.l.b16 %v3004
      %v3629 = vunpack.c.l.b16 %v3005
      %v3630 = vunpack.c.l.b16 %v3006
      %v3631 = vunpack.c.l.b16 %v3007
      %v3632 = vunpack.c.l.b16 %v3008
      %v3633 = vunpack.c.l.b16 %v3009
      %v3634 = vunpack.c.l.b16 %v3010
      %v3635 = vunpack.c.l.b16 %v3011
      %v3636 = vunpack.c.l.b16 %v3012
      %v3637 = vunpack.c.l.b16 %v3013
      %v3638 = vunpack.c.l.b16 %v3014
      %v3639 = vunpack.c.l.b16 %v3015
      %v3640 = vunpack.c.l.b16 %v3016
      %v3641 = vunpack.c.l.b16 %v3017
      %v3642 = vunpack.c.l.b16 %v3018
      %v3643 = vunpack.c.l.b16 %v3019
      %v3644 = vunpack.c.l.b16 %v3020
      %v3645 = vunpack.c.l.b16 %v3021
      %v3646 = vunpack.c.l.b16 %v3022
      %v3647 = vunpack.c.l.b16 %v3023
      %v3648 = vunpack.c.l.b16 %v3024
      %v3649 = vpack.c.b16 %v3618, %v3617
      %v3650 = vpack.c.b16 %v3620, %v3619
      %v3651 = vpack.c.b16 %v3622, %v3621
      %v3652 = vpack.c.b16 %v3624, %v3623
      %v3653 = vpack.c.b16 %v3626, %v3625
      %v3654 = vpack.c.b16 %v3628, %v3627
      %v3655 = vpack.c.b16 %v3630, %v3629
      %v3656 = vpack.c.b16 %v3632, %v3631
      %v3657 = vpack.c.b16 %v3634, %v3633
      %v3658 = vpack.c.b16 %v3636, %v3635
      %v3659 = vpack.c.b16 %v3638, %v3637
      %v3660 = vpack.c.b16 %v3640, %v3639
      %v3661 = vpack.c.b16 %v3642, %v3641
      %v3662 = vpack.c.b16 %v3644, %v3643
      %v3663 = vpack.c.b16 %v3646, %v3645
      %v3664 = vpack.c.b16 %v3648, %v3647
      %v3665 = vunpack.c.l.b16 %v3054
      %v3666 = vunpack.c.l.b16 %v3064
      %v3667 = vunpack.c.l.b16 %v3078
      %v3668 = vunpack.c.l.b16 %v3088
      %v3669 = vunpack.c.l.b16 %v3102
      %v3670 = vunpack.c.l.b16 %v3112
      %v3671 = vunpack.c.l.b16 %v3126
      %v3672 = vunpack.c.l.b16 %v3136
      %v3673 = vunpack.c.l.b16 %v3150
      %v3674 = vunpack.c.l.b16 %v3160
      %v3675 = vunpack.c.l.b16 %v3174
      %v3676 = vunpack.c.l.b16 %v3184
      %v3677 = vunpack.c.l.b16 %v3198
      %v3678 = vunpack.c.l.b16 %v3208
      %v3679 = vunpack.c.l.b16 %v3222
      %v3680 = vunpack.c.l.b16 %v3232
      %v3681 = vunpack.c.l.b16 %v3246
      %v3682 = vunpack.c.l.b16 %v3256
      %v3683 = vunpack.c.l.b16 %v3270
      %v3684 = vunpack.c.l.b16 %v3280
      %v3685 = vunpack.c.l.b16 %v3294
      %v3686 = vunpack.c.l.b16 %v3304
      %v3687 = vunpack.c.l.b16 %v3318
      %v3688 = vunpack.c.l.b16 %v3328
      %v3689 = vunpack.c.l.b16 %v3342
      %v3690 = vunpack.c.l.b16 %v3352
      %v3691 = vunpack.c.l.b16 %v3366
      %v3692 = vunpack.c.l.b16 %v3376
      %v3693 = vunpack.c.l.b16 %v3390
      %v3694 = vunpack.c.l.b16 %v3400
      %v3695 = vunpack.c.l.b16 %v3414
      %v3696 = vunpack.c.l.b16 %v3424
      %v3697 = vpack.c.b16 %v3666, %v3665
      %v3698 = vpack.c.b16 %v3668, %v3667
      %v3699 = vpack.c.b16 %v3670, %v3669
      %v3700 = vpack.c.b16 %v3672, %v3671
      %v3701 = vpack.c.b16 %v3674, %v3673
      %v3702 = vpack.c.b16 %v3676, %v3675
      %v3703 = vpack.c.b16 %v3678, %v3677
      %v3704 = vpack.c.b16 %v3680, %v3679
      %v3705 = vpack.c.b16 %v3682, %v3681
      %v3706 = vpack.c.b16 %v3684, %v3683
      %v3707 = vpack.c.b16 %v3686, %v3685
      %v3708 = vpack.c.b16 %v3688, %v3687
      %v3709 = vpack.c.b16 %v3690, %v3689
      %v3710 = vpack.c.b16 %v3692, %v3691
      %v3711 = vpack.c.b16 %v3694, %v3693
      %v3712 = vpack.c.b16 %v3696, %v3695
      %3713 = vrot.lane.b32.xlu0 %v3697, 4
      %v3714 = vpop.permute.xlu0 %3713
      %3715 = vrot.lane.b32.xlu0 %v3698, 4
      %v3716 = vpop.permute.xlu0 %3715
      %3717 = vrot.lane.b32.xlu0 %v3699, 4
      %v3718 = vpop.permute.xlu0 %3717
      %3719 = vrot.lane.b32.xlu0 %v3700, 4
      %v3720 = vpop.permute.xlu0 %3719
      %3721 = vrot.lane.b32.xlu0 %v3701, 4
      %v3722 = vpop.permute.xlu0 %3721
      %3723 = vrot.lane.b32.xlu0 %v3702, 4
      %v3724 = vpop.permute.xlu0 %3723
      %3725 = vrot.lane.b32.xlu0 %v3703, 4
      %v3726 = vpop.permute.xlu0 %3725
      %3727 = vrot.lane.b32.xlu0 %v3704, 4
      %v3728 = vpop.permute.xlu0 %3727
      %3729 = vrot.lane.b32.xlu0 %v3705, 4
      %v3730 = vpop.permute.xlu0 %3729
      %3731 = vrot.lane.b32.xlu0 %v3706, 4
      %v3732 = vpop.permute.xlu0 %3731
      %3733 = vrot.lane.b32.xlu0 %v3707, 4
      %v3734 = vpop.permute.xlu0 %3733
      %3735 = vrot.lane.b32.xlu0 %v3708, 4
      %v3736 = vpop.permute.xlu0 %3735
      %3737 = vrot.lane.b32.xlu0 %v3709, 4
      %v3738 = vpop.permute.xlu0 %3737
      %3739 = vrot.lane.b32.xlu0 %v3710, 4
      %v3740 = vpop.permute.xlu0 %3739
      %3741 = vrot.lane.b32.xlu0 %v3711, 4
      %v3742 = vpop.permute.xlu0 %3741
      %3743 = vrot.lane.b32.xlu0 %v3712, 4
      %v3744 = vpop.permute.xlu0 %3743
      %v3745 = vunpack.c.l.b16 %v3492
      %v3746 = vunpack.c.l.b16 %v3495
      %v3747 = vunpack.c.l.b16 %v3499
      %v3748 = vunpack.c.l.b16 %v3502
      %v3749 = vunpack.c.l.b16 %v3506
      %v3750 = vunpack.c.l.b16 %v3509
      %v3751 = vunpack.c.l.b16 %v3513
      %v3752 = vunpack.c.l.b16 %v3516
      %v3753 = vunpack.c.l.b16 %v3520
      %v3754 = vunpack.c.l.b16 %v3523
      %v3755 = vunpack.c.l.b16 %v3527
      %v3756 = vunpack.c.l.b16 %v3530
      %v3757 = vunpack.c.l.b16 %v3534
      %v3758 = vunpack.c.l.b16 %v3537
      %v3759 = vunpack.c.l.b16 %v3541
      %v3760 = vunpack.c.l.b16 %v3544
      %v3761 = vunpack.c.l.b16 %v3548
      %v3762 = vunpack.c.l.b16 %v3551
      %v3763 = vunpack.c.l.b16 %v3555
      %v3764 = vunpack.c.l.b16 %v3558
      %v3765 = vunpack.c.l.b16 %v3562
      %v3766 = vunpack.c.l.b16 %v3565
      %v3767 = vunpack.c.l.b16 %v3569
      %v3768 = vunpack.c.l.b16 %v3572
      %v3769 = vunpack.c.l.b16 %v3576
      %v3770 = vunpack.c.l.b16 %v3579
      %v3771 = vunpack.c.l.b16 %v3583
      %v3772 = vunpack.c.l.b16 %v3586
      %v3773 = vunpack.c.l.b16 %v3590
      %v3774 = vunpack.c.l.b16 %v3593
      %v3775 = vunpack.c.l.b16 %v3597
      %v3776 = vunpack.c.l.b16 %v3600
      %v3777 = vpack.c.b16 %v3746, %v3745
      %v3778 = vpack.c.b16 %v3748, %v3747
      %v3779 = vpack.c.b16 %v3750, %v3749
      %v3780 = vpack.c.b16 %v3752, %v3751
      %v3781 = vpack.c.b16 %v3754, %v3753
      %v3782 = vpack.c.b16 %v3756, %v3755
      %v3783 = vpack.c.b16 %v3758, %v3757
      %v3784 = vpack.c.b16 %v3760, %v3759
      %v3785 = vpack.c.b16 %v3762, %v3761
      %v3786 = vpack.c.b16 %v3764, %v3763
      %v3787 = vpack.c.b16 %v3766, %v3765
      %v3788 = vpack.c.b16 %v3768, %v3767
      %v3789 = vpack.c.b16 %v3770, %v3769
      %v3790 = vpack.c.b16 %v3772, %v3771
      %v3791 = vpack.c.b16 %v3774, %v3773
      %v3792 = vpack.c.b16 %v3776, %v3775
      %3793 = vrot.lane.b32.xlu0 %v3777, 8
      %v3794 = vpop.permute.xlu0 %3793
      %3795 = vrot.lane.b32.xlu0 %v3778, 8
      %v3796 = vpop.permute.xlu0 %3795
      %3797 = vrot.lane.b32.xlu0 %v3779, 8
      %v3798 = vpop.permute.xlu0 %3797
      %3799 = vrot.lane.b32.xlu0 %v3780, 8
      %v3800 = vpop.permute.xlu0 %3799
      %3801 = vrot.lane.b32.xlu0 %v3781, 8
      %v3802 = vpop.permute.xlu0 %3801
      %3803 = vrot.lane.b32.xlu0 %v3782, 8
      %v3804 = vpop.permute.xlu0 %3803
      %3805 = vrot.lane.b32.xlu0 %v3783, 8
      %v3806 = vpop.permute.xlu0 %3805
      %3807 = vrot.lane.b32.xlu0 %v3784, 8
      %v3808 = vpop.permute.xlu0 %3807
      %3809 = vrot.lane.b32.xlu0 %v3785, 8
      %v3810 = vpop.permute.xlu0 %3809
      %3811 = vrot.lane.b32.xlu0 %v3786, 8
      %v3812 = vpop.permute.xlu0 %3811
      %3813 = vrot.lane.b32.xlu0 %v3787, 8
      %v3814 = vpop.permute.xlu0 %3813
      %3815 = vrot.lane.b32.xlu0 %v3788, 8
      %v3816 = vpop.permute.xlu0 %3815
      %3817 = vrot.lane.b32.xlu0 %v3789, 8
      %v3818 = vpop.permute.xlu0 %3817
      %3819 = vrot.lane.b32.xlu0 %v3790, 8
      %v3820 = vpop.permute.xlu0 %3819
      %3821 = vrot.lane.b32.xlu0 %v3791, 8
      %v3822 = vpop.permute.xlu0 %3821
      %3823 = vrot.lane.b32.xlu0 %v3792, 8
      %v3824 = vpop.permute.xlu0 %3823
      %v3827 = vsel %vm1589, %v3649, %v3714
      %v3830 = vsel %vm1589, %v3650, %v3716
      %v3833 = vsel %vm1589, %v3651, %v3718
      %v3836 = vsel %vm1589, %v3652, %v3720
      %v3839 = vsel %vm1589, %v3653, %v3722
      %v3842 = vsel %vm1589, %v3654, %v3724
      %v3845 = vsel %vm1589, %v3655, %v3726
      %v3848 = vsel %vm1589, %v3656, %v3728
      %v3851 = vsel %vm1589, %v3657, %v3730
      %v3854 = vsel %vm1589, %v3658, %v3732
      %v3857 = vsel %vm1589, %v3659, %v3734
      %v3860 = vsel %vm1589, %v3660, %v3736
      %v3863 = vsel %vm1589, %v3661, %v3738
      %v3866 = vsel %vm1589, %v3662, %v3740
      %v3869 = vsel %vm1589, %v3663, %v3742
      %v3872 = vsel %vm1589, %v3664, %v3744
      %v3874 = vsel %vm1638, %v3827, %v3794
      %v3876 = vsel %vm1638, %v3830, %v3796
      %v3878 = vsel %vm1638, %v3833, %v3798
      %v3880 = vsel %vm1638, %v3836, %v3800
      %v3882 = vsel %vm1638, %v3839, %v3802
      %v3884 = vsel %vm1638, %v3842, %v3804
      %v3886 = vsel %vm1638, %v3845, %v3806
      %v3888 = vsel %vm1638, %v3848, %v3808
      %v3890 = vsel %vm1638, %v3851, %v3810
      %v3892 = vsel %vm1638, %v3854, %v3812
      %v3894 = vsel %vm1638, %v3857, %v3814
      %v3896 = vsel %vm1638, %v3860, %v3816
      %v3898 = vsel %vm1638, %v3863, %v3818
      %v3900 = vsel %vm1638, %v3866, %v3820
      %v3902 = vsel %vm1638, %v3869, %v3822
      %v3904 = vsel %vm1638, %v3872, %v3824
      %s3905 = scalar_lea.vmem %s1, 16
      %v3906 = vld [vmem:[%s3905] sm:$0xf]
      %v3907 = vld [vmem:[%s3905 + $0x4] sm:$0x3]
      %v3910 = vunpack.c.l.b16 %v3906
      %v3911 = vunpack.c.l.b16 %v3907
      %v3912 = vpack.c.b16 %v3911, %v3910
      %v3913 = vsel %vm2593, %v3874, 0
      %v3915 = vsel %vm2593, %v3876, 0
      %v3917 = vsel %vm2593, %v3878, 0
      %v3919 = vsel %vm2593, %v3880, 0
      %v3921 = vsel %vm2593, %v3882, 0
      %v3923 = vsel %vm2593, %v3884, 0
      %v3925 = vsel %vm2593, %v3886, 0
      %v3927 = vsel %vm2593, %v3888, 0
      %v3929 = vsel %vm2593, %v3890, 0
      %v3931 = vsel %vm2593, %v3892, 0
      %v3933 = vsel %vm2593, %v3894, 0
      %v3935 = vsel %vm2593, %v3896, 0
      %v3937 = vsel %vm2593, %v3898, 0
      %v3939 = vsel %vm2593, %v3900, 0
      %v3941 = vsel %vm2593, %v3902, 0
      %v3943 = vsel %vm2593, %v3904, 0
      %v3946 = vsel %vm2626, %v3912, 0
      %3948 = vmatprep.subr.bf16.mxu0 0
      %3949 = vmatpush1.bf16.msra.mxu0 0
      %3950 = vmatprep.subr.bf16.mxu0 0
      %3951 = vmatpush1.bf16.msra.mxu0 0
      %3952 = vmatprep.subr.bf16.mxu0 0
      %3953 = vmatpush1.bf16.msra.mxu0 0
      %3954 = vmatprep.subr.bf16.mxu0 0
      %3955 = vmatpush1.bf16.msra.mxu0 0
      %3956 = vmatprep.subr.bf16.mxu0 0
      %3957 = vmatpush1.bf16.msra.mxu0 0
      %3958 = vmatprep.subr.bf16.mxu0 0
      %3959 = vmatpush1.bf16.msra.mxu0 0
      %3960 = vmatprep.subr.bf16.mxu0 0
      %3961 = vmatpush1.bf16.msra.mxu0 0
      %3962 = vmatprep.subr.bf16.mxu0 0
      %3963 = vmatpush1.bf16.msra.mxu0 %v3946
      %3964 = vmatprep.subr.bf16.mxu0 0
      %3965 = vmatpush2.bf16.msra.mxu0 0
      %3966 = vmatprep.subr.bf16.mxu0 0
      %3967 = vmatpush2.bf16.msra.mxu0 0
      %3968 = vmatprep.subr.bf16.mxu0 0
      %3969 = vmatpush2.bf16.msra.mxu0 0
      %3970 = vmatprep.subr.bf16.mxu0 0
      %3971 = vmatpush2.bf16.msra.mxu0 0
      %3972 = vmatprep.subr.bf16.mxu0 0
      %3973 = vmatpush2.bf16.msra.mxu0 0
      %3974 = vmatprep.subr.bf16.mxu0 0
      %3975 = vmatpush2.bf16.msra.mxu0 0
      %3976 = vmatprep.subr.bf16.mxu0 0
      %3977 = vmatpush2.bf16.msra.mxu0 0
      %3978 = vmatprep.subr.bf16.mxu0 0
      %3979 = vmatpush2.bf16.msra.mxu0 0
      %3980 = vmatprep.mubr.bf16.mxu0 0
      %3981 = vmatmul.mubr.bf16.gmra.mxu0 %v3913
      %v3982 = vpop.f32.mrf.mxu0
      %v3983 = vadd.f32 0.0, %v3982
      %v3984 = vpop.f32.mrf.mxu0
      %v3985 = vpop.f32.mrf.mxu0
      %v3986 = vadd.f32 0.0, %v3985
      %v3987 = vpop.f32.mrf.mxu0
      %3988 = vmatprep.mubr.bf16.mxu0 0
      %3989 = vmatmul.mubr.bf16.gmra.mxu0 %v3915
      %v3990 = vpop.f32.mrf.mxu0
      %v3991 = vadd.f32 0.0, %v3990
      %v3992 = vpop.f32.mrf.mxu0
      %v3993 = vpop.f32.mrf.mxu0
      %v3994 = vadd.f32 0.0, %v3993
      %v3995 = vpop.f32.mrf.mxu0
      %3996 = vmatprep.mubr.bf16.mxu0 0
      %3997 = vmatmul.mubr.bf16.gmra.mxu0 %v3917
      %v3998 = vpop.f32.mrf.mxu0
      %v3999 = vadd.f32 0.0, %v3998
      %v4000 = vpop.f32.mrf.mxu0
      %v4001 = vpop.f32.mrf.mxu0
      %v4002 = vadd.f32 0.0, %v4001
      %v4003 = vpop.f32.mrf.mxu0
      %4004 = vmatprep.mubr.bf16.mxu0 0
      %4005 = vmatmul.mubr.bf16.gmra.mxu0 %v3919
      %v4006 = vpop.f32.mrf.mxu0
      %v4007 = vadd.f32 0.0, %v4006
      %v4008 = vpop.f32.mrf.mxu0
      %v4009 = vpop.f32.mrf.mxu0
      %v4010 = vadd.f32 0.0, %v4009
      %v4011 = vpop.f32.mrf.mxu0
      %4012 = vmatprep.mubr.bf16.mxu0 0
      %4013 = vmatmul.mubr.bf16.gmra.mxu0 %v3921
      %v4014 = vpop.f32.mrf.mxu0
      %v4015 = vadd.f32 0.0, %v4014
      %v4016 = vpop.f32.mrf.mxu0
      %v4017 = vpop.f32.mrf.mxu0
      %v4018 = vadd.f32 0.0, %v4017
      %v4019 = vpop.f32.mrf.mxu0
      %4020 = vmatprep.mubr.bf16.mxu0 0
      %4021 = vmatmul.mubr.bf16.gmra.mxu0 %v3923
      %v4022 = vpop.f32.mrf.mxu0
      %v4023 = vadd.f32 0.0, %v4022
      %v4024 = vpop.f32.mrf.mxu0
      %v4025 = vpop.f32.mrf.mxu0
      %v4026 = vadd.f32 0.0, %v4025
      %v4027 = vpop.f32.mrf.mxu0
      %4028 = vmatprep.mubr.bf16.mxu0 0
      %4029 = vmatmul.mubr.bf16.gmra.mxu0 %v3925
      %v4030 = vpop.f32.mrf.mxu0
      %v4031 = vadd.f32 0.0, %v4030
      %v4032 = vpop.f32.mrf.mxu0
      %v4033 = vpop.f32.mrf.mxu0
      %v4034 = vadd.f32 0.0, %v4033
      %v4035 = vpop.f32.mrf.mxu0
      %4036 = vmatprep.mubr.bf16.mxu0 0
      %4037 = vmatmul.mubr.bf16.gmra.mxu0 %v3927
      %v4038 = vpop.f32.mrf.mxu0
      %v4039 = vadd.f32 0.0, %v4038
      %v4040 = vpop.f32.mrf.mxu0
      %v4041 = vpop.f32.mrf.mxu0
      %v4042 = vadd.f32 0.0, %v4041
      %v4043 = vpop.f32.mrf.mxu0
      %4044 = vmatprep.mubr.bf16.mxu0 0
      %4045 = vmatmul.mubr.bf16.gmra.mxu0 %v3929
      %v4046 = vpop.f32.mrf.mxu0
      %v4047 = vadd.f32 0.0, %v4046
      %v4048 = vpop.f32.mrf.mxu0
      %v4049 = vpop.f32.mrf.mxu0
      %v4050 = vadd.f32 0.0, %v4049
      %v4051 = vpop.f32.mrf.mxu0
      %4052 = vmatprep.mubr.bf16.mxu0 0
      %4053 = vmatmul.mubr.bf16.gmra.mxu0 %v3931
      %v4054 = vpop.f32.mrf.mxu0
      %v4055 = vadd.f32 0.0, %v4054
      %v4056 = vpop.f32.mrf.mxu0
      %v4057 = vpop.f32.mrf.mxu0
      %v4058 = vadd.f32 0.0, %v4057
      %v4059 = vpop.f32.mrf.mxu0
      %4060 = vmatprep.mubr.bf16.mxu0 0
      %4061 = vmatmul.mubr.bf16.gmra.mxu0 %v3933
      %v4062 = vpop.f32.mrf.mxu0
      %v4063 = vadd.f32 0.0, %v4062
      %v4064 = vpop.f32.mrf.mxu0
      %v4065 = vpop.f32.mrf.mxu0
      %v4066 = vadd.f32 0.0, %v4065
      %v4067 = vpop.f32.mrf.mxu0
      %4068 = vmatprep.mubr.bf16.mxu0 0
      %4069 = vmatmul.mubr.bf16.gmra.mxu0 %v3935
      %v4070 = vpop.f32.mrf.mxu0
      %v4071 = vadd.f32 0.0, %v4070
      %v4072 = vpop.f32.mrf.mxu0
      %v4073 = vpop.f32.mrf.mxu0
      %v4074 = vadd.f32 0.0, %v4073
      %v4075 = vpop.f32.mrf.mxu0
      %4076 = vmatprep.mubr.bf16.mxu0 0
      %4077 = vmatmul.mubr.bf16.gmra.mxu0 %v3937
      %v4078 = vpop.f32.mrf.mxu0
      %v4079 = vadd.f32 0.0, %v4078
      %v4080 = vpop.f32.mrf.mxu0
      %v4081 = vpop.f32.mrf.mxu0
      %v4082 = vadd.f32 0.0, %v4081
      %v4083 = vpop.f32.mrf.mxu0
      %4084 = vmatprep.mubr.bf16.mxu0 0
      %4085 = vmatmul.mubr.bf16.gmra.mxu0 %v3939
      %v4086 = vpop.f32.mrf.mxu0
      %v4087 = vadd.f32 0.0, %v4086
      %v4088 = vpop.f32.mrf.mxu0
      %v4089 = vpop.f32.mrf.mxu0
      %v4090 = vadd.f32 0.0, %v4089
      %v4091 = vpop.f32.mrf.mxu0
      %4092 = vmatprep.mubr.bf16.mxu0 0
      %4093 = vmatmul.mubr.bf16.gmra.mxu0 %v3941
      %v4094 = vpop.f32.mrf.mxu0
      %v4095 = vadd.f32 0.0, %v4094
      %v4096 = vpop.f32.mrf.mxu0
      %v4097 = vpop.f32.mrf.mxu0
      %v4098 = vadd.f32 0.0, %v4097
      %v4099 = vpop.f32.mrf.mxu0
      %4100 = vmatprep.mubr.bf16.mxu0 0
      %4101 = vmatmul.mubr.bf16.gmra.mxu0 %v3943
      %v4102 = vpop.f32.mrf.mxu0
      %v4103 = vadd.f32 0.0, %v4102
      %v4104 = vpop.f32.mrf.mxu0
      %v4105 = vpop.f32.mrf.mxu0
      %v4106 = vadd.f32 0.0, %v4105
      %v4107 = vpop.f32.mrf.mxu0
      %4108 = vdwg.mxu0
      %v4109 = vadd.f32 %v2866, %v3983
      %v4110 = vadd.f32 %v2869, %v3986
      %v4111 = vadd.f32 %v2874, %v3991
      %v4112 = vadd.f32 %v2877, %v3994
      %v4113 = vadd.f32 %v2882, %v3999
      %v4114 = vadd.f32 %v2885, %v4002
      %v4115 = vadd.f32 %v2890, %v4007
      %v4116 = vadd.f32 %v2893, %v4010
      %v4117 = vadd.f32 %v2898, %v4015
      %v4118 = vadd.f32 %v2901, %v4018
      %v4119 = vadd.f32 %v2906, %v4023
      %v4120 = vadd.f32 %v2909, %v4026
      %v4121 = vadd.f32 %v2914, %v4031
      %v4122 = vadd.f32 %v2917, %v4034
      %v4123 = vadd.f32 %v2922, %v4039
      %v4124 = vadd.f32 %v2925, %v4042
      %v4125 = vadd.f32 %v2930, %v4047
      %v4126 = vadd.f32 %v2933, %v4050
      %v4127 = vadd.f32 %v2938, %v4055
      %v4128 = vadd.f32 %v2941, %v4058
      %v4129 = vadd.f32 %v2946, %v4063
      %v4130 = vadd.f32 %v2949, %v4066
      %v4131 = vadd.f32 %v2954, %v4071
      %v4132 = vadd.f32 %v2957, %v4074
      %v4133 = vadd.f32 %v2962, %v4079
      %v4134 = vadd.f32 %v2965, %v4082
      %v4135 = vadd.f32 %v2970, %v4087
      %v4136 = vadd.f32 %v2973, %v4090
      %v4137 = vadd.f32 %v2978, %v4095
      %v4138 = vadd.f32 %v2981, %v4098
      %v4139 = vadd.f32 %v2986, %v4103
      %v4140 = vadd.f32 %v2989, %v4106
      %v4141 = vld [vmem:[%s2] sm:$0x1]
      %v4143 = vlaneseq
      %v4144 = vshrl.u32 %v4143, 7
      %v4145 = vsub.s32 0, %v4144
      %v4146 = vrot.slane %v4141, %v4145
      %v4148 = vadd.f32 %v4109, %v4146
      %v4149 = vadd.f32 %v4110, %v4146
      %v4150 = vadd.f32 %v4111, %v4146
      %v4151 = vadd.f32 %v4112, %v4146
      %v4152 = vadd.f32 %v4113, %v4146
      %v4153 = vadd.f32 %v4114, %v4146
      %v4154 = vadd.f32 %v4115, %v4146
      %v4155 = vadd.f32 %v4116, %v4146
      %v4156 = vadd.f32 %v4117, %v4146
      %v4157 = vadd.f32 %v4118, %v4146
      %v4158 = vadd.f32 %v4119, %v4146
      %v4159 = vadd.f32 %v4120, %v4146
      %v4160 = vadd.f32 %v4121, %v4146
      %v4161 = vadd.f32 %v4122, %v4146
      %v4162 = vadd.f32 %v4123, %v4146
      %v4163 = vadd.f32 %v4124, %v4146
      %v4164 = vadd.f32 %v4125, %v4146
      %v4165 = vadd.f32 %v4126, %v4146
      %v4166 = vadd.f32 %v4127, %v4146
      %v4167 = vadd.f32 %v4128, %v4146
      %v4168 = vadd.f32 %v4129, %v4146
      %v4169 = vadd.f32 %v4130, %v4146
      %v4170 = vadd.f32 %v4131, %v4146
      %v4171 = vadd.f32 %v4132, %v4146
      %v4172 = vadd.f32 %v4133, %v4146
      %v4173 = vadd.f32 %v4134, %v4146
      %v4174 = vadd.f32 %v4135, %v4146
      %v4175 = vadd.f32 %v4136, %v4146
      %v4176 = vadd.f32 %v4137, %v4146
      %v4177 = vadd.f32 %v4138, %v4146
      %v4178 = vadd.f32 %v4139, %v4146
      %v4179 = vadd.f32 %v4140, %v4146
      %v4180 = vmax.f32 %v4148, 0.0
      %v4181 = vmax.f32 %v4149, 0.0
      %v4182 = vmax.f32 %v4150, 0.0
      %v4183 = vmax.f32 %v4151, 0.0
      %v4184 = vmax.f32 %v4152, 0.0
      %v4185 = vmax.f32 %v4153, 0.0
      %v4186 = vmax.f32 %v4154, 0.0
      %v4187 = vmax.f32 %v4155, 0.0
      %v4188 = vmax.f32 %v4156, 0.0
      %v4189 = vmax.f32 %v4157, 0.0
      %v4190 = vmax.f32 %v4158, 0.0
      %v4191 = vmax.f32 %v4159, 0.0
      %v4192 = vmax.f32 %v4160, 0.0
      %v4193 = vmax.f32 %v4161, 0.0
      %v4194 = vmax.f32 %v4162, 0.0
      %v4195 = vmax.f32 %v4163, 0.0
      %v4196 = vmax.f32 %v4164, 0.0
      %v4197 = vmax.f32 %v4165, 0.0
      %v4198 = vmax.f32 %v4166, 0.0
      %v4199 = vmax.f32 %v4167, 0.0
      %v4200 = vmax.f32 %v4168, 0.0
      %v4201 = vmax.f32 %v4169, 0.0
      %v4202 = vmax.f32 %v4170, 0.0
      %v4203 = vmax.f32 %v4171, 0.0
      %v4204 = vmax.f32 %v4172, 0.0
      %v4205 = vmax.f32 %v4173, 0.0
      %v4206 = vmax.f32 %v4174, 0.0
      %v4207 = vmax.f32 %v4175, 0.0
      %v4208 = vmax.f32 %v4176, 0.0
      %v4209 = vmax.f32 %v4177, 0.0
      %v4210 = vmax.f32 %v4178, 0.0
      %v4211 = vmax.f32 %v4179, 0.0
      %v4212 = vpack.c.bf16 %v4181, %v4180
      %v4213 = vpack.c.bf16 %v4183, %v4182
      %v4214 = vpack.c.bf16 %v4185, %v4184
      %v4215 = vpack.c.bf16 %v4187, %v4186
      %v4216 = vpack.c.bf16 %v4189, %v4188
      %v4217 = vpack.c.bf16 %v4191, %v4190
      %v4218 = vpack.c.bf16 %v4193, %v4192
      %v4219 = vpack.c.bf16 %v4195, %v4194
      %v4220 = vpack.c.bf16 %v4197, %v4196
      %v4221 = vpack.c.bf16 %v4199, %v4198
      %v4222 = vpack.c.bf16 %v4201, %v4200
      %v4223 = vpack.c.bf16 %v4203, %v4202
      %v4224 = vpack.c.bf16 %v4205, %v4204
      %v4225 = vpack.c.bf16 %v4207, %v4206
      %v4226 = vpack.c.bf16 %v4209, %v4208
      %v4227 = vpack.c.bf16 %v4211, %v4210
      %4228 = vst.msk [vmem:[#allocation2] sm:$0xf] %vm258, 0
      %4229 = vst.msk [vmem:[#allocation2 + $0x4] sm:$0xf] %vm258, 0
      %4230 = vst.msk [vmem:[#allocation2 + $0x8] sm:$0x1] %vm261, 0
      %4231 = vst.msk [vmem:[%s263] sm:$0xf] %vm258, 0
      %4232 = vst.msk [vmem:[%s263 + $0x4] sm:$0xf] %vm258, 0
      %4233 = vst.msk [vmem:[%s263 + $0x8] sm:$0x1] %vm261, 0
      %v4235 = vshrl.u32 %v4212, 16
      %v4237 = vrot.slane %v4235, 7
      %v4238 = vshll.u32 %v4212, 16
      %v4240 = vor.u32 %v4237, %v4238
      %v4242 = vshrl.u32 %v4213, 16
      %v4244 = vrot.slane %v4242, 7
      %v4245 = vshll.u32 %v4213, 16
      %v4247 = vor.u32 %v4244, %v4245
      %v4249 = vshrl.u32 %v4214, 16
      %v4251 = vrot.slane %v4249, 7
      %v4252 = vshll.u32 %v4214, 16
      %v4254 = vor.u32 %v4251, %v4252
      %v4256 = vshrl.u32 %v4215, 16
      %v4258 = vrot.slane %v4256, 7
      %v4259 = vshll.u32 %v4215, 16
      %v4261 = vor.u32 %v4258, %v4259
      %v4263 = vshrl.u32 %v4216, 16
      %v4265 = vrot.slane %v4263, 7
      %v4266 = vshll.u32 %v4216, 16
      %v4268 = vor.u32 %v4265, %v4266
      %v4270 = vshrl.u32 %v4217, 16
      %v4272 = vrot.slane %v4270, 7
      %v4273 = vshll.u32 %v4217, 16
      %v4275 = vor.u32 %v4272, %v4273
      %v4277 = vshrl.u32 %v4218, 16
      %v4279 = vrot.slane %v4277, 7
      %v4280 = vshll.u32 %v4218, 16
      %v4282 = vor.u32 %v4279, %v4280
      %v4284 = vshrl.u32 %v4219, 16
      %v4286 = vrot.slane %v4284, 7
      %v4287 = vshll.u32 %v4219, 16
      %v4289 = vor.u32 %v4286, %v4287
      %v4291 = vshrl.u32 %v4220, 16
      %v4293 = vrot.slane %v4291, 7
      %v4294 = vshll.u32 %v4220, 16
      %v4296 = vor.u32 %v4293, %v4294
      %v4298 = vshrl.u32 %v4221, 16
      %v4300 = vrot.slane %v4298, 7
      %v4301 = vshll.u32 %v4221, 16
      %v4303 = vor.u32 %v4300, %v4301
      %v4305 = vshrl.u32 %v4222, 16
      %v4307 = vrot.slane %v4305, 7
      %v4308 = vshll.u32 %v4222, 16
      %v4310 = vor.u32 %v4307, %v4308
      %v4312 = vshrl.u32 %v4223, 16
      %v4314 = vrot.slane %v4312, 7
      %v4315 = vshll.u32 %v4223, 16
      %v4317 = vor.u32 %v4314, %v4315
      %v4319 = vshrl.u32 %v4224, 16
      %v4321 = vrot.slane %v4319, 7
      %v4322 = vshll.u32 %v4224, 16
      %v4324 = vor.u32 %v4321, %v4322
      %v4326 = vshrl.u32 %v4225, 16
      %v4328 = vrot.slane %v4326, 7
      %v4329 = vshll.u32 %v4225, 16
      %v4331 = vor.u32 %v4328, %v4329
      %v4333 = vshrl.u32 %v4226, 16
      %v4335 = vrot.slane %v4333, 7
      %v4336 = vshll.u32 %v4226, 16
      %v4338 = vor.u32 %v4335, %v4336
      %v4340 = vshrl.u32 %v4227, 16
      %v4342 = vrot.slane %v4340, 7
      %v4343 = vshll.u32 %v4227, 16
      %v4345 = vor.u32 %v4342, %v4343
      %v4378 = vsel %vm493, 0, %v4240
      %v4379 = vsel %vm493, 0, %v4247
      %v4380 = vsel %vm493, 0, %v4254
      %v4381 = vsel %vm493, 0, %v4261
      %v4382 = vsel %vm493, 0, %v4268
      %v4383 = vsel %vm493, 0, %v4275
      %v4384 = vsel %vm493, 0, %v4282
      %v4385 = vsel %vm493, 0, %v4289
      %v4386 = vsel %vm493, 0, %v4296
      %v4387 = vsel %vm493, 0, %v4303
      %v4388 = vsel %vm493, 0, %v4310
      %v4389 = vsel %vm493, 0, %v4317
      %v4390 = vsel %vm493, 0, %v4324
      %v4391 = vsel %vm493, 0, %v4331
      %v4392 = vsel %vm493, 0, %v4338
      %v4393 = vsel %vm493, 0, %v4345
      %v4394 = vsel %vm493, %v4237, 0
      %v4395 = vsel %vm493, %v4244, 0
      %v4396 = vsel %vm493, %v4251, 0
      %v4397 = vsel %vm493, %v4258, 0
      %v4398 = vsel %vm493, %v4265, 0
      %v4399 = vsel %vm493, %v4272, 0
      %v4400 = vsel %vm493, %v4279, 0
      %v4401 = vsel %vm493, %v4286, 0
      %v4402 = vsel %vm493, %v4293, 0
      %v4403 = vsel %vm493, %v4300, 0
      %v4404 = vsel %vm493, %v4307, 0
      %v4405 = vsel %vm493, %v4314, 0
      %v4406 = vsel %vm493, %v4321, 0
      %v4407 = vsel %vm493, %v4328, 0
      %v4408 = vsel %vm493, %v4335, 0
      %v4409 = vsel %vm493, %v4342, 0
      %v4442 = vunpack.c.l.b16 %v4378
      %v4443 = vunpack.c.h.b16 %v4378
      %v4444 = vunpack.c.l.b16 %v4394
      %v4445 = vunpack.c.l.b16 %v4379
      %v4446 = vunpack.c.h.b16 %v4379
      %v4447 = vunpack.c.l.b16 %v4395
      %v4448 = vunpack.c.l.b16 %v4380
      %v4449 = vunpack.c.h.b16 %v4380
      %v4450 = vunpack.c.l.b16 %v4396
      %v4451 = vunpack.c.l.b16 %v4381
      %v4452 = vunpack.c.h.b16 %v4381
      %v4453 = vunpack.c.l.b16 %v4397
      %v4454 = vunpack.c.l.b16 %v4382
      %v4455 = vunpack.c.h.b16 %v4382
      %v4456 = vunpack.c.l.b16 %v4398
      %v4457 = vunpack.c.l.b16 %v4383
      %v4458 = vunpack.c.h.b16 %v4383
      %v4459 = vunpack.c.l.b16 %v4399
      %v4460 = vunpack.c.l.b16 %v4384
      %v4461 = vunpack.c.h.b16 %v4384
      %v4462 = vunpack.c.l.b16 %v4400
      %v4463 = vunpack.c.l.b16 %v4385
      %v4464 = vunpack.c.h.b16 %v4385
      %v4465 = vunpack.c.l.b16 %v4401
      %v4466 = vunpack.c.l.b16 %v4386
      %v4467 = vunpack.c.h.b16 %v4386
      %v4468 = vunpack.c.l.b16 %v4402
      %v4469 = vunpack.c.l.b16 %v4387
      %v4470 = vunpack.c.h.b16 %v4387
      %v4471 = vunpack.c.l.b16 %v4403
      %v4472 = vunpack.c.l.b16 %v4388
      %v4473 = vunpack.c.h.b16 %v4388
      %v4474 = vunpack.c.l.b16 %v4404
      %v4475 = vunpack.c.l.b16 %v4389
      %v4476 = vunpack.c.h.b16 %v4389
      %v4477 = vunpack.c.l.b16 %v4405
      %v4478 = vunpack.c.l.b16 %v4390
      %v4479 = vunpack.c.h.b16 %v4390
      %v4480 = vunpack.c.l.b16 %v4406
      %v4481 = vunpack.c.l.b16 %v4391
      %v4482 = vunpack.c.h.b16 %v4391
      %v4483 = vunpack.c.l.b16 %v4407
      %v4484 = vunpack.c.l.b16 %v4392
      %v4485 = vunpack.c.h.b16 %v4392
      %v4486 = vunpack.c.l.b16 %v4408
      %v4487 = vunpack.c.l.b16 %v4393
      %v4488 = vunpack.c.h.b16 %v4393
      %v4489 = vunpack.c.l.b16 %v4409
      %v4490 = vpack.c.b16 %v4442, %v4442
      %v4491 = vpack.c.b16 %v4443, %v4443
      %v4492 = vpack.c.b16 %v4444, %v4444
      %v4493 = vpack.c.b16 %v4445, %v4445
      %v4494 = vpack.c.b16 %v4446, %v4446
      %v4495 = vpack.c.b16 %v4447, %v4447
      %v4496 = vpack.c.b16 %v4448, %v4448
      %v4497 = vpack.c.b16 %v4449, %v4449
      %v4498 = vpack.c.b16 %v4450, %v4450
      %v4499 = vpack.c.b16 %v4451, %v4451
      %v4500 = vpack.c.b16 %v4452, %v4452
      %v4501 = vpack.c.b16 %v4453, %v4453
      %v4502 = vpack.c.b16 %v4454, %v4454
      %v4503 = vpack.c.b16 %v4455, %v4455
      %v4504 = vpack.c.b16 %v4456, %v4456
      %v4505 = vpack.c.b16 %v4457, %v4457
      %v4506 = vpack.c.b16 %v4458, %v4458
      %v4507 = vpack.c.b16 %v4459, %v4459
      %v4508 = vpack.c.b16 %v4460, %v4460
      %v4509 = vpack.c.b16 %v4461, %v4461
      %v4510 = vpack.c.b16 %v4462, %v4462
      %v4511 = vpack.c.b16 %v4463, %v4463
      %v4512 = vpack.c.b16 %v4464, %v4464
      %v4513 = vpack.c.b16 %v4465, %v4465
      %v4514 = vpack.c.b16 %v4466, %v4466
      %v4515 = vpack.c.b16 %v4467, %v4467
      %v4516 = vpack.c.b16 %v4468, %v4468
      %v4517 = vpack.c.b16 %v4469, %v4469
      %v4518 = vpack.c.b16 %v4470, %v4470
      %v4519 = vpack.c.b16 %v4471, %v4471
      %v4520 = vpack.c.b16 %v4472, %v4472
      %v4521 = vpack.c.b16 %v4473, %v4473
      %v4522 = vpack.c.b16 %v4474, %v4474
      %v4523 = vpack.c.b16 %v4475, %v4475
      %v4524 = vpack.c.b16 %v4476, %v4476
      %v4525 = vpack.c.b16 %v4477, %v4477
      %v4526 = vpack.c.b16 %v4478, %v4478
      %v4527 = vpack.c.b16 %v4479, %v4479
      %v4528 = vpack.c.b16 %v4480, %v4480
      %v4529 = vpack.c.b16 %v4481, %v4481
      %v4530 = vpack.c.b16 %v4482, %v4482
      %v4531 = vpack.c.b16 %v4483, %v4483
      %v4532 = vpack.c.b16 %v4484, %v4484
      %v4533 = vpack.c.b16 %v4485, %v4485
      %v4534 = vpack.c.b16 %v4486, %v4486
      %v4535 = vpack.c.b16 %v4487, %v4487
      %v4536 = vpack.c.b16 %v4488, %v4488
      %v4537 = vpack.c.b16 %v4489, %v4489
      %4586 = vst.msk [vmem:[%s702] sm:$0xf] %vm258, %v4490
      %4587 = vst.msk [vmem:[%s702 + $0x4] sm:$0xf] %vm258, %v4491
      %4588 = vst.msk [vmem:[%s702 + $0x8] sm:$0x1] %vm261, %v4492
      %4589 = vst.msk [vmem:[%s702 + $0xc] sm:$0xf] %vm258, %v4493
      %4590 = vst.msk [vmem:[%s702 + $0x10] sm:$0xf] %vm258, %v4494
      %4591 = vst.msk [vmem:[%s702 + $0x14] sm:$0x1] %vm261, %v4495
      %4592 = vst.msk [vmem:[%s702 + $0x18] sm:$0xf] %vm258, %v4496
      %4593 = vst.msk [vmem:[%s702 + $0x1c] sm:$0xf] %vm258, %v4497
      %4594 = vst.msk [vmem:[%s702 + $0x20] sm:$0x1] %vm261, %v4498
      %4595 = vst.msk [vmem:[%s702 + $0x24] sm:$0xf] %vm258, %v4499
      %4596 = vst.msk [vmem:[%s702 + $0x28] sm:$0xf] %vm258, %v4500
      %4597 = vst.msk [vmem:[%s702 + $0x2c] sm:$0x1] %vm261, %v4501
      %4598 = vst.msk [vmem:[%s702 + $0x30] sm:$0xf] %vm258, %v4502
      %4599 = vst.msk [vmem:[%s702 + $0x34] sm:$0xf] %vm258, %v4503
      %4600 = vst.msk [vmem:[%s702 + $0x38] sm:$0x1] %vm261, %v4504
      %4601 = vst.msk [vmem:[%s702 + $0x3c] sm:$0xf] %vm258, %v4505
      %4602 = vst.msk [vmem:[%s702 + $0x40] sm:$0xf] %vm258, %v4506
      %4603 = vst.msk [vmem:[%s702 + $0x44] sm:$0x1] %vm261, %v4507
      %4604 = vst.msk [vmem:[%s702 + $0x48] sm:$0xf] %vm258, %v4508
      %4605 = vst.msk [vmem:[%s702 + $0x4c] sm:$0xf] %vm258, %v4509
      %4606 = vst.msk [vmem:[%s702 + $0x50] sm:$0x1] %vm261, %v4510
      %4607 = vst.msk [vmem:[%s702 + $0x54] sm:$0xf] %vm258, %v4511
      %4608 = vst.msk [vmem:[%s702 + $0x58] sm:$0xf] %vm258, %v4512
      %4609 = vst.msk [vmem:[%s702 + $0x5c] sm:$0x1] %vm261, %v4513
      %4610 = vst.msk [vmem:[%s702 + $0x60] sm:$0xf] %vm258, %v4514
      %4611 = vst.msk [vmem:[%s702 + $0x64] sm:$0xf] %vm258, %v4515
      %4612 = vst.msk [vmem:[%s702 + $0x68] sm:$0x1] %vm261, %v4516
      %4613 = vst.msk [vmem:[%s702 + $0x6c] sm:$0xf] %vm258, %v4517
      %4614 = vst.msk [vmem:[%s702 + $0x70] sm:$0xf] %vm258, %v4518
      %4615 = vst.msk [vmem:[%s702 + $0x74] sm:$0x1] %vm261, %v4519
      %4616 = vst.msk [vmem:[%s702 + $0x78] sm:$0xf] %vm258, %v4520
      %4617 = vst.msk [vmem:[%s702 + $0x7c] sm:$0xf] %vm258, %v4521
      %4618 = vst.msk [vmem:[%s702 + $0x80] sm:$0x1] %vm261, %v4522
      %4619 = vst.msk [vmem:[%s702 + $0x84] sm:$0xf] %vm258, %v4523
      %4620 = vst.msk [vmem:[%s702 + $0x88] sm:$0xf] %vm258, %v4524
      %4621 = vst.msk [vmem:[%s702 + $0x8c] sm:$0x1] %vm261, %v4525
      %4622 = vst.msk [vmem:[%s702 + $0x90] sm:$0xf] %vm258, %v4526
      %4623 = vst.msk [vmem:[%s702 + $0x94] sm:$0xf] %vm258, %v4527
      %4624 = vst.msk [vmem:[%s702 + $0x98] sm:$0x1] %vm261, %v4528
      %4625 = vst.msk [vmem:[%s702 + $0x9c] sm:$0xf] %vm258, %v4529
      %4626 = vst.msk [vmem:[%s702 + $0xa0] sm:$0xf] %vm258, %v4530
      %4627 = vst.msk [vmem:[%s702 + $0xa4] sm:$0x1] %vm261, %v4531
      %4628 = vst.msk [vmem:[%s702 + $0xa8] sm:$0xf] %vm258, %v4532
      %4629 = vst.msk [vmem:[%s702 + $0xac] sm:$0xf] %vm258, %v4533
      %4630 = vst.msk [vmem:[%s702 + $0xb0] sm:$0x1] %vm261, %v4534
      %4631 = vst.msk [vmem:[%s702 + $0xb4] sm:$0xf] %vm258, %v4535
      %4632 = vst.msk [vmem:[%s702 + $0xb8] sm:$0xf] %vm258, %v4536
      %4633 = vst.msk [vmem:[%s702 + $0xbc] sm:$0x1] %vm261, %v4537
      %v4634 = vld [vmem:[#allocation2] sm:$0xf]
      %v4635 = vld [vmem:[#allocation2 + $0x4] sm:$0xf]
      %v4636 = vld [vmem:[#allocation2 + $0xc] sm:$0xf]
      %v4637 = vld [vmem:[#allocation2 + $0x10] sm:$0xf]
      %v4638 = vld [vmem:[#allocation2 + $0x18] sm:$0xf]
      %v4639 = vld [vmem:[#allocation2 + $0x1c] sm:$0xf]
      %v4640 = vld [vmem:[#allocation2 + $0x24] sm:$0xf]
      %v4641 = vld [vmem:[#allocation2 + $0x28] sm:$0xf]
      %v4642 = vld [vmem:[#allocation2 + $0x30] sm:$0xf]
      %v4643 = vld [vmem:[#allocation2 + $0x34] sm:$0xf]
      %v4644 = vld [vmem:[#allocation2 + $0x3c] sm:$0xf]
      %v4645 = vld [vmem:[#allocation2 + $0x40] sm:$0xf]
      %v4646 = vld [vmem:[#allocation2 + $0x48] sm:$0xf]
      %v4647 = vld [vmem:[#allocation2 + $0x4c] sm:$0xf]
      %v4648 = vld [vmem:[#allocation2 + $0x54] sm:$0xf]
      %v4649 = vld [vmem:[#allocation2 + $0x58] sm:$0xf]
      %v4650 = vld [vmem:[#allocation2 + $0x60] sm:$0xf]
      %v4651 = vld [vmem:[#allocation2 + $0x64] sm:$0xf]
      %v4652 = vld [vmem:[#allocation2 + $0x6c] sm:$0xf]
      %v4653 = vld [vmem:[#allocation2 + $0x70] sm:$0xf]
      %v4654 = vld [vmem:[#allocation2 + $0x78] sm:$0xf]
      %v4655 = vld [vmem:[#allocation2 + $0x7c] sm:$0xf]
      %v4656 = vld [vmem:[#allocation2 + $0x84] sm:$0xf]
      %v4657 = vld [vmem:[#allocation2 + $0x88] sm:$0xf]
      %v4658 = vld [vmem:[#allocation2 + $0x90] sm:$0xf]
      %v4659 = vld [vmem:[#allocation2 + $0x94] sm:$0xf]
      %v4660 = vld [vmem:[#allocation2 + $0x9c] sm:$0xf]
      %v4661 = vld [vmem:[#allocation2 + $0xa0] sm:$0xf]
      %v4662 = vld [vmem:[#allocation2 + $0xa8] sm:$0xf]
      %v4663 = vld [vmem:[#allocation2 + $0xac] sm:$0xf]
      %v4664 = vld [vmem:[#allocation2 + $0xb4] sm:$0xf]
      %v4665 = vld [vmem:[#allocation2 + $0xb8] sm:$0xf]
      %v4666 = vld [vmem:[#allocation2 + $0x8] sm:$0x1]
      %v4667 = vld [vmem:[#allocation2 + $0x14] sm:$0x1]
      %v4668 = vld [vmem:[#allocation2 + $0x20] sm:$0x1]
      %v4669 = vld [vmem:[#allocation2 + $0x2c] sm:$0x1]
      %v4670 = vld [vmem:[#allocation2 + $0x38] sm:$0x1]
      %v4671 = vld [vmem:[#allocation2 + $0x44] sm:$0x1]
      %v4672 = vld [vmem:[#allocation2 + $0x50] sm:$0x1]
      %v4673 = vld [vmem:[#allocation2 + $0x5c] sm:$0x1]
      %v4674 = vld [vmem:[#allocation2 + $0x68] sm:$0x1]
      %v4675 = vld [vmem:[#allocation2 + $0x74] sm:$0x1]
      %v4676 = vld [vmem:[#allocation2 + $0x80] sm:$0x1]
      %v4677 = vld [vmem:[#allocation2 + $0x8c] sm:$0x1]
      %v4678 = vld [vmem:[#allocation2 + $0x98] sm:$0x1]
      %v4679 = vld [vmem:[#allocation2 + $0xa4] sm:$0x1]
      %v4680 = vld [vmem:[#allocation2 + $0xb0] sm:$0x1]
      %v4681 = vld [vmem:[#allocation2 + $0xbc] sm:$0x1]
      %v4683 = vshrl.u32 %v4634, 16
      %v4685 = vrot.slane %v4683, 4
      %v4686 = vshll.u32 %v4634, 16
      %v4688 = vrot.slane %v4686, 5
      %v4689 = vor.u32 %v4685, %v4688
      %v4690 = vrot.slane %v4689, 4
      %v4692 = vshll.u32 %v4635, 16
      %v4694 = vrot.slane %v4692, 5
      %v4695 = vsel %vm801, %v4690, %v4694
      %v4696 = vshrl.u32 %v4635, 16
      %v4698 = vrot.slane %v4696, 4
      %v4699 = vor.u32 %v4698, %v4694
      %v4700 = vrot.slane %v4699, 4
      %v4702 = vshll.u32 %v4666, 16
      %v4704 = vrot.slane %v4702, 5
      %v4705 = vsel %vm801, %v4700, %v4704
      %v4707 = vshrl.u32 %v4636, 16
      %v4709 = vrot.slane %v4707, 4
      %v4710 = vshll.u32 %v4636, 16
      %v4712 = vrot.slane %v4710, 5
      %v4713 = vor.u32 %v4709, %v4712
      %v4714 = vrot.slane %v4713, 4
      %v4716 = vshll.u32 %v4637, 16
      %v4718 = vrot.slane %v4716, 5
      %v4719 = vsel %vm801, %v4714, %v4718
      %v4720 = vshrl.u32 %v4637, 16
      %v4722 = vrot.slane %v4720, 4
      %v4723 = vor.u32 %v4722, %v4718
      %v4724 = vrot.slane %v4723, 4
      %v4726 = vshll.u32 %v4667, 16
      %v4728 = vrot.slane %v4726, 5
      %v4729 = vsel %vm801, %v4724, %v4728
      %v4731 = vshrl.u32 %v4638, 16
      %v4733 = vrot.slane %v4731, 4
      %v4734 = vshll.u32 %v4638, 16
      %v4736 = vrot.slane %v4734, 5
      %v4737 = vor.u32 %v4733, %v4736
      %v4738 = vrot.slane %v4737, 4
      %v4740 = vshll.u32 %v4639, 16
      %v4742 = vrot.slane %v4740, 5
      %v4743 = vsel %vm801, %v4738, %v4742
      %v4744 = vshrl.u32 %v4639, 16
      %v4746 = vrot.slane %v4744, 4
      %v4747 = vor.u32 %v4746, %v4742
      %v4748 = vrot.slane %v4747, 4
      %v4750 = vshll.u32 %v4668, 16
      %v4752 = vrot.slane %v4750, 5
      %v4753 = vsel %vm801, %v4748, %v4752
      %v4755 = vshrl.u32 %v4640, 16
      %v4757 = vrot.slane %v4755, 4
      %v4758 = vshll.u32 %v4640, 16
      %v4760 = vrot.slane %v4758, 5
      %v4761 = vor.u32 %v4757, %v4760
      %v4762 = vrot.slane %v4761, 4
      %v4764 = vshll.u32 %v4641, 16
      %v4766 = vrot.slane %v4764, 5
      %v4767 = vsel %vm801, %v4762, %v4766
      %v4768 = vshrl.u32 %v4641, 16
      %v4770 = vrot.slane %v4768, 4
      %v4771 = vor.u32 %v4770, %v4766
      %v4772 = vrot.slane %v4771, 4
      %v4774 = vshll.u32 %v4669, 16
      %v4776 = vrot.slane %v4774, 5
      %v4777 = vsel %vm801, %v4772, %v4776
      %v4779 = vshrl.u32 %v4642, 16
      %v4781 = vrot.slane %v4779, 4
      %v4782 = vshll.u32 %v4642, 16
      %v4784 = vrot.slane %v4782, 5
      %v4785 = vor.u32 %v4781, %v4784
      %v4786 = vrot.slane %v4785, 4
      %v4788 = vshll.u32 %v4643, 16
      %v4790 = vrot.slane %v4788, 5
      %v4791 = vsel %vm801, %v4786, %v4790
      %v4792 = vshrl.u32 %v4643, 16
      %v4794 = vrot.slane %v4792, 4
      %v4795 = vor.u32 %v4794, %v4790
      %v4796 = vrot.slane %v4795, 4
      %v4798 = vshll.u32 %v4670, 16
      %v4800 = vrot.slane %v4798, 5
      %v4801 = vsel %vm801, %v4796, %v4800
      %v4803 = vshrl.u32 %v4644, 16
      %v4805 = vrot.slane %v4803, 4
      %v4806 = vshll.u32 %v4644, 16
      %v4808 = vrot.slane %v4806, 5
      %v4809 = vor.u32 %v4805, %v4808
      %v4810 = vrot.slane %v4809, 4
      %v4812 = vshll.u32 %v4645, 16
      %v4814 = vrot.slane %v4812, 5
      %v4815 = vsel %vm801, %v4810, %v4814
      %v4816 = vshrl.u32 %v4645, 16
      %v4818 = vrot.slane %v4816, 4
      %v4819 = vor.u32 %v4818, %v4814
      %v4820 = vrot.slane %v4819, 4
      %v4822 = vshll.u32 %v4671, 16
      %v4824 = vrot.slane %v4822, 5
      %v4825 = vsel %vm801, %v4820, %v4824
      %v4827 = vshrl.u32 %v4646, 16
      %v4829 = vrot.slane %v4827, 4
      %v4830 = vshll.u32 %v4646, 16
      %v4832 = vrot.slane %v4830, 5
      %v4833 = vor.u32 %v4829, %v4832
      %v4834 = vrot.slane %v4833, 4
      %v4836 = vshll.u32 %v4647, 16
      %v4838 = vrot.slane %v4836, 5
      %v4839 = vsel %vm801, %v4834, %v4838
      %v4840 = vshrl.u32 %v4647, 16
      %v4842 = vrot.slane %v4840, 4
      %v4843 = vor.u32 %v4842, %v4838
      %v4844 = vrot.slane %v4843, 4
      %v4846 = vshll.u32 %v4672, 16
      %v4848 = vrot.slane %v4846, 5
      %v4849 = vsel %vm801, %v4844, %v4848
      %v4851 = vshrl.u32 %v4648, 16
      %v4853 = vrot.slane %v4851, 4
      %v4854 = vshll.u32 %v4648, 16
      %v4856 = vrot.slane %v4854, 5
      %v4857 = vor.u32 %v4853, %v4856
      %v4858 = vrot.slane %v4857, 4
      %v4860 = vshll.u32 %v4649, 16
      %v4862 = vrot.slane %v4860, 5
      %v4863 = vsel %vm801, %v4858, %v4862
      %v4864 = vshrl.u32 %v4649, 16
      %v4866 = vrot.slane %v4864, 4
      %v4867 = vor.u32 %v4866, %v4862
      %v4868 = vrot.slane %v4867, 4
      %v4870 = vshll.u32 %v4673, 16
      %v4872 = vrot.slane %v4870, 5
      %v4873 = vsel %vm801, %v4868, %v4872
      %v4875 = vshrl.u32 %v4650, 16
      %v4877 = vrot.slane %v4875, 4
      %v4878 = vshll.u32 %v4650, 16
      %v4880 = vrot.slane %v4878, 5
      %v4881 = vor.u32 %v4877, %v4880
      %v4882 = vrot.slane %v4881, 4
      %v4884 = vshll.u32 %v4651, 16
      %v4886 = vrot.slane %v4884, 5
      %v4887 = vsel %vm801, %v4882, %v4886
      %v4888 = vshrl.u32 %v4651, 16
      %v4890 = vrot.slane %v4888, 4
      %v4891 = vor.u32 %v4890, %v4886
      %v4892 = vrot.slane %v4891, 4
      %v4894 = vshll.u32 %v4674, 16
      %v4896 = vrot.slane %v4894, 5
      %v4897 = vsel %vm801, %v4892, %v4896
      %v4899 = vshrl.u32 %v4652, 16
      %v4901 = vrot.slane %v4899, 4
      %v4902 = vshll.u32 %v4652, 16
      %v4904 = vrot.slane %v4902, 5
      %v4905 = vor.u32 %v4901, %v4904
      %v4906 = vrot.slane %v4905, 4
      %v4908 = vshll.u32 %v4653, 16
      %v4910 = vrot.slane %v4908, 5
      %v4911 = vsel %vm801, %v4906, %v4910
      %v4912 = vshrl.u32 %v4653, 16
      %v4914 = vrot.slane %v4912, 4
      %v4915 = vor.u32 %v4914, %v4910
      %v4916 = vrot.slane %v4915, 4
      %v4918 = vshll.u32 %v4675, 16
      %v4920 = vrot.slane %v4918, 5
      %v4921 = vsel %vm801, %v4916, %v4920
      %v4923 = vshrl.u32 %v4654, 16
      %v4925 = vrot.slane %v4923, 4
      %v4926 = vshll.u32 %v4654, 16
      %v4928 = vrot.slane %v4926, 5
      %v4929 = vor.u32 %v4925, %v4928
      %v4930 = vrot.slane %v4929, 4
      %v4932 = vshll.u32 %v4655, 16
      %v4934 = vrot.slane %v4932, 5
      %v4935 = vsel %vm801, %v4930, %v4934
      %v4936 = vshrl.u32 %v4655, 16
      %v4938 = vrot.slane %v4936, 4
      %v4939 = vor.u32 %v4938, %v4934
      %v4940 = vrot.slane %v4939, 4
      %v4942 = vshll.u32 %v4676, 16
      %v4944 = vrot.slane %v4942, 5
      %v4945 = vsel %vm801, %v4940, %v4944
      %v4947 = vshrl.u32 %v4656, 16
      %v4949 = vrot.slane %v4947, 4
      %v4950 = vshll.u32 %v4656, 16
      %v4952 = vrot.slane %v4950, 5
      %v4953 = vor.u32 %v4949, %v4952
      %v4954 = vrot.slane %v4953, 4
      %v4956 = vshll.u32 %v4657, 16
      %v4958 = vrot.slane %v4956, 5
      %v4959 = vsel %vm801, %v4954, %v4958
      %v4960 = vshrl.u32 %v4657, 16
      %v4962 = vrot.slane %v4960, 4
      %v4963 = vor.u32 %v4962, %v4958
      %v4964 = vrot.slane %v4963, 4
      %v4966 = vshll.u32 %v4677, 16
      %v4968 = vrot.slane %v4966, 5
      %v4969 = vsel %vm801, %v4964, %v4968
      %v4971 = vshrl.u32 %v4658, 16
      %v4973 = vrot.slane %v4971, 4
      %v4974 = vshll.u32 %v4658, 16
      %v4976 = vrot.slane %v4974, 5
      %v4977 = vor.u32 %v4973, %v4976
      %v4978 = vrot.slane %v4977, 4
      %v4980 = vshll.u32 %v4659, 16
      %v4982 = vrot.slane %v4980, 5
      %v4983 = vsel %vm801, %v4978, %v4982
      %v4984 = vshrl.u32 %v4659, 16
      %v4986 = vrot.slane %v4984, 4
      %v4987 = vor.u32 %v4986, %v4982
      %v4988 = vrot.slane %v4987, 4
      %v4990 = vshll.u32 %v4678, 16
      %v4992 = vrot.slane %v4990, 5
      %v4993 = vsel %vm801, %v4988, %v4992
      %v4995 = vshrl.u32 %v4660, 16
      %v4997 = vrot.slane %v4995, 4
      %v4998 = vshll.u32 %v4660, 16
      %v5000 = vrot.slane %v4998, 5
      %v5001 = vor.u32 %v4997, %v5000
      %v5002 = vrot.slane %v5001, 4
      %v5004 = vshll.u32 %v4661, 16
      %v5006 = vrot.slane %v5004, 5
      %v5007 = vsel %vm801, %v5002, %v5006
      %v5008 = vshrl.u32 %v4661, 16
      %v5010 = vrot.slane %v5008, 4
      %v5011 = vor.u32 %v5010, %v5006
      %v5012 = vrot.slane %v5011, 4
      %v5014 = vshll.u32 %v4679, 16
      %v5016 = vrot.slane %v5014, 5
      %v5017 = vsel %vm801, %v5012, %v5016
      %v5019 = vshrl.u32 %v4662, 16
      %v5021 = vrot.slane %v5019, 4
      %v5022 = vshll.u32 %v4662, 16
      %v5024 = vrot.slane %v5022, 5
      %v5025 = vor.u32 %v5021, %v5024
      %v5026 = vrot.slane %v5025, 4
      %v5028 = vshll.u32 %v4663, 16
      %v5030 = vrot.slane %v5028, 5
      %v5031 = vsel %vm801, %v5026, %v5030
      %v5032 = vshrl.u32 %v4663, 16
      %v5034 = vrot.slane %v5032, 4
      %v5035 = vor.u32 %v5034, %v5030
      %v5036 = vrot.slane %v5035, 4
      %v5038 = vshll.u32 %v4680, 16
      %v5040 = vrot.slane %v5038, 5
      %v5041 = vsel %vm801, %v5036, %v5040
      %v5043 = vshrl.u32 %v4664, 16
      %v5045 = vrot.slane %v5043, 4
      %v5046 = vshll.u32 %v4664, 16
      %v5048 = vrot.slane %v5046, 5
      %v5049 = vor.u32 %v5045, %v5048
      %v5050 = vrot.slane %v5049, 4
      %v5052 = vshll.u32 %v4665, 16
      %v5054 = vrot.slane %v5052, 5
      %v5055 = vsel %vm801, %v5050, %v5054
      %v5056 = vshrl.u32 %v4665, 16
      %v5058 = vrot.slane %v5056, 4
      %v5059 = vor.u32 %v5058, %v5054
      %v5060 = vrot.slane %v5059, 4
      %v5062 = vshll.u32 %v4681, 16
      %v5064 = vrot.slane %v5062, 5
      %v5065 = vsel %vm801, %v5060, %v5064
      %v5066 = vld [vmem:[#allocation2] sm:$0xe]
      %v5067 = vld [vmem:[#allocation2 + $0xc] sm:$0xe]
      %v5068 = vld [vmem:[#allocation2 + $0x18] sm:$0xe]
      %v5069 = vld [vmem:[#allocation2 + $0x24] sm:$0xe]
      %v5070 = vld [vmem:[#allocation2 + $0x30] sm:$0xe]
      %v5071 = vld [vmem:[#allocation2 + $0x3c] sm:$0xe]
      %v5072 = vld [vmem:[#allocation2 + $0x48] sm:$0xe]
      %v5073 = vld [vmem:[#allocation2 + $0x54] sm:$0xe]
      %v5074 = vld [vmem:[#allocation2 + $0x60] sm:$0xe]
      %v5075 = vld [vmem:[#allocation2 + $0x6c] sm:$0xe]
      %v5076 = vld [vmem:[#allocation2 + $0x78] sm:$0xe]
      %v5077 = vld [vmem:[#allocation2 + $0x84] sm:$0xe]
      %v5078 = vld [vmem:[#allocation2 + $0x90] sm:$0xe]
      %v5079 = vld [vmem:[#allocation2 + $0x9c] sm:$0xe]
      %v5080 = vld [vmem:[#allocation2 + $0xa8] sm:$0xe]
      %v5081 = vld [vmem:[#allocation2 + $0xb4] sm:$0xe]
      %v5130 = vrot.slane %v5066, 5
      %v5131 = vrot.slane %v5130, 4
      %v5132 = vrot.slane %v4635, 5
      %v5133 = vsel %vm1252, %v5131, %v5132
      %v5134 = vrot.slane %v5132, 4
      %v5135 = vrot.slane %v4666, 5
      %v5136 = vsel %vm1252, %v5134, %v5135
      %v5137 = vrot.slane %v5067, 5
      %v5138 = vrot.slane %v5137, 4
      %v5139 = vrot.slane %v4637, 5
      %v5140 = vsel %vm1252, %v5138, %v5139
      %v5141 = vrot.slane %v5139, 4
      %v5142 = vrot.slane %v4667, 5
      %v5143 = vsel %vm1252, %v5141, %v5142
      %v5144 = vrot.slane %v5068, 5
      %v5145 = vrot.slane %v5144, 4
      %v5146 = vrot.slane %v4639, 5
      %v5147 = vsel %vm1252, %v5145, %v5146
      %v5148 = vrot.slane %v5146, 4
      %v5149 = vrot.slane %v4668, 5
      %v5150 = vsel %vm1252, %v5148, %v5149
      %v5151 = vrot.slane %v5069, 5
      %v5152 = vrot.slane %v5151, 4
      %v5153 = vrot.slane %v4641, 5
      %v5154 = vsel %vm1252, %v5152, %v5153
      %v5155 = vrot.slane %v5153, 4
      %v5156 = vrot.slane %v4669, 5
      %v5157 = vsel %vm1252, %v5155, %v5156
      %v5158 = vrot.slane %v5070, 5
      %v5159 = vrot.slane %v5158, 4
      %v5160 = vrot.slane %v4643, 5
      %v5161 = vsel %vm1252, %v5159, %v5160
      %v5162 = vrot.slane %v5160, 4
      %v5163 = vrot.slane %v4670, 5
      %v5164 = vsel %vm1252, %v5162, %v5163
      %v5165 = vrot.slane %v5071, 5
      %v5166 = vrot.slane %v5165, 4
      %v5167 = vrot.slane %v4645, 5
      %v5168 = vsel %vm1252, %v5166, %v5167
      %v5169 = vrot.slane %v5167, 4
      %v5170 = vrot.slane %v4671, 5
      %v5171 = vsel %vm1252, %v5169, %v5170
      %v5172 = vrot.slane %v5072, 5
      %v5173 = vrot.slane %v5172, 4
      %v5174 = vrot.slane %v4647, 5
      %v5175 = vsel %vm1252, %v5173, %v5174
      %v5176 = vrot.slane %v5174, 4
      %v5177 = vrot.slane %v4672, 5
      %v5178 = vsel %vm1252, %v5176, %v5177
      %v5179 = vrot.slane %v5073, 5
      %v5180 = vrot.slane %v5179, 4
      %v5181 = vrot.slane %v4649, 5
      %v5182 = vsel %vm1252, %v5180, %v5181
      %v5183 = vrot.slane %v5181, 4
      %v5184 = vrot.slane %v4673, 5
      %v5185 = vsel %vm1252, %v5183, %v5184
      %v5186 = vrot.slane %v5074, 5
      %v5187 = vrot.slane %v5186, 4
      %v5188 = vrot.slane %v4651, 5
      %v5189 = vsel %vm1252, %v5187, %v5188
      %v5190 = vrot.slane %v5188, 4
      %v5191 = vrot.slane %v4674, 5
      %v5192 = vsel %vm1252, %v5190, %v5191
      %v5193 = vrot.slane %v5075, 5
      %v5194 = vrot.slane %v5193, 4
      %v5195 = vrot.slane %v4653, 5
      %v5196 = vsel %vm1252, %v5194, %v5195
      %v5197 = vrot.slane %v5195, 4
      %v5198 = vrot.slane %v4675, 5
      %v5199 = vsel %vm1252, %v5197, %v5198
      %v5200 = vrot.slane %v5076, 5
      %v5201 = vrot.slane %v5200, 4
      %v5202 = vrot.slane %v4655, 5
      %v5203 = vsel %vm1252, %v5201, %v5202
      %v5204 = vrot.slane %v5202, 4
      %v5205 = vrot.slane %v4676, 5
      %v5206 = vsel %vm1252, %v5204, %v5205
      %v5207 = vrot.slane %v5077, 5
      %v5208 = vrot.slane %v5207, 4
      %v5209 = vrot.slane %v4657, 5
      %v5210 = vsel %vm1252, %v5208, %v5209
      %v5211 = vrot.slane %v5209, 4
      %v5212 = vrot.slane %v4677, 5
      %v5213 = vsel %vm1252, %v5211, %v5212
      %v5214 = vrot.slane %v5078, 5
      %v5215 = vrot.slane %v5214, 4
      %v5216 = vrot.slane %v4659, 5
      %v5217 = vsel %vm1252, %v5215, %v5216
      %v5218 = vrot.slane %v5216, 4
      %v5219 = vrot.slane %v4678, 5
      %v5220 = vsel %vm1252, %v5218, %v5219
      %v5221 = vrot.slane %v5079, 5
      %v5222 = vrot.slane %v5221, 4
      %v5223 = vrot.slane %v4661, 5
      %v5224 = vsel %vm1252, %v5222, %v5223
      %v5225 = vrot.slane %v5223, 4
      %v5226 = vrot.slane %v4679, 5
      %v5227 = vsel %vm1252, %v5225, %v5226
      %v5228 = vrot.slane %v5080, 5
      %v5229 = vrot.slane %v5228, 4
      %v5230 = vrot.slane %v4663, 5
      %v5231 = vsel %vm1252, %v5229, %v5230
      %v5232 = vrot.slane %v5230, 4
      %v5233 = vrot.slane %v4680, 5
      %v5234 = vsel %vm1252, %v5232, %v5233
      %v5235 = vrot.slane %v5081, 5
      %v5236 = vrot.slane %v5235, 4
      %v5237 = vrot.slane %v4665, 5
      %v5238 = vsel %vm1252, %v5236, %v5237
      %v5239 = vrot.slane %v5237, 4
      %v5240 = vrot.slane %v4681, 5
      %v5241 = vsel %vm1252, %v5239, %v5240
      %v5258 = vunpack.c.l.b16 %v4634
      %v5259 = vunpack.c.l.b16 %v4635
      %v5260 = vunpack.c.l.b16 %v4636
      %v5261 = vunpack.c.l.b16 %v4637
      %v5262 = vunpack.c.l.b16 %v4638
      %v5263 = vunpack.c.l.b16 %v4639
      %v5264 = vunpack.c.l.b16 %v4640
      %v5265 = vunpack.c.l.b16 %v4641
      %v5266 = vunpack.c.l.b16 %v4642
      %v5267 = vunpack.c.l.b16 %v4643
      %v5268 = vunpack.c.l.b16 %v4644
      %v5269 = vunpack.c.l.b16 %v4645
      %v5270 = vunpack.c.l.b16 %v4646
      %v5271 = vunpack.c.l.b16 %v4647
      %v5272 = vunpack.c.l.b16 %v4648
      %v5273 = vunpack.c.l.b16 %v4649
      %v5274 = vunpack.c.l.b16 %v4650
      %v5275 = vunpack.c.l.b16 %v4651
      %v5276 = vunpack.c.l.b16 %v4652
      %v5277 = vunpack.c.l.b16 %v4653
      %v5278 = vunpack.c.l.b16 %v4654
      %v5279 = vunpack.c.l.b16 %v4655
      %v5280 = vunpack.c.l.b16 %v4656
      %v5281 = vunpack.c.l.b16 %v4657
      %v5282 = vunpack.c.l.b16 %v4658
      %v5283 = vunpack.c.l.b16 %v4659
      %v5284 = vunpack.c.l.b16 %v4660
      %v5285 = vunpack.c.l.b16 %v4661
      %v5286 = vunpack.c.l.b16 %v4662
      %v5287 = vunpack.c.l.b16 %v4663
      %v5288 = vunpack.c.l.b16 %v4664
      %v5289 = vunpack.c.l.b16 %v4665
      %v5290 = vpack.c.b16 %v5259, %v5258
      %v5291 = vpack.c.b16 %v5261, %v5260
      %v5292 = vpack.c.b16 %v5263, %v5262
      %v5293 = vpack.c.b16 %v5265, %v5264
      %v5294 = vpack.c.b16 %v5267, %v5266
      %v5295 = vpack.c.b16 %v5269, %v5268
      %v5296 = vpack.c.b16 %v5271, %v5270
      %v5297 = vpack.c.b16 %v5273, %v5272
      %v5298 = vpack.c.b16 %v5275, %v5274
      %v5299 = vpack.c.b16 %v5277, %v5276
      %v5300 = vpack.c.b16 %v5279, %v5278
      %v5301 = vpack.c.b16 %v5281, %v5280
      %v5302 = vpack.c.b16 %v5283, %v5282
      %v5303 = vpack.c.b16 %v5285, %v5284
      %v5304 = vpack.c.b16 %v5287, %v5286
      %v5305 = vpack.c.b16 %v5289, %v5288
      %v5306 = vunpack.c.l.b16 %v4695
      %v5307 = vunpack.c.l.b16 %v4705
      %v5308 = vunpack.c.l.b16 %v4719
      %v5309 = vunpack.c.l.b16 %v4729
      %v5310 = vunpack.c.l.b16 %v4743
      %v5311 = vunpack.c.l.b16 %v4753
      %v5312 = vunpack.c.l.b16 %v4767
      %v5313 = vunpack.c.l.b16 %v4777
      %v5314 = vunpack.c.l.b16 %v4791
      %v5315 = vunpack.c.l.b16 %v4801
      %v5316 = vunpack.c.l.b16 %v4815
      %v5317 = vunpack.c.l.b16 %v4825
      %v5318 = vunpack.c.l.b16 %v4839
      %v5319 = vunpack.c.l.b16 %v4849
      %v5320 = vunpack.c.l.b16 %v4863
      %v5321 = vunpack.c.l.b16 %v4873
      %v5322 = vunpack.c.l.b16 %v4887
      %v5323 = vunpack.c.l.b16 %v4897
      %v5324 = vunpack.c.l.b16 %v4911
      %v5325 = vunpack.c.l.b16 %v4921
      %v5326 = vunpack.c.l.b16 %v4935
      %v5327 = vunpack.c.l.b16 %v4945
      %v5328 = vunpack.c.l.b16 %v4959
      %v5329 = vunpack.c.l.b16 %v4969
      %v5330 = vunpack.c.l.b16 %v4983
      %v5331 = vunpack.c.l.b16 %v4993
      %v5332 = vunpack.c.l.b16 %v5007
      %v5333 = vunpack.c.l.b16 %v5017
      %v5334 = vunpack.c.l.b16 %v5031
      %v5335 = vunpack.c.l.b16 %v5041
      %v5336 = vunpack.c.l.b16 %v5055
      %v5337 = vunpack.c.l.b16 %v5065
      %v5338 = vpack.c.b16 %v5307, %v5306
      %v5339 = vpack.c.b16 %v5309, %v5308
      %v5340 = vpack.c.b16 %v5311, %v5310
      %v5341 = vpack.c.b16 %v5313, %v5312
      %v5342 = vpack.c.b16 %v5315, %v5314
      %v5343 = vpack.c.b16 %v5317, %v5316
      %v5344 = vpack.c.b16 %v5319, %v5318
      %v5345 = vpack.c.b16 %v5321, %v5320
      %v5346 = vpack.c.b16 %v5323, %v5322
      %v5347 = vpack.c.b16 %v5325, %v5324
      %v5348 = vpack.c.b16 %v5327, %v5326
      %v5349 = vpack.c.b16 %v5329, %v5328
      %v5350 = vpack.c.b16 %v5331, %v5330
      %v5351 = vpack.c.b16 %v5333, %v5332
      %v5352 = vpack.c.b16 %v5335, %v5334
      %v5353 = vpack.c.b16 %v5337, %v5336
      %5354 = vrot.lane.b32.xlu0 %v5338, 4
      %v5355 = vpop.permute.xlu0 %5354
      %5356 = vrot.lane.b32.xlu0 %v5339, 4
      %v5357 = vpop.permute.xlu0 %5356
      %5358 = vrot.lane.b32.xlu0 %v5340, 4
      %v5359 = vpop.permute.xlu0 %5358
      %5360 = vrot.lane.b32.xlu0 %v5341, 4
      %v5361 = vpop.permute.xlu0 %5360
      %5362 = vrot.lane.b32.xlu0 %v5342, 4
      %v5363 = vpop.permute.xlu0 %5362
      %5364 = vrot.lane.b32.xlu0 %v5343, 4
      %v5365 = vpop.permute.xlu0 %5364
      %5366 = vrot.lane.b32.xlu0 %v5344, 4
      %v5367 = vpop.permute.xlu0 %5366
      %5368 = vrot.lane.b32.xlu0 %v5345, 4
      %v5369 = vpop.permute.xlu0 %5368
      %5370 = vrot.lane.b32.xlu0 %v5346, 4
      %v5371 = vpop.permute.xlu0 %5370
      %5372 = vrot.lane.b32.xlu0 %v5347, 4
      %v5373 = vpop.permute.xlu0 %5372
      %5374 = vrot.lane.b32.xlu0 %v5348, 4
      %v5375 = vpop.permute.xlu0 %5374
      %5376 = vrot.lane.b32.xlu0 %v5349, 4
      %v5377 = vpop.permute.xlu0 %5376
      %5378 = vrot.lane.b32.xlu0 %v5350, 4
      %v5379 = vpop.permute.xlu0 %5378
      %5380 = vrot.lane.b32.xlu0 %v5351, 4
      %v5381 = vpop.permute.xlu0 %5380
      %5382 = vrot.lane.b32.xlu0 %v5352, 4
      %v5383 = vpop.permute.xlu0 %5382
      %5384 = vrot.lane.b32.xlu0 %v5353, 4
      %v5385 = vpop.permute.xlu0 %5384
      %v5386 = vunpack.c.l.b16 %v5133
      %v5387 = vunpack.c.l.b16 %v5136
      %v5388 = vunpack.c.l.b16 %v5140
      %v5389 = vunpack.c.l.b16 %v5143
      %v5390 = vunpack.c.l.b16 %v5147
      %v5391 = vunpack.c.l.b16 %v5150
      %v5392 = vunpack.c.l.b16 %v5154
      %v5393 = vunpack.c.l.b16 %v5157
      %v5394 = vunpack.c.l.b16 %v5161
      %v5395 = vunpack.c.l.b16 %v5164
      %v5396 = vunpack.c.l.b16 %v5168
      %v5397 = vunpack.c.l.b16 %v5171
      %v5398 = vunpack.c.l.b16 %v5175
      %v5399 = vunpack.c.l.b16 %v5178
      %v5400 = vunpack.c.l.b16 %v5182
      %v5401 = vunpack.c.l.b16 %v5185
      %v5402 = vunpack.c.l.b16 %v5189
      %v5403 = vunpack.c.l.b16 %v5192
      %v5404 = vunpack.c.l.b16 %v5196
      %v5405 = vunpack.c.l.b16 %v5199
      %v5406 = vunpack.c.l.b16 %v5203
      %v5407 = vunpack.c.l.b16 %v5206
      %v5408 = vunpack.c.l.b16 %v5210
      %v5409 = vunpack.c.l.b16 %v5213
      %v5410 = vunpack.c.l.b16 %v5217
      %v5411 = vunpack.c.l.b16 %v5220
      %v5412 = vunpack.c.l.b16 %v5224
      %v5413 = vunpack.c.l.b16 %v5227
      %v5414 = vunpack.c.l.b16 %v5231
      %v5415 = vunpack.c.l.b16 %v5234
      %v5416 = vunpack.c.l.b16 %v5238
      %v5417 = vunpack.c.l.b16 %v5241
      %v5418 = vpack.c.b16 %v5387, %v5386
      %v5419 = vpack.c.b16 %v5389, %v5388
      %v5420 = vpack.c.b16 %v5391, %v5390
      %v5421 = vpack.c.b16 %v5393, %v5392
      %v5422 = vpack.c.b16 %v5395, %v5394
      %v5423 = vpack.c.b16 %v5397, %v5396
      %v5424 = vpack.c.b16 %v5399, %v5398
      %v5425 = vpack.c.b16 %v5401, %v5400
      %v5426 = vpack.c.b16 %v5403, %v5402
      %v5427 = vpack.c.b16 %v5405, %v5404
      %v5428 = vpack.c.b16 %v5407, %v5406
      %v5429 = vpack.c.b16 %v5409, %v5408
      %v5430 = vpack.c.b16 %v5411, %v5410
      %v5431 = vpack.c.b16 %v5413, %v5412
      %v5432 = vpack.c.b16 %v5415, %v5414
      %v5433 = vpack.c.b16 %v5417, %v5416
      %5434 = vrot.lane.b32.xlu0 %v5418, 8
      %v5435 = vpop.permute.xlu0 %5434
      %5436 = vrot.lane.b32.xlu0 %v5419, 8
      %v5437 = vpop.permute.xlu0 %5436
      %5438 = vrot.lane.b32.xlu0 %v5420, 8
      %v5439 = vpop.permute.xlu0 %5438
      %5440 = vrot.lane.b32.xlu0 %v5421, 8
      %v5441 = vpop.permute.xlu0 %5440
      %5442 = vrot.lane.b32.xlu0 %v5422, 8
      %v5443 = vpop.permute.xlu0 %5442
      %5444 = vrot.lane.b32.xlu0 %v5423, 8
      %v5445 = vpop.permute.xlu0 %5444
      %5446 = vrot.lane.b32.xlu0 %v5424, 8
      %v5447 = vpop.permute.xlu0 %5446
      %5448 = vrot.lane.b32.xlu0 %v5425, 8
      %v5449 = vpop.permute.xlu0 %5448
      %5450 = vrot.lane.b32.xlu0 %v5426, 8
      %v5451 = vpop.permute.xlu0 %5450
      %5452 = vrot.lane.b32.xlu0 %v5427, 8
      %v5453 = vpop.permute.xlu0 %5452
      %5454 = vrot.lane.b32.xlu0 %v5428, 8
      %v5455 = vpop.permute.xlu0 %5454
      %5456 = vrot.lane.b32.xlu0 %v5429, 8
      %v5457 = vpop.permute.xlu0 %5456
      %5458 = vrot.lane.b32.xlu0 %v5430, 8
      %v5459 = vpop.permute.xlu0 %5458
      %5460 = vrot.lane.b32.xlu0 %v5431, 8
      %v5461 = vpop.permute.xlu0 %5460
      %5462 = vrot.lane.b32.xlu0 %v5432, 8
      %v5463 = vpop.permute.xlu0 %5462
      %5464 = vrot.lane.b32.xlu0 %v5433, 8
      %v5465 = vpop.permute.xlu0 %5464
      %v5468 = vsel %vm1589, %v5290, %v5355
      %v5471 = vsel %vm1589, %v5291, %v5357
      %v5474 = vsel %vm1589, %v5292, %v5359
      %v5477 = vsel %vm1589, %v5293, %v5361
      %v5480 = vsel %vm1589, %v5294, %v5363
      %v5483 = vsel %vm1589, %v5295, %v5365
      %v5486 = vsel %vm1589, %v5296, %v5367
      %v5489 = vsel %vm1589, %v5297, %v5369
      %v5492 = vsel %vm1589, %v5298, %v5371
      %v5495 = vsel %vm1589, %v5299, %v5373
      %v5498 = vsel %vm1589, %v5300, %v5375
      %v5501 = vsel %vm1589, %v5301, %v5377
      %v5504 = vsel %vm1589, %v5302, %v5379
      %v5507 = vsel %vm1589, %v5303, %v5381
      %v5510 = vsel %vm1589, %v5304, %v5383
      %v5513 = vsel %vm1589, %v5305, %v5385
      %v5515 = vsel %vm1638, %v5468, %v5435
      %v5517 = vsel %vm1638, %v5471, %v5437
      %v5519 = vsel %vm1638, %v5474, %v5439
      %v5521 = vsel %vm1638, %v5477, %v5441
      %v5523 = vsel %vm1638, %v5480, %v5443
      %v5525 = vsel %vm1638, %v5483, %v5445
      %v5527 = vsel %vm1638, %v5486, %v5447
      %v5529 = vsel %vm1638, %v5489, %v5449
      %v5531 = vsel %vm1638, %v5492, %v5451
      %v5533 = vsel %vm1638, %v5495, %v5453
      %v5535 = vsel %vm1638, %v5498, %v5455
      %v5537 = vsel %vm1638, %v5501, %v5457
      %v5539 = vsel %vm1638, %v5504, %v5459
      %v5541 = vsel %vm1638, %v5507, %v5461
      %v5543 = vsel %vm1638, %v5510, %v5463
      %v5545 = vsel %vm1638, %v5513, %v5465
      %v5546 = vld [vmem:[%s3] sm:$0xf]
      %v5547 = vld [vmem:[%s3 + $0x4] sm:$0x3]
      %v5548 = vld [vmem:[%s702] sm:$0xf]
      %v5549 = vld [vmem:[%s702 + $0x4] sm:$0xf]
      %v5550 = vld [vmem:[%s702 + $0xc] sm:$0xf]
      %v5551 = vld [vmem:[%s702 + $0x10] sm:$0xf]
      %v5552 = vld [vmem:[%s702 + $0x18] sm:$0xf]
      %v5553 = vld [vmem:[%s702 + $0x1c] sm:$0xf]
      %v5554 = vld [vmem:[%s702 + $0x24] sm:$0xf]
      %v5555 = vld [vmem:[%s702 + $0x28] sm:$0xf]
      %v5556 = vld [vmem:[%s702 + $0x30] sm:$0xf]
      %v5557 = vld [vmem:[%s702 + $0x34] sm:$0xf]
      %v5558 = vld [vmem:[%s702 + $0x3c] sm:$0xf]
      %v5559 = vld [vmem:[%s702 + $0x40] sm:$0xf]
      %v5560 = vld [vmem:[%s702 + $0x48] sm:$0xf]
      %v5561 = vld [vmem:[%s702 + $0x4c] sm:$0xf]
      %v5562 = vld [vmem:[%s702 + $0x54] sm:$0xf]
      %v5563 = vld [vmem:[%s702 + $0x58] sm:$0xf]
      %v5564 = vld [vmem:[%s702 + $0x60] sm:$0xf]
      %v5565 = vld [vmem:[%s702 + $0x64] sm:$0xf]
      %v5566 = vld [vmem:[%s702 + $0x6c] sm:$0xf]
      %v5567 = vld [vmem:[%s702 + $0x70] sm:$0xf]
      %v5568 = vld [vmem:[%s702 + $0x78] sm:$0xf]
      %v5569 = vld [vmem:[%s702 + $0x7c] sm:$0xf]
      %v5570 = vld [vmem:[%s702 + $0x84] sm:$0xf]
      %v5571 = vld [vmem:[%s702 + $0x88] sm:$0xf]
      %v5572 = vld [vmem:[%s702 + $0x90] sm:$0xf]
      %v5573 = vld [vmem:[%s702 + $0x94] sm:$0xf]
      %v5574 = vld [vmem:[%s702 + $0x9c] sm:$0xf]
      %v5575 = vld [vmem:[%s702 + $0xa0] sm:$0xf]
      %v5576 = vld [vmem:[%s702 + $0xa8] sm:$0xf]
      %v5577 = vld [vmem:[%s702 + $0xac] sm:$0xf]
      %v5578 = vld [vmem:[%s702 + $0xb4] sm:$0xf]
      %v5579 = vld [vmem:[%s702 + $0xb8] sm:$0xf]
      %v5580 = vld [vmem:[%s702 + $0x8] sm:$0x1]
      %v5581 = vld [vmem:[%s702 + $0x14] sm:$0x1]
      %v5582 = vld [vmem:[%s702 + $0x20] sm:$0x1]
      %v5583 = vld [vmem:[%s702 + $0x2c] sm:$0x1]
      %v5584 = vld [vmem:[%s702 + $0x38] sm:$0x1]
      %v5585 = vld [vmem:[%s702 + $0x44] sm:$0x1]
      %v5586 = vld [vmem:[%s702 + $0x50] sm:$0x1]
      %v5587 = vld [vmem:[%s702 + $0x5c] sm:$0x1]
      %v5588 = vld [vmem:[%s702 + $0x68] sm:$0x1]
      %v5589 = vld [vmem:[%s702 + $0x74] sm:$0x1]
      %v5590 = vld [vmem:[%s702 + $0x80] sm:$0x1]
      %v5591 = vld [vmem:[%s702 + $0x8c] sm:$0x1]
      %v5592 = vld [vmem:[%s702 + $0x98] sm:$0x1]
      %v5593 = vld [vmem:[%s702 + $0xa4] sm:$0x1]
      %v5594 = vld [vmem:[%s702 + $0xb0] sm:$0x1]
      %v5595 = vld [vmem:[%s702 + $0xbc] sm:$0x1]
      %v5597 = vshrl.u32 %v5548, 16
      %v5599 = vrot.slane %v5597, 4
      %v5600 = vshll.u32 %v5548, 16
      %v5602 = vrot.slane %v5600, 5
      %v5603 = vor.u32 %v5599, %v5602
      %v5604 = vrot.slane %v5603, 4
      %v5606 = vshll.u32 %v5549, 16
      %v5608 = vrot.slane %v5606, 5
      %v5609 = vsel %vm801, %v5604, %v5608
      %v5610 = vshrl.u32 %v5549, 16
      %v5612 = vrot.slane %v5610, 4
      %v5613 = vor.u32 %v5612, %v5608
      %v5614 = vrot.slane %v5613, 4
      %v5616 = vshll.u32 %v5580, 16
      %v5618 = vrot.slane %v5616, 5
      %v5619 = vsel %vm801, %v5614, %v5618
      %v5621 = vshrl.u32 %v5550, 16
      %v5623 = vrot.slane %v5621, 4
      %v5624 = vshll.u32 %v5550, 16
      %v5626 = vrot.slane %v5624, 5
      %v5627 = vor.u32 %v5623, %v5626
      %v5628 = vrot.slane %v5627, 4
      %v5630 = vshll.u32 %v5551, 16
      %v5632 = vrot.slane %v5630, 5
      %v5633 = vsel %vm801, %v5628, %v5632
      %v5634 = vshrl.u32 %v5551, 16
      %v5636 = vrot.slane %v5634, 4
      %v5637 = vor.u32 %v5636, %v5632
      %v5638 = vrot.slane %v5637, 4
      %v5640 = vshll.u32 %v5581, 16
      %v5642 = vrot.slane %v5640, 5
      %v5643 = vsel %vm801, %v5638, %v5642
      %v5645 = vshrl.u32 %v5552, 16
      %v5647 = vrot.slane %v5645, 4
      %v5648 = vshll.u32 %v5552, 16
      %v5650 = vrot.slane %v5648, 5
      %v5651 = vor.u32 %v5647, %v5650
      %v5652 = vrot.slane %v5651, 4
      %v5654 = vshll.u32 %v5553, 16
      %v5656 = vrot.slane %v5654, 5
      %v5657 = vsel %vm801, %v5652, %v5656
      %v5658 = vshrl.u32 %v5553, 16
      %v5660 = vrot.slane %v5658, 4
      %v5661 = vor.u32 %v5660, %v5656
      %v5662 = vrot.slane %v5661, 4
      %v5664 = vshll.u32 %v5582, 16
      %v5666 = vrot.slane %v5664, 5
      %v5667 = vsel %vm801, %v5662, %v5666
      %v5669 = vshrl.u32 %v5554, 16
      %v5671 = vrot.slane %v5669, 4
      %v5672 = vshll.u32 %v5554, 16
      %v5674 = vrot.slane %v5672, 5
      %v5675 = vor.u32 %v5671, %v5674
      %v5676 = vrot.slane %v5675, 4
      %v5678 = vshll.u32 %v5555, 16
      %v5680 = vrot.slane %v5678, 5
      %v5681 = vsel %vm801, %v5676, %v5680
      %v5682 = vshrl.u32 %v5555, 16
      %v5684 = vrot.slane %v5682, 4
      %v5685 = vor.u32 %v5684, %v5680
      %v5686 = vrot.slane %v5685, 4
      %v5688 = vshll.u32 %v5583, 16
      %v5690 = vrot.slane %v5688, 5
      %v5691 = vsel %vm801, %v5686, %v5690
      %v5693 = vshrl.u32 %v5556, 16
      %v5695 = vrot.slane %v5693, 4
      %v5696 = vshll.u32 %v5556, 16
      %v5698 = vrot.slane %v5696, 5
      %v5699 = vor.u32 %v5695, %v5698
      %v5700 = vrot.slane %v5699, 4
      %v5702 = vshll.u32 %v5557, 16
      %v5704 = vrot.slane %v5702, 5
      %v5705 = vsel %vm801, %v5700, %v5704
      %v5706 = vshrl.u32 %v5557, 16
      %v5708 = vrot.slane %v5706, 4
      %v5709 = vor.u32 %v5708, %v5704
      %v5710 = vrot.slane %v5709, 4
      %v5712 = vshll.u32 %v5584, 16
      %v5714 = vrot.slane %v5712, 5
      %v5715 = vsel %vm801, %v5710, %v5714
      %v5717 = vshrl.u32 %v5558, 16
      %v5719 = vrot.slane %v5717, 4
      %v5720 = vshll.u32 %v5558, 16
      %v5722 = vrot.slane %v5720, 5
      %v5723 = vor.u32 %v5719, %v5722
      %v5724 = vrot.slane %v5723, 4
      %v5726 = vshll.u32 %v5559, 16
      %v5728 = vrot.slane %v5726, 5
      %v5729 = vsel %vm801, %v5724, %v5728
      %v5730 = vshrl.u32 %v5559, 16
      %v5732 = vrot.slane %v5730, 4
      %v5733 = vor.u32 %v5732, %v5728
      %v5734 = vrot.slane %v5733, 4
      %v5736 = vshll.u32 %v5585, 16
      %v5738 = vrot.slane %v5736, 5
      %v5739 = vsel %vm801, %v5734, %v5738
      %v5741 = vshrl.u32 %v5560, 16
      %v5743 = vrot.slane %v5741, 4
      %v5744 = vshll.u32 %v5560, 16
      %v5746 = vrot.slane %v5744, 5
      %v5747 = vor.u32 %v5743, %v5746
      %v5748 = vrot.slane %v5747, 4
      %v5750 = vshll.u32 %v5561, 16
      %v5752 = vrot.slane %v5750, 5
      %v5753 = vsel %vm801, %v5748, %v5752
      %v5754 = vshrl.u32 %v5561, 16
      %v5756 = vrot.slane %v5754, 4
      %v5757 = vor.u32 %v5756, %v5752
      %v5758 = vrot.slane %v5757, 4
      %v5760 = vshll.u32 %v5586, 16
      %v5762 = vrot.slane %v5760, 5
      %v5763 = vsel %vm801, %v5758, %v5762
      %v5765 = vshrl.u32 %v5562, 16
      %v5767 = vrot.slane %v5765, 4
      %v5768 = vshll.u32 %v5562, 16
      %v5770 = vrot.slane %v5768, 5
      %v5771 = vor.u32 %v5767, %v5770
      %v5772 = vrot.slane %v5771, 4
      %v5774 = vshll.u32 %v5563, 16
      %v5776 = vrot.slane %v5774, 5
      %v5777 = vsel %vm801, %v5772, %v5776
      %v5778 = vshrl.u32 %v5563, 16
      %v5780 = vrot.slane %v5778, 4
      %v5781 = vor.u32 %v5780, %v5776
      %v5782 = vrot.slane %v5781, 4
      %v5784 = vshll.u32 %v5587, 16
      %v5786 = vrot.slane %v5784, 5
      %v5787 = vsel %vm801, %v5782, %v5786
      %v5789 = vshrl.u32 %v5564, 16
      %v5791 = vrot.slane %v5789, 4
      %v5792 = vshll.u32 %v5564, 16
      %v5794 = vrot.slane %v5792, 5
      %v5795 = vor.u32 %v5791, %v5794
      %v5796 = vrot.slane %v5795, 4
      %v5798 = vshll.u32 %v5565, 16
      %v5800 = vrot.slane %v5798, 5
      %v5801 = vsel %vm801, %v5796, %v5800
      %v5802 = vshrl.u32 %v5565, 16
      %v5804 = vrot.slane %v5802, 4
      %v5805 = vor.u32 %v5804, %v5800
      %v5806 = vrot.slane %v5805, 4
      %v5808 = vshll.u32 %v5588, 16
      %v5810 = vrot.slane %v5808, 5
      %v5811 = vsel %vm801, %v5806, %v5810
      %v5813 = vshrl.u32 %v5566, 16
      %v5815 = vrot.slane %v5813, 4
      %v5816 = vshll.u32 %v5566, 16
      %v5818 = vrot.slane %v5816, 5
      %v5819 = vor.u32 %v5815, %v5818
      %v5820 = vrot.slane %v5819, 4
      %v5822 = vshll.u32 %v5567, 16
      %v5824 = vrot.slane %v5822, 5
      %v5825 = vsel %vm801, %v5820, %v5824
      %v5826 = vshrl.u32 %v5567, 16
      %v5828 = vrot.slane %v5826, 4
      %v5829 = vor.u32 %v5828, %v5824
      %v5830 = vrot.slane %v5829, 4
      %v5832 = vshll.u32 %v5589, 16
      %v5834 = vrot.slane %v5832, 5
      %v5835 = vsel %vm801, %v5830, %v5834
      %v5837 = vshrl.u32 %v5568, 16
      %v5839 = vrot.slane %v5837, 4
      %v5840 = vshll.u32 %v5568, 16
      %v5842 = vrot.slane %v5840, 5
      %v5843 = vor.u32 %v5839, %v5842
      %v5844 = vrot.slane %v5843, 4
      %v5846 = vshll.u32 %v5569, 16
      %v5848 = vrot.slane %v5846, 5
      %v5849 = vsel %vm801, %v5844, %v5848
      %v5850 = vshrl.u32 %v5569, 16
      %v5852 = vrot.slane %v5850, 4
      %v5853 = vor.u32 %v5852, %v5848
      %v5854 = vrot.slane %v5853, 4
      %v5856 = vshll.u32 %v5590, 16
      %v5858 = vrot.slane %v5856, 5
      %v5859 = vsel %vm801, %v5854, %v5858
      %v5861 = vshrl.u32 %v5570, 16
      %v5863 = vrot.slane %v5861, 4
      %v5864 = vshll.u32 %v5570, 16
      %v5866 = vrot.slane %v5864, 5
      %v5867 = vor.u32 %v5863, %v5866
      %v5868 = vrot.slane %v5867, 4
      %v5870 = vshll.u32 %v5571, 16
      %v5872 = vrot.slane %v5870, 5
      %v5873 = vsel %vm801, %v5868, %v5872
      %v5874 = vshrl.u32 %v5571, 16
      %v5876 = vrot.slane %v5874, 4
      %v5877 = vor.u32 %v5876, %v5872
      %v5878 = vrot.slane %v5877, 4
      %v5880 = vshll.u32 %v5591, 16
      %v5882 = vrot.slane %v5880, 5
      %v5883 = vsel %vm801, %v5878, %v5882
      %v5885 = vshrl.u32 %v5572, 16
      %v5887 = vrot.slane %v5885, 4
      %v5888 = vshll.u32 %v5572, 16
      %v5890 = vrot.slane %v5888, 5
      %v5891 = vor.u32 %v5887, %v5890
      %v5892 = vrot.slane %v5891, 4
      %v5894 = vshll.u32 %v5573, 16
      %v5896 = vrot.slane %v5894, 5
      %v5897 = vsel %vm801, %v5892, %v5896
      %v5898 = vshrl.u32 %v5573, 16
      %v5900 = vrot.slane %v5898, 4
      %v5901 = vor.u32 %v5900, %v5896
      %v5902 = vrot.slane %v5901, 4
      %v5904 = vshll.u32 %v5592, 16
      %v5906 = vrot.slane %v5904, 5
      %v5907 = vsel %vm801, %v5902, %v5906
      %v5909 = vshrl.u32 %v5574, 16
      %v5911 = vrot.slane %v5909, 4
      %v5912 = vshll.u32 %v5574, 16
      %v5914 = vrot.slane %v5912, 5
      %v5915 = vor.u32 %v5911, %v5914
      %v5916 = vrot.slane %v5915, 4
      %v5918 = vshll.u32 %v5575, 16
      %v5920 = vrot.slane %v5918, 5
      %v5921 = vsel %vm801, %v5916, %v5920
      %v5922 = vshrl.u32 %v5575, 16
      %v5924 = vrot.slane %v5922, 4
      %v5925 = vor.u32 %v5924, %v5920
      %v5926 = vrot.slane %v5925, 4
      %v5928 = vshll.u32 %v5593, 16
      %v5930 = vrot.slane %v5928, 5
      %v5931 = vsel %vm801, %v5926, %v5930
      %v5933 = vshrl.u32 %v5576, 16
      %v5935 = vrot.slane %v5933, 4
      %v5936 = vshll.u32 %v5576, 16
      %v5938 = vrot.slane %v5936, 5
      %v5939 = vor.u32 %v5935, %v5938
      %v5940 = vrot.slane %v5939, 4
      %v5942 = vshll.u32 %v5577, 16
      %v5944 = vrot.slane %v5942, 5
      %v5945 = vsel %vm801, %v5940, %v5944
      %v5946 = vshrl.u32 %v5577, 16
      %v5948 = vrot.slane %v5946, 4
      %v5949 = vor.u32 %v5948, %v5944
      %v5950 = vrot.slane %v5949, 4
      %v5952 = vshll.u32 %v5594, 16
      %v5954 = vrot.slane %v5952, 5
      %v5955 = vsel %vm801, %v5950, %v5954
      %v5957 = vshrl.u32 %v5578, 16
      %v5959 = vrot.slane %v5957, 4
      %v5960 = vshll.u32 %v5578, 16
      %v5962 = vrot.slane %v5960, 5
      %v5963 = vor.u32 %v5959, %v5962
      %v5964 = vrot.slane %v5963, 4
      %v5966 = vshll.u32 %v5579, 16
      %v5968 = vrot.slane %v5966, 5
      %v5969 = vsel %vm801, %v5964, %v5968
      %v5970 = vshrl.u32 %v5579, 16
      %v5972 = vrot.slane %v5970, 4
      %v5973 = vor.u32 %v5972, %v5968
      %v5974 = vrot.slane %v5973, 4
      %v5976 = vshll.u32 %v5595, 16
      %v5978 = vrot.slane %v5976, 5
      %v5979 = vsel %vm801, %v5974, %v5978
      %v5980 = vld [vmem:[%s702] sm:$0xe]
      %v5981 = vld [vmem:[%s702 + $0xc] sm:$0xe]
      %v5982 = vld [vmem:[%s702 + $0x18] sm:$0xe]
      %v5983 = vld [vmem:[%s702 + $0x24] sm:$0xe]
      %v5984 = vld [vmem:[%s702 + $0x30] sm:$0xe]
      %v5985 = vld [vmem:[%s702 + $0x3c] sm:$0xe]
      %v5986 = vld [vmem:[%s702 + $0x48] sm:$0xe]
      %v5987 = vld [vmem:[%s702 + $0x54] sm:$0xe]
      %v5988 = vld [vmem:[%s702 + $0x60] sm:$0xe]
      %v5989 = vld [vmem:[%s702 + $0x6c] sm:$0xe]
      %v5990 = vld [vmem:[%s702 + $0x78] sm:$0xe]
      %v5991 = vld [vmem:[%s702 + $0x84] sm:$0xe]
      %v5992 = vld [vmem:[%s702 + $0x90] sm:$0xe]
      %v5993 = vld [vmem:[%s702 + $0x9c] sm:$0xe]
      %v5994 = vld [vmem:[%s702 + $0xa8] sm:$0xe]
      %v5995 = vld [vmem:[%s702 + $0xb4] sm:$0xe]
      %v6044 = vrot.slane %v5980, 5
      %v6045 = vrot.slane %v6044, 4
      %v6046 = vrot.slane %v5549, 5
      %v6047 = vsel %vm1252, %v6045, %v6046
      %v6048 = vrot.slane %v6046, 4
      %v6049 = vrot.slane %v5580, 5
      %v6050 = vsel %vm1252, %v6048, %v6049
      %v6051 = vrot.slane %v5981, 5
      %v6052 = vrot.slane %v6051, 4
      %v6053 = vrot.slane %v5551, 5
      %v6054 = vsel %vm1252, %v6052, %v6053
      %v6055 = vrot.slane %v6053, 4
      %v6056 = vrot.slane %v5581, 5
      %v6057 = vsel %vm1252, %v6055, %v6056
      %v6058 = vrot.slane %v5982, 5
      %v6059 = vrot.slane %v6058, 4
      %v6060 = vrot.slane %v5553, 5
      %v6061 = vsel %vm1252, %v6059, %v6060
      %v6062 = vrot.slane %v6060, 4
      %v6063 = vrot.slane %v5582, 5
      %v6064 = vsel %vm1252, %v6062, %v6063
      %v6065 = vrot.slane %v5983, 5
      %v6066 = vrot.slane %v6065, 4
      %v6067 = vrot.slane %v5555, 5
      %v6068 = vsel %vm1252, %v6066, %v6067
      %v6069 = vrot.slane %v6067, 4
      %v6070 = vrot.slane %v5583, 5
      %v6071 = vsel %vm1252, %v6069, %v6070
      %v6072 = vrot.slane %v5984, 5
      %v6073 = vrot.slane %v6072, 4
      %v6074 = vrot.slane %v5557, 5
      %v6075 = vsel %vm1252, %v6073, %v6074
      %v6076 = vrot.slane %v6074, 4
      %v6077 = vrot.slane %v5584, 5
      %v6078 = vsel %vm1252, %v6076, %v6077
      %v6079 = vrot.slane %v5985, 5
      %v6080 = vrot.slane %v6079, 4
      %v6081 = vrot.slane %v5559, 5
      %v6082 = vsel %vm1252, %v6080, %v6081
      %v6083 = vrot.slane %v6081, 4
      %v6084 = vrot.slane %v5585, 5
      %v6085 = vsel %vm1252, %v6083, %v6084
      %v6086 = vrot.slane %v5986, 5
      %v6087 = vrot.slane %v6086, 4
      %v6088 = vrot.slane %v5561, 5
      %v6089 = vsel %vm1252, %v6087, %v6088
      %v6090 = vrot.slane %v6088, 4
      %v6091 = vrot.slane %v5586, 5
      %v6092 = vsel %vm1252, %v6090, %v6091
      %v6093 = vrot.slane %v5987, 5
      %v6094 = vrot.slane %v6093, 4
      %v6095 = vrot.slane %v5563, 5
      %v6096 = vsel %vm1252, %v6094, %v6095
      %v6097 = vrot.slane %v6095, 4
      %v6098 = vrot.slane %v5587, 5
      %v6099 = vsel %vm1252, %v6097, %v6098
      %v6100 = vrot.slane %v5988, 5
      %v6101 = vrot.slane %v6100, 4
      %v6102 = vrot.slane %v5565, 5
      %v6103 = vsel %vm1252, %v6101, %v6102
      %v6104 = vrot.slane %v6102, 4
      %v6105 = vrot.slane %v5588, 5
      %v6106 = vsel %vm1252, %v6104, %v6105
      %v6107 = vrot.slane %v5989, 5
      %v6108 = vrot.slane %v6107, 4
      %v6109 = vrot.slane %v5567, 5
      %v6110 = vsel %vm1252, %v6108, %v6109
      %v6111 = vrot.slane %v6109, 4
      %v6112 = vrot.slane %v5589, 5
      %v6113 = vsel %vm1252, %v6111, %v6112
      %v6114 = vrot.slane %v5990, 5
      %v6115 = vrot.slane %v6114, 4
      %v6116 = vrot.slane %v5569, 5
      %v6117 = vsel %vm1252, %v6115, %v6116
      %v6118 = vrot.slane %v6116, 4
      %v6119 = vrot.slane %v5590, 5
      %v6120 = vsel %vm1252, %v6118, %v6119
      %v6121 = vrot.slane %v5991, 5
      %v6122 = vrot.slane %v6121, 4
      %v6123 = vrot.slane %v5571, 5
      %v6124 = vsel %vm1252, %v6122, %v6123
      %v6125 = vrot.slane %v6123, 4
      %v6126 = vrot.slane %v5591, 5
      %v6127 = vsel %vm1252, %v6125, %v6126
      %v6128 = vrot.slane %v5992, 5
      %v6129 = vrot.slane %v6128, 4
      %v6130 = vrot.slane %v5573, 5
      %v6131 = vsel %vm1252, %v6129, %v6130
      %v6132 = vrot.slane %v6130, 4
      %v6133 = vrot.slane %v5592, 5
      %v6134 = vsel %vm1252, %v6132, %v6133
      %v6135 = vrot.slane %v5993, 5
      %v6136 = vrot.slane %v6135, 4
      %v6137 = vrot.slane %v5575, 5
      %v6138 = vsel %vm1252, %v6136, %v6137
      %v6139 = vrot.slane %v6137, 4
      %v6140 = vrot.slane %v5593, 5
      %v6141 = vsel %vm1252, %v6139, %v6140
      %v6142 = vrot.slane %v5994, 5
      %v6143 = vrot.slane %v6142, 4
      %v6144 = vrot.slane %v5577, 5
      %v6145 = vsel %vm1252, %v6143, %v6144
      %v6146 = vrot.slane %v6144, 4
      %v6147 = vrot.slane %v5594, 5
      %v6148 = vsel %vm1252, %v6146, %v6147
      %v6149 = vrot.slane %v5995, 5
      %v6150 = vrot.slane %v6149, 4
      %v6151 = vrot.slane %v5579, 5
      %v6152 = vsel %vm1252, %v6150, %v6151
      %v6153 = vrot.slane %v6151, 4
      %v6154 = vrot.slane %v5595, 5
      %v6155 = vsel %vm1252, %v6153, %v6154
      %v6172 = vunpack.c.l.b16 %v5548
      %v6173 = vunpack.c.l.b16 %v5549
      %v6174 = vunpack.c.l.b16 %v5550
      %v6175 = vunpack.c.l.b16 %v5551
      %v6176 = vunpack.c.l.b16 %v5552
      %v6177 = vunpack.c.l.b16 %v5553
      %v6178 = vunpack.c.l.b16 %v5554
      %v6179 = vunpack.c.l.b16 %v5555
      %v6180 = vunpack.c.l.b16 %v5556
      %v6181 = vunpack.c.l.b16 %v5557
      %v6182 = vunpack.c.l.b16 %v5558
      %v6183 = vunpack.c.l.b16 %v5559
      %v6184 = vunpack.c.l.b16 %v5560
      %v6185 = vunpack.c.l.b16 %v5561
      %v6186 = vunpack.c.l.b16 %v5562
      %v6187 = vunpack.c.l.b16 %v5563
      %v6188 = vunpack.c.l.b16 %v5564
      %v6189 = vunpack.c.l.b16 %v5565
      %v6190 = vunpack.c.l.b16 %v5566
      %v6191 = vunpack.c.l.b16 %v5567
      %v6192 = vunpack.c.l.b16 %v5568
      %v6193 = vunpack.c.l.b16 %v5569
      %v6194 = vunpack.c.l.b16 %v5570
      %v6195 = vunpack.c.l.b16 %v5571
      %v6196 = vunpack.c.l.b16 %v5572
      %v6197 = vunpack.c.l.b16 %v5573
      %v6198 = vunpack.c.l.b16 %v5574
      %v6199 = vunpack.c.l.b16 %v5575
      %v6200 = vunpack.c.l.b16 %v5576
      %v6201 = vunpack.c.l.b16 %v5577
      %v6202 = vunpack.c.l.b16 %v5578
      %v6203 = vunpack.c.l.b16 %v5579
      %v6204 = vpack.c.b16 %v6173, %v6172
      %v6205 = vpack.c.b16 %v6175, %v6174
      %v6206 = vpack.c.b16 %v6177, %v6176
      %v6207 = vpack.c.b16 %v6179, %v6178
      %v6208 = vpack.c.b16 %v6181, %v6180
      %v6209 = vpack.c.b16 %v6183, %v6182
      %v6210 = vpack.c.b16 %v6185, %v6184
      %v6211 = vpack.c.b16 %v6187, %v6186
      %v6212 = vpack.c.b16 %v6189, %v6188
      %v6213 = vpack.c.b16 %v6191, %v6190
      %v6214 = vpack.c.b16 %v6193, %v6192
      %v6215 = vpack.c.b16 %v6195, %v6194
      %v6216 = vpack.c.b16 %v6197, %v6196
      %v6217 = vpack.c.b16 %v6199, %v6198
      %v6218 = vpack.c.b16 %v6201, %v6200
      %v6219 = vpack.c.b16 %v6203, %v6202
      %v6220 = vunpack.c.l.b16 %v5609
      %v6221 = vunpack.c.l.b16 %v5619
      %v6222 = vunpack.c.l.b16 %v5633
      %v6223 = vunpack.c.l.b16 %v5643
      %v6224 = vunpack.c.l.b16 %v5657
      %v6225 = vunpack.c.l.b16 %v5667
      %v6226 = vunpack.c.l.b16 %v5681
      %v6227 = vunpack.c.l.b16 %v5691
      %v6228 = vunpack.c.l.b16 %v5705
      %v6229 = vunpack.c.l.b16 %v5715
      %v6230 = vunpack.c.l.b16 %v5729
      %v6231 = vunpack.c.l.b16 %v5739
      %v6232 = vunpack.c.l.b16 %v5753
      %v6233 = vunpack.c.l.b16 %v5763
      %v6234 = vunpack.c.l.b16 %v5777
      %v6235 = vunpack.c.l.b16 %v5787
      %v6236 = vunpack.c.l.b16 %v5801
      %v6237 = vunpack.c.l.b16 %v5811
      %v6238 = vunpack.c.l.b16 %v5825
      %v6239 = vunpack.c.l.b16 %v5835
      %v6240 = vunpack.c.l.b16 %v5849
      %v6241 = vunpack.c.l.b16 %v5859
      %v6242 = vunpack.c.l.b16 %v5873
      %v6243 = vunpack.c.l.b16 %v5883
      %v6244 = vunpack.c.l.b16 %v5897
      %v6245 = vunpack.c.l.b16 %v5907
      %v6246 = vunpack.c.l.b16 %v5921
      %v6247 = vunpack.c.l.b16 %v5931
      %v6248 = vunpack.c.l.b16 %v5945
      %v6249 = vunpack.c.l.b16 %v5955
      %v6250 = vunpack.c.l.b16 %v5969
      %v6251 = vunpack.c.l.b16 %v5979
      %v6252 = vpack.c.b16 %v6221, %v6220
      %v6253 = vpack.c.b16 %v6223, %v6222
      %v6254 = vpack.c.b16 %v6225, %v6224
      %v6255 = vpack.c.b16 %v6227, %v6226
      %v6256 = vpack.c.b16 %v6229, %v6228
      %v6257 = vpack.c.b16 %v6231, %v6230
      %v6258 = vpack.c.b16 %v6233, %v6232
      %v6259 = vpack.c.b16 %v6235, %v6234
      %v6260 = vpack.c.b16 %v6237, %v6236
      %v6261 = vpack.c.b16 %v6239, %v6238
      %v6262 = vpack.c.b16 %v6241, %v6240
      %v6263 = vpack.c.b16 %v6243, %v6242
      %v6264 = vpack.c.b16 %v6245, %v6244
      %v6265 = vpack.c.b16 %v6247, %v6246
      %v6266 = vpack.c.b16 %v6249, %v6248
      %v6267 = vpack.c.b16 %v6251, %v6250
      %6268 = vrot.lane.b32.xlu0 %v6252, 4
      %v6269 = vpop.permute.xlu0 %6268
      %6270 = vrot.lane.b32.xlu0 %v6253, 4
      %v6271 = vpop.permute.xlu0 %6270
      %6272 = vrot.lane.b32.xlu0 %v6254, 4
      %v6273 = vpop.permute.xlu0 %6272
      %6274 = vrot.lane.b32.xlu0 %v6255, 4
      %v6275 = vpop.permute.xlu0 %6274
      %6276 = vrot.lane.b32.xlu0 %v6256, 4
      %v6277 = vpop.permute.xlu0 %6276
      %6278 = vrot.lane.b32.xlu0 %v6257, 4
      %v6279 = vpop.permute.xlu0 %6278
      %6280 = vrot.lane.b32.xlu0 %v6258, 4
      %v6281 = vpop.permute.xlu0 %6280
      %6282 = vrot.lane.b32.xlu0 %v6259, 4
      %v6283 = vpop.permute.xlu0 %6282
      %6284 = vrot.lane.b32.xlu0 %v6260, 4
      %v6285 = vpop.permute.xlu0 %6284
      %6286 = vrot.lane.b32.xlu0 %v6261, 4
      %v6287 = vpop.permute.xlu0 %6286
      %6288 = vrot.lane.b32.xlu0 %v6262, 4
      %v6289 = vpop.permute.xlu0 %6288
      %6290 = vrot.lane.b32.xlu0 %v6263, 4
      %v6291 = vpop.permute.xlu0 %6290
      %6292 = vrot.lane.b32.xlu0 %v6264, 4
      %v6293 = vpop.permute.xlu0 %6292
      %6294 = vrot.lane.b32.xlu0 %v6265, 4
      %v6295 = vpop.permute.xlu0 %6294
      %6296 = vrot.lane.b32.xlu0 %v6266, 4
      %v6297 = vpop.permute.xlu0 %6296
      %6298 = vrot.lane.b32.xlu0 %v6267, 4
      %v6299 = vpop.permute.xlu0 %6298
      %v6300 = vunpack.c.l.b16 %v6047
      %v6301 = vunpack.c.l.b16 %v6050
      %v6302 = vunpack.c.l.b16 %v6054
      %v6303 = vunpack.c.l.b16 %v6057
      %v6304 = vunpack.c.l.b16 %v6061
      %v6305 = vunpack.c.l.b16 %v6064
      %v6306 = vunpack.c.l.b16 %v6068
      %v6307 = vunpack.c.l.b16 %v6071
      %v6308 = vunpack.c.l.b16 %v6075
      %v6309 = vunpack.c.l.b16 %v6078
      %v6310 = vunpack.c.l.b16 %v6082
      %v6311 = vunpack.c.l.b16 %v6085
      %v6312 = vunpack.c.l.b16 %v6089
      %v6313 = vunpack.c.l.b16 %v6092
      %v6314 = vunpack.c.l.b16 %v6096
      %v6315 = vunpack.c.l.b16 %v6099
      %v6316 = vunpack.c.l.b16 %v6103
      %v6317 = vunpack.c.l.b16 %v6106
      %v6318 = vunpack.c.l.b16 %v6110
      %v6319 = vunpack.c.l.b16 %v6113
      %v6320 = vunpack.c.l.b16 %v6117
      %v6321 = vunpack.c.l.b16 %v6120
      %v6322 = vunpack.c.l.b16 %v6124
      %v6323 = vunpack.c.l.b16 %v6127
      %v6324 = vunpack.c.l.b16 %v6131
      %v6325 = vunpack.c.l.b16 %v6134
      %v6326 = vunpack.c.l.b16 %v6138
      %v6327 = vunpack.c.l.b16 %v6141
      %v6328 = vunpack.c.l.b16 %v6145
      %v6329 = vunpack.c.l.b16 %v6148
      %v6330 = vunpack.c.l.b16 %v6152
      %v6331 = vunpack.c.l.b16 %v6155
      %v6332 = vpack.c.b16 %v6301, %v6300
      %v6333 = vpack.c.b16 %v6303, %v6302
      %v6334 = vpack.c.b16 %v6305, %v6304
      %v6335 = vpack.c.b16 %v6307, %v6306
      %v6336 = vpack.c.b16 %v6309, %v6308
      %v6337 = vpack.c.b16 %v6311, %v6310
      %v6338 = vpack.c.b16 %v6313, %v6312
      %v6339 = vpack.c.b16 %v6315, %v6314
      %v6340 = vpack.c.b16 %v6317, %v6316
      %v6341 = vpack.c.b16 %v6319, %v6318
      %v6342 = vpack.c.b16 %v6321, %v6320
      %v6343 = vpack.c.b16 %v6323, %v6322
      %v6344 = vpack.c.b16 %v6325, %v6324
      %v6345 = vpack.c.b16 %v6327, %v6326
      %v6346 = vpack.c.b16 %v6329, %v6328
      %v6347 = vpack.c.b16 %v6331, %v6330
      %6348 = vrot.lane.b32.xlu0 %v6332, 8
      %v6349 = vpop.permute.xlu0 %6348
      %6350 = vrot.lane.b32.xlu0 %v6333, 8
      %v6351 = vpop.permute.xlu0 %6350
      %6352 = vrot.lane.b32.xlu0 %v6334, 8
      %v6353 = vpop.permute.xlu0 %6352
      %6354 = vrot.lane.b32.xlu0 %v6335, 8
      %v6355 = vpop.permute.xlu0 %6354
      %6356 = vrot.lane.b32.xlu0 %v6336, 8
      %v6357 = vpop.permute.xlu0 %6356
      %6358 = vrot.lane.b32.xlu0 %v6337, 8
      %v6359 = vpop.permute.xlu0 %6358
      %6360 = vrot.lane.b32.xlu0 %v6338, 8
      %v6361 = vpop.permute.xlu0 %6360
      %6362 = vrot.lane.b32.xlu0 %v6339, 8
      %v6363 = vpop.permute.xlu0 %6362
      %6364 = vrot.lane.b32.xlu0 %v6340, 8
      %v6365 = vpop.permute.xlu0 %6364
      %6366 = vrot.lane.b32.xlu0 %v6341, 8
      %v6367 = vpop.permute.xlu0 %6366
      %6368 = vrot.lane.b32.xlu0 %v6342, 8
      %v6369 = vpop.permute.xlu0 %6368
      %6370 = vrot.lane.b32.xlu0 %v6343, 8
      %v6371 = vpop.permute.xlu0 %6370
      %6372 = vrot.lane.b32.xlu0 %v6344, 8
      %v6373 = vpop.permute.xlu0 %6372
      %6374 = vrot.lane.b32.xlu0 %v6345, 8
      %v6375 = vpop.permute.xlu0 %6374
      %6376 = vrot.lane.b32.xlu0 %v6346, 8
      %v6377 = vpop.permute.xlu0 %6376
      %6378 = vrot.lane.b32.xlu0 %v6347, 8
      %v6379 = vpop.permute.xlu0 %6378
      %v6382 = vsel %vm1589, %v6204, %v6269
      %v6385 = vsel %vm1589, %v6205, %v6271
      %v6388 = vsel %vm1589, %v6206, %v6273
      %v6391 = vsel %vm1589, %v6207, %v6275
      %v6394 = vsel %vm1589, %v6208, %v6277
      %v6397 = vsel %vm1589, %v6209, %v6279
      %v6400 = vsel %vm1589, %v6210, %v6281
      %v6403 = vsel %vm1589, %v6211, %v6283
      %v6406 = vsel %vm1589, %v6212, %v6285
      %v6409 = vsel %vm1589, %v6213, %v6287
      %v6412 = vsel %vm1589, %v6214, %v6289
      %v6415 = vsel %vm1589, %v6215, %v6291
      %v6418 = vsel %vm1589, %v6216, %v6293
      %v6421 = vsel %vm1589, %v6217, %v6295
      %v6424 = vsel %vm1589, %v6218, %v6297
      %v6427 = vsel %vm1589, %v6219, %v6299
      %v6429 = vsel %vm1638, %v6382, %v6349
      %v6431 = vsel %vm1638, %v6385, %v6351
      %v6433 = vsel %vm1638, %v6388, %v6353
      %v6435 = vsel %vm1638, %v6391, %v6355
      %v6437 = vsel %vm1638, %v6394, %v6357
      %v6439 = vsel %vm1638, %v6397, %v6359
      %v6441 = vsel %vm1638, %v6400, %v6361
      %v6443 = vsel %vm1638, %v6403, %v6363
      %v6445 = vsel %vm1638, %v6406, %v6365
      %v6447 = vsel %vm1638, %v6409, %v6367
      %v6449 = vsel %vm1638, %v6412, %v6369
      %v6451 = vsel %vm1638, %v6415, %v6371
      %v6453 = vsel %vm1638, %v6418, %v6373
      %v6455 = vsel %vm1638, %v6421, %v6375
      %v6457 = vsel %vm1638, %v6424, %v6377
      %v6459 = vsel %vm1638, %v6427, %v6379
      %s6460 = scalar_lea.vmem %s3, 8
      %v6461 = vld [vmem:[%s6460] sm:$0xf]
      %v6462 = vld [vmem:[%s6460 + $0x4] sm:$0x3]
      %v6465 = vunpack.c.l.b16 %v6461
      %v6466 = vunpack.c.l.b16 %v6462
      %v6467 = vpack.c.b16 %v6466, %v6465
      %v6468 = vsel %vm2593, %v6429, 0
      %v6470 = vsel %vm2593, %v6431, 0
      %v6472 = vsel %vm2593, %v6433, 0
      %v6474 = vsel %vm2593, %v6435, 0
      %v6476 = vsel %vm2593, %v6437, 0
      %v6478 = vsel %vm2593, %v6439, 0
      %v6480 = vsel %vm2593, %v6441, 0
      %v6482 = vsel %vm2593, %v6443, 0
      %v6484 = vsel %vm2593, %v6445, 0
      %v6486 = vsel %vm2593, %v6447, 0
      %v6488 = vsel %vm2593, %v6449, 0
      %v6490 = vsel %vm2593, %v6451, 0
      %v6492 = vsel %vm2593, %v6453, 0
      %v6494 = vsel %vm2593, %v6455, 0
      %v6496 = vsel %vm2593, %v6457, 0
      %v6498 = vsel %vm2593, %v6459, 0
      %v6501 = vsel %vm2626, %v6467, 0
      %6503 = vmatprep.subr.bf16.mxu0 0
      %6504 = vmatpush1.bf16.msra.mxu0 0
      %6505 = vmatprep.subr.bf16.mxu0 0
      %6506 = vmatpush1.bf16.msra.mxu0 0
      %6507 = vmatprep.subr.bf16.mxu0 0
      %6508 = vmatpush1.bf16.msra.mxu0 0
      %6509 = vmatprep.subr.bf16.mxu0 0
      %6510 = vmatpush1.bf16.msra.mxu0 0
      %6511 = vmatprep.subr.bf16.mxu0 0
      %6512 = vmatpush1.bf16.msra.mxu0 0
      %6513 = vmatprep.subr.bf16.mxu0 0
      %6514 = vmatpush1.bf16.msra.mxu0 0
      %6515 = vmatprep.subr.bf16.mxu0 0
      %6516 = vmatpush1.bf16.msra.mxu0 0
      %6517 = vmatprep.subr.bf16.mxu0 0
      %6518 = vmatpush1.bf16.msra.mxu0 %v6501
      %6519 = vmatprep.subr.bf16.mxu0 0
      %6520 = vmatpush2.bf16.msra.mxu0 0
      %6521 = vmatprep.subr.bf16.mxu0 0
      %6522 = vmatpush2.bf16.msra.mxu0 0
      %6523 = vmatprep.subr.bf16.mxu0 0
      %6524 = vmatpush2.bf16.msra.mxu0 0
      %6525 = vmatprep.subr.bf16.mxu0 0
      %6526 = vmatpush2.bf16.msra.mxu0 0
      %6527 = vmatprep.subr.bf16.mxu0 0
      %6528 = vmatpush2.bf16.msra.mxu0 0
      %6529 = vmatprep.subr.bf16.mxu0 0
      %6530 = vmatpush2.bf16.msra.mxu0 0
      %6531 = vmatprep.subr.bf16.mxu0 0
      %6532 = vmatpush2.bf16.msra.mxu0 0
      %6533 = vmatprep.subr.bf16.mxu0 0
      %6534 = vmatpush2.bf16.msra.mxu0 0
      %6535 = vmatprep.mubr.bf16.mxu0 0
      %6536 = vmatmul.mubr.bf16.gmra.mxu0 %v6468
      %v6537 = vpop.f32.mrf.mxu0
      %v6538 = vadd.f32 0.0, %v6537
      %v6539 = vpop.f32.mrf.mxu0
      %v6540 = vpop.f32.mrf.mxu0
      %v6541 = vadd.f32 0.0, %v6540
      %v6542 = vpop.f32.mrf.mxu0
      %6543 = vmatprep.mubr.bf16.mxu0 0
      %6544 = vmatmul.mubr.bf16.gmra.mxu0 %v6470
      %v6545 = vpop.f32.mrf.mxu0
      %v6546 = vadd.f32 0.0, %v6545
      %v6547 = vpop.f32.mrf.mxu0
      %v6548 = vpop.f32.mrf.mxu0
      %v6549 = vadd.f32 0.0, %v6548
      %v6550 = vpop.f32.mrf.mxu0
      %6551 = vmatprep.mubr.bf16.mxu0 0
      %6552 = vmatmul.mubr.bf16.gmra.mxu0 %v6472
      %v6553 = vpop.f32.mrf.mxu0
      %v6554 = vadd.f32 0.0, %v6553
      %v6555 = vpop.f32.mrf.mxu0
      %v6556 = vpop.f32.mrf.mxu0
      %v6557 = vadd.f32 0.0, %v6556
      %v6558 = vpop.f32.mrf.mxu0
      %6559 = vmatprep.mubr.bf16.mxu0 0
      %6560 = vmatmul.mubr.bf16.gmra.mxu0 %v6474
      %v6561 = vpop.f32.mrf.mxu0
      %v6562 = vadd.f32 0.0, %v6561
      %v6563 = vpop.f32.mrf.mxu0
      %v6564 = vpop.f32.mrf.mxu0
      %v6565 = vadd.f32 0.0, %v6564
      %v6566 = vpop.f32.mrf.mxu0
      %6567 = vmatprep.mubr.bf16.mxu0 0
      %6568 = vmatmul.mubr.bf16.gmra.mxu0 %v6476
      %v6569 = vpop.f32.mrf.mxu0
      %v6570 = vadd.f32 0.0, %v6569
      %v6571 = vpop.f32.mrf.mxu0
      %v6572 = vpop.f32.mrf.mxu0
      %v6573 = vadd.f32 0.0, %v6572
      %v6574 = vpop.f32.mrf.mxu0
      %6575 = vmatprep.mubr.bf16.mxu0 0
      %6576 = vmatmul.mubr.bf16.gmra.mxu0 %v6478
      %v6577 = vpop.f32.mrf.mxu0
      %v6578 = vadd.f32 0.0, %v6577
      %v6579 = vpop.f32.mrf.mxu0
      %v6580 = vpop.f32.mrf.mxu0
      %v6581 = vadd.f32 0.0, %v6580
      %v6582 = vpop.f32.mrf.mxu0
      %6583 = vmatprep.mubr.bf16.mxu0 0
      %6584 = vmatmul.mubr.bf16.gmra.mxu0 %v6480
      %v6585 = vpop.f32.mrf.mxu0
      %v6586 = vadd.f32 0.0, %v6585
      %v6587 = vpop.f32.mrf.mxu0
      %v6588 = vpop.f32.mrf.mxu0
      %v6589 = vadd.f32 0.0, %v6588
      %v6590 = vpop.f32.mrf.mxu0
      %6591 = vmatprep.mubr.bf16.mxu0 0
      %6592 = vmatmul.mubr.bf16.gmra.mxu0 %v6482
      %v6593 = vpop.f32.mrf.mxu0
      %v6594 = vadd.f32 0.0, %v6593
      %v6595 = vpop.f32.mrf.mxu0
      %v6596 = vpop.f32.mrf.mxu0
      %v6597 = vadd.f32 0.0, %v6596
      %v6598 = vpop.f32.mrf.mxu0
      %6599 = vmatprep.mubr.bf16.mxu0 0
      %6600 = vmatmul.mubr.bf16.gmra.mxu0 %v6484
      %v6601 = vpop.f32.mrf.mxu0
      %v6602 = vadd.f32 0.0, %v6601
      %v6603 = vpop.f32.mrf.mxu0
      %v6604 = vpop.f32.mrf.mxu0
      %v6605 = vadd.f32 0.0, %v6604
      %v6606 = vpop.f32.mrf.mxu0
      %6607 = vmatprep.mubr.bf16.mxu0 0
      %6608 = vmatmul.mubr.bf16.gmra.mxu0 %v6486
      %v6609 = vpop.f32.mrf.mxu0
      %v6610 = vadd.f32 0.0, %v6609
      %v6611 = vpop.f32.mrf.mxu0
      %v6612 = vpop.f32.mrf.mxu0
      %v6613 = vadd.f32 0.0, %v6612
      %v6614 = vpop.f32.mrf.mxu0
      %6615 = vmatprep.mubr.bf16.mxu0 0
      %6616 = vmatmul.mubr.bf16.gmra.mxu0 %v6488
      %v6617 = vpop.f32.mrf.mxu0
      %v6618 = vadd.f32 0.0, %v6617
      %v6619 = vpop.f32.mrf.mxu0
      %v6620 = vpop.f32.mrf.mxu0
      %v6621 = vadd.f32 0.0, %v6620
      %v6622 = vpop.f32.mrf.mxu0
      %6623 = vmatprep.mubr.bf16.mxu0 0
      %6624 = vmatmul.mubr.bf16.gmra.mxu0 %v6490
      %v6625 = vpop.f32.mrf.mxu0
      %v6626 = vadd.f32 0.0, %v6625
      %v6627 = vpop.f32.mrf.mxu0
      %v6628 = vpop.f32.mrf.mxu0
      %v6629 = vadd.f32 0.0, %v6628
      %v6630 = vpop.f32.mrf.mxu0
      %6631 = vmatprep.mubr.bf16.mxu0 0
      %6632 = vmatmul.mubr.bf16.gmra.mxu0 %v6492
      %v6633 = vpop.f32.mrf.mxu0
      %v6634 = vadd.f32 0.0, %v6633
      %v6635 = vpop.f32.mrf.mxu0
      %v6636 = vpop.f32.mrf.mxu0
      %v6637 = vadd.f32 0.0, %v6636
      %v6638 = vpop.f32.mrf.mxu0
      %6639 = vmatprep.mubr.bf16.mxu0 0
      %6640 = vmatmul.mubr.bf16.gmra.mxu0 %v6494
      %v6641 = vpop.f32.mrf.mxu0
      %v6642 = vadd.f32 0.0, %v6641
      %v6643 = vpop.f32.mrf.mxu0
      %v6644 = vpop.f32.mrf.mxu0
      %v6645 = vadd.f32 0.0, %v6644
      %v6646 = vpop.f32.mrf.mxu0
      %6647 = vmatprep.mubr.bf16.mxu0 0
      %6648 = vmatmul.mubr.bf16.gmra.mxu0 %v6496
      %v6649 = vpop.f32.mrf.mxu0
      %v6650 = vadd.f32 0.0, %v6649
      %v6651 = vpop.f32.mrf.mxu0
      %v6652 = vpop.f32.mrf.mxu0
      %v6653 = vadd.f32 0.0, %v6652
      %v6654 = vpop.f32.mrf.mxu0
      %6655 = vmatprep.mubr.bf16.mxu0 0
      %6656 = vmatmul.mubr.bf16.gmra.mxu0 %v6498
      %v6657 = vpop.f32.mrf.mxu0
      %v6658 = vadd.f32 0.0, %v6657
      %v6659 = vpop.f32.mrf.mxu0
      %v6660 = vpop.f32.mrf.mxu0
      %v6661 = vadd.f32 0.0, %v6660
      %v6662 = vpop.f32.mrf.mxu0
      %6663 = vdwg.mxu0
      %v6666 = vunpack.c.l.b16 %v5546
      %v6667 = vunpack.c.l.b16 %v5547
      %v6668 = vpack.c.b16 %v6667, %v6666
      %v6669 = vsel %vm2593, %v5515, 0
      %v6671 = vsel %vm2593, %v5517, 0
      %v6673 = vsel %vm2593, %v5519, 0
      %v6675 = vsel %vm2593, %v5521, 0
      %v6677 = vsel %vm2593, %v5523, 0
      %v6679 = vsel %vm2593, %v5525, 0
      %v6681 = vsel %vm2593, %v5527, 0
      %v6683 = vsel %vm2593, %v5529, 0
      %v6685 = vsel %vm2593, %v5531, 0
      %v6687 = vsel %vm2593, %v5533, 0
      %v6689 = vsel %vm2593, %v5535, 0
      %v6691 = vsel %vm2593, %v5537, 0
      %v6693 = vsel %vm2593, %v5539, 0
      %v6695 = vsel %vm2593, %v5541, 0
      %v6697 = vsel %vm2593, %v5543, 0
      %v6699 = vsel %vm2593, %v5545, 0
      %v6702 = vsel %vm2626, %v6668, 0
      %6704 = vmatprep.subr.bf16.mxu0 0
      %6705 = vmatpush1.bf16.msra.mxu0 0
      %6706 = vmatprep.subr.bf16.mxu0 0
      %6707 = vmatpush1.bf16.msra.mxu0 0
      %6708 = vmatprep.subr.bf16.mxu0 0
      %6709 = vmatpush1.bf16.msra.mxu0 0
      %6710 = vmatprep.subr.bf16.mxu0 0
      %6711 = vmatpush1.bf16.msra.mxu0 0
      %6712 = vmatprep.subr.bf16.mxu0 0
      %6713 = vmatpush1.bf16.msra.mxu0 0
      %6714 = vmatprep.subr.bf16.mxu0 0
      %6715 = vmatpush1.bf16.msra.mxu0 0
      %6716 = vmatprep.subr.bf16.mxu0 0
      %6717 = vmatpush1.bf16.msra.mxu0 0
      %6718 = vmatprep.subr.bf16.mxu0 0
      %6719 = vmatpush1.bf16.msra.mxu0 %v6702
      %6720 = vmatprep.subr.bf16.mxu0 0
      %6721 = vmatpush2.bf16.msra.mxu0 0
      %6722 = vmatprep.subr.bf16.mxu0 0
      %6723 = vmatpush2.bf16.msra.mxu0 0
      %6724 = vmatprep.subr.bf16.mxu0 0
      %6725 = vmatpush2.bf16.msra.mxu0 0
      %6726 = vmatprep.subr.bf16.mxu0 0
      %6727 = vmatpush2.bf16.msra.mxu0 0
      %6728 = vmatprep.subr.bf16.mxu0 0
      %6729 = vmatpush2.bf16.msra.mxu0 0
      %6730 = vmatprep.subr.bf16.mxu0 0
      %6731 = vmatpush2.bf16.msra.mxu0 0
      %6732 = vmatprep.subr.bf16.mxu0 0
      %6733 = vmatpush2.bf16.msra.mxu0 0
      %6734 = vmatprep.subr.bf16.mxu0 0
      %6735 = vmatpush2.bf16.msra.mxu0 0
      %6736 = vmatprep.mubr.bf16.mxu0 0
      %6737 = vmatmul.mubr.bf16.gmra.mxu0 %v6669
      %v6738 = vpop.f32.mrf.mxu0
      %v6739 = vadd.f32 %v6538, %v6738
      %v6740 = vpop.f32.mrf.mxu0
      %v6741 = vpop.f32.mrf.mxu0
      %v6742 = vadd.f32 %v6541, %v6741
      %v6743 = vpop.f32.mrf.mxu0
      %6744 = vmatprep.mubr.bf16.mxu0 0
      %6745 = vmatmul.mubr.bf16.gmra.mxu0 %v6671
      %v6746 = vpop.f32.mrf.mxu0
      %v6747 = vadd.f32 %v6546, %v6746
      %v6748 = vpop.f32.mrf.mxu0
      %v6749 = vpop.f32.mrf.mxu0
      %v6750 = vadd.f32 %v6549, %v6749
      %v6751 = vpop.f32.mrf.mxu0
      %6752 = vmatprep.mubr.bf16.mxu0 0
      %6753 = vmatmul.mubr.bf16.gmra.mxu0 %v6673
      %v6754 = vpop.f32.mrf.mxu0
      %v6755 = vadd.f32 %v6554, %v6754
      %v6756 = vpop.f32.mrf.mxu0
      %v6757 = vpop.f32.mrf.mxu0
      %v6758 = vadd.f32 %v6557, %v6757
      %v6759 = vpop.f32.mrf.mxu0
      %6760 = vmatprep.mubr.bf16.mxu0 0
      %6761 = vmatmul.mubr.bf16.gmra.mxu0 %v6675
      %v6762 = vpop.f32.mrf.mxu0
      %v6763 = vadd.f32 %v6562, %v6762
      %v6764 = vpop.f32.mrf.mxu0
      %v6765 = vpop.f32.mrf.mxu0
      %v6766 = vadd.f32 %v6565, %v6765
      %v6767 = vpop.f32.mrf.mxu0
      %6768 = vmatprep.mubr.bf16.mxu0 0
      %6769 = vmatmul.mubr.bf16.gmra.mxu0 %v6677
      %v6770 = vpop.f32.mrf.mxu0
      %v6771 = vadd.f32 %v6570, %v6770
      %v6772 = vpop.f32.mrf.mxu0
      %v6773 = vpop.f32.mrf.mxu0
      %v6774 = vadd.f32 %v6573, %v6773
      %v6775 = vpop.f32.mrf.mxu0
      %6776 = vmatprep.mubr.bf16.mxu0 0
      %6777 = vmatmul.mubr.bf16.gmra.mxu0 %v6679
      %v6778 = vpop.f32.mrf.mxu0
      %v6779 = vadd.f32 %v6578, %v6778
      %v6780 = vpop.f32.mrf.mxu0
      %v6781 = vpop.f32.mrf.mxu0
      %v6782 = vadd.f32 %v6581, %v6781
      %v6783 = vpop.f32.mrf.mxu0
      %6784 = vmatprep.mubr.bf16.mxu0 0
      %6785 = vmatmul.mubr.bf16.gmra.mxu0 %v6681
      %v6786 = vpop.f32.mrf.mxu0
      %v6787 = vadd.f32 %v6586, %v6786
      %v6788 = vpop.f32.mrf.mxu0
      %v6789 = vpop.f32.mrf.mxu0
      %v6790 = vadd.f32 %v6589, %v6789
      %v6791 = vpop.f32.mrf.mxu0
      %6792 = vmatprep.mubr.bf16.mxu0 0
      %6793 = vmatmul.mubr.bf16.gmra.mxu0 %v6683
      %v6794 = vpop.f32.mrf.mxu0
      %v6795 = vadd.f32 %v6594, %v6794
      %v6796 = vpop.f32.mrf.mxu0
      %v6797 = vpop.f32.mrf.mxu0
      %v6798 = vadd.f32 %v6597, %v6797
      %v6799 = vpop.f32.mrf.mxu0
      %6800 = vmatprep.mubr.bf16.mxu0 0
      %6801 = vmatmul.mubr.bf16.gmra.mxu0 %v6685
      %v6802 = vpop.f32.mrf.mxu0
      %v6803 = vadd.f32 %v6602, %v6802
      %v6804 = vpop.f32.mrf.mxu0
      %v6805 = vpop.f32.mrf.mxu0
      %v6806 = vadd.f32 %v6605, %v6805
      %v6807 = vpop.f32.mrf.mxu0
      %6808 = vmatprep.mubr.bf16.mxu0 0
      %6809 = vmatmul.mubr.bf16.gmra.mxu0 %v6687
      %v6810 = vpop.f32.mrf.mxu0
      %v6811 = vadd.f32 %v6610, %v6810
      %v6812 = vpop.f32.mrf.mxu0
      %v6813 = vpop.f32.mrf.mxu0
      %v6814 = vadd.f32 %v6613, %v6813
      %v6815 = vpop.f32.mrf.mxu0
      %6816 = vmatprep.mubr.bf16.mxu0 0
      %6817 = vmatmul.mubr.bf16.gmra.mxu0 %v6689
      %v6818 = vpop.f32.mrf.mxu0
      %v6819 = vadd.f32 %v6618, %v6818
      %v6820 = vpop.f32.mrf.mxu0
      %v6821 = vpop.f32.mrf.mxu0
      %v6822 = vadd.f32 %v6621, %v6821
      %v6823 = vpop.f32.mrf.mxu0
      %6824 = vmatprep.mubr.bf16.mxu0 0
      %6825 = vmatmul.mubr.bf16.gmra.mxu0 %v6691
      %v6826 = vpop.f32.mrf.mxu0
      %v6827 = vadd.f32 %v6626, %v6826
      %v6828 = vpop.f32.mrf.mxu0
      %v6829 = vpop.f32.mrf.mxu0
      %v6830 = vadd.f32 %v6629, %v6829
      %v6831 = vpop.f32.mrf.mxu0
      %6832 = vmatprep.mubr.bf16.mxu0 0
      %6833 = vmatmul.mubr.bf16.gmra.mxu0 %v6693
      %v6834 = vpop.f32.mrf.mxu0
      %v6835 = vadd.f32 %v6634, %v6834
      %v6836 = vpop.f32.mrf.mxu0
      %v6837 = vpop.f32.mrf.mxu0
      %v6838 = vadd.f32 %v6637, %v6837
      %v6839 = vpop.f32.mrf.mxu0
      %6840 = vmatprep.mubr.bf16.mxu0 0
      %6841 = vmatmul.mubr.bf16.gmra.mxu0 %v6695
      %v6842 = vpop.f32.mrf.mxu0
      %v6843 = vadd.f32 %v6642, %v6842
      %v6844 = vpop.f32.mrf.mxu0
      %v6845 = vpop.f32.mrf.mxu0
      %v6846 = vadd.f32 %v6645, %v6845
      %v6847 = vpop.f32.mrf.mxu0
      %6848 = vmatprep.mubr.bf16.mxu0 0
      %6849 = vmatmul.mubr.bf16.gmra.mxu0 %v6697
      %v6850 = vpop.f32.mrf.mxu0
      %v6851 = vadd.f32 %v6650, %v6850
      %v6852 = vpop.f32.mrf.mxu0
      %v6853 = vpop.f32.mrf.mxu0
      %v6854 = vadd.f32 %v6653, %v6853
      %v6855 = vpop.f32.mrf.mxu0
      %6856 = vmatprep.mubr.bf16.mxu0 0
      %6857 = vmatmul.mubr.bf16.gmra.mxu0 %v6699
      %v6858 = vpop.f32.mrf.mxu0
      %v6859 = vadd.f32 %v6658, %v6858
      %v6860 = vpop.f32.mrf.mxu0
      %v6861 = vpop.f32.mrf.mxu0
      %v6862 = vadd.f32 %v6661, %v6861
      %v6863 = vpop.f32.mrf.mxu0
      %6864 = vdwg.mxu0
      %v6865 = vld [vmem:[%s2992] sm:$0xf]
      %v6866 = vld [vmem:[%s2992 + $0x4] sm:$0xf]
      %v6867 = vld [vmem:[%s2992 + $0xc] sm:$0xf]
      %v6868 = vld [vmem:[%s2992 + $0x10] sm:$0xf]
      %v6869 = vld [vmem:[%s2992 + $0x18] sm:$0xf]
      %v6870 = vld [vmem:[%s2992 + $0x1c] sm:$0xf]
      %v6871 = vld [vmem:[%s2992 + $0x24] sm:$0xf]
      %v6872 = vld [vmem:[%s2992 + $0x28] sm:$0xf]
      %v6873 = vld [vmem:[%s2992 + $0x30] sm:$0xf]
      %v6874 = vld [vmem:[%s2992 + $0x34] sm:$0xf]
      %v6875 = vld [vmem:[%s2992 + $0x3c] sm:$0xf]
      %v6876 = vld [vmem:[%s2992 + $0x40] sm:$0xf]
      %v6877 = vld [vmem:[%s2992 + $0x48] sm:$0xf]
      %v6878 = vld [vmem:[%s2992 + $0x4c] sm:$0xf]
      %v6879 = vld [vmem:[%s2992 + $0x54] sm:$0xf]
      %v6880 = vld [vmem:[%s2992 + $0x58] sm:$0xf]
      %v6881 = vld [vmem:[%s2992 + $0x60] sm:$0xf]
      %v6882 = vld [vmem:[%s2992 + $0x64] sm:$0xf]
      %v6883 = vld [vmem:[%s2992 + $0x6c] sm:$0xf]
      %v6884 = vld [vmem:[%s2992 + $0x70] sm:$0xf]
      %v6885 = vld [vmem:[%s2992 + $0x78] sm:$0xf]
      %v6886 = vld [vmem:[%s2992 + $0x7c] sm:$0xf]
      %v6887 = vld [vmem:[%s2992 + $0x84] sm:$0xf]
      %v6888 = vld [vmem:[%s2992 + $0x88] sm:$0xf]
      %v6889 = vld [vmem:[%s2992 + $0x90] sm:$0xf]
      %v6890 = vld [vmem:[%s2992 + $0x94] sm:$0xf]
      %v6891 = vld [vmem:[%s2992 + $0x9c] sm:$0xf]
      %v6892 = vld [vmem:[%s2992 + $0xa0] sm:$0xf]
      %v6893 = vld [vmem:[%s2992 + $0xa8] sm:$0xf]
      %v6894 = vld [vmem:[%s2992 + $0xac] sm:$0xf]
      %v6895 = vld [vmem:[%s2992 + $0xb4] sm:$0xf]
      %v6896 = vld [vmem:[%s2992 + $0xb8] sm:$0xf]
      %v6897 = vld [vmem:[%s2992 + $0x8] sm:$0x1]
      %v6898 = vld [vmem:[%s2992 + $0x14] sm:$0x1]
      %v6899 = vld [vmem:[%s2992 + $0x20] sm:$0x1]
      %v6900 = vld [vmem:[%s2992 + $0x2c] sm:$0x1]
      %v6901 = vld [vmem:[%s2992 + $0x38] sm:$0x1]
      %v6902 = vld [vmem:[%s2992 + $0x44] sm:$0x1]
      %v6903 = vld [vmem:[%s2992 + $0x50] sm:$0x1]
      %v6904 = vld [vmem:[%s2992 + $0x5c] sm:$0x1]
      %v6905 = vld [vmem:[%s2992 + $0x68] sm:$0x1]
      %v6906 = vld [vmem:[%s2992 + $0x74] sm:$0x1]
      %v6907 = vld [vmem:[%s2992 + $0x80] sm:$0x1]
      %v6908 = vld [vmem:[%s2992 + $0x8c] sm:$0x1]
      %v6909 = vld [vmem:[%s2992 + $0x98] sm:$0x1]
      %v6910 = vld [vmem:[%s2992 + $0xa4] sm:$0x1]
      %v6911 = vld [vmem:[%s2992 + $0xb0] sm:$0x1]
      %v6912 = vld [vmem:[%s2992 + $0xbc] sm:$0x1]
      %v6914 = vshrl.u32 %v6865, 16
      %v6916 = vrot.slane %v6914, 4
      %v6917 = vshll.u32 %v6865, 16
      %v6919 = vrot.slane %v6917, 5
      %v6920 = vor.u32 %v6916, %v6919
      %v6921 = vrot.slane %v6920, 4
      %v6923 = vshll.u32 %v6866, 16
      %v6925 = vrot.slane %v6923, 5
      %v6926 = vsel %vm801, %v6921, %v6925
      %v6927 = vshrl.u32 %v6866, 16
      %v6929 = vrot.slane %v6927, 4
      %v6930 = vor.u32 %v6929, %v6925
      %v6931 = vrot.slane %v6930, 4
      %v6933 = vshll.u32 %v6897, 16
      %v6935 = vrot.slane %v6933, 5
      %v6936 = vsel %vm801, %v6931, %v6935
      %v6938 = vshrl.u32 %v6867, 16
      %v6940 = vrot.slane %v6938, 4
      %v6941 = vshll.u32 %v6867, 16
      %v6943 = vrot.slane %v6941, 5
      %v6944 = vor.u32 %v6940, %v6943
      %v6945 = vrot.slane %v6944, 4
      %v6947 = vshll.u32 %v6868, 16
      %v6949 = vrot.slane %v6947, 5
      %v6950 = vsel %vm801, %v6945, %v6949
      %v6951 = vshrl.u32 %v6868, 16
      %v6953 = vrot.slane %v6951, 4
      %v6954 = vor.u32 %v6953, %v6949
      %v6955 = vrot.slane %v6954, 4
      %v6957 = vshll.u32 %v6898, 16
      %v6959 = vrot.slane %v6957, 5
      %v6960 = vsel %vm801, %v6955, %v6959
      %v6962 = vshrl.u32 %v6869, 16
      %v6964 = vrot.slane %v6962, 4
      %v6965 = vshll.u32 %v6869, 16
      %v6967 = vrot.slane %v6965, 5
      %v6968 = vor.u32 %v6964, %v6967
      %v6969 = vrot.slane %v6968, 4
      %v6971 = vshll.u32 %v6870, 16
      %v6973 = vrot.slane %v6971, 5
      %v6974 = vsel %vm801, %v6969, %v6973
      %v6975 = vshrl.u32 %v6870, 16
      %v6977 = vrot.slane %v6975, 4
      %v6978 = vor.u32 %v6977, %v6973
      %v6979 = vrot.slane %v6978, 4
      %v6981 = vshll.u32 %v6899, 16
      %v6983 = vrot.slane %v6981, 5
      %v6984 = vsel %vm801, %v6979, %v6983
      %v6986 = vshrl.u32 %v6871, 16
      %v6988 = vrot.slane %v6986, 4
      %v6989 = vshll.u32 %v6871, 16
      %v6991 = vrot.slane %v6989, 5
      %v6992 = vor.u32 %v6988, %v6991
      %v6993 = vrot.slane %v6992, 4
      %v6995 = vshll.u32 %v6872, 16
      %v6997 = vrot.slane %v6995, 5
      %v6998 = vsel %vm801, %v6993, %v6997
      %v6999 = vshrl.u32 %v6872, 16
      %v7001 = vrot.slane %v6999, 4
      %v7002 = vor.u32 %v7001, %v6997
      %v7003 = vrot.slane %v7002, 4
      %v7005 = vshll.u32 %v6900, 16
      %v7007 = vrot.slane %v7005, 5
      %v7008 = vsel %vm801, %v7003, %v7007
      %v7010 = vshrl.u32 %v6873, 16
      %v7012 = vrot.slane %v7010, 4
      %v7013 = vshll.u32 %v6873, 16
      %v7015 = vrot.slane %v7013, 5
      %v7016 = vor.u32 %v7012, %v7015
      %v7017 = vrot.slane %v7016, 4
      %v7019 = vshll.u32 %v6874, 16
      %v7021 = vrot.slane %v7019, 5
      %v7022 = vsel %vm801, %v7017, %v7021
      %v7023 = vshrl.u32 %v6874, 16
      %v7025 = vrot.slane %v7023, 4
      %v7026 = vor.u32 %v7025, %v7021
      %v7027 = vrot.slane %v7026, 4
      %v7029 = vshll.u32 %v6901, 16
      %v7031 = vrot.slane %v7029, 5
      %v7032 = vsel %vm801, %v7027, %v7031
      %v7034 = vshrl.u32 %v6875, 16
      %v7036 = vrot.slane %v7034, 4
      %v7037 = vshll.u32 %v6875, 16
      %v7039 = vrot.slane %v7037, 5
      %v7040 = vor.u32 %v7036, %v7039
      %v7041 = vrot.slane %v7040, 4
      %v7043 = vshll.u32 %v6876, 16
      %v7045 = vrot.slane %v7043, 5
      %v7046 = vsel %vm801, %v7041, %v7045
      %v7047 = vshrl.u32 %v6876, 16
      %v7049 = vrot.slane %v7047, 4
      %v7050 = vor.u32 %v7049, %v7045
      %v7051 = vrot.slane %v7050, 4
      %v7053 = vshll.u32 %v6902, 16
      %v7055 = vrot.slane %v7053, 5
      %v7056 = vsel %vm801, %v7051, %v7055
      %v7058 = vshrl.u32 %v6877, 16
      %v7060 = vrot.slane %v7058, 4
      %v7061 = vshll.u32 %v6877, 16
      %v7063 = vrot.slane %v7061, 5
      %v7064 = vor.u32 %v7060, %v7063
      %v7065 = vrot.slane %v7064, 4
      %v7067 = vshll.u32 %v6878, 16
      %v7069 = vrot.slane %v7067, 5
      %v7070 = vsel %vm801, %v7065, %v7069
      %v7071 = vshrl.u32 %v6878, 16
      %v7073 = vrot.slane %v7071, 4
      %v7074 = vor.u32 %v7073, %v7069
      %v7075 = vrot.slane %v7074, 4
      %v7077 = vshll.u32 %v6903, 16
      %v7079 = vrot.slane %v7077, 5
      %v7080 = vsel %vm801, %v7075, %v7079
      %v7082 = vshrl.u32 %v6879, 16
      %v7084 = vrot.slane %v7082, 4
      %v7085 = vshll.u32 %v6879, 16
      %v7087 = vrot.slane %v7085, 5
      %v7088 = vor.u32 %v7084, %v7087
      %v7089 = vrot.slane %v7088, 4
      %v7091 = vshll.u32 %v6880, 16
      %v7093 = vrot.slane %v7091, 5
      %v7094 = vsel %vm801, %v7089, %v7093
      %v7095 = vshrl.u32 %v6880, 16
      %v7097 = vrot.slane %v7095, 4
      %v7098 = vor.u32 %v7097, %v7093
      %v7099 = vrot.slane %v7098, 4
      %v7101 = vshll.u32 %v6904, 16
      %v7103 = vrot.slane %v7101, 5
      %v7104 = vsel %vm801, %v7099, %v7103
      %v7106 = vshrl.u32 %v6881, 16
      %v7108 = vrot.slane %v7106, 4
      %v7109 = vshll.u32 %v6881, 16
      %v7111 = vrot.slane %v7109, 5
      %v7112 = vor.u32 %v7108, %v7111
      %v7113 = vrot.slane %v7112, 4
      %v7115 = vshll.u32 %v6882, 16
      %v7117 = vrot.slane %v7115, 5
      %v7118 = vsel %vm801, %v7113, %v7117
      %v7119 = vshrl.u32 %v6882, 16
      %v7121 = vrot.slane %v7119, 4
      %v7122 = vor.u32 %v7121, %v7117
      %v7123 = vrot.slane %v7122, 4
      %v7125 = vshll.u32 %v6905, 16
      %v7127 = vrot.slane %v7125, 5
      %v7128 = vsel %vm801, %v7123, %v7127
      %v7130 = vshrl.u32 %v6883, 16
      %v7132 = vrot.slane %v7130, 4
      %v7133 = vshll.u32 %v6883, 16
      %v7135 = vrot.slane %v7133, 5
      %v7136 = vor.u32 %v7132, %v7135
      %v7137 = vrot.slane %v7136, 4
      %v7139 = vshll.u32 %v6884, 16
      %v7141 = vrot.slane %v7139, 5
      %v7142 = vsel %vm801, %v7137, %v7141
      %v7143 = vshrl.u32 %v6884, 16
      %v7145 = vrot.slane %v7143, 4
      %v7146 = vor.u32 %v7145, %v7141
      %v7147 = vrot.slane %v7146, 4
      %v7149 = vshll.u32 %v6906, 16
      %v7151 = vrot.slane %v7149, 5
      %v7152 = vsel %vm801, %v7147, %v7151
      %v7154 = vshrl.u32 %v6885, 16
      %v7156 = vrot.slane %v7154, 4
      %v7157 = vshll.u32 %v6885, 16
      %v7159 = vrot.slane %v7157, 5
      %v7160 = vor.u32 %v7156, %v7159
      %v7161 = vrot.slane %v7160, 4
      %v7163 = vshll.u32 %v6886, 16
      %v7165 = vrot.slane %v7163, 5
      %v7166 = vsel %vm801, %v7161, %v7165
      %v7167 = vshrl.u32 %v6886, 16
      %v7169 = vrot.slane %v7167, 4
      %v7170 = vor.u32 %v7169, %v7165
      %v7171 = vrot.slane %v7170, 4
      %v7173 = vshll.u32 %v6907, 16
      %v7175 = vrot.slane %v7173, 5
      %v7176 = vsel %vm801, %v7171, %v7175
      %v7178 = vshrl.u32 %v6887, 16
      %v7180 = vrot.slane %v7178, 4
      %v7181 = vshll.u32 %v6887, 16
      %v7183 = vrot.slane %v7181, 5
      %v7184 = vor.u32 %v7180, %v7183
      %v7185 = vrot.slane %v7184, 4
      %v7187 = vshll.u32 %v6888, 16
      %v7189 = vrot.slane %v7187, 5
      %v7190 = vsel %vm801, %v7185, %v7189
      %v7191 = vshrl.u32 %v6888, 16
      %v7193 = vrot.slane %v7191, 4
      %v7194 = vor.u32 %v7193, %v7189
      %v7195 = vrot.slane %v7194, 4
      %v7197 = vshll.u32 %v6908, 16
      %v7199 = vrot.slane %v7197, 5
      %v7200 = vsel %vm801, %v7195, %v7199
      %v7202 = vshrl.u32 %v6889, 16
      %v7204 = vrot.slane %v7202, 4
      %v7205 = vshll.u32 %v6889, 16
      %v7207 = vrot.slane %v7205, 5
      %v7208 = vor.u32 %v7204, %v7207
      %v7209 = vrot.slane %v7208, 4
      %v7211 = vshll.u32 %v6890, 16
      %v7213 = vrot.slane %v7211, 5
      %v7214 = vsel %vm801, %v7209, %v7213
      %v7215 = vshrl.u32 %v6890, 16
      %v7217 = vrot.slane %v7215, 4
      %v7218 = vor.u32 %v7217, %v7213
      %v7219 = vrot.slane %v7218, 4
      %v7221 = vshll.u32 %v6909, 16
      %v7223 = vrot.slane %v7221, 5
      %v7224 = vsel %vm801, %v7219, %v7223
      %v7226 = vshrl.u32 %v6891, 16
      %v7228 = vrot.slane %v7226, 4
      %v7229 = vshll.u32 %v6891, 16
      %v7231 = vrot.slane %v7229, 5
      %v7232 = vor.u32 %v7228, %v7231
      %v7233 = vrot.slane %v7232, 4
      %v7235 = vshll.u32 %v6892, 16
      %v7237 = vrot.slane %v7235, 5
      %v7238 = vsel %vm801, %v7233, %v7237
      %v7239 = vshrl.u32 %v6892, 16
      %v7241 = vrot.slane %v7239, 4
      %v7242 = vor.u32 %v7241, %v7237
      %v7243 = vrot.slane %v7242, 4
      %v7245 = vshll.u32 %v6910, 16
      %v7247 = vrot.slane %v7245, 5
      %v7248 = vsel %vm801, %v7243, %v7247
      %v7250 = vshrl.u32 %v6893, 16
      %v7252 = vrot.slane %v7250, 4
      %v7253 = vshll.u32 %v6893, 16
      %v7255 = vrot.slane %v7253, 5
      %v7256 = vor.u32 %v7252, %v7255
      %v7257 = vrot.slane %v7256, 4
      %v7259 = vshll.u32 %v6894, 16
      %v7261 = vrot.slane %v7259, 5
      %v7262 = vsel %vm801, %v7257, %v7261
      %v7263 = vshrl.u32 %v6894, 16
      %v7265 = vrot.slane %v7263, 4
      %v7266 = vor.u32 %v7265, %v7261
      %v7267 = vrot.slane %v7266, 4
      %v7269 = vshll.u32 %v6911, 16
      %v7271 = vrot.slane %v7269, 5
      %v7272 = vsel %vm801, %v7267, %v7271
      %v7274 = vshrl.u32 %v6895, 16
      %v7276 = vrot.slane %v7274, 4
      %v7277 = vshll.u32 %v6895, 16
      %v7279 = vrot.slane %v7277, 5
      %v7280 = vor.u32 %v7276, %v7279
      %v7281 = vrot.slane %v7280, 4
      %v7283 = vshll.u32 %v6896, 16
      %v7285 = vrot.slane %v7283, 5
      %v7286 = vsel %vm801, %v7281, %v7285
      %v7287 = vshrl.u32 %v6896, 16
      %v7289 = vrot.slane %v7287, 4
      %v7290 = vor.u32 %v7289, %v7285
      %v7291 = vrot.slane %v7290, 4
      %v7293 = vshll.u32 %v6912, 16
      %v7295 = vrot.slane %v7293, 5
      %v7296 = vsel %vm801, %v7291, %v7295
      %v7297 = vld [vmem:[%s2992] sm:$0xe]
      %v7298 = vld [vmem:[%s2992 + $0xc] sm:$0xe]
      %v7299 = vld [vmem:[%s2992 + $0x18] sm:$0xe]
      %v7300 = vld [vmem:[%s2992 + $0x24] sm:$0xe]
      %v7301 = vld [vmem:[%s2992 + $0x30] sm:$0xe]
      %v7302 = vld [vmem:[%s2992 + $0x3c] sm:$0xe]
      %v7303 = vld [vmem:[%s2992 + $0x48] sm:$0xe]
      %v7304 = vld [vmem:[%s2992 + $0x54] sm:$0xe]
      %v7305 = vld [vmem:[%s2992 + $0x60] sm:$0xe]
      %v7306 = vld [vmem:[%s2992 + $0x6c] sm:$0xe]
      %v7307 = vld [vmem:[%s2992 + $0x78] sm:$0xe]
      %v7308 = vld [vmem:[%s2992 + $0x84] sm:$0xe]
      %v7309 = vld [vmem:[%s2992 + $0x90] sm:$0xe]
      %v7310 = vld [vmem:[%s2992 + $0x9c] sm:$0xe]
      %v7311 = vld [vmem:[%s2992 + $0xa8] sm:$0xe]
      %v7312 = vld [vmem:[%s2992 + $0xb4] sm:$0xe]
      %v7361 = vrot.slane %v7297, 5
      %v7362 = vrot.slane %v7361, 4
      %v7363 = vrot.slane %v6866, 5
      %v7364 = vsel %vm1252, %v7362, %v7363
      %v7365 = vrot.slane %v7363, 4
      %v7366 = vrot.slane %v6897, 5
      %v7367 = vsel %vm1252, %v7365, %v7366
      %v7368 = vrot.slane %v7298, 5
      %v7369 = vrot.slane %v7368, 4
      %v7370 = vrot.slane %v6868, 5
      %v7371 = vsel %vm1252, %v7369, %v7370
      %v7372 = vrot.slane %v7370, 4
      %v7373 = vrot.slane %v6898, 5
      %v7374 = vsel %vm1252, %v7372, %v7373
      %v7375 = vrot.slane %v7299, 5
      %v7376 = vrot.slane %v7375, 4
      %v7377 = vrot.slane %v6870, 5
      %v7378 = vsel %vm1252, %v7376, %v7377
      %v7379 = vrot.slane %v7377, 4
      %v7380 = vrot.slane %v6899, 5
      %v7381 = vsel %vm1252, %v7379, %v7380
      %v7382 = vrot.slane %v7300, 5
      %v7383 = vrot.slane %v7382, 4
      %v7384 = vrot.slane %v6872, 5
      %v7385 = vsel %vm1252, %v7383, %v7384
      %v7386 = vrot.slane %v7384, 4
      %v7387 = vrot.slane %v6900, 5
      %v7388 = vsel %vm1252, %v7386, %v7387
      %v7389 = vrot.slane %v7301, 5
      %v7390 = vrot.slane %v7389, 4
      %v7391 = vrot.slane %v6874, 5
      %v7392 = vsel %vm1252, %v7390, %v7391
      %v7393 = vrot.slane %v7391, 4
      %v7394 = vrot.slane %v6901, 5
      %v7395 = vsel %vm1252, %v7393, %v7394
      %v7396 = vrot.slane %v7302, 5
      %v7397 = vrot.slane %v7396, 4
      %v7398 = vrot.slane %v6876, 5
      %v7399 = vsel %vm1252, %v7397, %v7398
      %v7400 = vrot.slane %v7398, 4
      %v7401 = vrot.slane %v6902, 5
      %v7402 = vsel %vm1252, %v7400, %v7401
      %v7403 = vrot.slane %v7303, 5
      %v7404 = vrot.slane %v7403, 4
      %v7405 = vrot.slane %v6878, 5
      %v7406 = vsel %vm1252, %v7404, %v7405
      %v7407 = vrot.slane %v7405, 4
      %v7408 = vrot.slane %v6903, 5
      %v7409 = vsel %vm1252, %v7407, %v7408
      %v7410 = vrot.slane %v7304, 5
      %v7411 = vrot.slane %v7410, 4
      %v7412 = vrot.slane %v6880, 5
      %v7413 = vsel %vm1252, %v7411, %v7412
      %v7414 = vrot.slane %v7412, 4
      %v7415 = vrot.slane %v6904, 5
      %v7416 = vsel %vm1252, %v7414, %v7415
      %v7417 = vrot.slane %v7305, 5
      %v7418 = vrot.slane %v7417, 4
      %v7419 = vrot.slane %v6882, 5
      %v7420 = vsel %vm1252, %v7418, %v7419
      %v7421 = vrot.slane %v7419, 4
      %v7422 = vrot.slane %v6905, 5
      %v7423 = vsel %vm1252, %v7421, %v7422
      %v7424 = vrot.slane %v7306, 5
      %v7425 = vrot.slane %v7424, 4
      %v7426 = vrot.slane %v6884, 5
      %v7427 = vsel %vm1252, %v7425, %v7426
      %v7428 = vrot.slane %v7426, 4
      %v7429 = vrot.slane %v6906, 5
      %v7430 = vsel %vm1252, %v7428, %v7429
      %v7431 = vrot.slane %v7307, 5
      %v7432 = vrot.slane %v7431, 4
      %v7433 = vrot.slane %v6886, 5
      %v7434 = vsel %vm1252, %v7432, %v7433
      %v7435 = vrot.slane %v7433, 4
      %v7436 = vrot.slane %v6907, 5
      %v7437 = vsel %vm1252, %v7435, %v7436
      %v7438 = vrot.slane %v7308, 5
      %v7439 = vrot.slane %v7438, 4
      %v7440 = vrot.slane %v6888, 5
      %v7441 = vsel %vm1252, %v7439, %v7440
      %v7442 = vrot.slane %v7440, 4
      %v7443 = vrot.slane %v6908, 5
      %v7444 = vsel %vm1252, %v7442, %v7443
      %v7445 = vrot.slane %v7309, 5
      %v7446 = vrot.slane %v7445, 4
      %v7447 = vrot.slane %v6890, 5
      %v7448 = vsel %vm1252, %v7446, %v7447
      %v7449 = vrot.slane %v7447, 4
      %v7450 = vrot.slane %v6909, 5
      %v7451 = vsel %vm1252, %v7449, %v7450
      %v7452 = vrot.slane %v7310, 5
      %v7453 = vrot.slane %v7452, 4
      %v7454 = vrot.slane %v6892, 5
      %v7455 = vsel %vm1252, %v7453, %v7454
      %v7456 = vrot.slane %v7454, 4
      %v7457 = vrot.slane %v6910, 5
      %v7458 = vsel %vm1252, %v7456, %v7457
      %v7459 = vrot.slane %v7311, 5
      %v7460 = vrot.slane %v7459, 4
      %v7461 = vrot.slane %v6894, 5
      %v7462 = vsel %vm1252, %v7460, %v7461
      %v7463 = vrot.slane %v7461, 4
      %v7464 = vrot.slane %v6911, 5
      %v7465 = vsel %vm1252, %v7463, %v7464
      %v7466 = vrot.slane %v7312, 5
      %v7467 = vrot.slane %v7466, 4
      %v7468 = vrot.slane %v6896, 5
      %v7469 = vsel %vm1252, %v7467, %v7468
      %v7470 = vrot.slane %v7468, 4
      %v7471 = vrot.slane %v6912, 5
      %v7472 = vsel %vm1252, %v7470, %v7471
      %v7489 = vunpack.c.l.b16 %v6865
      %v7490 = vunpack.c.l.b16 %v6866
      %v7491 = vunpack.c.l.b16 %v6867
      %v7492 = vunpack.c.l.b16 %v6868
      %v7493 = vunpack.c.l.b16 %v6869
      %v7494 = vunpack.c.l.b16 %v6870
      %v7495 = vunpack.c.l.b16 %v6871
      %v7496 = vunpack.c.l.b16 %v6872
      %v7497 = vunpack.c.l.b16 %v6873
      %v7498 = vunpack.c.l.b16 %v6874
      %v7499 = vunpack.c.l.b16 %v6875
      %v7500 = vunpack.c.l.b16 %v6876
      %v7501 = vunpack.c.l.b16 %v6877
      %v7502 = vunpack.c.l.b16 %v6878
      %v7503 = vunpack.c.l.b16 %v6879
      %v7504 = vunpack.c.l.b16 %v6880
      %v7505 = vunpack.c.l.b16 %v6881
      %v7506 = vunpack.c.l.b16 %v6882
      %v7507 = vunpack.c.l.b16 %v6883
      %v7508 = vunpack.c.l.b16 %v6884
      %v7509 = vunpack.c.l.b16 %v6885
      %v7510 = vunpack.c.l.b16 %v6886
      %v7511 = vunpack.c.l.b16 %v6887
      %v7512 = vunpack.c.l.b16 %v6888
      %v7513 = vunpack.c.l.b16 %v6889
      %v7514 = vunpack.c.l.b16 %v6890
      %v7515 = vunpack.c.l.b16 %v6891
      %v7516 = vunpack.c.l.b16 %v6892
      %v7517 = vunpack.c.l.b16 %v6893
      %v7518 = vunpack.c.l.b16 %v6894
      %v7519 = vunpack.c.l.b16 %v6895
      %v7520 = vunpack.c.l.b16 %v6896
      %v7521 = vpack.c.b16 %v7490, %v7489
      %v7522 = vpack.c.b16 %v7492, %v7491
      %v7523 = vpack.c.b16 %v7494, %v7493
      %v7524 = vpack.c.b16 %v7496, %v7495
      %v7525 = vpack.c.b16 %v7498, %v7497
      %v7526 = vpack.c.b16 %v7500, %v7499
      %v7527 = vpack.c.b16 %v7502, %v7501
      %v7528 = vpack.c.b16 %v7504, %v7503
      %v7529 = vpack.c.b16 %v7506, %v7505
      %v7530 = vpack.c.b16 %v7508, %v7507
      %v7531 = vpack.c.b16 %v7510, %v7509
      %v7532 = vpack.c.b16 %v7512, %v7511
      %v7533 = vpack.c.b16 %v7514, %v7513
      %v7534 = vpack.c.b16 %v7516, %v7515
      %v7535 = vpack.c.b16 %v7518, %v7517
      %v7536 = vpack.c.b16 %v7520, %v7519
      %v7537 = vunpack.c.l.b16 %v6926
      %v7538 = vunpack.c.l.b16 %v6936
      %v7539 = vunpack.c.l.b16 %v6950
      %v7540 = vunpack.c.l.b16 %v6960
      %v7541 = vunpack.c.l.b16 %v6974
      %v7542 = vunpack.c.l.b16 %v6984
      %v7543 = vunpack.c.l.b16 %v6998
      %v7544 = vunpack.c.l.b16 %v7008
      %v7545 = vunpack.c.l.b16 %v7022
      %v7546 = vunpack.c.l.b16 %v7032
      %v7547 = vunpack.c.l.b16 %v7046
      %v7548 = vunpack.c.l.b16 %v7056
      %v7549 = vunpack.c.l.b16 %v7070
      %v7550 = vunpack.c.l.b16 %v7080
      %v7551 = vunpack.c.l.b16 %v7094
      %v7552 = vunpack.c.l.b16 %v7104
      %v7553 = vunpack.c.l.b16 %v7118
      %v7554 = vunpack.c.l.b16 %v7128
      %v7555 = vunpack.c.l.b16 %v7142
      %v7556 = vunpack.c.l.b16 %v7152
      %v7557 = vunpack.c.l.b16 %v7166
      %v7558 = vunpack.c.l.b16 %v7176
      %v7559 = vunpack.c.l.b16 %v7190
      %v7560 = vunpack.c.l.b16 %v7200
      %v7561 = vunpack.c.l.b16 %v7214
      %v7562 = vunpack.c.l.b16 %v7224
      %v7563 = vunpack.c.l.b16 %v7238
      %v7564 = vunpack.c.l.b16 %v7248
      %v7565 = vunpack.c.l.b16 %v7262
      %v7566 = vunpack.c.l.b16 %v7272
      %v7567 = vunpack.c.l.b16 %v7286
      %v7568 = vunpack.c.l.b16 %v7296
      %v7569 = vpack.c.b16 %v7538, %v7537
      %v7570 = vpack.c.b16 %v7540, %v7539
      %v7571 = vpack.c.b16 %v7542, %v7541
      %v7572 = vpack.c.b16 %v7544, %v7543
      %v7573 = vpack.c.b16 %v7546, %v7545
      %v7574 = vpack.c.b16 %v7548, %v7547
      %v7575 = vpack.c.b16 %v7550, %v7549
      %v7576 = vpack.c.b16 %v7552, %v7551
      %v7577 = vpack.c.b16 %v7554, %v7553
      %v7578 = vpack.c.b16 %v7556, %v7555
      %v7579 = vpack.c.b16 %v7558, %v7557
      %v7580 = vpack.c.b16 %v7560, %v7559
      %v7581 = vpack.c.b16 %v7562, %v7561
      %v7582 = vpack.c.b16 %v7564, %v7563
      %v7583 = vpack.c.b16 %v7566, %v7565
      %v7584 = vpack.c.b16 %v7568, %v7567
      %7585 = vrot.lane.b32.xlu0 %v7569, 4
      %v7586 = vpop.permute.xlu0 %7585
      %7587 = vrot.lane.b32.xlu0 %v7570, 4
      %v7588 = vpop.permute.xlu0 %7587
      %7589 = vrot.lane.b32.xlu0 %v7571, 4
      %v7590 = vpop.permute.xlu0 %7589
      %7591 = vrot.lane.b32.xlu0 %v7572, 4
      %v7592 = vpop.permute.xlu0 %7591
      %7593 = vrot.lane.b32.xlu0 %v7573, 4
      %v7594 = vpop.permute.xlu0 %7593
      %7595 = vrot.lane.b32.xlu0 %v7574, 4
      %v7596 = vpop.permute.xlu0 %7595
      %7597 = vrot.lane.b32.xlu0 %v7575, 4
      %v7598 = vpop.permute.xlu0 %7597
      %7599 = vrot.lane.b32.xlu0 %v7576, 4
      %v7600 = vpop.permute.xlu0 %7599
      %7601 = vrot.lane.b32.xlu0 %v7577, 4
      %v7602 = vpop.permute.xlu0 %7601
      %7603 = vrot.lane.b32.xlu0 %v7578, 4
      %v7604 = vpop.permute.xlu0 %7603
      %7605 = vrot.lane.b32.xlu0 %v7579, 4
      %v7606 = vpop.permute.xlu0 %7605
      %7607 = vrot.lane.b32.xlu0 %v7580, 4
      %v7608 = vpop.permute.xlu0 %7607
      %7609 = vrot.lane.b32.xlu0 %v7581, 4
      %v7610 = vpop.permute.xlu0 %7609
      %7611 = vrot.lane.b32.xlu0 %v7582, 4
      %v7612 = vpop.permute.xlu0 %7611
      %7613 = vrot.lane.b32.xlu0 %v7583, 4
      %v7614 = vpop.permute.xlu0 %7613
      %7615 = vrot.lane.b32.xlu0 %v7584, 4
      %v7616 = vpop.permute.xlu0 %7615
      %v7617 = vunpack.c.l.b16 %v7364
      %v7618 = vunpack.c.l.b16 %v7367
      %v7619 = vunpack.c.l.b16 %v7371
      %v7620 = vunpack.c.l.b16 %v7374
      %v7621 = vunpack.c.l.b16 %v7378
      %v7622 = vunpack.c.l.b16 %v7381
      %v7623 = vunpack.c.l.b16 %v7385
      %v7624 = vunpack.c.l.b16 %v7388
      %v7625 = vunpack.c.l.b16 %v7392
      %v7626 = vunpack.c.l.b16 %v7395
      %v7627 = vunpack.c.l.b16 %v7399
      %v7628 = vunpack.c.l.b16 %v7402
      %v7629 = vunpack.c.l.b16 %v7406
      %v7630 = vunpack.c.l.b16 %v7409
      %v7631 = vunpack.c.l.b16 %v7413
      %v7632 = vunpack.c.l.b16 %v7416
      %v7633 = vunpack.c.l.b16 %v7420
      %v7634 = vunpack.c.l.b16 %v7423
      %v7635 = vunpack.c.l.b16 %v7427
      %v7636 = vunpack.c.l.b16 %v7430
      %v7637 = vunpack.c.l.b16 %v7434
      %v7638 = vunpack.c.l.b16 %v7437
      %v7639 = vunpack.c.l.b16 %v7441
      %v7640 = vunpack.c.l.b16 %v7444
      %v7641 = vunpack.c.l.b16 %v7448
      %v7642 = vunpack.c.l.b16 %v7451
      %v7643 = vunpack.c.l.b16 %v7455
      %v7644 = vunpack.c.l.b16 %v7458
      %v7645 = vunpack.c.l.b16 %v7462
      %v7646 = vunpack.c.l.b16 %v7465
      %v7647 = vunpack.c.l.b16 %v7469
      %v7648 = vunpack.c.l.b16 %v7472
      %v7649 = vpack.c.b16 %v7618, %v7617
      %v7650 = vpack.c.b16 %v7620, %v7619
      %v7651 = vpack.c.b16 %v7622, %v7621
      %v7652 = vpack.c.b16 %v7624, %v7623
      %v7653 = vpack.c.b16 %v7626, %v7625
      %v7654 = vpack.c.b16 %v7628, %v7627
      %v7655 = vpack.c.b16 %v7630, %v7629
      %v7656 = vpack.c.b16 %v7632, %v7631
      %v7657 = vpack.c.b16 %v7634, %v7633
      %v7658 = vpack.c.b16 %v7636, %v7635
      %v7659 = vpack.c.b16 %v7638, %v7637
      %v7660 = vpack.c.b16 %v7640, %v7639
      %v7661 = vpack.c.b16 %v7642, %v7641
      %v7662 = vpack.c.b16 %v7644, %v7643
      %v7663 = vpack.c.b16 %v7646, %v7645
      %v7664 = vpack.c.b16 %v7648, %v7647
      %7665 = vrot.lane.b32.xlu0 %v7649, 8
      %v7666 = vpop.permute.xlu0 %7665
      %7667 = vrot.lane.b32.xlu0 %v7650, 8
      %v7668 = vpop.permute.xlu0 %7667
      %7669 = vrot.lane.b32.xlu0 %v7651, 8
      %v7670 = vpop.permute.xlu0 %7669
      %7671 = vrot.lane.b32.xlu0 %v7652, 8
      %v7672 = vpop.permute.xlu0 %7671
      %7673 = vrot.lane.b32.xlu0 %v7653, 8
      %v7674 = vpop.permute.xlu0 %7673
      %7675 = vrot.lane.b32.xlu0 %v7654, 8
      %v7676 = vpop.permute.xlu0 %7675
      %7677 = vrot.lane.b32.xlu0 %v7655, 8
      %v7678 = vpop.permute.xlu0 %7677
      %7679 = vrot.lane.b32.xlu0 %v7656, 8
      %v7680 = vpop.permute.xlu0 %7679
      %7681 = vrot.lane.b32.xlu0 %v7657, 8
      %v7682 = vpop.permute.xlu0 %7681
      %7683 = vrot.lane.b32.xlu0 %v7658, 8
      %v7684 = vpop.permute.xlu0 %7683
      %7685 = vrot.lane.b32.xlu0 %v7659, 8
      %v7686 = vpop.permute.xlu0 %7685
      %7687 = vrot.lane.b32.xlu0 %v7660, 8
      %v7688 = vpop.permute.xlu0 %7687
      %7689 = vrot.lane.b32.xlu0 %v7661, 8
      %v7690 = vpop.permute.xlu0 %7689
      %7691 = vrot.lane.b32.xlu0 %v7662, 8
      %v7692 = vpop.permute.xlu0 %7691
      %7693 = vrot.lane.b32.xlu0 %v7663, 8
      %v7694 = vpop.permute.xlu0 %7693
      %7695 = vrot.lane.b32.xlu0 %v7664, 8
      %v7696 = vpop.permute.xlu0 %7695
      %v7699 = vsel %vm1589, %v7521, %v7586
      %v7702 = vsel %vm1589, %v7522, %v7588
      %v7705 = vsel %vm1589, %v7523, %v7590
      %v7708 = vsel %vm1589, %v7524, %v7592
      %v7711 = vsel %vm1589, %v7525, %v7594
      %v7714 = vsel %vm1589, %v7526, %v7596
      %v7717 = vsel %vm1589, %v7527, %v7598
      %v7720 = vsel %vm1589, %v7528, %v7600
      %v7723 = vsel %vm1589, %v7529, %v7602
      %v7726 = vsel %vm1589, %v7530, %v7604
      %v7729 = vsel %vm1589, %v7531, %v7606
      %v7732 = vsel %vm1589, %v7532, %v7608
      %v7735 = vsel %vm1589, %v7533, %v7610
      %v7738 = vsel %vm1589, %v7534, %v7612
      %v7741 = vsel %vm1589, %v7535, %v7614
      %v7744 = vsel %vm1589, %v7536, %v7616
      %v7746 = vsel %vm1638, %v7699, %v7666
      %v7748 = vsel %vm1638, %v7702, %v7668
      %v7750 = vsel %vm1638, %v7705, %v7670
      %v7752 = vsel %vm1638, %v7708, %v7672
      %v7754 = vsel %vm1638, %v7711, %v7674
      %v7756 = vsel %vm1638, %v7714, %v7676
      %v7758 = vsel %vm1638, %v7717, %v7678
      %v7760 = vsel %vm1638, %v7720, %v7680
      %v7762 = vsel %vm1638, %v7723, %v7682
      %v7764 = vsel %vm1638, %v7726, %v7684
      %v7766 = vsel %vm1638, %v7729, %v7686
      %v7768 = vsel %vm1638, %v7732, %v7688
      %v7770 = vsel %vm1638, %v7735, %v7690
      %v7772 = vsel %vm1638, %v7738, %v7692
      %v7774 = vsel %vm1638, %v7741, %v7694
      %v7776 = vsel %vm1638, %v7744, %v7696
      %s7777 = scalar_lea.vmem %s3, 16
      %v7778 = vld [vmem:[%s7777] sm:$0xf]
      %v7779 = vld [vmem:[%s7777 + $0x4] sm:$0x3]
      %v7782 = vunpack.c.l.b16 %v7778
      %v7783 = vunpack.c.l.b16 %v7779
      %v7784 = vpack.c.b16 %v7783, %v7782
      %v7785 = vsel %vm2593, %v7746, 0
      %v7787 = vsel %vm2593, %v7748, 0
      %v7789 = vsel %vm2593, %v7750, 0
      %v7791 = vsel %vm2593, %v7752, 0
      %v7793 = vsel %vm2593, %v7754, 0
      %v7795 = vsel %vm2593, %v7756, 0
      %v7797 = vsel %vm2593, %v7758, 0
      %v7799 = vsel %vm2593, %v7760, 0
      %v7801 = vsel %vm2593, %v7762, 0
      %v7803 = vsel %vm2593, %v7764, 0
      %v7805 = vsel %vm2593, %v7766, 0
      %v7807 = vsel %vm2593, %v7768, 0
      %v7809 = vsel %vm2593, %v7770, 0
      %v7811 = vsel %vm2593, %v7772, 0
      %v7813 = vsel %vm2593, %v7774, 0
      %v7815 = vsel %vm2593, %v7776, 0
      %v7818 = vsel %vm2626, %v7784, 0
      %7820 = vmatprep.subr.bf16.mxu0 0
      %7821 = vmatpush1.bf16.msra.mxu0 0
      %7822 = vmatprep.subr.bf16.mxu0 0
      %7823 = vmatpush1.bf16.msra.mxu0 0
      %7824 = vmatprep.subr.bf16.mxu0 0
      %7825 = vmatpush1.bf16.msra.mxu0 0
      %7826 = vmatprep.subr.bf16.mxu0 0
      %7827 = vmatpush1.bf16.msra.mxu0 0
      %7828 = vmatprep.subr.bf16.mxu0 0
      %7829 = vmatpush1.bf16.msra.mxu0 0
      %7830 = vmatprep.subr.bf16.mxu0 0
      %7831 = vmatpush1.bf16.msra.mxu0 0
      %7832 = vmatprep.subr.bf16.mxu0 0
      %7833 = vmatpush1.bf16.msra.mxu0 0
      %7834 = vmatprep.subr.bf16.mxu0 0
      %7835 = vmatpush1.bf16.msra.mxu0 %v7818
      %7836 = vmatprep.subr.bf16.mxu0 0
      %7837 = vmatpush2.bf16.msra.mxu0 0
      %7838 = vmatprep.subr.bf16.mxu0 0
      %7839 = vmatpush2.bf16.msra.mxu0 0
      %7840 = vmatprep.subr.bf16.mxu0 0
      %7841 = vmatpush2.bf16.msra.mxu0 0
      %7842 = vmatprep.subr.bf16.mxu0 0
      %7843 = vmatpush2.bf16.msra.mxu0 0
      %7844 = vmatprep.subr.bf16.mxu0 0
      %7845 = vmatpush2.bf16.msra.mxu0 0
      %7846 = vmatprep.subr.bf16.mxu0 0
      %7847 = vmatpush2.bf16.msra.mxu0 0
      %7848 = vmatprep.subr.bf16.mxu0 0
      %7849 = vmatpush2.bf16.msra.mxu0 0
      %7850 = vmatprep.subr.bf16.mxu0 0
      %7851 = vmatpush2.bf16.msra.mxu0 0
      %7852 = vmatprep.mubr.bf16.mxu0 0
      %7853 = vmatmul.mubr.bf16.gmra.mxu0 %v7785
      %v7854 = vpop.f32.mrf.mxu0
      %v7855 = vadd.f32 0.0, %v7854
      %v7856 = vpop.f32.mrf.mxu0
      %v7857 = vpop.f32.mrf.mxu0
      %v7858 = vadd.f32 0.0, %v7857
      %v7859 = vpop.f32.mrf.mxu0
      %7860 = vmatprep.mubr.bf16.mxu0 0
      %7861 = vmatmul.mubr.bf16.gmra.mxu0 %v7787
      %v7862 = vpop.f32.mrf.mxu0
      %v7863 = vadd.f32 0.0, %v7862
      %v7864 = vpop.f32.mrf.mxu0
      %v7865 = vpop.f32.mrf.mxu0
      %v7866 = vadd.f32 0.0, %v7865
      %v7867 = vpop.f32.mrf.mxu0
      %7868 = vmatprep.mubr.bf16.mxu0 0
      %7869 = vmatmul.mubr.bf16.gmra.mxu0 %v7789
      %v7870 = vpop.f32.mrf.mxu0
      %v7871 = vadd.f32 0.0, %v7870
      %v7872 = vpop.f32.mrf.mxu0
      %v7873 = vpop.f32.mrf.mxu0
      %v7874 = vadd.f32 0.0, %v7873
      %v7875 = vpop.f32.mrf.mxu0
      %7876 = vmatprep.mubr.bf16.mxu0 0
      %7877 = vmatmul.mubr.bf16.gmra.mxu0 %v7791
      %v7878 = vpop.f32.mrf.mxu0
      %v7879 = vadd.f32 0.0, %v7878
      %v7880 = vpop.f32.mrf.mxu0
      %v7881 = vpop.f32.mrf.mxu0
      %v7882 = vadd.f32 0.0, %v7881
      %v7883 = vpop.f32.mrf.mxu0
      %7884 = vmatprep.mubr.bf16.mxu0 0
      %7885 = vmatmul.mubr.bf16.gmra.mxu0 %v7793
      %v7886 = vpop.f32.mrf.mxu0
      %v7887 = vadd.f32 0.0, %v7886
      %v7888 = vpop.f32.mrf.mxu0
      %v7889 = vpop.f32.mrf.mxu0
      %v7890 = vadd.f32 0.0, %v7889
      %v7891 = vpop.f32.mrf.mxu0
      %7892 = vmatprep.mubr.bf16.mxu0 0
      %7893 = vmatmul.mubr.bf16.gmra.mxu0 %v7795
      %v7894 = vpop.f32.mrf.mxu0
      %v7895 = vadd.f32 0.0, %v7894
      %v7896 = vpop.f32.mrf.mxu0
      %v7897 = vpop.f32.mrf.mxu0
      %v7898 = vadd.f32 0.0, %v7897
      %v7899 = vpop.f32.mrf.mxu0
      %7900 = vmatprep.mubr.bf16.mxu0 0
      %7901 = vmatmul.mubr.bf16.gmra.mxu0 %v7797
      %v7902 = vpop.f32.mrf.mxu0
      %v7903 = vadd.f32 0.0, %v7902
      %v7904 = vpop.f32.mrf.mxu0
      %v7905 = vpop.f32.mrf.mxu0
      %v7906 = vadd.f32 0.0, %v7905
      %v7907 = vpop.f32.mrf.mxu0
      %7908 = vmatprep.mubr.bf16.mxu0 0
      %7909 = vmatmul.mubr.bf16.gmra.mxu0 %v7799
      %v7910 = vpop.f32.mrf.mxu0
      %v7911 = vadd.f32 0.0, %v7910
      %v7912 = vpop.f32.mrf.mxu0
      %v7913 = vpop.f32.mrf.mxu0
      %v7914 = vadd.f32 0.0, %v7913
      %v7915 = vpop.f32.mrf.mxu0
      %7916 = vmatprep.mubr.bf16.mxu0 0
      %7917 = vmatmul.mubr.bf16.gmra.mxu0 %v7801
      %v7918 = vpop.f32.mrf.mxu0
      %v7919 = vadd.f32 0.0, %v7918
      %v7920 = vpop.f32.mrf.mxu0
      %v7921 = vpop.f32.mrf.mxu0
      %v7922 = vadd.f32 0.0, %v7921
      %v7923 = vpop.f32.mrf.mxu0
      %7924 = vmatprep.mubr.bf16.mxu0 0
      %7925 = vmatmul.mubr.bf16.gmra.mxu0 %v7803
      %v7926 = vpop.f32.mrf.mxu0
      %v7927 = vadd.f32 0.0, %v7926
      %v7928 = vpop.f32.mrf.mxu0
      %v7929 = vpop.f32.mrf.mxu0
      %v7930 = vadd.f32 0.0, %v7929
      %v7931 = vpop.f32.mrf.mxu0
      %7932 = vmatprep.mubr.bf16.mxu0 0
      %7933 = vmatmul.mubr.bf16.gmra.mxu0 %v7805
      %v7934 = vpop.f32.mrf.mxu0
      %v7935 = vadd.f32 0.0, %v7934
      %v7936 = vpop.f32.mrf.mxu0
      %v7937 = vpop.f32.mrf.mxu0
      %v7938 = vadd.f32 0.0, %v7937
      %v7939 = vpop.f32.mrf.mxu0
      %7940 = vmatprep.mubr.bf16.mxu0 0
      %7941 = vmatmul.mubr.bf16.gmra.mxu0 %v7807
      %v7942 = vpop.f32.mrf.mxu0
      %v7943 = vadd.f32 0.0, %v7942
      %v7944 = vpop.f32.mrf.mxu0
      %v7945 = vpop.f32.mrf.mxu0
      %v7946 = vadd.f32 0.0, %v7945
      %v7947 = vpop.f32.mrf.mxu0
      %7948 = vmatprep.mubr.bf16.mxu0 0
      %7949 = vmatmul.mubr.bf16.gmra.mxu0 %v7809
      %v7950 = vpop.f32.mrf.mxu0
      %v7951 = vadd.f32 0.0, %v7950
      %v7952 = vpop.f32.mrf.mxu0
      %v7953 = vpop.f32.mrf.mxu0
      %v7954 = vadd.f32 0.0, %v7953
      %v7955 = vpop.f32.mrf.mxu0
      %7956 = vmatprep.mubr.bf16.mxu0 0
      %7957 = vmatmul.mubr.bf16.gmra.mxu0 %v7811
      %v7958 = vpop.f32.mrf.mxu0
      %v7959 = vadd.f32 0.0, %v7958
      %v7960 = vpop.f32.mrf.mxu0
      %v7961 = vpop.f32.mrf.mxu0
      %v7962 = vadd.f32 0.0, %v7961
      %v7963 = vpop.f32.mrf.mxu0
      %7964 = vmatprep.mubr.bf16.mxu0 0
      %7965 = vmatmul.mubr.bf16.gmra.mxu0 %v7813
      %v7966 = vpop.f32.mrf.mxu0
      %v7967 = vadd.f32 0.0, %v7966
      %v7968 = vpop.f32.mrf.mxu0
      %v7969 = vpop.f32.mrf.mxu0
      %v7970 = vadd.f32 0.0, %v7969
      %v7971 = vpop.f32.mrf.mxu0
      %7972 = vmatprep.mubr.bf16.mxu0 0
      %7973 = vmatmul.mubr.bf16.gmra.mxu0 %v7815
      %v7974 = vpop.f32.mrf.mxu0
      %v7975 = vadd.f32 0.0, %v7974
      %v7976 = vpop.f32.mrf.mxu0
      %v7977 = vpop.f32.mrf.mxu0
      %v7978 = vadd.f32 0.0, %v7977
      %v7979 = vpop.f32.mrf.mxu0
      %7980 = vdwg.mxu0
      %v7981 = vadd.f32 %v6739, %v7855
      %v7982 = vadd.f32 %v6742, %v7858
      %v7983 = vadd.f32 %v6747, %v7863
      %v7984 = vadd.f32 %v6750, %v7866
      %v7985 = vadd.f32 %v6755, %v7871
      %v7986 = vadd.f32 %v6758, %v7874
      %v7987 = vadd.f32 %v6763, %v7879
      %v7988 = vadd.f32 %v6766, %v7882
      %v7989 = vadd.f32 %v6771, %v7887
      %v7990 = vadd.f32 %v6774, %v7890
      %v7991 = vadd.f32 %v6779, %v7895
      %v7992 = vadd.f32 %v6782, %v7898
      %v7993 = vadd.f32 %v6787, %v7903
      %v7994 = vadd.f32 %v6790, %v7906
      %v7995 = vadd.f32 %v6795, %v7911
      %v7996 = vadd.f32 %v6798, %v7914
      %v7997 = vadd.f32 %v6803, %v7919
      %v7998 = vadd.f32 %v6806, %v7922
      %v7999 = vadd.f32 %v6811, %v7927
      %v8000 = vadd.f32 %v6814, %v7930
      %v8001 = vadd.f32 %v6819, %v7935
      %v8002 = vadd.f32 %v6822, %v7938
      %v8003 = vadd.f32 %v6827, %v7943
      %v8004 = vadd.f32 %v6830, %v7946
      %v8005 = vadd.f32 %v6835, %v7951
      %v8006 = vadd.f32 %v6838, %v7954
      %v8007 = vadd.f32 %v6843, %v7959
      %v8008 = vadd.f32 %v6846, %v7962
      %v8009 = vadd.f32 %v6851, %v7967
      %v8010 = vadd.f32 %v6854, %v7970
      %v8011 = vadd.f32 %v6859, %v7975
      %v8012 = vadd.f32 %v6862, %v7978
      %v8013 = vld [vmem:[%s4] sm:$0x1]
      %v8015 = vlaneseq
      %v8016 = vshrl.u32 %v8015, 7
      %v8017 = vsub.s32 0, %v8016
      %v8018 = vrot.slane %v8013, %v8017
      %v8020 = vadd.f32 %v7981, %v8018
      %v8021 = vadd.f32 %v7982, %v8018
      %v8022 = vadd.f32 %v7983, %v8018
      %v8023 = vadd.f32 %v7984, %v8018
      %v8024 = vadd.f32 %v7985, %v8018
      %v8025 = vadd.f32 %v7986, %v8018
      %v8026 = vadd.f32 %v7987, %v8018
      %v8027 = vadd.f32 %v7988, %v8018
      %v8028 = vadd.f32 %v7989, %v8018
      %v8029 = vadd.f32 %v7990, %v8018
      %v8030 = vadd.f32 %v7991, %v8018
      %v8031 = vadd.f32 %v7992, %v8018
      %v8032 = vadd.f32 %v7993, %v8018
      %v8033 = vadd.f32 %v7994, %v8018
      %v8034 = vadd.f32 %v7995, %v8018
      %v8035 = vadd.f32 %v7996, %v8018
      %v8036 = vadd.f32 %v7997, %v8018
      %v8037 = vadd.f32 %v7998, %v8018
      %v8038 = vadd.f32 %v7999, %v8018
      %v8039 = vadd.f32 %v8000, %v8018
      %v8040 = vadd.f32 %v8001, %v8018
      %v8041 = vadd.f32 %v8002, %v8018
      %v8042 = vadd.f32 %v8003, %v8018
      %v8043 = vadd.f32 %v8004, %v8018
      %v8044 = vadd.f32 %v8005, %v8018
      %v8045 = vadd.f32 %v8006, %v8018
      %v8046 = vadd.f32 %v8007, %v8018
      %v8047 = vadd.f32 %v8008, %v8018
      %v8048 = vadd.f32 %v8009, %v8018
      %v8049 = vadd.f32 %v8010, %v8018
      %v8050 = vadd.f32 %v8011, %v8018
      %v8051 = vadd.f32 %v8012, %v8018
      %v8052 = vld [vmem:[%s219] sm:$0xf]
      %v8053 = vld [vmem:[%s219 + $0x4] sm:$0xf]
      %v8054 = vld [vmem:[%s219 + $0x8] sm:$0xf]
      %v8055 = vld [vmem:[%s219 + $0xc] sm:$0xf]
      %v8056 = vld [vmem:[%s219 + $0x10] sm:$0xf]
      %v8057 = vld [vmem:[%s219 + $0x14] sm:$0xf]
      %v8058 = vld [vmem:[%s219 + $0x18] sm:$0xf]
      %v8059 = vld [vmem:[%s219 + $0x1c] sm:$0xf]
      %v8060 = vld [vmem:[%s219 + $0x20] sm:$0xf]
      %v8061 = vld [vmem:[%s219 + $0x24] sm:$0xf]
      %v8062 = vld [vmem:[%s219 + $0x28] sm:$0xf]
      %v8063 = vld [vmem:[%s219 + $0x2c] sm:$0xf]
      %v8064 = vld [vmem:[%s219 + $0x30] sm:$0xf]
      %v8065 = vld [vmem:[%s219 + $0x34] sm:$0xf]
      %v8066 = vld [vmem:[%s219 + $0x38] sm:$0xf]
      %v8067 = vld [vmem:[%s219 + $0x3c] sm:$0xf]
      %v8068 = vld [vmem:[%s219 + $0x40] sm:$0xf]
      %v8069 = vld [vmem:[%s219 + $0x44] sm:$0xf]
      %v8070 = vld [vmem:[%s219 + $0x48] sm:$0xf]
      %v8071 = vld [vmem:[%s219 + $0x4c] sm:$0xf]
      %v8072 = vld [vmem:[%s219 + $0x50] sm:$0xf]
      %v8073 = vld [vmem:[%s219 + $0x54] sm:$0xf]
      %v8074 = vld [vmem:[%s219 + $0x58] sm:$0xf]
      %v8075 = vld [vmem:[%s219 + $0x5c] sm:$0xf]
      %v8076 = vld [vmem:[%s219 + $0x60] sm:$0xf]
      %v8077 = vld [vmem:[%s219 + $0x64] sm:$0xf]
      %v8078 = vld [vmem:[%s219 + $0x68] sm:$0xf]
      %v8079 = vld [vmem:[%s219 + $0x6c] sm:$0xf]
      %v8080 = vld [vmem:[%s219 + $0x70] sm:$0xf]
      %v8081 = vld [vmem:[%s219 + $0x74] sm:$0xf]
      %v8082 = vld [vmem:[%s219 + $0x78] sm:$0xf]
      %v8083 = vld [vmem:[%s219 + $0x7c] sm:$0xf]
      %v8084 = vunpack.c.l.bf16 %v8052
      %v8085 = vunpack.c.l.bf16 %v8053
      %v8086 = vunpack.c.l.bf16 %v8054
      %v8087 = vunpack.c.l.bf16 %v8055
      %v8088 = vunpack.c.l.bf16 %v8056
      %v8089 = vunpack.c.l.bf16 %v8057
      %v8090 = vunpack.c.l.bf16 %v8058
      %v8091 = vunpack.c.l.bf16 %v8059
      %v8092 = vunpack.c.l.bf16 %v8060
      %v8093 = vunpack.c.l.bf16 %v8061
      %v8094 = vunpack.c.l.bf16 %v8062
      %v8095 = vunpack.c.l.bf16 %v8063
      %v8096 = vunpack.c.l.bf16 %v8064
      %v8097 = vunpack.c.l.bf16 %v8065
      %v8098 = vunpack.c.l.bf16 %v8066
      %v8099 = vunpack.c.l.bf16 %v8067
      %v8100 = vunpack.c.l.bf16 %v8068
      %v8101 = vunpack.c.l.bf16 %v8069
      %v8102 = vunpack.c.l.bf16 %v8070
      %v8103 = vunpack.c.l.bf16 %v8071
      %v8104 = vunpack.c.l.bf16 %v8072
      %v8105 = vunpack.c.l.bf16 %v8073
      %v8106 = vunpack.c.l.bf16 %v8074
      %v8107 = vunpack.c.l.bf16 %v8075
      %v8108 = vunpack.c.l.bf16 %v8076
      %v8109 = vunpack.c.l.bf16 %v8077
      %v8110 = vunpack.c.l.bf16 %v8078
      %v8111 = vunpack.c.l.bf16 %v8079
      %v8112 = vunpack.c.l.bf16 %v8080
      %v8113 = vunpack.c.l.bf16 %v8081
      %v8114 = vunpack.c.l.bf16 %v8082
      %v8115 = vunpack.c.l.bf16 %v8083
      %v8116 = vadd.f32 %v8020, %v8084
      %v8117 = vadd.f32 %v8021, %v8085
      %v8118 = vadd.f32 %v8022, %v8086
      %v8119 = vadd.f32 %v8023, %v8087
      %v8120 = vadd.f32 %v8024, %v8088
      %v8121 = vadd.f32 %v8025, %v8089
      %v8122 = vadd.f32 %v8026, %v8090
      %v8123 = vadd.f32 %v8027, %v8091
      %v8124 = vadd.f32 %v8028, %v8092
      %v8125 = vadd.f32 %v8029, %v8093
      %v8126 = vadd.f32 %v8030, %v8094
      %v8127 = vadd.f32 %v8031, %v8095
      %v8128 = vadd.f32 %v8032, %v8096
      %v8129 = vadd.f32 %v8033, %v8097
      %v8130 = vadd.f32 %v8034, %v8098
      %v8131 = vadd.f32 %v8035, %v8099
      %v8132 = vadd.f32 %v8036, %v8100
      %v8133 = vadd.f32 %v8037, %v8101
      %v8134 = vadd.f32 %v8038, %v8102
      %v8135 = vadd.f32 %v8039, %v8103
      %v8136 = vadd.f32 %v8040, %v8104
      %v8137 = vadd.f32 %v8041, %v8105
      %v8138 = vadd.f32 %v8042, %v8106
      %v8139 = vadd.f32 %v8043, %v8107
      %v8140 = vadd.f32 %v8044, %v8108
      %v8141 = vadd.f32 %v8045, %v8109
      %v8142 = vadd.f32 %v8046, %v8110
      %v8143 = vadd.f32 %v8047, %v8111
      %v8144 = vadd.f32 %v8048, %v8112
      %v8145 = vadd.f32 %v8049, %v8113
      %v8146 = vadd.f32 %v8050, %v8114
      %v8147 = vadd.f32 %v8051, %v8115
      %v8148 = vmax.f32 %v8116, 0.0
      %v8149 = vmax.f32 %v8117, 0.0
      %v8150 = vmax.f32 %v8118, 0.0
      %v8151 = vmax.f32 %v8119, 0.0
      %v8152 = vmax.f32 %v8120, 0.0
      %v8153 = vmax.f32 %v8121, 0.0
      %v8154 = vmax.f32 %v8122, 0.0
      %v8155 = vmax.f32 %v8123, 0.0
      %v8156 = vmax.f32 %v8124, 0.0
      %v8157 = vmax.f32 %v8125, 0.0
      %v8158 = vmax.f32 %v8126, 0.0
      %v8159 = vmax.f32 %v8127, 0.0
      %v8160 = vmax.f32 %v8128, 0.0
      %v8161 = vmax.f32 %v8129, 0.0
      %v8162 = vmax.f32 %v8130, 0.0
      %v8163 = vmax.f32 %v8131, 0.0
      %v8164 = vmax.f32 %v8132, 0.0
      %v8165 = vmax.f32 %v8133, 0.0
      %v8166 = vmax.f32 %v8134, 0.0
      %v8167 = vmax.f32 %v8135, 0.0
      %v8168 = vmax.f32 %v8136, 0.0
      %v8169 = vmax.f32 %v8137, 0.0
      %v8170 = vmax.f32 %v8138, 0.0
      %v8171 = vmax.f32 %v8139, 0.0
      %v8172 = vmax.f32 %v8140, 0.0
      %v8173 = vmax.f32 %v8141, 0.0
      %v8174 = vmax.f32 %v8142, 0.0
      %v8175 = vmax.f32 %v8143, 0.0
      %v8176 = vmax.f32 %v8144, 0.0
      %v8177 = vmax.f32 %v8145, 0.0
      %v8178 = vmax.f32 %v8146, 0.0
      %v8179 = vmax.f32 %v8147, 0.0
      %v8180 = vpack.c.bf16 %v8149, %v8148
      %v8181 = vpack.c.bf16 %v8151, %v8150
      %v8182 = vpack.c.bf16 %v8153, %v8152
      %v8183 = vpack.c.bf16 %v8155, %v8154
      %v8184 = vpack.c.bf16 %v8157, %v8156
      %v8185 = vpack.c.bf16 %v8159, %v8158
      %v8186 = vpack.c.bf16 %v8161, %v8160
      %v8187 = vpack.c.bf16 %v8163, %v8162
      %v8188 = vpack.c.bf16 %v8165, %v8164
      %v8189 = vpack.c.bf16 %v8167, %v8166
      %v8190 = vpack.c.bf16 %v8169, %v8168
      %v8191 = vpack.c.bf16 %v8171, %v8170
      %v8192 = vpack.c.bf16 %v8173, %v8172
      %v8193 = vpack.c.bf16 %v8175, %v8174
      %v8194 = vpack.c.bf16 %v8177, %v8176
      %v8195 = vpack.c.bf16 %v8179, %v8178
      %v8212 = vunpack.c.l.b16 %v8180
      %v8213 = vunpack.c.h.b16 %v8180
      %v8214 = vunpack.c.l.b16 %v8181
      %v8215 = vunpack.c.h.b16 %v8181
      %v8216 = vunpack.c.l.b16 %v8182
      %v8217 = vunpack.c.h.b16 %v8182
      %v8218 = vunpack.c.l.b16 %v8183
      %v8219 = vunpack.c.h.b16 %v8183
      %v8220 = vunpack.c.l.b16 %v8184
      %v8221 = vunpack.c.h.b16 %v8184
      %v8222 = vunpack.c.l.b16 %v8185
      %v8223 = vunpack.c.h.b16 %v8185
      %v8224 = vunpack.c.l.b16 %v8186
      %v8225 = vunpack.c.h.b16 %v8186
      %v8226 = vunpack.c.l.b16 %v8187
      %v8227 = vunpack.c.h.b16 %v8187
      %v8228 = vunpack.c.l.b16 %v8188
      %v8229 = vunpack.c.h.b16 %v8188
      %v8230 = vunpack.c.l.b16 %v8189
      %v8231 = vunpack.c.h.b16 %v8189
      %v8232 = vunpack.c.l.b16 %v8190
      %v8233 = vunpack.c.h.b16 %v8190
      %v8234 = vunpack.c.l.b16 %v8191
      %v8235 = vunpack.c.h.b16 %v8191
      %v8236 = vunpack.c.l.b16 %v8192
      %v8237 = vunpack.c.h.b16 %v8192
      %v8238 = vunpack.c.l.b16 %v8193
      %v8239 = vunpack.c.h.b16 %v8193
      %v8240 = vunpack.c.l.b16 %v8194
      %v8241 = vunpack.c.h.b16 %v8194
      %v8242 = vunpack.c.l.b16 %v8195
      %v8243 = vunpack.c.h.b16 %v8195
      %v8244 = vpack.c.b16 %v8212, %v8212
      %v8245 = vpack.c.b16 %v8213, %v8213
      %v8246 = vpack.c.b16 %v8214, %v8214
      %v8247 = vpack.c.b16 %v8215, %v8215
      %v8248 = vpack.c.b16 %v8216, %v8216
      %v8249 = vpack.c.b16 %v8217, %v8217
      %v8250 = vpack.c.b16 %v8218, %v8218
      %v8251 = vpack.c.b16 %v8219, %v8219
      %v8252 = vpack.c.b16 %v8220, %v8220
      %v8253 = vpack.c.b16 %v8221, %v8221
      %v8254 = vpack.c.b16 %v8222, %v8222
      %v8255 = vpack.c.b16 %v8223, %v8223
      %v8256 = vpack.c.b16 %v8224, %v8224
      %v8257 = vpack.c.b16 %v8225, %v8225
      %v8258 = vpack.c.b16 %v8226, %v8226
      %v8259 = vpack.c.b16 %v8227, %v8227
      %v8260 = vpack.c.b16 %v8228, %v8228
      %v8261 = vpack.c.b16 %v8229, %v8229
      %v8262 = vpack.c.b16 %v8230, %v8230
      %v8263 = vpack.c.b16 %v8231, %v8231
      %v8264 = vpack.c.b16 %v8232, %v8232
      %v8265 = vpack.c.b16 %v8233, %v8233
      %v8266 = vpack.c.b16 %v8234, %v8234
      %v8267 = vpack.c.b16 %v8235, %v8235
      %v8268 = vpack.c.b16 %v8236, %v8236
      %v8269 = vpack.c.b16 %v8237, %v8237
      %v8270 = vpack.c.b16 %v8238, %v8238
      %v8271 = vpack.c.b16 %v8239, %v8239
      %v8272 = vpack.c.b16 %v8240, %v8240
      %v8273 = vpack.c.b16 %v8241, %v8241
      %v8274 = vpack.c.b16 %v8242, %v8242
      %v8275 = vpack.c.b16 %v8243, %v8243
      %8308 = vst.msk [vmem:[%s224] sm:$0xf] %vm258, %v8244
      %8309 = vst.msk [vmem:[%s224 + $0x4] sm:$0xf] %vm258, %v8245
      %8310 = vst.msk [vmem:[%s224 + $0x8] sm:$0xf] %vm258, %v8246
      %8311 = vst.msk [vmem:[%s224 + $0xc] sm:$0xf] %vm258, %v8247
      %8312 = vst.msk [vmem:[%s224 + $0x10] sm:$0xf] %vm258, %v8248
      %8313 = vst.msk [vmem:[%s224 + $0x14] sm:$0xf] %vm258, %v8249
      %8314 = vst.msk [vmem:[%s224 + $0x18] sm:$0xf] %vm258, %v8250
      %8315 = vst.msk [vmem:[%s224 + $0x1c] sm:$0xf] %vm258, %v8251
      %8316 = vst.msk [vmem:[%s224 + $0x20] sm:$0xf] %vm258, %v8252
      %8317 = vst.msk [vmem:[%s224 + $0x24] sm:$0xf] %vm258, %v8253
      %8318 = vst.msk [vmem:[%s224 + $0x28] sm:$0xf] %vm258, %v8254
      %8319 = vst.msk [vmem:[%s224 + $0x2c] sm:$0xf] %vm258, %v8255
      %8320 = vst.msk [vmem:[%s224 + $0x30] sm:$0xf] %vm258, %v8256
      %8321 = vst.msk [vmem:[%s224 + $0x34] sm:$0xf] %vm258, %v8257
      %8322 = vst.msk [vmem:[%s224 + $0x38] sm:$0xf] %vm258, %v8258
      %8323 = vst.msk [vmem:[%s224 + $0x3c] sm:$0xf] %vm258, %v8259
      %8324 = vst.msk [vmem:[%s224 + $0x40] sm:$0xf] %vm258, %v8260
      %8325 = vst.msk [vmem:[%s224 + $0x44] sm:$0xf] %vm258, %v8261
      %8326 = vst.msk [vmem:[%s224 + $0x48] sm:$0xf] %vm258, %v8262
      %8327 = vst.msk [vmem:[%s224 + $0x4c] sm:$0xf] %vm258, %v8263
      %8328 = vst.msk [vmem:[%s224 + $0x50] sm:$0xf] %vm258, %v8264
      %8329 = vst.msk [vmem:[%s224 + $0x54] sm:$0xf] %vm258, %v8265
      %8330 = vst.msk [vmem:[%s224 + $0x58] sm:$0xf] %vm258, %v8266
      %8331 = vst.msk [vmem:[%s224 + $0x5c] sm:$0xf] %vm258, %v8267
      %8332 = vst.msk [vmem:[%s224 + $0x60] sm:$0xf] %vm258, %v8268
      %8333 = vst.msk [vmem:[%s224 + $0x64] sm:$0xf] %vm258, %v8269
      %8334 = vst.msk [vmem:[%s224 + $0x68] sm:$0xf] %vm258, %v8270
      %8335 = vst.msk [vmem:[%s224 + $0x6c] sm:$0xf] %vm258, %v8271
      %8336 = vst.msk [vmem:[%s224 + $0x70] sm:$0xf] %vm258, %v8272
      %8337 = vst.msk [vmem:[%s224 + $0x74] sm:$0xf] %vm258, %v8273
      %8338 = vst.msk [vmem:[%s224 + $0x78] sm:$0xf] %vm258, %v8274
      %8339 = vst.msk [vmem:[%s224 + $0x7c] sm:$0xf] %vm258, %v8275
      %p8340 = scmp.lt.s32.totalorder %s16, 1
      %s8341 = scalar_select %p8340, %s16, 1
      %s8342 = smul.addr %s8341, 32
      %s8343 = smul.addr %s8342, 4
      %s8344 = scalar_lea.vmem %s5, %s8343
      // Predicated region
      $region41: #{tpu_custom_call.1} parent=39 // pred_check
        %p8345 = pneg %p144
      $region42: #{tpu_custom_call.1} parent=39 // pred_check_branch
        %8347 = sbr.rel (%p8345) target = $region44
      $region43: #{tpu_custom_call.1} parent=39 // pred_region
        _
      $region44: #{tpu_custom_call.1} parent=39 // pred_fallthru
        _
    $region40: #{tpu_custom_call.1} parent=5 // pred_fallthru
      _
    %p8348 = scmp.le.s32.totalorder 2, %s11
    // Predicated region
    $region45: #{tpu_custom_call.1} parent=5 // pred_check
      %p8349 = pneg %p8348
    $region46: #{tpu_custom_call.1} parent=5 // pred_check_branch
      %8351 = sbr.rel (%p8349) target = $region48
    $region47: #{tpu_custom_call.1} parent=5 // pred_region
      %s8352 = ssub.s32 %s11, 2
      // Predicated region
      $region49: #{tpu_custom_call.1} parent=47 // pred_check
        %p8353 = pneg %p150
      $region50: #{tpu_custom_call.1} parent=47 // pred_check_branch
        %8355 = sbr.rel (%p8353) target = $region52
      $region51: #{tpu_custom_call.1} parent=47 // pred_region
        %p8356 = scmp.lt.s32.totalorder %s17, 1
        %s8357 = scalar_select %p8356, %s17, 1
        %s8358 = smul.addr %s8357, 32
        %s8359 = smul.addr %s8358, 4
        %s8360 = scalar_lea.vmem %s5, %s8359
      $region52: #{tpu_custom_call.1} parent=47 // pred_fallthru
        _
    $region48: #{tpu_custom_call.1} parent=5 // pred_fallthru
      _
  $region6: #{tpu_custom_call.1} parent=0 // loop_footer
    %s15 = sadd.s32 1, %s11
  $region7: #{tpu_custom_call.1} parent=0 // loop_footer_branch
    %10 = sbr.rel target = $region3
  $region8: #{tpu_custom_call.1} parent=0 // loop_exit
    _

</llo_original>
